<compile_context>
chip_gen: v5e
topology: v5e:2x2
jax: 0.10.0
libtpu: 0.0.40
codegen_flags: <defaults>
</compile_context>

<pallas_src>
import functools

import jax
import jax.numpy as jnp
from jax.experimental import pallas as pl
from jax.experimental.pallas import tpu as pltpu


# --------------------------------------------------------------------------
# Pallas kernel: out = act(x @ w + b), bf16 MXU inputs, f32 accumulation.
# --------------------------------------------------------------------------
def _gemm_bias_act_kernel(x_ref, w_ref, b_ref, o_ref, *, relu):
    acc = jnp.dot(x_ref[...], w_ref[...], preferred_element_type=jnp.float32)
    acc = acc + b_ref[...]                       # (1, tn) bias broadcasts
    if relu:
        acc = jnp.maximum(acc, 0.0)
    o_ref[...] = acc.astype(o_ref.dtype)


def gemm_bias_act(x, w, b, *, relu=False, out_dtype=jnp.float32,
                  tm=1024, tn=128):
    """x: (M, K), w: (K, N), b: (N,)  ->  (M, N) in `out_dtype`.

    Inputs are cast to bf16 for the MXU; accumulation / bias / ReLU are f32.
    Row tile = min(M, tm); N is split into 128-wide tiles only when it is a
    multiple of 128 larger than 128 (keeps stores lane-dense).
    """
    M, K = x.shape
    _, N = w.shape
    x = x.astype(jnp.bfloat16)
    w = w.astype(jnp.bfloat16)
    b2 = b.astype(jnp.float32).reshape(1, N)

    tm_eff = M if M <= tm else tm                     # full-M block when small
    tn_eff = tn if (N % tn == 0 and N > tn) else N    # split only conv3 (N=256)
    grid = (pl.cdiv(M, tm_eff), N // tn_eff)

    kern = functools.partial(_gemm_bias_act_kernel, relu=relu)
    return pl.pallas_call(
        kern,
        out_shape=jax.ShapeDtypeStruct((M, N), out_dtype),
        grid_spec=pltpu.PrefetchScalarGridSpec(
            num_scalar_prefetch=0,
            grid=grid,
            in_specs=[
                pl.BlockSpec((tm_eff, K), lambda i, j: (i, 0)),   # row tile of x
                pl.BlockSpec((K, tn_eff), lambda i, j: (0, j)),   # weight column tile
                pl.BlockSpec((1, tn_eff), lambda i, j: (0, j)),   # bias
            ],
            out_specs=pl.BlockSpec((tm_eff, tn_eff), lambda i, j: (i, j)),
        ),
        compiler_params=pltpu.CompilerParams(
            dimension_semantics=("parallel", "parallel")),
    )(x, w, b2)


# --------------------------------------------------------------------------
# Conv2d(4x4, stride 2, no padding) + ReLU via im2col + Pallas GEMM.
# --------------------------------------------------------------------------
def _im2col_nhwc(x, kh, kw, stride):
    B, H, W, C = x.shape
    Ho = (H - kh) // stride + 1
    Wo = (W - kw) // stride + 1
    cols = []
    for i in range(kh):
        for j in range(kw):
            cols.append(x[:, i:i + stride * Ho:stride,
                           j:j + stride * Wo:stride, :])
    patches = jnp.concatenate(cols, axis=-1)          # (B, Ho, Wo, kh*kw*C)
    return patches.reshape(B * Ho * Wo, kh * kw * C), Ho, Wo


def conv2d_relu(x_nhwc, w_oihw, b, stride=2):
    Cout, Cin, kh, kw = w_oihw.shape
    cols, Ho, Wo = _im2col_nhwc(x_nhwc, kh, kw, stride)   # bf16 patches
    # weight -> (kh*kw*Cin, Cout), matching the (i, j, c) patch ordering
    w_mat = jnp.transpose(w_oihw, (2, 3, 1, 0)).reshape(kh * kw * Cin, Cout)
    # conv activations stay bf16 between layers (next GEMM is bf16 anyway)
    y = gemm_bias_act(cols, w_mat, b, relu=True, out_dtype=jnp.bfloat16)
    B = x_nhwc.shape[0]
    return y.reshape(B, Ho, Wo, Cout)


# --------------------------------------------------------------------------
# Parameters (deterministic, synthetic; mirror the PyTorch module init).
# --------------------------------------------------------------------------
def make_params(key, input_channel=3, class_latent_size=16,
                content_latent_size=32, flatten_size=1024):
    keys = jax.random.split(key, 11)
    params = {}
    conv_shapes = [(32, input_channel, 4, 4), (64, 32, 4, 4),
                   (128, 64, 4, 4), (256, 128, 4, 4)]
    for n, shape in enumerate(conv_shapes):
        fan_in = shape[1] * shape[2] * shape[3]
        bound = 1.0 / jnp.sqrt(jnp.float32(fan_in))
        params[f"conv{n}_w"] = jax.random.uniform(
            keys[2 * n], shape, jnp.float32, -bound, bound)
        params[f"conv{n}_b"] = jax.random.uniform(
            keys[2 * n + 1], (shape[0],), jnp.float32, -bound, bound)

    # init_params: Linear weight ~ N(0,1) normalized by per-row L2 norm, bias 0
    def linear_init(k, out_dim, in_dim):
        w = jax.random.normal(k, (out_dim, in_dim), jnp.float32)
        w = w / jnp.sqrt(jnp.sum(w * w, axis=1, keepdims=True))
        return w, jnp.zeros((out_dim,), jnp.float32)

    params["mu_w"], params["mu_b"] = linear_init(
        keys[8], content_latent_size, flatten_size)
    params["logsigma_w"], params["logsigma_b"] = linear_init(
        keys[9], content_latent_size, flatten_size)
    params["class_w"], params["class_b"] = linear_init(
        keys[10], class_latent_size, flatten_size)
    return params


# --------------------------------------------------------------------------
# Forward pass matching CarlaEncoder.forward
# --------------------------------------------------------------------------
def carla_encoder_forward(x_nchw, params):
    # NCHW (PyTorch) -> NHWC for the TPU im2col GEMM path, bf16 activations.
    x = jnp.transpose(x_nchw, (0, 2, 3, 1)).astype(jnp.bfloat16)

    # Pad input channels 3 -> 8 (zeros) so conv0's im2col K = 16*8 = 128.
    cin = x.shape[-1]
    cin_pad = max(cin, 8)
    w0 = params["conv0_w"]
    if cin_pad != cin:
        x = jnp.pad(x, ((0, 0), (0, 0), (0, 0), (0, cin_pad - cin)))
        w0 = jnp.pad(w0, ((0, 0), (0, cin_pad - cin), (0, 0), (0, 0)))

    conv_ws = [w0, params["conv1_w"], params["conv2_w"], params["conv3_w"]]
    for n in range(4):
        x = conv2d_relu(x, conv_ws[n], params[f"conv{n}_b"], stride=2)

    # PyTorch flatten order is (C, H, W)
    B = x.shape[0]
    feat = jnp.transpose(x, (0, 3, 1, 2)).reshape(B, -1)

    # Fused heads: one lane-dense GEMM for [mu | logsigma | classcode].
    c_lat = params["mu_w"].shape[0]
    k_lat = params["class_w"].shape[0]
    w_heads = jnp.concatenate(
        [params["mu_w"].T, params["logsigma_w"].T, params["class_w"].T], axis=1)
    b_heads = jnp.concatenate(
        [params["mu_b"], params["logsigma_b"], params["class_b"]])
    n_tot = 2 * c_lat + k_lat
    n_pad = ((n_tot + 127) // 128) * 128
    if n_pad != n_tot:
        w_heads = jnp.pad(w_heads, ((0, 0), (0, n_pad - n_tot)))
        b_heads = jnp.pad(b_heads, (0, n_pad - n_tot))

    heads = gemm_bias_act(feat, w_heads, b_heads,
                          relu=False, out_dtype=jnp.float32)
    mu = heads[:, :c_lat]
    logsigma = jnp.clip(heads[:, c_lat:2 * c_lat], -40.0, 20.0)
    classcode = heads[:, 2 * c_lat:n_tot]
    return mu, logsigma, classcode


if __name__ == "__main__":
    key = jax.random.PRNGKey(0)
    pkey, xkey = jax.random.split(key)

    # 64x64 input -> conv stack output 256x2x2 => flatten_size = 1024
    # (flatten_size is an __init__ arg of the module).
    params = make_params(pkey, input_channel=3, class_latent_size=16,
                         content_latent_size=32, flatten_size=1024)
    x = jax.random.normal(xkey, (2, 3, 64, 64), jnp.float32)   # NCHW

    fwd = jax.jit(carla_encoder_forward)
    mu, logsigma, classcode = fwd(x, params)
    jax.block_until_ready((mu, logsigma, classcode))

    assert mu.shape == (2, 32)
    assert logsigma.shape == (2, 32)
    assert classcode.shape == (2, 16)
    assert bool(jnp.all(logsigma <= 20.0)) and bool(jnp.all(logsigma >= -40.0))
    print("KERNEL_OK")
</pallas_src>

<mosaic_0001>
module attributes {stable_mosaic.version = 11 : i64} {
  func.func @_gemm_bias_act_kernel(%arg0: i32, %arg1: i32, %arg2: memref<1024x128xbf16, #tpu.memory_space<vmem>>, %arg3: memref<128x32xbf16, #tpu.memory_space<vmem>>, %arg4: memref<1x32xf32, #tpu.memory_space<vmem>>, %arg5: memref<1024x32xbf16, #tpu.memory_space<vmem>>) attributes {dimension_semantics = [#tpu.dimension_semantics<parallel>, #tpu.dimension_semantics<parallel>], iteration_bounds = array<i64: 2, 1>, scalar_prefetch = 0 : i64, scratch_operands = 0 : i64, tpu.core_type = #tpu.core_type<tc>, window_params = [{transform_indices = @transform_0, window_bounds = array<i64: 1024, 128>}, {transform_indices = @transform_1, window_bounds = array<i64: 128, 32>}, {transform_indices = @transform_2, window_bounds = array<i64: 1, 32>}, {transform_indices = @transform_3, window_bounds = array<i64: 1024, 32>}]} {
    %c0 = arith.constant 0 : index
    %c0_0 = arith.constant 0 : index
    %0 = vector.load %arg2[%c0, %c0_0] : memref<1024x128xbf16, #tpu.memory_space<vmem>>, vector<1024x128xbf16>
    %c0_1 = arith.constant 0 : index
    %c0_2 = arith.constant 0 : index
    %1 = vector.load %arg3[%c0_1, %c0_2] : memref<128x32xbf16, #tpu.memory_space<vmem>>, vector<128x32xbf16>
    %cst = arith.constant dense<0.000000e+00> : vector<1024x32xf32>
    %2 = tpu.matmul %0, %1, %cst {dimension_numbers = #tpu.dot_dimension_numbers<[1], [0], [0], [1], [0, 0, 1, 1], [], []>} : vector<1024x128xbf16>, vector<128x32xbf16>, vector<1024x32xf32> -> vector<1024x32xf32>
    %c0_3 = arith.constant 0 : index
    %c0_4 = arith.constant 0 : index
    %3 = vector.load %arg4[%c0_3, %c0_4] : memref<1x32xf32, #tpu.memory_space<vmem>>, vector<1x32xf32>
    %4 = vector.broadcast %3 : vector<1x32xf32> to vector<1024x32xf32>
    %5 = arith.addf %2, %4 : vector<1024x32xf32>
    %cst_5 = arith.constant 0.000000e+00 : f32
    %6 = vector.broadcast %cst_5 : f32 to vector<1024x32xf32>
    %7 = arith.maximumf %5, %6 : vector<1024x32xf32>
    %8 = arith.truncf %7 : vector<1024x32xf32> to vector<1024x32xbf16>
    %c0_6 = arith.constant 0 : index
    %c0_7 = arith.constant 0 : index
    %9 = vector.load %arg5[%c0_6, %c0_7] : memref<1024x32xbf16, #tpu.memory_space<vmem>>, vector<1024x32xbf16>
    tpu.vector_store %arg5[%c0_6, %c0_7], %8 {strides = array<i32>} : memref<1024x32xbf16, #tpu.memory_space<vmem>>, vector<1024x32xbf16>,
    return
  }
  func.func @transform_0(%arg0: i32, %arg1: i32) -> (i32, i32) {
    %c0_i32 = arith.constant 0 : i32
    %c0_i32_0 = arith.constant 0 : i32
    return %arg0, %c0_i32 : i32, i32
  }
  func.func @transform_1(%arg0: i32, %arg1: i32) -> (i32, i32) {
    %c0_i32 = arith.constant 0 : i32
    %c0_i32_0 = arith.constant 0 : i32
    return %c0_i32, %arg1 : i32, i32
  }
  func.func @transform_2(%arg0: i32, %arg1: i32) -> (i32, i32) {
    %c0_i32 = arith.constant 0 : i32
    %c0_i32_0 = arith.constant 0 : i32
    return %c0_i32, %arg1 : i32, i32
  }
  func.func @transform_3(%arg0: i32, %arg1: i32) -> (i32, i32) {
    %c0_i32 = arith.constant 0 : i32
    return %arg0, %arg1 : i32, i32
  }
}

module attributes {stable_mosaic.version = 11 : i64} {
  func.func @_gemm_bias_act_kernel(%arg0: i32, %arg1: i32, %arg2: memref<392x512xbf16, #tpu.memory_space<vmem>>, %arg3: memref<512x64xbf16, #tpu.memory_space<vmem>>, %arg4: memref<1x64xf32, #tpu.memory_space<vmem>>, %arg5: memref<392x64xbf16, #tpu.memory_space<vmem>>) attributes {dimension_semantics = [#tpu.dimension_semantics<parallel>, #tpu.dimension_semantics<parallel>], iteration_bounds = array<i64: 1, 1>, scalar_prefetch = 0 : i64, scratch_operands = 0 : i64, tpu.core_type = #tpu.core_type<tc>, window_params = [{transform_indices = @transform_0, window_bounds = array<i64: 392, 512>}, {transform_indices = @transform_1, window_bounds = array<i64: 512, 64>}, {transform_indices = @transform_2, window_bounds = array<i64: 1, 64>}, {transform_indices = @transform_3, window_bounds = array<i64: 392, 64>}]} {
    %c0 = arith.constant 0 : index
    %c0_0 = arith.constant 0 : index
    %0 = vector.load %arg2[%c0, %c0_0] : memref<392x512xbf16, #tpu.memory_space<vmem>>, vector<392x512xbf16>
    %c0_1 = arith.constant 0 : index
    %c0_2 = arith.constant 0 : index
    %1 = vector.load %arg3[%c0_1, %c0_2] : memref<512x64xbf16, #tpu.memory_space<vmem>>, vector<512x64xbf16>
    %cst = arith.constant dense<0.000000e+00> : vector<392x64xf32>
    %2 = tpu.matmul %0, %1, %cst {dimension_numbers = #tpu.dot_dimension_numbers<[1], [0], [0], [1], [0, 0, 1, 1], [], []>} : vector<392x512xbf16>, vector<512x64xbf16>, vector<392x64xf32> -> vector<392x64xf32>
    %c0_3 = arith.constant 0 : index
    %c0_4 = arith.constant 0 : index
    %3 = vector.load %arg4[%c0_3, %c0_4] : memref<1x64xf32, #tpu.memory_space<vmem>>, vector<1x64xf32>
    %4 = vector.broadcast %3 : vector<1x64xf32> to vector<392x64xf32>
    %5 = arith.addf %2, %4 : vector<392x64xf32>
    %cst_5 = arith.constant 0.000000e+00 : f32
    %6 = vector.broadcast %cst_5 : f32 to vector<392x64xf32>
    %7 = arith.maximumf %5, %6 : vector<392x64xf32>
    %8 = arith.truncf %7 : vector<392x64xf32> to vector<392x64xbf16>
    %c0_6 = arith.constant 0 : index
    %c0_7 = arith.constant 0 : index
    %9 = vector.load %arg5[%c0_6, %c0_7] : memref<392x64xbf16, #tpu.memory_space<vmem>>, vector<392x64xbf16>
    tpu.vector_store %arg5[%c0_6, %c0_7], %8 {strides = array<i32>} : memref<392x64xbf16, #tpu.memory_space<vmem>>, vector<392x64xbf16>,
    return
  }
  func.func @transform_0(%arg0: i32, %arg1: i32) -> (i32, i32) {
    %c0_i32 = arith.constant 0 : i32
    %c0_i32_0 = arith.constant 0 : i32
    return %arg0, %c0_i32 : i32, i32
  }
  func.func @transform_1(%arg0: i32, %arg1: i32) -> (i32, i32) {
    %c0_i32 = arith.constant 0 : i32
    %c0_i32_0 = arith.constant 0 : i32
    return %c0_i32, %arg1 : i32, i32
  }
  func.func @transform_2(%arg0: i32, %arg1: i32) -> (i32, i32) {
    %c0_i32 = arith.constant 0 : i32
    %c0_i32_0 = arith.constant 0 : i32
    return %c0_i32, %arg1 : i32, i32
  }
  func.func @transform_3(%arg0: i32, %arg1: i32) -> (i32, i32) {
    %c0_i32 = arith.constant 0 : i32
    return %arg0, %arg1 : i32, i32
  }
}

module attributes {stable_mosaic.version = 11 : i64} {
  func.func @_gemm_bias_act_kernel(%arg0: i32, %arg1: i32, %arg2: memref<72x1024xbf16, #tpu.memory_space<vmem>>, %arg3: memref<1024x128xbf16, #tpu.memory_space<vmem>>, %arg4: memref<1x128xf32, #tpu.memory_space<vmem>>, %arg5: memref<72x128xbf16, #tpu.memory_space<vmem>>) attributes {dimension_semantics = [#tpu.dimension_semantics<parallel>, #tpu.dimension_semantics<parallel>], iteration_bounds = array<i64: 1, 1>, scalar_prefetch = 0 : i64, scratch_operands = 0 : i64, tpu.core_type = #tpu.core_type<tc>, window_params = [{transform_indices = @transform_0, window_bounds = array<i64: 72, 1024>}, {transform_indices = @transform_1, window_bounds = array<i64: 1024, 128>}, {transform_indices = @transform_2, window_bounds = array<i64: 1, 128>}, {transform_indices = @transform_3, window_bounds = array<i64: 72, 128>}]} {
    %c0 = arith.constant 0 : index
    %c0_0 = arith.constant 0 : index
    %0 = vector.load %arg2[%c0, %c0_0] : memref<72x1024xbf16, #tpu.memory_space<vmem>>, vector<72x1024xbf16>
    %c0_1 = arith.constant 0 : index
    %c0_2 = arith.constant 0 : index
    %1 = vector.load %arg3[%c0_1, %c0_2] : memref<1024x128xbf16, #tpu.memory_space<vmem>>, vector<1024x128xbf16>
    %cst = arith.constant dense<0.000000e+00> : vector<72x128xf32>
    %2 = tpu.matmul %0, %1, %cst {dimension_numbers = #tpu.dot_dimension_numbers<[1], [0], [0], [1], [0, 0, 1, 1], [], []>} : vector<72x1024xbf16>, vector<1024x128xbf16>, vector<72x128xf32> -> vector<72x128xf32>
    %c0_3 = arith.constant 0 : index
    %c0_4 = arith.constant 0 : index
    %3 = vector.load %arg4[%c0_3, %c0_4] : memref<1x128xf32, #tpu.memory_space<vmem>>, vector<1x128xf32>
    %4 = vector.broadcast %3 : vector<1x128xf32> to vector<72x128xf32>
    %5 = arith.addf %2, %4 : vector<72x128xf32>
    %cst_5 = arith.constant 0.000000e+00 : f32
    %6 = vector.broadcast %cst_5 : f32 to vector<72x128xf32>
    %7 = arith.maximumf %5, %6 : vector<72x128xf32>
    %8 = arith.truncf %7 : vector<72x128xf32> to vector<72x128xbf16>
    %c0_6 = arith.constant 0 : index
    %c0_7 = arith.constant 0 : index
    %9 = vector.load %arg5[%c0_6, %c0_7] : memref<72x128xbf16, #tpu.memory_space<vmem>>, vector<72x128xbf16>
    tpu.vector_store %arg5[%c0_6, %c0_7], %8 {strides = array<i32>} : memref<72x128xbf16, #tpu.memory_space<vmem>>, vector<72x128xbf16>,
    return
  }
  func.func @transform_0(%arg0: i32, %arg1: i32) -> (i32, i32) {
    %c0_i32 = arith.constant 0 : i32
    %c0_i32_0 = arith.constant 0 : i32
    return %arg0, %c0_i32 : i32, i32
  }
  func.func @transform_1(%arg0: i32, %arg1: i32) -> (i32, i32) {
    %c0_i32 = arith.constant 0 : i32
    %c0_i32_0 = arith.constant 0 : i32
    return %c0_i32, %arg1 : i32, i32
  }
  func.func @transform_2(%arg0: i32, %arg1: i32) -> (i32, i32) {
    %c0_i32 = arith.constant 0 : i32
    %c0_i32_0 = arith.constant 0 : i32
    return %c0_i32, %arg1 : i32, i32
  }
  func.func @transform_3(%arg0: i32, %arg1: i32) -> (i32, i32) {
    %c0_i32 = arith.constant 0 : i32
    return %arg0, %arg1 : i32, i32
  }
}

module attributes {stable_mosaic.version = 11 : i64} {
  func.func @_gemm_bias_act_kernel(%arg0: i32, %arg1: i32, %arg2: memref<8x2048xbf16, #tpu.memory_space<vmem>>, %arg3: memref<2048x128xbf16, #tpu.memory_space<vmem>>, %arg4: memref<1x128xf32, #tpu.memory_space<vmem>>, %arg5: memref<8x128xbf16, #tpu.memory_space<vmem>>) attributes {dimension_semantics = [#tpu.dimension_semantics<parallel>, #tpu.dimension_semantics<parallel>], iteration_bounds = array<i64: 1, 2>, scalar_prefetch = 0 : i64, scratch_operands = 0 : i64, tpu.core_type = #tpu.core_type<tc>, window_params = [{transform_indices = @transform_0, window_bounds = array<i64: 8, 2048>}, {transform_indices = @transform_1, window_bounds = array<i64: 2048, 128>}, {transform_indices = @transform_2, window_bounds = array<i64: 1, 128>}, {transform_indices = @transform_3, window_bounds = array<i64: 8, 128>}]} {
    %c0 = arith.constant 0 : index
    %c0_0 = arith.constant 0 : index
    %0 = vector.load %arg2[%c0, %c0_0] : memref<8x2048xbf16, #tpu.memory_space<vmem>>, vector<8x2048xbf16>
    %c0_1 = arith.constant 0 : index
    %c0_2 = arith.constant 0 : index
    %1 = vector.load %arg3[%c0_1, %c0_2] : memref<2048x128xbf16, #tpu.memory_space<vmem>>, vector<2048x128xbf16>
    %cst = arith.constant dense<0.000000e+00> : vector<8x128xf32>
    %2 = tpu.matmul %0, %1, %cst {dimension_numbers = #tpu.dot_dimension_numbers<[1], [0], [0], [1], [0, 0, 1, 1], [], []>} : vector<8x2048xbf16>, vector<2048x128xbf16>, vector<8x128xf32> -> vector<8x128xf32>
    %c0_3 = arith.constant 0 : index
    %c0_4 = arith.constant 0 : index
    %3 = vector.load %arg4[%c0_3, %c0_4] : memref<1x128xf32, #tpu.memory_space<vmem>>, vector<1x128xf32>
    %4 = vector.broadcast %3 : vector<1x128xf32> to vector<8x128xf32>
    %5 = arith.addf %2, %4 : vector<8x128xf32>
    %cst_5 = arith.constant 0.000000e+00 : f32
    %6 = vector.broadcast %cst_5 : f32 to vector<8x128xf32>
    %7 = arith.maximumf %5, %6 : vector<8x128xf32>
    %8 = arith.truncf %7 : vector<8x128xf32> to vector<8x128xbf16>
    %c0_6 = arith.constant 0 : index
    %c0_7 = arith.constant 0 : index
    %9 = vector.load %arg5[%c0_6, %c0_7] : memref<8x128xbf16, #tpu.memory_space<vmem>>, vector<8x128xbf16>
    tpu.vector_store %arg5[%c0_6, %c0_7], %8 {strides = array<i32>} : memref<8x128xbf16, #tpu.memory_space<vmem>>, vector<8x128xbf16>,
    return
  }
  func.func @transform_0(%arg0: i32, %arg1: i32) -> (i32, i32) {
    %c0_i32 = arith.constant 0 : i32
    %c0_i32_0 = arith.constant 0 : i32
    return %arg0, %c0_i32 : i32, i32
  }
  func.func @transform_1(%arg0: i32, %arg1: i32) -> (i32, i32) {
    %c0_i32 = arith.constant 0 : i32
    %c0_i32_0 = arith.constant 0 : i32
    return %c0_i32, %arg1 : i32, i32
  }
  func.func @transform_2(%arg0: i32, %arg1: i32) -> (i32, i32) {
    %c0_i32 = arith.constant 0 : i32
    %c0_i32_0 = arith.constant 0 : i32
    return %c0_i32, %arg1 : i32, i32
  }
  func.func @transform_3(%arg0: i32, %arg1: i32) -> (i32, i32) {
    %c0_i32 = arith.constant 0 : i32
    return %arg0, %arg1 : i32, i32
  }
}

module attributes {stable_mosaic.version = 11 : i64} {
  func.func @_gemm_bias_act_kernel(%arg0: i32, %arg1: i32, %arg2: memref<2x1024xbf16, #tpu.memory_space<vmem>>, %arg3: memref<1024x128xbf16, #tpu.memory_space<vmem>>, %arg4: memref<1x128xf32, #tpu.memory_space<vmem>>, %arg5: memref<2x128xf32, #tpu.memory_space<vmem>>) attributes {dimension_semantics = [#tpu.dimension_semantics<parallel>, #tpu.dimension_semantics<parallel>], iteration_bounds = array<i64: 1, 1>, scalar_prefetch = 0 : i64, scratch_operands = 0 : i64, tpu.core_type = #tpu.core_type<tc>, window_params = [{transform_indices = @transform_0, window_bounds = array<i64: 2, 1024>}, {transform_indices = @transform_1, window_bounds = array<i64: 1024, 128>}, {transform_indices = @transform_2, window_bounds = array<i64: 1, 128>}, {transform_indices = @transform_3, window_bounds = array<i64: 2, 128>}]} {
    %c0 = arith.constant 0 : index
    %c0_0 = arith.constant 0 : index
    %0 = vector.load %arg2[%c0, %c0_0] : memref<2x1024xbf16, #tpu.memory_space<vmem>>, vector<2x1024xbf16>
    %c0_1 = arith.constant 0 : index
    %c0_2 = arith.constant 0 : index
    %1 = vector.load %arg3[%c0_1, %c0_2] : memref<1024x128xbf16, #tpu.memory_space<vmem>>, vector<1024x128xbf16>
    %cst = arith.constant dense<0.000000e+00> : vector<2x128xf32>
    %2 = tpu.matmul %0, %1, %cst {dimension_numbers = #tpu.dot_dimension_numbers<[1], [0], [0], [1], [0, 0, 1, 1], [], []>} : vector<2x1024xbf16>, vector<1024x128xbf16>, vector<2x128xf32> -> vector<2x128xf32>
    %c0_3 = arith.constant 0 : index
    %c0_4 = arith.constant 0 : index
    %3 = vector.load %arg4[%c0_3, %c0_4] : memref<1x128xf32, #tpu.memory_space<vmem>>, vector<1x128xf32>
    %4 = vector.broadcast %3 : vector<1x128xf32> to vector<2x128xf32>
    %5 = arith.addf %2, %4 : vector<2x128xf32>
    %c0_5 = arith.constant 0 : index
    %c0_6 = arith.constant 0 : index
    %6 = vector.load %arg5[%c0_5, %c0_6] : memref<2x128xf32, #tpu.memory_space<vmem>>, vector<2x128xf32>
    tpu.vector_store %arg5[%c0_5, %c0_6], %5 {strides = array<i32>} : memref<2x128xf32, #tpu.memory_space<vmem>>, vector<2x128xf32>,
    return
  }
  func.func @transform_0(%arg0: i32, %arg1: i32) -> (i32, i32) {
    %c0_i32 = arith.constant 0 : i32
    %c0_i32_0 = arith.constant 0 : i32
    return %arg0, %c0_i32 : i32, i32
  }
  func.func @transform_1(%arg0: i32, %arg1: i32) -> (i32, i32) {
    %c0_i32 = arith.constant 0 : i32
    %c0_i32_0 = arith.constant 0 : i32
    return %c0_i32, %arg1 : i32, i32
  }
  func.func @transform_2(%arg0: i32, %arg1: i32) -> (i32, i32) {
    %c0_i32 = arith.constant 0 : i32
    %c0_i32_0 = arith.constant 0 : i32
    return %c0_i32, %arg1 : i32, i32
  }
  func.func @transform_3(%arg0: i32, %arg1: i32) -> (i32, i32) {
    %c0_i32 = arith.constant 0 : i32
    return %arg0, %arg1 : i32, i32
  }
}

</mosaic_0001>

<llo_original>
// kernel: carla_encoder_forward.5
$region0: #{carla_encoder_forward.5}
  #allocation0 [shape = 'u32[]', space=smem, size = 0x4, offset = 0x4, fixed_abs, tag = 'smem constant byte address 0x4 - core index']
  #allocation1 [shape = 'u32[72,128]{1,0:T(1,128)}', space=vmem, size = 0x9000, scoped, tag = 'internal scratch']
  %s0 = inlined_call_operand.vmem [shape: bf16[1922,128], index: 0, kind: input, shape index: {}]
  %s1 = inlined_call_operand.vmem [shape: bf16[128,32], index: 1, kind: input, shape index: {}]
  %s2 = inlined_call_operand.vmem [shape: f32[1,32], index: 2, kind: input, shape index: {}]
  %s3 = inlined_call_operand.vmem [shape: bf16[1922,32], index: 3, kind: output, shape index: {}]
  %s4 = sld [smem:[#allocation0]]
  $region89: #{carla_encoder_forward.5} parent=0
    _
  %s6 = ssub.s32 1, %s4
  %s7 = scalar_select 0, %s6, %s4
  $region1: #{carla_encoder_forward.5} parent=0
    #allocation2 [shape = 'u8[524288]{0}', space=vmem, size = 0x80000, scoped, tag = 'output window, operand 0']
    loop: start=0, step=1, limit=4
    $region2: #{carla_encoder_forward.5} parent=1 // loop_pre_header
      _
    $region3: #{carla_encoder_forward.5} parent=1 // loop_header
      %s9 = sphi 0, %s13
      %p10 = scmp.ge.s32.totalorder %s9, 4
      %s16 = sphi 0, %s28
      %s17 = sphi 0, %s24
      %s18 = sphi 0, %s16
      %s19 = sphi 0, %s17
      %s20 = sphi 0, %s18
      %s21 = sphi 0, %s19
      %s31 = sphi 0, %s33
      %s34 = sphi 0, %s31
      %s35 = sphi 0, %s34
      %s51 = sphi 0, %s35
      %s57 = sphi 0, %s59
      %s60 = sphi 0, %s57
      %s61 = sphi 0, %s60
      %s77 = sphi 0, %s61
      %s83 = sphi 0, %s85
      %s86 = sphi 0, %s83
      %s87 = sphi 0, %s86
      %s103 = sphi 0, %s87
      %s111 = sphi 0, %s113
      %s114 = sphi 0, %s111
      %s115 = sphi 0, %s114
      %s131 = sphi 0, %s115
    $region4: #{carla_encoder_forward.5} parent=1 // loop_header_branch
      %12 = sbr.rel (%p10) target = $region8
    $region5: #{carla_encoder_forward.5} parent=1 // loop_body
      %s14 = ssub.s32 %s9, 1
      %s15 = ssub.s32 %s9, 2
      %s22 = sadd.s32 1, %s17
      %p23 = scmp.ge.s32.totalorder %s22, 1
      %s24 = scalar_select %p23, 0, %s22
      %s25 = sadd.s32 1, %s16
      %s26 = scalar_select %p23, %s25, %s16
      %p27 = scmp.ge.s32.totalorder %s26, 2
      %s28 = scalar_select %p27, 0, %s26
      %s29 = ssub.s32 %s16, %s28
      %p30 = scmp.eq.s32.totalorder %s29, 0
      %s32 = sadd.s32 %s31, 1
      %s33 = scalar_select %p30, %s31, %s32
      %p36 = pneg %p30
      %p37 = scmp.eq.s32.totalorder %s9, 1
      %p38 = por %p36, %p37
      %p39 = scmp.ne.s32.totalorder %s31, %s34
      %p40 = scmp.eq.s32.totalorder %s9, 0
      %p41 = por %p39, %p40
      %p42 = scmp.ne.s32.totalorder %s31, %s34
      %p43 = scmp.eq.s32.totalorder %s14, 1
      %p44 = por %p42, %p43
      %p45 = scmp.ne.s32.totalorder %s34, %s35
      %p46 = scmp.eq.s32.totalorder %s14, 0
      %p47 = por %p45, %p46
      %p48 = scmp.ne.s32.totalorder %s34, %s35
      %p49 = scmp.eq.s32.totalorder %s15, 1
      %p50 = por %p48, %p49
      %p52 = scmp.ne.s32.totalorder %s35, %s51
      %p53 = scmp.eq.s32.totalorder %s15, 0
      %p54 = por %p52, %p53
      %s55 = ssub.s32 %s17, %s24
      %p56 = scmp.eq.s32.totalorder %s55, 0
      %s58 = sadd.s32 %s57, 1
      %s59 = scalar_select %p56, %s57, %s58
      %p62 = pneg %p56
      %p63 = scmp.eq.s32.totalorder %s9, 1
      %p64 = por %p62, %p63
      %p65 = scmp.ne.s32.totalorder %s57, %s60
      %p66 = scmp.eq.s32.totalorder %s9, 0
      %p67 = por %p65, %p66
      %p68 = scmp.ne.s32.totalorder %s57, %s60
      %p69 = scmp.eq.s32.totalorder %s14, 1
      %p70 = por %p68, %p69
      %p71 = scmp.ne.s32.totalorder %s60, %s61
      %p72 = scmp.eq.s32.totalorder %s14, 0
      %p73 = por %p71, %p72
      %p74 = scmp.ne.s32.totalorder %s60, %s61
      %p75 = scmp.eq.s32.totalorder %s15, 1
      %p76 = por %p74, %p75
      %p78 = scmp.ne.s32.totalorder %s61, %s77
      %p79 = scmp.eq.s32.totalorder %s15, 0
      %p80 = por %p78, %p79
      %s81 = ssub.s32 %s17, %s24
      %p82 = scmp.eq.s32.totalorder %s81, 0
      %s84 = sadd.s32 %s83, 1
      %s85 = scalar_select %p82, %s83, %s84
      %p88 = pneg %p82
      %p89 = scmp.eq.s32.totalorder %s9, 1
      %p90 = por %p88, %p89
      %p91 = scmp.ne.s32.totalorder %s83, %s86
      %p92 = scmp.eq.s32.totalorder %s9, 0
      %p93 = por %p91, %p92
      %p94 = scmp.ne.s32.totalorder %s83, %s86
      %p95 = scmp.eq.s32.totalorder %s14, 1
      %p96 = por %p94, %p95
      %p97 = scmp.ne.s32.totalorder %s86, %s87
      %p98 = scmp.eq.s32.totalorder %s14, 0
      %p99 = por %p97, %p98
      %p100 = scmp.ne.s32.totalorder %s86, %s87
      %p101 = scmp.eq.s32.totalorder %s15, 1
      %p102 = por %p100, %p101
      %p104 = scmp.ne.s32.totalorder %s87, %s103
      %p105 = scmp.eq.s32.totalorder %s15, 0
      %p106 = por %p104, %p105
      %s107 = ssub.s32 %s16, %s28
      %s108 = ssub.s32 %s17, %s24
      %s109 = sor.u32 %s107, %s108
      %p110 = scmp.eq.s32.totalorder %s109, 0
      %s112 = sadd.s32 %s111, 1
      %s113 = scalar_select %p110, %s111, %s112
      %p116 = pneg %p110
      %p117 = scmp.eq.s32.totalorder %s9, 1
      %p118 = por %p116, %p117
      %p119 = scmp.ne.s32.totalorder %s111, %s114
      %p120 = scmp.eq.s32.totalorder %s9, 0
      %p121 = por %p119, %p120
      %p122 = scmp.ne.s32.totalorder %s111, %s114
      %p123 = scmp.eq.s32.totalorder %s14, 1
      %p124 = por %p122, %p123
      %p125 = scmp.ne.s32.totalorder %s114, %s115
      %p126 = scmp.eq.s32.totalorder %s14, 0
      %p127 = por %p125, %p126
      %p128 = scmp.ne.s32.totalorder %s114, %s115
      %p129 = scmp.eq.s32.totalorder %s15, 1
      %p130 = por %p128, %p129
      %p132 = scmp.ne.s32.totalorder %s115, %s131
      %p133 = scmp.eq.s32.totalorder %s15, 0
      %p134 = por %p132, %p133
      %p135 = scmp.le.s32.totalorder 1, %s9
      %p136 = scmp.lt.s32.totalorder %s9, 3
      %p137 = pnand %p135, %p136
      %p138 = pneg %p137
      // Predicated region
      $region9: #{carla_encoder_forward.5} parent=5 // pred_check
        _
      $region10: #{carla_encoder_forward.5} parent=5 // pred_check_branch
        %140 = sbr.rel (%p137) target = $region12
      $region11: #{carla_encoder_forward.5} parent=5 // pred_region
        %s141 = ssub.s32 %s9, 1
        // Predicated region
        $region13: #{carla_encoder_forward.5} parent=11 // pred_check
          %p142 = pneg %p73
        $region14: #{carla_encoder_forward.5} parent=11 // pred_check_branch
          %144 = sbr.rel (%p142) target = $region16
        $region15: #{carla_encoder_forward.5} parent=11 // pred_region
          %p145 = scmp.lt.s32.totalorder %s19, 0
          %s146 = scalar_select %p145, %s19, 0
          %s147 = smul.addr %s146, 4
          %s148 = scalar_lea.vmem %s1, %s147
        $region16: #{carla_encoder_forward.5} parent=11 // pred_fallthru
          _
        // Predicated region
        $region17: #{carla_encoder_forward.5} parent=11 // pred_check
          %p149 = pneg %p99
        $region18: #{carla_encoder_forward.5} parent=11 // pred_check_branch
          %151 = sbr.rel (%p149) target = $region20
        $region19: #{carla_encoder_forward.5} parent=11 // pred_region
          %p152 = scmp.lt.s32.totalorder %s19, 0
          %s153 = scalar_select %p152, %s19, 0
          %s154 = scalar_lea.vmem %s2, %s153
        $region20: #{carla_encoder_forward.5} parent=11 // pred_fallthru
          _
      $region12: #{carla_encoder_forward.5} parent=5 // pred_fallthru
        _
      %p155 = scmp.lt.s32.totalorder %s9, 2
      // Predicated region
      $region21: #{carla_encoder_forward.5} parent=5 // pred_check
        %p156 = pneg %p155
      $region22: #{carla_encoder_forward.5} parent=5 // pred_check_branch
        %158 = sbr.rel (%p156) target = $region24
      $region23: #{carla_encoder_forward.5} parent=5 // pred_region
        // Predicated region
        $region25: #{carla_encoder_forward.5} parent=23 // pred_check
          %p159 = pneg %p41
        $region26: #{carla_encoder_forward.5} parent=23 // pred_check_branch
          %161 = sbr.rel (%p159) target = $region28
        $region27: #{carla_encoder_forward.5} parent=23 // pred_region
          %s162 = smul.u32 128, %s16
          %s163 = ssub.s32 241, %s162
          %p164 = scmp.lt.s32.totalorder %s163, 128
          %s165 = scalar_select %p164, %s163, 128
          %s166 = smul.u32 4, %s165
          %p167 = scmp.lt.s32.totalorder %s162, 240
          %s168 = scalar_select %p167, %s162, 240
          %s169 = smul.addr %s168, 4
          %s170 = scalar_lea.vmem %s0, %s169
          %s171 = smul.u32 128, %s16
          %s172 = ssub.s32 241, %s171
          %p173 = scmp.lt.s32.totalorder %s172, 128
          %s174 = scalar_select %p173, %s172, 128
          %s175 = smul.u32 4, %s174
        $region28: #{carla_encoder_forward.5} parent=23 // pred_fallthru
          _
      $region24: #{carla_encoder_forward.5} parent=5 // pred_fallthru
        _
      %p176 = scmp.le.s32.totalorder 1, %s9
      %p177 = scmp.lt.s32.totalorder %s9, 3
      %p178 = pnand %p176, %p177
      %p179 = pneg %p178
      // Predicated region
      $region29: #{carla_encoder_forward.5} parent=5 // pred_check
        _
      $region30: #{carla_encoder_forward.5} parent=5 // pred_check_branch
        %181 = sbr.rel (%p178) target = $region32
      $region31: #{carla_encoder_forward.5} parent=5 // pred_region
        %s182 = ssub.s32 %s9, 1
        %s183 = smul.u32 128, %s18
        %s184 = ssub.s32 241, %s183
        %p185 = scmp.lt.s32.totalorder %s184, 128
        %s186 = scalar_select %p185, %s184, 128
        %s187 = smul.u32 4, %s186
        %p188 = scmp.lt.s32.totalorder %s183, 240
        %s189 = scalar_select %p188, %s183, 240
        %s190 = smul.addr %s189, 4
        %s191 = scalar_lea.vmem %s0, %s190
        %p192 = pneg %p47
        %p193 = pneg %p44
        %p194 = scmp.lt.s32.totalorder %s19, 0
        %s195 = scalar_select %p194, %s19, 0
        %s196 = smul.addr %s195, 4
        %s197 = scalar_lea.vmem %s1, %s196
        %p198 = pneg %p73
        %p199 = pneg %p70
        %p200 = scmp.lt.s32.totalorder %s19, 0
        %s201 = scalar_select %p200, %s19, 0
        %s202 = scalar_lea.vmem %s2, %s201
        %p203 = pneg %p99
        %p204 = pneg %p96
        %p205 = pneg %p127
        %p206 = pneg %p124
        %s207 = sand.u32 %s114, 1
        %s208 = sand.u32 %s114, 1
        %s209 = smul.addr %s208, 512
        %s210 = scalar_lea.vmem [#allocation2], %s209
        %s211 = smul.u32 128, %s18
        %s212 = ssub.s32 241, %s211
        %p213 = scmp.lt.s32.totalorder %s212, 128
        %s214 = scalar_select %p213, %s212, 128
        %s215 = smul.u32 4, %s214
        %p216 = scmp.lt.s32.totalorder %s211, 240
        %s217 = scalar_select %p216, %s211, 240
        %s218 = smul.addr %s217, 4
        %s219 = scalar_lea.vmem %s0, %s218
        %s220 = smul.u32 128, %s18
        %s221 = ssub.s32 241, %s220
        %p222 = scmp.lt.s32.totalorder %s221, 128
        %s223 = scalar_select %p222, %s221, 128
        %s224 = smul.u32 4, %s223
        %p225 = scmp.lt.s32.totalorder %s19, 0
        %s226 = scalar_select %p225, %s19, 0
        %s227 = smul.addr %s226, 4
        %s228 = scalar_lea.vmem %s1, %s227
        %p229 = scmp.lt.s32.totalorder %s19, 0
        %s230 = scalar_select %p229, %s19, 0
        %s231 = scalar_lea.vmem %s2, %s230
        %s232 = smul.u32 128, %s18
        %s233 = ssub.s32 241, %s232
        %p234 = scmp.lt.s32.totalorder %s233, 128
        %s235 = scalar_select %p234, %s233, 128
        %s236 = smul.u32 4, %s235
        %v237 = vld [vmem:[%s219] sm:$0xf]
        %v238 = vld [vmem:[%s219 + $0x4] sm:$0xf]
        %v239 = vld [vmem:[%s219 + $0x8] sm:$0xf]
        %v240 = vld [vmem:[%s219 + $0xc] sm:$0xf]
        %v241 = vld [vmem:[%s219 + $0x10] sm:$0xf]
        %v242 = vld [vmem:[%s219 + $0x14] sm:$0xf]
        %v243 = vld [vmem:[%s219 + $0x18] sm:$0xf]
        %v244 = vld [vmem:[%s219 + $0x1c] sm:$0xf]
        %v245 = vld [vmem:[%s219 + $0x20] sm:$0xf]
        %v246 = vld [vmem:[%s219 + $0x24] sm:$0xf]
        %v247 = vld [vmem:[%s219 + $0x28] sm:$0xf]
        %v248 = vld [vmem:[%s219 + $0x2c] sm:$0xf]
        %v249 = vld [vmem:[%s219 + $0x30] sm:$0xf]
        %v250 = vld [vmem:[%s219 + $0x34] sm:$0xf]
        %v251 = vld [vmem:[%s219 + $0x38] sm:$0xf]
        %v252 = vld [vmem:[%s219 + $0x3c] sm:$0xf]
        %v253 = vld [vmem:[%s219 + $0x40] sm:$0xf]
        %v254 = vld [vmem:[%s219 + $0x44] sm:$0xf]
        %v255 = vld [vmem:[%s219 + $0x48] sm:$0xf]
        %v256 = vld [vmem:[%s219 + $0x4c] sm:$0xf]
        %v257 = vld [vmem:[%s219 + $0x50] sm:$0xf]
        %v258 = vld [vmem:[%s219 + $0x54] sm:$0xf]
        %v259 = vld [vmem:[%s219 + $0x58] sm:$0xf]
        %v260 = vld [vmem:[%s219 + $0x5c] sm:$0xf]
        %v261 = vld [vmem:[%s219 + $0x60] sm:$0xf]
        %v262 = vld [vmem:[%s219 + $0x64] sm:$0xf]
        %v263 = vld [vmem:[%s219 + $0x68] sm:$0xf]
        %v264 = vld [vmem:[%s219 + $0x6c] sm:$0xf]
        %v265 = vld [vmem:[%s219 + $0x70] sm:$0xf]
        %v266 = vld [vmem:[%s219 + $0x74] sm:$0xf]
        %v267 = vld [vmem:[%s219 + $0x78] sm:$0xf]
        %v268 = vld [vmem:[%s219 + $0x7c] sm:$0xf]
        %v269 = vld [vmem:[%s219 + $0x80] sm:$0xf]
        %v270 = vld [vmem:[%s219 + $0x84] sm:$0xf]
        %v271 = vld [vmem:[%s219 + $0x88] sm:$0xf]
        %v272 = vld [vmem:[%s219 + $0x8c] sm:$0xf]
        %v273 = vld [vmem:[%s219 + $0x90] sm:$0xf]
        %v274 = vld [vmem:[%s219 + $0x94] sm:$0xf]
        %v275 = vld [vmem:[%s219 + $0x98] sm:$0xf]
        %v276 = vld [vmem:[%s219 + $0x9c] sm:$0xf]
        %v277 = vld [vmem:[%s219 + $0xa0] sm:$0xf]
        %v278 = vld [vmem:[%s219 + $0xa4] sm:$0xf]
        %v279 = vld [vmem:[%s219 + $0xa8] sm:$0xf]
        %v280 = vld [vmem:[%s219 + $0xac] sm:$0xf]
        %v281 = vld [vmem:[%s219 + $0xb0] sm:$0xf]
        %v282 = vld [vmem:[%s219 + $0xb4] sm:$0xf]
        %v283 = vld [vmem:[%s219 + $0xb8] sm:$0xf]
        %v284 = vld [vmem:[%s219 + $0xbc] sm:$0xf]
        %v285 = vld [vmem:[%s219 + $0xc0] sm:$0xf]
        %v286 = vld [vmem:[%s219 + $0xc4] sm:$0xf]
        %v287 = vld [vmem:[%s219 + $0xc8] sm:$0xf]
        %v288 = vld [vmem:[%s219 + $0xcc] sm:$0xf]
        %v289 = vld [vmem:[%s219 + $0xd0] sm:$0xf]
        %v290 = vld [vmem:[%s219 + $0xd4] sm:$0xf]
        %v291 = vld [vmem:[%s219 + $0xd8] sm:$0xf]
        %v292 = vld [vmem:[%s219 + $0xdc] sm:$0xf]
        %v293 = vld [vmem:[%s219 + $0xe0] sm:$0xf]
        %v294 = vld [vmem:[%s219 + $0xe4] sm:$0xf]
        %v295 = vld [vmem:[%s219 + $0xe8] sm:$0xf]
        %v296 = vld [vmem:[%s219 + $0xec] sm:$0xf]
        %v297 = vld [vmem:[%s219 + $0xf0] sm:$0xf]
        %v298 = vld [vmem:[%s219 + $0xf4] sm:$0xf]
        %v299 = vld [vmem:[%s219 + $0xf8] sm:$0xf]
        %v300 = vld [vmem:[%s219 + $0xfc] sm:$0xf]
        %v301 = vld [vmem:[%s219 + $0x100] sm:$0xf]
        %v302 = vld [vmem:[%s219 + $0x104] sm:$0xf]
        %v303 = vld [vmem:[%s219 + $0x108] sm:$0xf]
        %v304 = vld [vmem:[%s219 + $0x10c] sm:$0xf]
        %v305 = vld [vmem:[%s219 + $0x110] sm:$0xf]
        %v306 = vld [vmem:[%s219 + $0x114] sm:$0xf]
        %v307 = vld [vmem:[%s219 + $0x118] sm:$0xf]
        %v308 = vld [vmem:[%s219 + $0x11c] sm:$0xf]
        %v309 = vld [vmem:[%s219 + $0x120] sm:$0xf]
        %v310 = vld [vmem:[%s219 + $0x124] sm:$0xf]
        %v311 = vld [vmem:[%s219 + $0x128] sm:$0xf]
        %v312 = vld [vmem:[%s219 + $0x12c] sm:$0xf]
        %v313 = vld [vmem:[%s219 + $0x130] sm:$0xf]
        %v314 = vld [vmem:[%s219 + $0x134] sm:$0xf]
        %v315 = vld [vmem:[%s219 + $0x138] sm:$0xf]
        %v316 = vld [vmem:[%s219 + $0x13c] sm:$0xf]
        %v317 = vld [vmem:[%s219 + $0x140] sm:$0xf]
        %v318 = vld [vmem:[%s219 + $0x144] sm:$0xf]
        %v319 = vld [vmem:[%s219 + $0x148] sm:$0xf]
        %v320 = vld [vmem:[%s219 + $0x14c] sm:$0xf]
        %v321 = vld [vmem:[%s219 + $0x150] sm:$0xf]
        %v322 = vld [vmem:[%s219 + $0x154] sm:$0xf]
        %v323 = vld [vmem:[%s219 + $0x158] sm:$0xf]
        %v324 = vld [vmem:[%s219 + $0x15c] sm:$0xf]
        %v325 = vld [vmem:[%s219 + $0x160] sm:$0xf]
        %v326 = vld [vmem:[%s219 + $0x164] sm:$0xf]
        %v327 = vld [vmem:[%s219 + $0x168] sm:$0xf]
        %v328 = vld [vmem:[%s219 + $0x16c] sm:$0xf]
        %v329 = vld [vmem:[%s219 + $0x170] sm:$0xf]
        %v330 = vld [vmem:[%s219 + $0x174] sm:$0xf]
        %v331 = vld [vmem:[%s219 + $0x178] sm:$0xf]
        %v332 = vld [vmem:[%s219 + $0x17c] sm:$0xf]
        %v333 = vld [vmem:[%s219 + $0x180] sm:$0xf]
        %v334 = vld [vmem:[%s219 + $0x184] sm:$0xf]
        %v335 = vld [vmem:[%s219 + $0x188] sm:$0xf]
        %v336 = vld [vmem:[%s219 + $0x18c] sm:$0xf]
        %v337 = vld [vmem:[%s219 + $0x190] sm:$0xf]
        %v338 = vld [vmem:[%s219 + $0x194] sm:$0xf]
        %v339 = vld [vmem:[%s219 + $0x198] sm:$0xf]
        %v340 = vld [vmem:[%s219 + $0x19c] sm:$0xf]
        %v341 = vld [vmem:[%s219 + $0x1a0] sm:$0xf]
        %v342 = vld [vmem:[%s219 + $0x1a4] sm:$0xf]
        %v343 = vld [vmem:[%s219 + $0x1a8] sm:$0xf]
        %v344 = vld [vmem:[%s219 + $0x1ac] sm:$0xf]
        %v345 = vld [vmem:[%s219 + $0x1b0] sm:$0xf]
        %v346 = vld [vmem:[%s219 + $0x1b4] sm:$0xf]
        %v347 = vld [vmem:[%s219 + $0x1b8] sm:$0xf]
        %v348 = vld [vmem:[%s219 + $0x1bc] sm:$0xf]
        %v349 = vld [vmem:[%s219 + $0x1c0] sm:$0xf]
        %v350 = vld [vmem:[%s219 + $0x1c4] sm:$0xf]
        %v351 = vld [vmem:[%s219 + $0x1c8] sm:$0xf]
        %v352 = vld [vmem:[%s219 + $0x1cc] sm:$0xf]
        %v353 = vld [vmem:[%s219 + $0x1d0] sm:$0xf]
        %v354 = vld [vmem:[%s219 + $0x1d4] sm:$0xf]
        %v355 = vld [vmem:[%s219 + $0x1d8] sm:$0xf]
        %v356 = vld [vmem:[%s219 + $0x1dc] sm:$0xf]
        %v357 = vld [vmem:[%s219 + $0x1e0] sm:$0xf]
        %v358 = vld [vmem:[%s219 + $0x1e4] sm:$0xf]
        %v359 = vld [vmem:[%s219 + $0x1e8] sm:$0xf]
        %v360 = vld [vmem:[%s219 + $0x1ec] sm:$0xf]
        %v361 = vld [vmem:[%s219 + $0x1f0] sm:$0xf]
        %v362 = vld [vmem:[%s219 + $0x1f4] sm:$0xf]
        %v363 = vld [vmem:[%s219 + $0x1f8] sm:$0xf]
        %v364 = vld [vmem:[%s219 + $0x1fc] sm:$0xf]
        %v365 = vld [vmem:[%s228] sm:$0xf]
        %v366 = vld [vmem:[%s228 + $0x4] sm:$0xf]
        %v367 = vld [vmem:[%s228 + $0x8] sm:$0xf]
        %v368 = vld [vmem:[%s228 + $0xc] sm:$0xf]
        %v369 = vld [vmem:[%s228 + $0x10] sm:$0xf]
        %v370 = vld [vmem:[%s228 + $0x14] sm:$0xf]
        %v371 = vld [vmem:[%s228 + $0x18] sm:$0xf]
        %v372 = vld [vmem:[%s228 + $0x1c] sm:$0xf]
        %v373 = vld [vmem:[%s228 + $0x20] sm:$0xf]
        %v374 = vld [vmem:[%s228 + $0x24] sm:$0xf]
        %v375 = vld [vmem:[%s228 + $0x28] sm:$0xf]
        %v376 = vld [vmem:[%s228 + $0x2c] sm:$0xf]
        %v377 = vld [vmem:[%s228 + $0x30] sm:$0xf]
        %v378 = vld [vmem:[%s228 + $0x34] sm:$0xf]
        %v379 = vld [vmem:[%s228 + $0x38] sm:$0xf]
        %v380 = vld [vmem:[%s228 + $0x3c] sm:$0xf]
        %v381 = vld [vmem:[%s231] sm:$0x1]
        %v383 = vperm.slane %v381, 0
        %v513 = vunpack.c.l.b16 %v237
        %v514 = vunpack.c.l.b16 %v238
        %v515 = vunpack.c.l.b16 %v239
        %v516 = vunpack.c.l.b16 %v240
        %v517 = vunpack.c.l.b16 %v241
        %v518 = vunpack.c.l.b16 %v242
        %v519 = vunpack.c.l.b16 %v243
        %v520 = vunpack.c.l.b16 %v244
        %v521 = vunpack.c.l.b16 %v245
        %v522 = vunpack.c.l.b16 %v246
        %v523 = vunpack.c.l.b16 %v247
        %v524 = vunpack.c.l.b16 %v248
        %v525 = vunpack.c.l.b16 %v249
        %v526 = vunpack.c.l.b16 %v250
        %v527 = vunpack.c.l.b16 %v251
        %v528 = vunpack.c.l.b16 %v252
        %v529 = vunpack.c.l.b16 %v253
        %v530 = vunpack.c.l.b16 %v254
        %v531 = vunpack.c.l.b16 %v255
        %v532 = vunpack.c.l.b16 %v256
        %v533 = vunpack.c.l.b16 %v257
        %v534 = vunpack.c.l.b16 %v258
        %v535 = vunpack.c.l.b16 %v259
        %v536 = vunpack.c.l.b16 %v260
        %v537 = vunpack.c.l.b16 %v261
        %v538 = vunpack.c.l.b16 %v262
        %v539 = vunpack.c.l.b16 %v263
        %v540 = vunpack.c.l.b16 %v264
        %v541 = vunpack.c.l.b16 %v265
        %v542 = vunpack.c.l.b16 %v266
        %v543 = vunpack.c.l.b16 %v267
        %v544 = vunpack.c.l.b16 %v268
        %v545 = vunpack.c.l.b16 %v269
        %v546 = vunpack.c.l.b16 %v270
        %v547 = vunpack.c.l.b16 %v271
        %v548 = vunpack.c.l.b16 %v272
        %v549 = vunpack.c.l.b16 %v273
        %v550 = vunpack.c.l.b16 %v274
        %v551 = vunpack.c.l.b16 %v275
        %v552 = vunpack.c.l.b16 %v276
        %v553 = vunpack.c.l.b16 %v277
        %v554 = vunpack.c.l.b16 %v278
        %v555 = vunpack.c.l.b16 %v279
        %v556 = vunpack.c.l.b16 %v280
        %v557 = vunpack.c.l.b16 %v281
        %v558 = vunpack.c.l.b16 %v282
        %v559 = vunpack.c.l.b16 %v283
        %v560 = vunpack.c.l.b16 %v284
        %v561 = vunpack.c.l.b16 %v285
        %v562 = vunpack.c.l.b16 %v286
        %v563 = vunpack.c.l.b16 %v287
        %v564 = vunpack.c.l.b16 %v288
        %v565 = vunpack.c.l.b16 %v289
        %v566 = vunpack.c.l.b16 %v290
        %v567 = vunpack.c.l.b16 %v291
        %v568 = vunpack.c.l.b16 %v292
        %v569 = vunpack.c.l.b16 %v293
        %v570 = vunpack.c.l.b16 %v294
        %v571 = vunpack.c.l.b16 %v295
        %v572 = vunpack.c.l.b16 %v296
        %v573 = vunpack.c.l.b16 %v297
        %v574 = vunpack.c.l.b16 %v298
        %v575 = vunpack.c.l.b16 %v299
        %v576 = vunpack.c.l.b16 %v300
        %v577 = vunpack.c.l.b16 %v301
        %v578 = vunpack.c.l.b16 %v302
        %v579 = vunpack.c.l.b16 %v303
        %v580 = vunpack.c.l.b16 %v304
        %v581 = vunpack.c.l.b16 %v305
        %v582 = vunpack.c.l.b16 %v306
        %v583 = vunpack.c.l.b16 %v307
        %v584 = vunpack.c.l.b16 %v308
        %v585 = vunpack.c.l.b16 %v309
        %v586 = vunpack.c.l.b16 %v310
        %v587 = vunpack.c.l.b16 %v311
        %v588 = vunpack.c.l.b16 %v312
        %v589 = vunpack.c.l.b16 %v313
        %v590 = vunpack.c.l.b16 %v314
        %v591 = vunpack.c.l.b16 %v315
        %v592 = vunpack.c.l.b16 %v316
        %v593 = vunpack.c.l.b16 %v317
        %v594 = vunpack.c.l.b16 %v318
        %v595 = vunpack.c.l.b16 %v319
        %v596 = vunpack.c.l.b16 %v320
        %v597 = vunpack.c.l.b16 %v321
        %v598 = vunpack.c.l.b16 %v322
        %v599 = vunpack.c.l.b16 %v323
        %v600 = vunpack.c.l.b16 %v324
        %v601 = vunpack.c.l.b16 %v325
        %v602 = vunpack.c.l.b16 %v326
        %v603 = vunpack.c.l.b16 %v327
        %v604 = vunpack.c.l.b16 %v328
        %v605 = vunpack.c.l.b16 %v329
        %v606 = vunpack.c.l.b16 %v330
        %v607 = vunpack.c.l.b16 %v331
        %v608 = vunpack.c.l.b16 %v332
        %v609 = vunpack.c.l.b16 %v333
        %v610 = vunpack.c.l.b16 %v334
        %v611 = vunpack.c.l.b16 %v335
        %v612 = vunpack.c.l.b16 %v336
        %v613 = vunpack.c.l.b16 %v337
        %v614 = vunpack.c.l.b16 %v338
        %v615 = vunpack.c.l.b16 %v339
        %v616 = vunpack.c.l.b16 %v340
        %v617 = vunpack.c.l.b16 %v341
        %v618 = vunpack.c.l.b16 %v342
        %v619 = vunpack.c.l.b16 %v343
        %v620 = vunpack.c.l.b16 %v344
        %v621 = vunpack.c.l.b16 %v345
        %v622 = vunpack.c.l.b16 %v346
        %v623 = vunpack.c.l.b16 %v347
        %v624 = vunpack.c.l.b16 %v348
        %v625 = vunpack.c.l.b16 %v349
        %v626 = vunpack.c.l.b16 %v350
        %v627 = vunpack.c.l.b16 %v351
        %v628 = vunpack.c.l.b16 %v352
        %v629 = vunpack.c.l.b16 %v353
        %v630 = vunpack.c.l.b16 %v354
        %v631 = vunpack.c.l.b16 %v355
        %v632 = vunpack.c.l.b16 %v356
        %v633 = vunpack.c.l.b16 %v357
        %v634 = vunpack.c.l.b16 %v358
        %v635 = vunpack.c.l.b16 %v359
        %v636 = vunpack.c.l.b16 %v360
        %v637 = vunpack.c.l.b16 %v361
        %v638 = vunpack.c.l.b16 %v362
        %v639 = vunpack.c.l.b16 %v363
        %v640 = vunpack.c.l.b16 %v364
        %v641 = vpack.c.b16 %v514, %v513
        %v642 = vpack.c.b16 %v516, %v515
        %v643 = vpack.c.b16 %v518, %v517
        %v644 = vpack.c.b16 %v520, %v519
        %v645 = vpack.c.b16 %v522, %v521
        %v646 = vpack.c.b16 %v524, %v523
        %v647 = vpack.c.b16 %v526, %v525
        %v648 = vpack.c.b16 %v528, %v527
        %v649 = vpack.c.b16 %v530, %v529
        %v650 = vpack.c.b16 %v532, %v531
        %v651 = vpack.c.b16 %v534, %v533
        %v652 = vpack.c.b16 %v536, %v535
        %v653 = vpack.c.b16 %v538, %v537
        %v654 = vpack.c.b16 %v540, %v539
        %v655 = vpack.c.b16 %v542, %v541
        %v656 = vpack.c.b16 %v544, %v543
        %v657 = vpack.c.b16 %v546, %v545
        %v658 = vpack.c.b16 %v548, %v547
        %v659 = vpack.c.b16 %v550, %v549
        %v660 = vpack.c.b16 %v552, %v551
        %v661 = vpack.c.b16 %v554, %v553
        %v662 = vpack.c.b16 %v556, %v555
        %v663 = vpack.c.b16 %v558, %v557
        %v664 = vpack.c.b16 %v560, %v559
        %v665 = vpack.c.b16 %v562, %v561
        %v666 = vpack.c.b16 %v564, %v563
        %v667 = vpack.c.b16 %v566, %v565
        %v668 = vpack.c.b16 %v568, %v567
        %v669 = vpack.c.b16 %v570, %v569
        %v670 = vpack.c.b16 %v572, %v571
        %v671 = vpack.c.b16 %v574, %v573
        %v672 = vpack.c.b16 %v576, %v575
        %v673 = vpack.c.b16 %v578, %v577
        %v674 = vpack.c.b16 %v580, %v579
        %v675 = vpack.c.b16 %v582, %v581
        %v676 = vpack.c.b16 %v584, %v583
        %v677 = vpack.c.b16 %v586, %v585
        %v678 = vpack.c.b16 %v588, %v587
        %v679 = vpack.c.b16 %v590, %v589
        %v680 = vpack.c.b16 %v592, %v591
        %v681 = vpack.c.b16 %v594, %v593
        %v682 = vpack.c.b16 %v596, %v595
        %v683 = vpack.c.b16 %v598, %v597
        %v684 = vpack.c.b16 %v600, %v599
        %v685 = vpack.c.b16 %v602, %v601
        %v686 = vpack.c.b16 %v604, %v603
        %v687 = vpack.c.b16 %v606, %v605
        %v688 = vpack.c.b16 %v608, %v607
        %v689 = vpack.c.b16 %v610, %v609
        %v690 = vpack.c.b16 %v612, %v611
        %v691 = vpack.c.b16 %v614, %v613
        %v692 = vpack.c.b16 %v616, %v615
        %v693 = vpack.c.b16 %v618, %v617
        %v694 = vpack.c.b16 %v620, %v619
        %v695 = vpack.c.b16 %v622, %v621
        %v696 = vpack.c.b16 %v624, %v623
        %v697 = vpack.c.b16 %v626, %v625
        %v698 = vpack.c.b16 %v628, %v627
        %v699 = vpack.c.b16 %v630, %v629
        %v700 = vpack.c.b16 %v632, %v631
        %v701 = vpack.c.b16 %v634, %v633
        %v702 = vpack.c.b16 %v636, %v635
        %v703 = vpack.c.b16 %v638, %v637
        %v704 = vpack.c.b16 %v640, %v639
        %v785 = vunpack.c.l.b16 %v365
        %v786 = vunpack.c.l.b16 %v366
        %v787 = vunpack.c.l.b16 %v367
        %v788 = vunpack.c.l.b16 %v368
        %v789 = vunpack.c.l.b16 %v369
        %v790 = vunpack.c.l.b16 %v370
        %v791 = vunpack.c.l.b16 %v371
        %v792 = vunpack.c.l.b16 %v372
        %v793 = vunpack.c.l.b16 %v373
        %v794 = vunpack.c.l.b16 %v374
        %v795 = vunpack.c.l.b16 %v375
        %v796 = vunpack.c.l.b16 %v376
        %v797 = vunpack.c.l.b16 %v377
        %v798 = vunpack.c.l.b16 %v378
        %v799 = vunpack.c.l.b16 %v379
        %v800 = vunpack.c.l.b16 %v380
        %v801 = vpack.c.b16 %v786, %v785
        %v802 = vpack.c.b16 %v788, %v787
        %v803 = vpack.c.b16 %v790, %v789
        %v804 = vpack.c.b16 %v792, %v791
        %v805 = vpack.c.b16 %v794, %v793
        %v806 = vpack.c.b16 %v796, %v795
        %v807 = vpack.c.b16 %v798, %v797
        %v808 = vpack.c.b16 %v800, %v799
        %817 = vmatpush.bf16.msra.mxu0 %v808
        %818 = vmatpush.bf16.msra.mxu0 %v807
        %819 = vmatpush.bf16.msra.mxu0 %v806
        %820 = vmatpush.bf16.msra.mxu0 %v805
        %821 = vmatpush.bf16.msra.mxu0 %v804
        %822 = vmatpush.bf16.msra.mxu0 %v803
        %823 = vmatpush.bf16.msra.mxu0 %v802
        %824 = vmatpush.bf16.msra.mxu0 %v801
        %825 = vmatmul.bf16.gmra.mxu0 %v641
        %v826 = vpop.f32.mrf.mxu0
        %v827 = vadd.f32 %v383, %v826
        %v828 = vpop.f32.mrf.mxu0
        %v829 = vadd.f32 %v383, %v828
        %830 = vmatmul.bf16.gmra.mxu0 %v642
        %v831 = vpop.f32.mrf.mxu0
        %v832 = vadd.f32 %v383, %v831
        %v833 = vpop.f32.mrf.mxu0
        %v834 = vadd.f32 %v383, %v833
        %835 = vmatmul.bf16.gmra.mxu0 %v643
        %v836 = vpop.f32.mrf.mxu0
        %v837 = vadd.f32 %v383, %v836
        %v838 = vpop.f32.mrf.mxu0
        %v839 = vadd.f32 %v383, %v838
        %840 = vmatmul.bf16.gmra.mxu0 %v644
        %v841 = vpop.f32.mrf.mxu0
        %v842 = vadd.f32 %v383, %v841
        %v843 = vpop.f32.mrf.mxu0
        %v844 = vadd.f32 %v383, %v843
        %845 = vmatmul.bf16.gmra.mxu0 %v645
        %v846 = vpop.f32.mrf.mxu0
        %v847 = vadd.f32 %v383, %v846
        %v848 = vpop.f32.mrf.mxu0
        %v849 = vadd.f32 %v383, %v848
        %850 = vmatmul.bf16.gmra.mxu0 %v646
        %v851 = vpop.f32.mrf.mxu0
        %v852 = vadd.f32 %v383, %v851
        %v853 = vpop.f32.mrf.mxu0
        %v854 = vadd.f32 %v383, %v853
        %855 = vmatmul.bf16.gmra.mxu0 %v647
        %v856 = vpop.f32.mrf.mxu0
        %v857 = vadd.f32 %v383, %v856
        %v858 = vpop.f32.mrf.mxu0
        %v859 = vadd.f32 %v383, %v858
        %860 = vmatmul.bf16.gmra.mxu0 %v648
        %v861 = vpop.f32.mrf.mxu0
        %v862 = vadd.f32 %v383, %v861
        %v863 = vpop.f32.mrf.mxu0
        %v864 = vadd.f32 %v383, %v863
        %865 = vmatmul.bf16.gmra.mxu0 %v649
        %v866 = vpop.f32.mrf.mxu0
        %v867 = vadd.f32 %v383, %v866
        %v868 = vpop.f32.mrf.mxu0
        %v869 = vadd.f32 %v383, %v868
        %870 = vmatmul.bf16.gmra.mxu0 %v650
        %v871 = vpop.f32.mrf.mxu0
        %v872 = vadd.f32 %v383, %v871
        %v873 = vpop.f32.mrf.mxu0
        %v874 = vadd.f32 %v383, %v873
        %875 = vmatmul.bf16.gmra.mxu0 %v651
        %v876 = vpop.f32.mrf.mxu0
        %v877 = vadd.f32 %v383, %v876
        %v878 = vpop.f32.mrf.mxu0
        %v879 = vadd.f32 %v383, %v878
        %880 = vmatmul.bf16.gmra.mxu0 %v652
        %v881 = vpop.f32.mrf.mxu0
        %v882 = vadd.f32 %v383, %v881
        %v883 = vpop.f32.mrf.mxu0
        %v884 = vadd.f32 %v383, %v883
        %885 = vmatmul.bf16.gmra.mxu0 %v653
        %v886 = vpop.f32.mrf.mxu0
        %v887 = vadd.f32 %v383, %v886
        %v888 = vpop.f32.mrf.mxu0
        %v889 = vadd.f32 %v383, %v888
        %890 = vmatmul.bf16.gmra.mxu0 %v654
        %v891 = vpop.f32.mrf.mxu0
        %v892 = vadd.f32 %v383, %v891
        %v893 = vpop.f32.mrf.mxu0
        %v894 = vadd.f32 %v383, %v893
        %895 = vmatmul.bf16.gmra.mxu0 %v655
        %v896 = vpop.f32.mrf.mxu0
        %v897 = vadd.f32 %v383, %v896
        %v898 = vpop.f32.mrf.mxu0
        %v899 = vadd.f32 %v383, %v898
        %900 = vmatmul.bf16.gmra.mxu0 %v656
        %v901 = vpop.f32.mrf.mxu0
        %v902 = vadd.f32 %v383, %v901
        %v903 = vpop.f32.mrf.mxu0
        %v904 = vadd.f32 %v383, %v903
        %905 = vmatmul.bf16.gmra.mxu0 %v657
        %v906 = vpop.f32.mrf.mxu0
        %v907 = vadd.f32 %v383, %v906
        %v908 = vpop.f32.mrf.mxu0
        %v909 = vadd.f32 %v383, %v908
        %910 = vmatmul.bf16.gmra.mxu0 %v658
        %v911 = vpop.f32.mrf.mxu0
        %v912 = vadd.f32 %v383, %v911
        %v913 = vpop.f32.mrf.mxu0
        %v914 = vadd.f32 %v383, %v913
        %915 = vmatmul.bf16.gmra.mxu0 %v659
        %v916 = vpop.f32.mrf.mxu0
        %v917 = vadd.f32 %v383, %v916
        %v918 = vpop.f32.mrf.mxu0
        %v919 = vadd.f32 %v383, %v918
        %920 = vmatmul.bf16.gmra.mxu0 %v660
        %v921 = vpop.f32.mrf.mxu0
        %v922 = vadd.f32 %v383, %v921
        %v923 = vpop.f32.mrf.mxu0
        %v924 = vadd.f32 %v383, %v923
        %925 = vmatmul.bf16.gmra.mxu0 %v661
        %v926 = vpop.f32.mrf.mxu0
        %v927 = vadd.f32 %v383, %v926
        %v928 = vpop.f32.mrf.mxu0
        %v929 = vadd.f32 %v383, %v928
        %930 = vmatmul.bf16.gmra.mxu0 %v662
        %v931 = vpop.f32.mrf.mxu0
        %v932 = vadd.f32 %v383, %v931
        %v933 = vpop.f32.mrf.mxu0
        %v934 = vadd.f32 %v383, %v933
        %935 = vmatmul.bf16.gmra.mxu0 %v663
        %v936 = vpop.f32.mrf.mxu0
        %v937 = vadd.f32 %v383, %v936
        %v938 = vpop.f32.mrf.mxu0
        %v939 = vadd.f32 %v383, %v938
        %940 = vmatmul.bf16.gmra.mxu0 %v664
        %v941 = vpop.f32.mrf.mxu0
        %v942 = vadd.f32 %v383, %v941
        %v943 = vpop.f32.mrf.mxu0
        %v944 = vadd.f32 %v383, %v943
        %945 = vmatmul.bf16.gmra.mxu0 %v665
        %v946 = vpop.f32.mrf.mxu0
        %v947 = vadd.f32 %v383, %v946
        %v948 = vpop.f32.mrf.mxu0
        %v949 = vadd.f32 %v383, %v948
        %950 = vmatmul.bf16.gmra.mxu0 %v666
        %v951 = vpop.f32.mrf.mxu0
        %v952 = vadd.f32 %v383, %v951
        %v953 = vpop.f32.mrf.mxu0
        %v954 = vadd.f32 %v383, %v953
        %955 = vmatmul.bf16.gmra.mxu0 %v667
        %v956 = vpop.f32.mrf.mxu0
        %v957 = vadd.f32 %v383, %v956
        %v958 = vpop.f32.mrf.mxu0
        %v959 = vadd.f32 %v383, %v958
        %960 = vmatmul.bf16.gmra.mxu0 %v668
        %v961 = vpop.f32.mrf.mxu0
        %v962 = vadd.f32 %v383, %v961
        %v963 = vpop.f32.mrf.mxu0
        %v964 = vadd.f32 %v383, %v963
        %965 = vmatmul.bf16.gmra.mxu0 %v669
        %v966 = vpop.f32.mrf.mxu0
        %v967 = vadd.f32 %v383, %v966
        %v968 = vpop.f32.mrf.mxu0
        %v969 = vadd.f32 %v383, %v968
        %970 = vmatmul.bf16.gmra.mxu0 %v670
        %v971 = vpop.f32.mrf.mxu0
        %v972 = vadd.f32 %v383, %v971
        %v973 = vpop.f32.mrf.mxu0
        %v974 = vadd.f32 %v383, %v973
        %975 = vmatmul.bf16.gmra.mxu0 %v671
        %v976 = vpop.f32.mrf.mxu0
        %v977 = vadd.f32 %v383, %v976
        %v978 = vpop.f32.mrf.mxu0
        %v979 = vadd.f32 %v383, %v978
        %980 = vmatmul.bf16.gmra.mxu0 %v672
        %v981 = vpop.f32.mrf.mxu0
        %v982 = vadd.f32 %v383, %v981
        %v983 = vpop.f32.mrf.mxu0
        %v984 = vadd.f32 %v383, %v983
        %985 = vmatmul.bf16.gmra.mxu0 %v673
        %v986 = vpop.f32.mrf.mxu0
        %v987 = vadd.f32 %v383, %v986
        %v988 = vpop.f32.mrf.mxu0
        %v989 = vadd.f32 %v383, %v988
        %990 = vmatmul.bf16.gmra.mxu0 %v674
        %v991 = vpop.f32.mrf.mxu0
        %v992 = vadd.f32 %v383, %v991
        %v993 = vpop.f32.mrf.mxu0
        %v994 = vadd.f32 %v383, %v993
        %995 = vmatmul.bf16.gmra.mxu0 %v675
        %v996 = vpop.f32.mrf.mxu0
        %v997 = vadd.f32 %v383, %v996
        %v998 = vpop.f32.mrf.mxu0
        %v999 = vadd.f32 %v383, %v998
        %1000 = vmatmul.bf16.gmra.mxu0 %v676
        %v1001 = vpop.f32.mrf.mxu0
        %v1002 = vadd.f32 %v383, %v1001
        %v1003 = vpop.f32.mrf.mxu0
        %v1004 = vadd.f32 %v383, %v1003
        %1005 = vmatmul.bf16.gmra.mxu0 %v677
        %v1006 = vpop.f32.mrf.mxu0
        %v1007 = vadd.f32 %v383, %v1006
        %v1008 = vpop.f32.mrf.mxu0
        %v1009 = vadd.f32 %v383, %v1008
        %1010 = vmatmul.bf16.gmra.mxu0 %v678
        %v1011 = vpop.f32.mrf.mxu0
        %v1012 = vadd.f32 %v383, %v1011
        %v1013 = vpop.f32.mrf.mxu0
        %v1014 = vadd.f32 %v383, %v1013
        %1015 = vmatmul.bf16.gmra.mxu0 %v679
        %v1016 = vpop.f32.mrf.mxu0
        %v1017 = vadd.f32 %v383, %v1016
        %v1018 = vpop.f32.mrf.mxu0
        %v1019 = vadd.f32 %v383, %v1018
        %1020 = vmatmul.bf16.gmra.mxu0 %v680
        %v1021 = vpop.f32.mrf.mxu0
        %v1022 = vadd.f32 %v383, %v1021
        %v1023 = vpop.f32.mrf.mxu0
        %v1024 = vadd.f32 %v383, %v1023
        %1025 = vmatmul.bf16.gmra.mxu0 %v681
        %v1026 = vpop.f32.mrf.mxu0
        %v1027 = vadd.f32 %v383, %v1026
        %v1028 = vpop.f32.mrf.mxu0
        %v1029 = vadd.f32 %v383, %v1028
        %1030 = vmatmul.bf16.gmra.mxu0 %v682
        %v1031 = vpop.f32.mrf.mxu0
        %v1032 = vadd.f32 %v383, %v1031
        %v1033 = vpop.f32.mrf.mxu0
        %v1034 = vadd.f32 %v383, %v1033
        %1035 = vmatmul.bf16.gmra.mxu0 %v683
        %v1036 = vpop.f32.mrf.mxu0
        %v1037 = vadd.f32 %v383, %v1036
        %v1038 = vpop.f32.mrf.mxu0
        %v1039 = vadd.f32 %v383, %v1038
        %1040 = vmatmul.bf16.gmra.mxu0 %v684
        %v1041 = vpop.f32.mrf.mxu0
        %v1042 = vadd.f32 %v383, %v1041
        %v1043 = vpop.f32.mrf.mxu0
        %v1044 = vadd.f32 %v383, %v1043
        %1045 = vmatmul.bf16.gmra.mxu0 %v685
        %v1046 = vpop.f32.mrf.mxu0
        %v1047 = vadd.f32 %v383, %v1046
        %v1048 = vpop.f32.mrf.mxu0
        %v1049 = vadd.f32 %v383, %v1048
        %1050 = vmatmul.bf16.gmra.mxu0 %v686
        %v1051 = vpop.f32.mrf.mxu0
        %v1052 = vadd.f32 %v383, %v1051
        %v1053 = vpop.f32.mrf.mxu0
        %v1054 = vadd.f32 %v383, %v1053
        %1055 = vmatmul.bf16.gmra.mxu0 %v687
        %v1056 = vpop.f32.mrf.mxu0
        %v1057 = vadd.f32 %v383, %v1056
        %v1058 = vpop.f32.mrf.mxu0
        %v1059 = vadd.f32 %v383, %v1058
        %1060 = vmatmul.bf16.gmra.mxu0 %v688
        %v1061 = vpop.f32.mrf.mxu0
        %v1062 = vadd.f32 %v383, %v1061
        %v1063 = vpop.f32.mrf.mxu0
        %v1064 = vadd.f32 %v383, %v1063
        %1065 = vmatmul.bf16.gmra.mxu0 %v689
        %v1066 = vpop.f32.mrf.mxu0
        %v1067 = vadd.f32 %v383, %v1066
        %v1068 = vpop.f32.mrf.mxu0
        %v1069 = vadd.f32 %v383, %v1068
        %1070 = vmatmul.bf16.gmra.mxu0 %v690
        %v1071 = vpop.f32.mrf.mxu0
        %v1072 = vadd.f32 %v383, %v1071
        %v1073 = vpop.f32.mrf.mxu0
        %v1074 = vadd.f32 %v383, %v1073
        %1075 = vmatmul.bf16.gmra.mxu0 %v691
        %v1076 = vpop.f32.mrf.mxu0
        %v1077 = vadd.f32 %v383, %v1076
        %v1078 = vpop.f32.mrf.mxu0
        %v1079 = vadd.f32 %v383, %v1078
        %1080 = vmatmul.bf16.gmra.mxu0 %v692
        %v1081 = vpop.f32.mrf.mxu0
        %v1082 = vadd.f32 %v383, %v1081
        %v1083 = vpop.f32.mrf.mxu0
        %v1084 = vadd.f32 %v383, %v1083
        %1085 = vmatmul.bf16.gmra.mxu0 %v693
        %v1086 = vpop.f32.mrf.mxu0
        %v1087 = vadd.f32 %v383, %v1086
        %v1088 = vpop.f32.mrf.mxu0
        %v1089 = vadd.f32 %v383, %v1088
        %1090 = vmatmul.bf16.gmra.mxu0 %v694
        %v1091 = vpop.f32.mrf.mxu0
        %v1092 = vadd.f32 %v383, %v1091
        %v1093 = vpop.f32.mrf.mxu0
        %v1094 = vadd.f32 %v383, %v1093
        %1095 = vmatmul.bf16.gmra.mxu0 %v695
        %v1096 = vpop.f32.mrf.mxu0
        %v1097 = vadd.f32 %v383, %v1096
        %v1098 = vpop.f32.mrf.mxu0
        %v1099 = vadd.f32 %v383, %v1098
        %1100 = vmatmul.bf16.gmra.mxu0 %v696
        %v1101 = vpop.f32.mrf.mxu0
        %v1102 = vadd.f32 %v383, %v1101
        %v1103 = vpop.f32.mrf.mxu0
        %v1104 = vadd.f32 %v383, %v1103
        %1105 = vmatmul.bf16.gmra.mxu0 %v697
        %v1106 = vpop.f32.mrf.mxu0
        %v1107 = vadd.f32 %v383, %v1106
        %v1108 = vpop.f32.mrf.mxu0
        %v1109 = vadd.f32 %v383, %v1108
        %1110 = vmatmul.bf16.gmra.mxu0 %v698
        %v1111 = vpop.f32.mrf.mxu0
        %v1112 = vadd.f32 %v383, %v1111
        %v1113 = vpop.f32.mrf.mxu0
        %v1114 = vadd.f32 %v383, %v1113
        %1115 = vmatmul.bf16.gmra.mxu0 %v699
        %v1116 = vpop.f32.mrf.mxu0
        %v1117 = vadd.f32 %v383, %v1116
        %v1118 = vpop.f32.mrf.mxu0
        %v1119 = vadd.f32 %v383, %v1118
        %1120 = vmatmul.bf16.gmra.mxu0 %v700
        %v1121 = vpop.f32.mrf.mxu0
        %v1122 = vadd.f32 %v383, %v1121
        %v1123 = vpop.f32.mrf.mxu0
        %v1124 = vadd.f32 %v383, %v1123
        %1125 = vmatmul.bf16.gmra.mxu0 %v701
        %v1126 = vpop.f32.mrf.mxu0
        %v1127 = vadd.f32 %v383, %v1126
        %v1128 = vpop.f32.mrf.mxu0
        %v1129 = vadd.f32 %v383, %v1128
        %1130 = vmatmul.bf16.gmra.mxu0 %v702
        %v1131 = vpop.f32.mrf.mxu0
        %v1132 = vadd.f32 %v383, %v1131
        %v1133 = vpop.f32.mrf.mxu0
        %v1134 = vadd.f32 %v383, %v1133
        %1135 = vmatmul.bf16.gmra.mxu0 %v703
        %v1136 = vpop.f32.mrf.mxu0
        %v1137 = vadd.f32 %v383, %v1136
        %v1138 = vpop.f32.mrf.mxu0
        %v1139 = vadd.f32 %v383, %v1138
        %1140 = vmatmul.bf16.gmra.mxu0 %v704
        %v1141 = vpop.f32.mrf.mxu0
        %v1142 = vadd.f32 %v383, %v1141
        %v1143 = vpop.f32.mrf.mxu0
        %v1144 = vadd.f32 %v383, %v1143
        %1145 = vdwg.mxu0
        %v1146 = vmax.f32 %v827, 0.0
        %v1147 = vmax.f32 %v829, 0.0
        %v1148 = vmax.f32 %v832, 0.0
        %v1149 = vmax.f32 %v834, 0.0
        %v1150 = vmax.f32 %v837, 0.0
        %v1151 = vmax.f32 %v839, 0.0
        %v1152 = vmax.f32 %v842, 0.0
        %v1153 = vmax.f32 %v844, 0.0
        %v1154 = vmax.f32 %v847, 0.0
        %v1155 = vmax.f32 %v849, 0.0
        %v1156 = vmax.f32 %v852, 0.0
        %v1157 = vmax.f32 %v854, 0.0
        %v1158 = vmax.f32 %v857, 0.0
        %v1159 = vmax.f32 %v859, 0.0
        %v1160 = vmax.f32 %v862, 0.0
        %v1161 = vmax.f32 %v864, 0.0
        %v1162 = vmax.f32 %v867, 0.0
        %v1163 = vmax.f32 %v869, 0.0
        %v1164 = vmax.f32 %v872, 0.0
        %v1165 = vmax.f32 %v874, 0.0
        %v1166 = vmax.f32 %v877, 0.0
        %v1167 = vmax.f32 %v879, 0.0
        %v1168 = vmax.f32 %v882, 0.0
        %v1169 = vmax.f32 %v884, 0.0
        %v1170 = vmax.f32 %v887, 0.0
        %v1171 = vmax.f32 %v889, 0.0
        %v1172 = vmax.f32 %v892, 0.0
        %v1173 = vmax.f32 %v894, 0.0
        %v1174 = vmax.f32 %v897, 0.0
        %v1175 = vmax.f32 %v899, 0.0
        %v1176 = vmax.f32 %v902, 0.0
        %v1177 = vmax.f32 %v904, 0.0
        %v1178 = vmax.f32 %v907, 0.0
        %v1179 = vmax.f32 %v909, 0.0
        %v1180 = vmax.f32 %v912, 0.0
        %v1181 = vmax.f32 %v914, 0.0
        %v1182 = vmax.f32 %v917, 0.0
        %v1183 = vmax.f32 %v919, 0.0
        %v1184 = vmax.f32 %v922, 0.0
        %v1185 = vmax.f32 %v924, 0.0
        %v1186 = vmax.f32 %v927, 0.0
        %v1187 = vmax.f32 %v929, 0.0
        %v1188 = vmax.f32 %v932, 0.0
        %v1189 = vmax.f32 %v934, 0.0
        %v1190 = vmax.f32 %v937, 0.0
        %v1191 = vmax.f32 %v939, 0.0
        %v1192 = vmax.f32 %v942, 0.0
        %v1193 = vmax.f32 %v944, 0.0
        %v1194 = vmax.f32 %v947, 0.0
        %v1195 = vmax.f32 %v949, 0.0
        %v1196 = vmax.f32 %v952, 0.0
        %v1197 = vmax.f32 %v954, 0.0
        %v1198 = vmax.f32 %v957, 0.0
        %v1199 = vmax.f32 %v959, 0.0
        %v1200 = vmax.f32 %v962, 0.0
        %v1201 = vmax.f32 %v964, 0.0
        %v1202 = vmax.f32 %v967, 0.0
        %v1203 = vmax.f32 %v969, 0.0
        %v1204 = vmax.f32 %v972, 0.0
        %v1205 = vmax.f32 %v974, 0.0
        %v1206 = vmax.f32 %v977, 0.0
        %v1207 = vmax.f32 %v979, 0.0
        %v1208 = vmax.f32 %v982, 0.0
        %v1209 = vmax.f32 %v984, 0.0
        %v1210 = vmax.f32 %v987, 0.0
        %v1211 = vmax.f32 %v989, 0.0
        %v1212 = vmax.f32 %v992, 0.0
        %v1213 = vmax.f32 %v994, 0.0
        %v1214 = vmax.f32 %v997, 0.0
        %v1215 = vmax.f32 %v999, 0.0
        %v1216 = vmax.f32 %v1002, 0.0
        %v1217 = vmax.f32 %v1004, 0.0
        %v1218 = vmax.f32 %v1007, 0.0
        %v1219 = vmax.f32 %v1009, 0.0
        %v1220 = vmax.f32 %v1012, 0.0
        %v1221 = vmax.f32 %v1014, 0.0
        %v1222 = vmax.f32 %v1017, 0.0
        %v1223 = vmax.f32 %v1019, 0.0
        %v1224 = vmax.f32 %v1022, 0.0
        %v1225 = vmax.f32 %v1024, 0.0
        %v1226 = vmax.f32 %v1027, 0.0
        %v1227 = vmax.f32 %v1029, 0.0
        %v1228 = vmax.f32 %v1032, 0.0
        %v1229 = vmax.f32 %v1034, 0.0
        %v1230 = vmax.f32 %v1037, 0.0
        %v1231 = vmax.f32 %v1039, 0.0
        %v1232 = vmax.f32 %v1042, 0.0
        %v1233 = vmax.f32 %v1044, 0.0
        %v1234 = vmax.f32 %v1047, 0.0
        %v1235 = vmax.f32 %v1049, 0.0
        %v1236 = vmax.f32 %v1052, 0.0
        %v1237 = vmax.f32 %v1054, 0.0
        %v1238 = vmax.f32 %v1057, 0.0
        %v1239 = vmax.f32 %v1059, 0.0
        %v1240 = vmax.f32 %v1062, 0.0
        %v1241 = vmax.f32 %v1064, 0.0
        %v1242 = vmax.f32 %v1067, 0.0
        %v1243 = vmax.f32 %v1069, 0.0
        %v1244 = vmax.f32 %v1072, 0.0
        %v1245 = vmax.f32 %v1074, 0.0
        %v1246 = vmax.f32 %v1077, 0.0
        %v1247 = vmax.f32 %v1079, 0.0
        %v1248 = vmax.f32 %v1082, 0.0
        %v1249 = vmax.f32 %v1084, 0.0
        %v1250 = vmax.f32 %v1087, 0.0
        %v1251 = vmax.f32 %v1089, 0.0
        %v1252 = vmax.f32 %v1092, 0.0
        %v1253 = vmax.f32 %v1094, 0.0
        %v1254 = vmax.f32 %v1097, 0.0
        %v1255 = vmax.f32 %v1099, 0.0
        %v1256 = vmax.f32 %v1102, 0.0
        %v1257 = vmax.f32 %v1104, 0.0
        %v1258 = vmax.f32 %v1107, 0.0
        %v1259 = vmax.f32 %v1109, 0.0
        %v1260 = vmax.f32 %v1112, 0.0
        %v1261 = vmax.f32 %v1114, 0.0
        %v1262 = vmax.f32 %v1117, 0.0
        %v1263 = vmax.f32 %v1119, 0.0
        %v1264 = vmax.f32 %v1122, 0.0
        %v1265 = vmax.f32 %v1124, 0.0
        %v1266 = vmax.f32 %v1127, 0.0
        %v1267 = vmax.f32 %v1129, 0.0
        %v1268 = vmax.f32 %v1132, 0.0
        %v1269 = vmax.f32 %v1134, 0.0
        %v1270 = vmax.f32 %v1137, 0.0
        %v1271 = vmax.f32 %v1139, 0.0
        %v1272 = vmax.f32 %v1142, 0.0
        %v1273 = vmax.f32 %v1144, 0.0
        %v1274 = vpack.c.bf16 %v1146, %v1146
        %v1275 = vpack.c.bf16 %v1147, %v1147
        %v1276 = vpack.c.bf16 %v1148, %v1148
        %v1277 = vpack.c.bf16 %v1149, %v1149
        %v1278 = vpack.c.bf16 %v1150, %v1150
        %v1279 = vpack.c.bf16 %v1151, %v1151
        %v1280 = vpack.c.bf16 %v1152, %v1152
        %v1281 = vpack.c.bf16 %v1153, %v1153
        %v1282 = vpack.c.bf16 %v1154, %v1154
        %v1283 = vpack.c.bf16 %v1155, %v1155
        %v1284 = vpack.c.bf16 %v1156, %v1156
        %v1285 = vpack.c.bf16 %v1157, %v1157
        %v1286 = vpack.c.bf16 %v1158, %v1158
        %v1287 = vpack.c.bf16 %v1159, %v1159
        %v1288 = vpack.c.bf16 %v1160, %v1160
        %v1289 = vpack.c.bf16 %v1161, %v1161
        %v1290 = vpack.c.bf16 %v1162, %v1162
        %v1291 = vpack.c.bf16 %v1163, %v1163
        %v1292 = vpack.c.bf16 %v1164, %v1164
        %v1293 = vpack.c.bf16 %v1165, %v1165
        %v1294 = vpack.c.bf16 %v1166, %v1166
        %v1295 = vpack.c.bf16 %v1167, %v1167
        %v1296 = vpack.c.bf16 %v1168, %v1168
        %v1297 = vpack.c.bf16 %v1169, %v1169
        %v1298 = vpack.c.bf16 %v1170, %v1170
        %v1299 = vpack.c.bf16 %v1171, %v1171
        %v1300 = vpack.c.bf16 %v1172, %v1172
        %v1301 = vpack.c.bf16 %v1173, %v1173
        %v1302 = vpack.c.bf16 %v1174, %v1174
        %v1303 = vpack.c.bf16 %v1175, %v1175
        %v1304 = vpack.c.bf16 %v1176, %v1176
        %v1305 = vpack.c.bf16 %v1177, %v1177
        %v1306 = vpack.c.bf16 %v1178, %v1178
        %v1307 = vpack.c.bf16 %v1179, %v1179
        %v1308 = vpack.c.bf16 %v1180, %v1180
        %v1309 = vpack.c.bf16 %v1181, %v1181
        %v1310 = vpack.c.bf16 %v1182, %v1182
        %v1311 = vpack.c.bf16 %v1183, %v1183
        %v1312 = vpack.c.bf16 %v1184, %v1184
        %v1313 = vpack.c.bf16 %v1185, %v1185
        %v1314 = vpack.c.bf16 %v1186, %v1186
        %v1315 = vpack.c.bf16 %v1187, %v1187
        %v1316 = vpack.c.bf16 %v1188, %v1188
        %v1317 = vpack.c.bf16 %v1189, %v1189
        %v1318 = vpack.c.bf16 %v1190, %v1190
        %v1319 = vpack.c.bf16 %v1191, %v1191
        %v1320 = vpack.c.bf16 %v1192, %v1192
        %v1321 = vpack.c.bf16 %v1193, %v1193
        %v1322 = vpack.c.bf16 %v1194, %v1194
        %v1323 = vpack.c.bf16 %v1195, %v1195
        %v1324 = vpack.c.bf16 %v1196, %v1196
        %v1325 = vpack.c.bf16 %v1197, %v1197
        %v1326 = vpack.c.bf16 %v1198, %v1198
        %v1327 = vpack.c.bf16 %v1199, %v1199
        %v1328 = vpack.c.bf16 %v1200, %v1200
        %v1329 = vpack.c.bf16 %v1201, %v1201
        %v1330 = vpack.c.bf16 %v1202, %v1202
        %v1331 = vpack.c.bf16 %v1203, %v1203
        %v1332 = vpack.c.bf16 %v1204, %v1204
        %v1333 = vpack.c.bf16 %v1205, %v1205
        %v1334 = vpack.c.bf16 %v1206, %v1206
        %v1335 = vpack.c.bf16 %v1207, %v1207
        %v1336 = vpack.c.bf16 %v1208, %v1208
        %v1337 = vpack.c.bf16 %v1209, %v1209
        %v1338 = vpack.c.bf16 %v1210, %v1210
        %v1339 = vpack.c.bf16 %v1211, %v1211
        %v1340 = vpack.c.bf16 %v1212, %v1212
        %v1341 = vpack.c.bf16 %v1213, %v1213
        %v1342 = vpack.c.bf16 %v1214, %v1214
        %v1343 = vpack.c.bf16 %v1215, %v1215
        %v1344 = vpack.c.bf16 %v1216, %v1216
        %v1345 = vpack.c.bf16 %v1217, %v1217
        %v1346 = vpack.c.bf16 %v1218, %v1218
        %v1347 = vpack.c.bf16 %v1219, %v1219
        %v1348 = vpack.c.bf16 %v1220, %v1220
        %v1349 = vpack.c.bf16 %v1221, %v1221
        %v1350 = vpack.c.bf16 %v1222, %v1222
        %v1351 = vpack.c.bf16 %v1223, %v1223
        %v1352 = vpack.c.bf16 %v1224, %v1224
        %v1353 = vpack.c.bf16 %v1225, %v1225
        %v1354 = vpack.c.bf16 %v1226, %v1226
        %v1355 = vpack.c.bf16 %v1227, %v1227
        %v1356 = vpack.c.bf16 %v1228, %v1228
        %v1357 = vpack.c.bf16 %v1229, %v1229
        %v1358 = vpack.c.bf16 %v1230, %v1230
        %v1359 = vpack.c.bf16 %v1231, %v1231
        %v1360 = vpack.c.bf16 %v1232, %v1232
        %v1361 = vpack.c.bf16 %v1233, %v1233
        %v1362 = vpack.c.bf16 %v1234, %v1234
        %v1363 = vpack.c.bf16 %v1235, %v1235
        %v1364 = vpack.c.bf16 %v1236, %v1236
        %v1365 = vpack.c.bf16 %v1237, %v1237
        %v1366 = vpack.c.bf16 %v1238, %v1238
        %v1367 = vpack.c.bf16 %v1239, %v1239
        %v1368 = vpack.c.bf16 %v1240, %v1240
        %v1369 = vpack.c.bf16 %v1241, %v1241
        %v1370 = vpack.c.bf16 %v1242, %v1242
        %v1371 = vpack.c.bf16 %v1243, %v1243
        %v1372 = vpack.c.bf16 %v1244, %v1244
        %v1373 = vpack.c.bf16 %v1245, %v1245
        %v1374 = vpack.c.bf16 %v1246, %v1246
        %v1375 = vpack.c.bf16 %v1247, %v1247
        %v1376 = vpack.c.bf16 %v1248, %v1248
        %v1377 = vpack.c.bf16 %v1249, %v1249
        %v1378 = vpack.c.bf16 %v1250, %v1250
        %v1379 = vpack.c.bf16 %v1251, %v1251
        %v1380 = vpack.c.bf16 %v1252, %v1252
        %v1381 = vpack.c.bf16 %v1253, %v1253
        %v1382 = vpack.c.bf16 %v1254, %v1254
        %v1383 = vpack.c.bf16 %v1255, %v1255
        %v1384 = vpack.c.bf16 %v1256, %v1256
        %v1385 = vpack.c.bf16 %v1257, %v1257
        %v1386 = vpack.c.bf16 %v1258, %v1258
        %v1387 = vpack.c.bf16 %v1259, %v1259
        %v1388 = vpack.c.bf16 %v1260, %v1260
        %v1389 = vpack.c.bf16 %v1261, %v1261
        %v1390 = vpack.c.bf16 %v1262, %v1262
        %v1391 = vpack.c.bf16 %v1263, %v1263
        %v1392 = vpack.c.bf16 %v1264, %v1264
        %v1393 = vpack.c.bf16 %v1265, %v1265
        %v1394 = vpack.c.bf16 %v1266, %v1266
        %v1395 = vpack.c.bf16 %v1267, %v1267
        %v1396 = vpack.c.bf16 %v1268, %v1268
        %v1397 = vpack.c.bf16 %v1269, %v1269
        %v1398 = vpack.c.bf16 %v1270, %v1270
        %v1399 = vpack.c.bf16 %v1271, %v1271
        %v1400 = vpack.c.bf16 %v1272, %v1272
        %v1401 = vpack.c.bf16 %v1273, %v1273
        %vm1402 = vcmask 257024
        %1403 = vst.msk [vmem:[%s210] sm:$0xf] %vm1402, %v1274
        %1404 = vst.msk [vmem:[%s210 + $0x4] sm:$0xf] %vm1402, %v1275
        %1405 = vst.msk [vmem:[%s210 + $0x8] sm:$0xf] %vm1402, %v1276
        %1406 = vst.msk [vmem:[%s210 + $0xc] sm:$0xf] %vm1402, %v1277
        %1407 = vst.msk [vmem:[%s210 + $0x10] sm:$0xf] %vm1402, %v1278
        %1408 = vst.msk [vmem:[%s210 + $0x14] sm:$0xf] %vm1402, %v1279
        %1409 = vst.msk [vmem:[%s210 + $0x18] sm:$0xf] %vm1402, %v1280
        %1410 = vst.msk [vmem:[%s210 + $0x1c] sm:$0xf] %vm1402, %v1281
        %1411 = vst.msk [vmem:[%s210 + $0x20] sm:$0xf] %vm1402, %v1282
        %1412 = vst.msk [vmem:[%s210 + $0x24] sm:$0xf] %vm1402, %v1283
        %1413 = vst.msk [vmem:[%s210 + $0x28] sm:$0xf] %vm1402, %v1284
        %1414 = vst.msk [vmem:[%s210 + $0x2c] sm:$0xf] %vm1402, %v1285
        %1415 = vst.msk [vmem:[%s210 + $0x30] sm:$0xf] %vm1402, %v1286
        %1416 = vst.msk [vmem:[%s210 + $0x34] sm:$0xf] %vm1402, %v1287
        %1417 = vst.msk [vmem:[%s210 + $0x38] sm:$0xf] %vm1402, %v1288
        %1418 = vst.msk [vmem:[%s210 + $0x3c] sm:$0xf] %vm1402, %v1289
        %1419 = vst.msk [vmem:[%s210 + $0x40] sm:$0xf] %vm1402, %v1290
        %1420 = vst.msk [vmem:[%s210 + $0x44] sm:$0xf] %vm1402, %v1291
        %1421 = vst.msk [vmem:[%s210 + $0x48] sm:$0xf] %vm1402, %v1292
        %1422 = vst.msk [vmem:[%s210 + $0x4c] sm:$0xf] %vm1402, %v1293
        %1423 = vst.msk [vmem:[%s210 + $0x50] sm:$0xf] %vm1402, %v1294
        %1424 = vst.msk [vmem:[%s210 + $0x54] sm:$0xf] %vm1402, %v1295
        %1425 = vst.msk [vmem:[%s210 + $0x58] sm:$0xf] %vm1402, %v1296
        %1426 = vst.msk [vmem:[%s210 + $0x5c] sm:$0xf] %vm1402, %v1297
        %1427 = vst.msk [vmem:[%s210 + $0x60] sm:$0xf] %vm1402, %v1298
        %1428 = vst.msk [vmem:[%s210 + $0x64] sm:$0xf] %vm1402, %v1299
        %1429 = vst.msk [vmem:[%s210 + $0x68] sm:$0xf] %vm1402, %v1300
        %1430 = vst.msk [vmem:[%s210 + $0x6c] sm:$0xf] %vm1402, %v1301
        %1431 = vst.msk [vmem:[%s210 + $0x70] sm:$0xf] %vm1402, %v1302
        %1432 = vst.msk [vmem:[%s210 + $0x74] sm:$0xf] %vm1402, %v1303
        %1433 = vst.msk [vmem:[%s210 + $0x78] sm:$0xf] %vm1402, %v1304
        %1434 = vst.msk [vmem:[%s210 + $0x7c] sm:$0xf] %vm1402, %v1305
        %1435 = vst.msk [vmem:[%s210 + $0x80] sm:$0xf] %vm1402, %v1306
        %1436 = vst.msk [vmem:[%s210 + $0x84] sm:$0xf] %vm1402, %v1307
        %1437 = vst.msk [vmem:[%s210 + $0x88] sm:$0xf] %vm1402, %v1308
        %1438 = vst.msk [vmem:[%s210 + $0x8c] sm:$0xf] %vm1402, %v1309
        %1439 = vst.msk [vmem:[%s210 + $0x90] sm:$0xf] %vm1402, %v1310
        %1440 = vst.msk [vmem:[%s210 + $0x94] sm:$0xf] %vm1402, %v1311
        %1441 = vst.msk [vmem:[%s210 + $0x98] sm:$0xf] %vm1402, %v1312
        %1442 = vst.msk [vmem:[%s210 + $0x9c] sm:$0xf] %vm1402, %v1313
        %1443 = vst.msk [vmem:[%s210 + $0xa0] sm:$0xf] %vm1402, %v1314
        %1444 = vst.msk [vmem:[%s210 + $0xa4] sm:$0xf] %vm1402, %v1315
        %1445 = vst.msk [vmem:[%s210 + $0xa8] sm:$0xf] %vm1402, %v1316
        %1446 = vst.msk [vmem:[%s210 + $0xac] sm:$0xf] %vm1402, %v1317
        %1447 = vst.msk [vmem:[%s210 + $0xb0] sm:$0xf] %vm1402, %v1318
        %1448 = vst.msk [vmem:[%s210 + $0xb4] sm:$0xf] %vm1402, %v1319
        %1449 = vst.msk [vmem:[%s210 + $0xb8] sm:$0xf] %vm1402, %v1320
        %1450 = vst.msk [vmem:[%s210 + $0xbc] sm:$0xf] %vm1402, %v1321
        %1451 = vst.msk [vmem:[%s210 + $0xc0] sm:$0xf] %vm1402, %v1322
        %1452 = vst.msk [vmem:[%s210 + $0xc4] sm:$0xf] %vm1402, %v1323
        %1453 = vst.msk [vmem:[%s210 + $0xc8] sm:$0xf] %vm1402, %v1324
        %1454 = vst.msk [vmem:[%s210 + $0xcc] sm:$0xf] %vm1402, %v1325
        %1455 = vst.msk [vmem:[%s210 + $0xd0] sm:$0xf] %vm1402, %v1326
        %1456 = vst.msk [vmem:[%s210 + $0xd4] sm:$0xf] %vm1402, %v1327
        %1457 = vst.msk [vmem:[%s210 + $0xd8] sm:$0xf] %vm1402, %v1328
        %1458 = vst.msk [vmem:[%s210 + $0xdc] sm:$0xf] %vm1402, %v1329
        %1459 = vst.msk [vmem:[%s210 + $0xe0] sm:$0xf] %vm1402, %v1330
        %1460 = vst.msk [vmem:[%s210 + $0xe4] sm:$0xf] %vm1402, %v1331
        %1461 = vst.msk [vmem:[%s210 + $0xe8] sm:$0xf] %vm1402, %v1332
        %1462 = vst.msk [vmem:[%s210 + $0xec] sm:$0xf] %vm1402, %v1333
        %1463 = vst.msk [vmem:[%s210 + $0xf0] sm:$0xf] %vm1402, %v1334
        %1464 = vst.msk [vmem:[%s210 + $0xf4] sm:$0xf] %vm1402, %v1335
        %1465 = vst.msk [vmem:[%s210 + $0xf8] sm:$0xf] %vm1402, %v1336
        %1466 = vst.msk [vmem:[%s210 + $0xfc] sm:$0xf] %vm1402, %v1337
        %1467 = vst.msk [vmem:[%s210 + $0x100] sm:$0xf] %vm1402, %v1338
        %1468 = vst.msk [vmem:[%s210 + $0x104] sm:$0xf] %vm1402, %v1339
        %1469 = vst.msk [vmem:[%s210 + $0x108] sm:$0xf] %vm1402, %v1340
        %1470 = vst.msk [vmem:[%s210 + $0x10c] sm:$0xf] %vm1402, %v1341
        %1471 = vst.msk [vmem:[%s210 + $0x110] sm:$0xf] %vm1402, %v1342
        %1472 = vst.msk [vmem:[%s210 + $0x114] sm:$0xf] %vm1402, %v1343
        %1473 = vst.msk [vmem:[%s210 + $0x118] sm:$0xf] %vm1402, %v1344
        %1474 = vst.msk [vmem:[%s210 + $0x11c] sm:$0xf] %vm1402, %v1345
        %1475 = vst.msk [vmem:[%s210 + $0x120] sm:$0xf] %vm1402, %v1346
        %1476 = vst.msk [vmem:[%s210 + $0x124] sm:$0xf] %vm1402, %v1347
        %1477 = vst.msk [vmem:[%s210 + $0x128] sm:$0xf] %vm1402, %v1348
        %1478 = vst.msk [vmem:[%s210 + $0x12c] sm:$0xf] %vm1402, %v1349
        %1479 = vst.msk [vmem:[%s210 + $0x130] sm:$0xf] %vm1402, %v1350
        %1480 = vst.msk [vmem:[%s210 + $0x134] sm:$0xf] %vm1402, %v1351
        %1481 = vst.msk [vmem:[%s210 + $0x138] sm:$0xf] %vm1402, %v1352
        %1482 = vst.msk [vmem:[%s210 + $0x13c] sm:$0xf] %vm1402, %v1353
        %1483 = vst.msk [vmem:[%s210 + $0x140] sm:$0xf] %vm1402, %v1354
        %1484 = vst.msk [vmem:[%s210 + $0x144] sm:$0xf] %vm1402, %v1355
        %1485 = vst.msk [vmem:[%s210 + $0x148] sm:$0xf] %vm1402, %v1356
        %1486 = vst.msk [vmem:[%s210 + $0x14c] sm:$0xf] %vm1402, %v1357
        %1487 = vst.msk [vmem:[%s210 + $0x150] sm:$0xf] %vm1402, %v1358
        %1488 = vst.msk [vmem:[%s210 + $0x154] sm:$0xf] %vm1402, %v1359
        %1489 = vst.msk [vmem:[%s210 + $0x158] sm:$0xf] %vm1402, %v1360
        %1490 = vst.msk [vmem:[%s210 + $0x15c] sm:$0xf] %vm1402, %v1361
        %1491 = vst.msk [vmem:[%s210 + $0x160] sm:$0xf] %vm1402, %v1362
        %1492 = vst.msk [vmem:[%s210 + $0x164] sm:$0xf] %vm1402, %v1363
        %1493 = vst.msk [vmem:[%s210 + $0x168] sm:$0xf] %vm1402, %v1364
        %1494 = vst.msk [vmem:[%s210 + $0x16c] sm:$0xf] %vm1402, %v1365
        %1495 = vst.msk [vmem:[%s210 + $0x170] sm:$0xf] %vm1402, %v1366
        %1496 = vst.msk [vmem:[%s210 + $0x174] sm:$0xf] %vm1402, %v1367
        %1497 = vst.msk [vmem:[%s210 + $0x178] sm:$0xf] %vm1402, %v1368
        %1498 = vst.msk [vmem:[%s210 + $0x17c] sm:$0xf] %vm1402, %v1369
        %1499 = vst.msk [vmem:[%s210 + $0x180] sm:$0xf] %vm1402, %v1370
        %1500 = vst.msk [vmem:[%s210 + $0x184] sm:$0xf] %vm1402, %v1371
        %1501 = vst.msk [vmem:[%s210 + $0x188] sm:$0xf] %vm1402, %v1372
        %1502 = vst.msk [vmem:[%s210 + $0x18c] sm:$0xf] %vm1402, %v1373
        %1503 = vst.msk [vmem:[%s210 + $0x190] sm:$0xf] %vm1402, %v1374
        %1504 = vst.msk [vmem:[%s210 + $0x194] sm:$0xf] %vm1402, %v1375
        %1505 = vst.msk [vmem:[%s210 + $0x198] sm:$0xf] %vm1402, %v1376
        %1506 = vst.msk [vmem:[%s210 + $0x19c] sm:$0xf] %vm1402, %v1377
        %1507 = vst.msk [vmem:[%s210 + $0x1a0] sm:$0xf] %vm1402, %v1378
        %1508 = vst.msk [vmem:[%s210 + $0x1a4] sm:$0xf] %vm1402, %v1379
        %1509 = vst.msk [vmem:[%s210 + $0x1a8] sm:$0xf] %vm1402, %v1380
        %1510 = vst.msk [vmem:[%s210 + $0x1ac] sm:$0xf] %vm1402, %v1381
        %1511 = vst.msk [vmem:[%s210 + $0x1b0] sm:$0xf] %vm1402, %v1382
        %1512 = vst.msk [vmem:[%s210 + $0x1b4] sm:$0xf] %vm1402, %v1383
        %1513 = vst.msk [vmem:[%s210 + $0x1b8] sm:$0xf] %vm1402, %v1384
        %1514 = vst.msk [vmem:[%s210 + $0x1bc] sm:$0xf] %vm1402, %v1385
        %1515 = vst.msk [vmem:[%s210 + $0x1c0] sm:$0xf] %vm1402, %v1386
        %1516 = vst.msk [vmem:[%s210 + $0x1c4] sm:$0xf] %vm1402, %v1387
        %1517 = vst.msk [vmem:[%s210 + $0x1c8] sm:$0xf] %vm1402, %v1388
        %1518 = vst.msk [vmem:[%s210 + $0x1cc] sm:$0xf] %vm1402, %v1389
        %1519 = vst.msk [vmem:[%s210 + $0x1d0] sm:$0xf] %vm1402, %v1390
        %1520 = vst.msk [vmem:[%s210 + $0x1d4] sm:$0xf] %vm1402, %v1391
        %1521 = vst.msk [vmem:[%s210 + $0x1d8] sm:$0xf] %vm1402, %v1392
        %1522 = vst.msk [vmem:[%s210 + $0x1dc] sm:$0xf] %vm1402, %v1393
        %1523 = vst.msk [vmem:[%s210 + $0x1e0] sm:$0xf] %vm1402, %v1394
        %1524 = vst.msk [vmem:[%s210 + $0x1e4] sm:$0xf] %vm1402, %v1395
        %1525 = vst.msk [vmem:[%s210 + $0x1e8] sm:$0xf] %vm1402, %v1396
        %1526 = vst.msk [vmem:[%s210 + $0x1ec] sm:$0xf] %vm1402, %v1397
        %1527 = vst.msk [vmem:[%s210 + $0x1f0] sm:$0xf] %vm1402, %v1398
        %1528 = vst.msk [vmem:[%s210 + $0x1f4] sm:$0xf] %vm1402, %v1399
        %1529 = vst.msk [vmem:[%s210 + $0x1f8] sm:$0xf] %vm1402, %v1400
        %1530 = vst.msk [vmem:[%s210 + $0x1fc] sm:$0xf] %vm1402, %v1401
        %s1531 = sand.u32 %s114, 1
        %s1532 = sand.u32 %s114, 1
        %s1533 = smul.addr %s1532, 512
        %s1534 = scalar_lea.vmem [#allocation2], %s1533
        // Predicated region
        $region33: #{carla_encoder_forward.5} parent=31 // pred_check
          %p1535 = pneg %p124
        $region34: #{carla_encoder_forward.5} parent=31 // pred_check_branch
          %1537 = sbr.rel (%p1535) target = $region36
        $region35: #{carla_encoder_forward.5} parent=31 // pred_region
          %s1538 = smul.u32 128, %s18
          %s1539 = ssub.s32 241, %s1538
          %p1540 = scmp.lt.s32.totalorder %s1539, 128
          %s1541 = scalar_select %p1540, %s1539, 128
          %s1542 = smul.u32 4, %s1541
          %p1543 = scmp.ne.s32.totalorder 0, %s1542
          %s1544 = sadd.s32 %s19, %s1538
          %s1545 = smul.addr %s1544, 4
          %s1546 = scalar_lea.vmem %s3, %s1545
          // Predicated region
          $region37: #{carla_encoder_forward.5} parent=35 // pred_check
            %p1547 = pneg %p1543
          $region38: #{carla_encoder_forward.5} parent=35 // pred_check_branch
            %1549 = sbr.rel (%p1547) target = $region40
          $region39: #{carla_encoder_forward.5} parent=35 // pred_region
            // Predicated region
            $region41: #{carla_encoder_forward.5} parent=39 // pred_check
              _
            $region42: #{carla_encoder_forward.5} parent=39 // pred_check_branch
              %1551 = sbr.rel target = $region44
            $region43: #{carla_encoder_forward.5} parent=39 // pred_region
              // Predicated region
              $region63: #{carla_encoder_forward.5} parent=43 // pred_check
                _
              $region64: #{carla_encoder_forward.5} parent=43 // pred_check_branch
                %1663 = sbr.rel (0) target = $region66
              $region65: #{carla_encoder_forward.5} parent=43 // pred_region
                %s1665 = ssub.s32 16, 1
                %s1666 = sshrl.u32 %s1541, 5
                // While loop
                $region67: #{carla_encoder_forward.5} parent=65 // loop_pre_header
                  _
                $region68: #{carla_encoder_forward.5} parent=65 // loop_header
                  %s1668 = sphi 0, %s1670
                  %p1669 = scmp.ge.s32.totalorder %s1668, %s1666
                  %s1673 = sphi 0, %s1742
                  %s1674 = sphi %s1534, %s1745
                  %s1675 = sphi %s1546, %s1746
                $region69: #{carla_encoder_forward.5} parent=65 // loop_header_branch
                  %1672 = sbr.rel (%p1669) target = $region73
                $region70: #{carla_encoder_forward.5} parent=65 // loop_body
                  %v1676 = vld [vmem:[%s1674] sm:%s1665]
                  %1677 = vst [vmem:[%s1675] sm:%s1665] %v1676
                  %v1678 = vld [vmem:[%s1674 + $0x4] sm:%s1665]
                  %1679 = vst [vmem:[%s1675 + $0x4] sm:%s1665] %v1678
                  %v1680 = vld [vmem:[%s1674 + $0x8] sm:%s1665]
                  %1681 = vst [vmem:[%s1675 + $0x8] sm:%s1665] %v1680
                  %v1682 = vld [vmem:[%s1674 + $0xc] sm:%s1665]
                  %1683 = vst [vmem:[%s1675 + $0xc] sm:%s1665] %v1682
                  %v1684 = vld [vmem:[%s1674 + $0x10] sm:%s1665]
                  %1685 = vst [vmem:[%s1675 + $0x10] sm:%s1665] %v1684
                  %v1686 = vld [vmem:[%s1674 + $0x14] sm:%s1665]
                  %1687 = vst [vmem:[%s1675 + $0x14] sm:%s1665] %v1686
                  %v1688 = vld [vmem:[%s1674 + $0x18] sm:%s1665]
                  %1689 = vst [vmem:[%s1675 + $0x18] sm:%s1665] %v1688
                  %v1690 = vld [vmem:[%s1674 + $0x1c] sm:%s1665]
                  %1691 = vst [vmem:[%s1675 + $0x1c] sm:%s1665] %v1690
                  %v1692 = vld [vmem:[%s1674 + $0x20] sm:%s1665]
                  %1693 = vst [vmem:[%s1675 + $0x20] sm:%s1665] %v1692
                  %v1694 = vld [vmem:[%s1674 + $0x24] sm:%s1665]
                  %1695 = vst [vmem:[%s1675 + $0x24] sm:%s1665] %v1694
                  %v1696 = vld [vmem:[%s1674 + $0x28] sm:%s1665]
                  %1697 = vst [vmem:[%s1675 + $0x28] sm:%s1665] %v1696
                  %v1698 = vld [vmem:[%s1674 + $0x2c] sm:%s1665]
                  %1699 = vst [vmem:[%s1675 + $0x2c] sm:%s1665] %v1698
                  %v1700 = vld [vmem:[%s1674 + $0x30] sm:%s1665]
                  %1701 = vst [vmem:[%s1675 + $0x30] sm:%s1665] %v1700
                  %v1702 = vld [vmem:[%s1674 + $0x34] sm:%s1665]
                  %1703 = vst [vmem:[%s1675 + $0x34] sm:%s1665] %v1702
                  %v1704 = vld [vmem:[%s1674 + $0x38] sm:%s1665]
                  %1705 = vst [vmem:[%s1675 + $0x38] sm:%s1665] %v1704
                  %v1706 = vld [vmem:[%s1674 + $0x3c] sm:%s1665]
                  %1707 = vst [vmem:[%s1675 + $0x3c] sm:%s1665] %v1706
                  %v1708 = vld [vmem:[%s1674 + $0x40] sm:%s1665]
                  %1709 = vst [vmem:[%s1675 + $0x40] sm:%s1665] %v1708
                  %v1710 = vld [vmem:[%s1674 + $0x44] sm:%s1665]
                  %1711 = vst [vmem:[%s1675 + $0x44] sm:%s1665] %v1710
                  %v1712 = vld [vmem:[%s1674 + $0x48] sm:%s1665]
                  %1713 = vst [vmem:[%s1675 + $0x48] sm:%s1665] %v1712
                  %v1714 = vld [vmem:[%s1674 + $0x4c] sm:%s1665]
                  %1715 = vst [vmem:[%s1675 + $0x4c] sm:%s1665] %v1714
                  %v1716 = vld [vmem:[%s1674 + $0x50] sm:%s1665]
                  %1717 = vst [vmem:[%s1675 + $0x50] sm:%s1665] %v1716
                  %v1718 = vld [vmem:[%s1674 + $0x54] sm:%s1665]
                  %1719 = vst [vmem:[%s1675 + $0x54] sm:%s1665] %v1718
                  %v1720 = vld [vmem:[%s1674 + $0x58] sm:%s1665]
                  %1721 = vst [vmem:[%s1675 + $0x58] sm:%s1665] %v1720
                  %v1722 = vld [vmem:[%s1674 + $0x5c] sm:%s1665]
                  %1723 = vst [vmem:[%s1675 + $0x5c] sm:%s1665] %v1722
                  %v1724 = vld [vmem:[%s1674 + $0x60] sm:%s1665]
                  %1725 = vst [vmem:[%s1675 + $0x60] sm:%s1665] %v1724
                  %v1726 = vld [vmem:[%s1674 + $0x64] sm:%s1665]
                  %1727 = vst [vmem:[%s1675 + $0x64] sm:%s1665] %v1726
                  %v1728 = vld [vmem:[%s1674 + $0x68] sm:%s1665]
                  %1729 = vst [vmem:[%s1675 + $0x68] sm:%s1665] %v1728
                  %v1730 = vld [vmem:[%s1674 + $0x6c] sm:%s1665]
                  %1731 = vst [vmem:[%s1675 + $0x6c] sm:%s1665] %v1730
                  %v1732 = vld [vmem:[%s1674 + $0x70] sm:%s1665]
                  %1733 = vst [vmem:[%s1675 + $0x70] sm:%s1665] %v1732
                  %v1734 = vld [vmem:[%s1674 + $0x74] sm:%s1665]
                  %1735 = vst [vmem:[%s1675 + $0x74] sm:%s1665] %v1734
                  %v1736 = vld [vmem:[%s1674 + $0x78] sm:%s1665]
                  %1737 = vst [vmem:[%s1675 + $0x78] sm:%s1665] %v1736
                  %v1738 = vld [vmem:[%s1674 + $0x7c] sm:%s1665]
                  %1739 = vst [vmem:[%s1675 + $0x7c] sm:%s1665] %v1738
                  %s1740 = sadd.s32 1, %s1673
                  %p1741 = scmp.ge.s32.totalorder %s1740, %s1666
                  %s1742 = scalar_select %p1741, 0, %s1740
                  %s1743 = smul.u32 %s1742, 128
                  %s1744 = smul.u32 %s1742, 128
                  %s1745 = scalar_lea.vmem %s1534, %s1743 [#allocation2]
                  %s1746 = scalar_lea.vmem %s1546, %s1744
                $region71: #{carla_encoder_forward.5} parent=65 // loop_footer
                  %s1670 = sadd.s32 %s1668, 1
                $region72: #{carla_encoder_forward.5} parent=65 // loop_footer_branch
                  %1667 = sbr.rel target = $region68
                $region73: #{carla_encoder_forward.5} parent=65 // loop_exit
                  _
                %s1747 = sshrl.u32 %s1541, 5
                %s1748 = sand.u32 %s1541, 31
                %s1749 = smul.u32 %s1747, 32
                %s1750 = smul.u32 4, %s1749
                %s1751 = scalar_lea.vmem %s1534, %s1750 [#allocation2]
                %s1752 = smul.u32 4, %s1749
                %s1753 = scalar_lea.vmem %s1546, %s1752
                // While loop
                $region74: #{carla_encoder_forward.5} parent=65 // loop_pre_header
                  _
                $region75: #{carla_encoder_forward.5} parent=65 // loop_header
                  %s1755 = sphi 0, %s1757
                  %p1756 = scmp.ge.s32.totalorder %s1755, %s1748
                  %s1760 = sphi 0, %s1767
                  %s1761 = sphi %s1751, %s1770
                  %s1762 = sphi %s1753, %s1771
                $region76: #{carla_encoder_forward.5} parent=65 // loop_header_branch
                  %1759 = sbr.rel (%p1756) target = $region80
                $region77: #{carla_encoder_forward.5} parent=65 // loop_body
                  %v1763 = vld [vmem:[%s1761] sm:%s1665]
                  %1764 = vst [vmem:[%s1762] sm:%s1665] %v1763
                  %s1765 = sadd.s32 1, %s1760
                  %p1766 = scmp.ge.s32.totalorder %s1765, %s1748
                  %s1767 = scalar_select %p1766, 0, %s1765
                  %s1768 = smul.u32 %s1767, 4
                  %s1769 = smul.u32 %s1767, 4
                  %s1770 = scalar_lea.vmem %s1751, %s1768 [#allocation2]
                  %s1771 = scalar_lea.vmem %s1753, %s1769
                $region78: #{carla_encoder_forward.5} parent=65 // loop_footer
                  %s1757 = sadd.s32 %s1755, 1
                $region79: #{carla_encoder_forward.5} parent=65 // loop_footer_branch
                  %1754 = sbr.rel target = $region75
                $region80: #{carla_encoder_forward.5} parent=65 // loop_exit
                  _
              $region66: #{carla_encoder_forward.5} parent=43 // pred_fallthru
                _
            $region44: #{carla_encoder_forward.5} parent=39 // pred_fallthru
              _
            // Predicated region
            $region45: #{carla_encoder_forward.5} parent=39 // pred_check
              _
            $region46: #{carla_encoder_forward.5} parent=39 // pred_check_branch
              %1553 = sbr.rel (0) target = $region48
            $region47: #{carla_encoder_forward.5} parent=39 // pred_region
              %s1555 = ssub.s32 16, 1
              %s1556 = sshrl.u32 %s1541, 5
              // While loop
              $region49: #{carla_encoder_forward.5} parent=47 // loop_pre_header
                _
              $region50: #{carla_encoder_forward.5} parent=47 // loop_header
                %s1558 = sphi 0, %s1560
                %p1559 = scmp.ge.s32.totalorder %s1558, %s1556
                %s1563 = sphi 0, %s1632
                %s1564 = sphi %s1534, %s1635
                %s1565 = sphi %s1546, %s1636
              $region51: #{carla_encoder_forward.5} parent=47 // loop_header_branch
                %1562 = sbr.rel (%p1559) target = $region55
              $region52: #{carla_encoder_forward.5} parent=47 // loop_body
                %v1566 = vld [vmem:[%s1564] sm:%s1555]
                %1567 = vst [vmem:[%s1565] sm:%s1555] %v1566
                %v1568 = vld [vmem:[%s1564 + $0x4] sm:%s1555]
                %1569 = vst [vmem:[%s1565 + $0x4] sm:%s1555] %v1568
                %v1570 = vld [vmem:[%s1564 + $0x8] sm:%s1555]
                %1571 = vst [vmem:[%s1565 + $0x8] sm:%s1555] %v1570
                %v1572 = vld [vmem:[%s1564 + $0xc] sm:%s1555]
                %1573 = vst [vmem:[%s1565 + $0xc] sm:%s1555] %v1572
                %v1574 = vld [vmem:[%s1564 + $0x10] sm:%s1555]
                %1575 = vst [vmem:[%s1565 + $0x10] sm:%s1555] %v1574
                %v1576 = vld [vmem:[%s1564 + $0x14] sm:%s1555]
                %1577 = vst [vmem:[%s1565 + $0x14] sm:%s1555] %v1576
                %v1578 = vld [vmem:[%s1564 + $0x18] sm:%s1555]
                %1579 = vst [vmem:[%s1565 + $0x18] sm:%s1555] %v1578
                %v1580 = vld [vmem:[%s1564 + $0x1c] sm:%s1555]
                %1581 = vst [vmem:[%s1565 + $0x1c] sm:%s1555] %v1580
                %v1582 = vld [vmem:[%s1564 + $0x20] sm:%s1555]
                %1583 = vst [vmem:[%s1565 + $0x20] sm:%s1555] %v1582
                %v1584 = vld [vmem:[%s1564 + $0x24] sm:%s1555]
                %1585 = vst [vmem:[%s1565 + $0x24] sm:%s1555] %v1584
                %v1586 = vld [vmem:[%s1564 + $0x28] sm:%s1555]
                %1587 = vst [vmem:[%s1565 + $0x28] sm:%s1555] %v1586
                %v1588 = vld [vmem:[%s1564 + $0x2c] sm:%s1555]
                %1589 = vst [vmem:[%s1565 + $0x2c] sm:%s1555] %v1588
                %v1590 = vld [vmem:[%s1564 + $0x30] sm:%s1555]
                %1591 = vst [vmem:[%s1565 + $0x30] sm:%s1555] %v1590
                %v1592 = vld [vmem:[%s1564 + $0x34] sm:%s1555]
                %1593 = vst [vmem:[%s1565 + $0x34] sm:%s1555] %v1592
                %v1594 = vld [vmem:[%s1564 + $0x38] sm:%s1555]
                %1595 = vst [vmem:[%s1565 + $0x38] sm:%s1555] %v1594
                %v1596 = vld [vmem:[%s1564 + $0x3c] sm:%s1555]
                %1597 = vst [vmem:[%s1565 + $0x3c] sm:%s1555] %v1596
                %v1598 = vld [vmem:[%s1564 + $0x40] sm:%s1555]
                %1599 = vst [vmem:[%s1565 + $0x40] sm:%s1555] %v1598
                %v1600 = vld [vmem:[%s1564 + $0x44] sm:%s1555]
                %1601 = vst [vmem:[%s1565 + $0x44] sm:%s1555] %v1600
                %v1602 = vld [vmem:[%s1564 + $0x48] sm:%s1555]
                %1603 = vst [vmem:[%s1565 + $0x48] sm:%s1555] %v1602
                %v1604 = vld [vmem:[%s1564 + $0x4c] sm:%s1555]
                %1605 = vst [vmem:[%s1565 + $0x4c] sm:%s1555] %v1604
                %v1606 = vld [vmem:[%s1564 + $0x50] sm:%s1555]
                %1607 = vst [vmem:[%s1565 + $0x50] sm:%s1555] %v1606
                %v1608 = vld [vmem:[%s1564 + $0x54] sm:%s1555]
                %1609 = vst [vmem:[%s1565 + $0x54] sm:%s1555] %v1608
                %v1610 = vld [vmem:[%s1564 + $0x58] sm:%s1555]
                %1611 = vst [vmem:[%s1565 + $0x58] sm:%s1555] %v1610
                %v1612 = vld [vmem:[%s1564 + $0x5c] sm:%s1555]
                %1613 = vst [vmem:[%s1565 + $0x5c] sm:%s1555] %v1612
                %v1614 = vld [vmem:[%s1564 + $0x60] sm:%s1555]
                %1615 = vst [vmem:[%s1565 + $0x60] sm:%s1555] %v1614
                %v1616 = vld [vmem:[%s1564 + $0x64] sm:%s1555]
                %1617 = vst [vmem:[%s1565 + $0x64] sm:%s1555] %v1616
                %v1618 = vld [vmem:[%s1564 + $0x68] sm:%s1555]
                %1619 = vst [vmem:[%s1565 + $0x68] sm:%s1555] %v1618
                %v1620 = vld [vmem:[%s1564 + $0x6c] sm:%s1555]
                %1621 = vst [vmem:[%s1565 + $0x6c] sm:%s1555] %v1620
                %v1622 = vld [vmem:[%s1564 + $0x70] sm:%s1555]
                %1623 = vst [vmem:[%s1565 + $0x70] sm:%s1555] %v1622
                %v1624 = vld [vmem:[%s1564 + $0x74] sm:%s1555]
                %1625 = vst [vmem:[%s1565 + $0x74] sm:%s1555] %v1624
                %v1626 = vld [vmem:[%s1564 + $0x78] sm:%s1555]
                %1627 = vst [vmem:[%s1565 + $0x78] sm:%s1555] %v1626
                %v1628 = vld [vmem:[%s1564 + $0x7c] sm:%s1555]
                %1629 = vst [vmem:[%s1565 + $0x7c] sm:%s1555] %v1628
                %s1630 = sadd.s32 1, %s1563
                %p1631 = scmp.ge.s32.totalorder %s1630, %s1556
                %s1632 = scalar_select %p1631, 0, %s1630
                %s1633 = smul.u32 %s1632, 128
                %s1634 = smul.u32 %s1632, 128
                %s1635 = scalar_lea.vmem %s1534, %s1633 [#allocation2]
                %s1636 = scalar_lea.vmem %s1546, %s1634
              $region53: #{carla_encoder_forward.5} parent=47 // loop_footer
                %s1560 = sadd.s32 %s1558, 1
              $region54: #{carla_encoder_forward.5} parent=47 // loop_footer_branch
                %1557 = sbr.rel target = $region50
              $region55: #{carla_encoder_forward.5} parent=47 // loop_exit
                _
              %s1637 = sshrl.u32 %s1541, 5
              %s1638 = sand.u32 %s1541, 31
              %s1639 = smul.u32 %s1637, 32
              %s1640 = smul.u32 4, %s1639
              %s1641 = scalar_lea.vmem %s1534, %s1640 [#allocation2]
              %s1642 = smul.u32 4, %s1639
              %s1643 = scalar_lea.vmem %s1546, %s1642
              // While loop
              $region56: #{carla_encoder_forward.5} parent=47 // loop_pre_header
                _
              $region57: #{carla_encoder_forward.5} parent=47 // loop_header
                %s1645 = sphi 0, %s1647
                %p1646 = scmp.ge.s32.totalorder %s1645, %s1638
                %s1650 = sphi 0, %s1657
                %s1651 = sphi %s1641, %s1660
                %s1652 = sphi %s1643, %s1661
              $region58: #{carla_encoder_forward.5} parent=47 // loop_header_branch
                %1649 = sbr.rel (%p1646) target = $region62
              $region59: #{carla_encoder_forward.5} parent=47 // loop_body
                %v1653 = vld [vmem:[%s1651] sm:%s1555]
                %1654 = vst [vmem:[%s1652] sm:%s1555] %v1653
                %s1655 = sadd.s32 1, %s1650
                %p1656 = scmp.ge.s32.totalorder %s1655, %s1638
                %s1657 = scalar_select %p1656, 0, %s1655
                %s1658 = smul.u32 %s1657, 4
                %s1659 = smul.u32 %s1657, 4
                %s1660 = scalar_lea.vmem %s1641, %s1658 [#allocation2]
                %s1661 = scalar_lea.vmem %s1643, %s1659
              $region60: #{carla_encoder_forward.5} parent=47 // loop_footer
                %s1647 = sadd.s32 %s1645, 1
              $region61: #{carla_encoder_forward.5} parent=47 // loop_footer_branch
                %1644 = sbr.rel target = $region57
              $region62: #{carla_encoder_forward.5} parent=47 // loop_exit
                _
            $region48: #{carla_encoder_forward.5} parent=39 // pred_fallthru
              _
          $region40: #{carla_encoder_forward.5} parent=35 // pred_fallthru
            _
          %1772 = vnop
        $region36: #{carla_encoder_forward.5} parent=31 // pred_fallthru
          _
      $region32: #{carla_encoder_forward.5} parent=5 // pred_fallthru
        _
      %p1773 = scmp.le.s32.totalorder 2, %s9
      // Predicated region
      $region81: #{carla_encoder_forward.5} parent=5 // pred_check
        %p1774 = pneg %p1773
      $region82: #{carla_encoder_forward.5} parent=5 // pred_check_branch
        %1776 = sbr.rel (%p1774) target = $region84
      $region83: #{carla_encoder_forward.5} parent=5 // pred_region
        %s1777 = ssub.s32 %s9, 2
        // Predicated region
        $region85: #{carla_encoder_forward.5} parent=83 // pred_check
          %p1778 = pneg %p130
        $region86: #{carla_encoder_forward.5} parent=83 // pred_check_branch
          %1780 = sbr.rel (%p1778) target = $region88
        $region87: #{carla_encoder_forward.5} parent=83 // pred_region
          %s1781 = sand.u32 %s115, 1
          %s1782 = sand.u32 %s115, 1
          %s1783 = smul.addr %s1782, 512
          %s1784 = scalar_lea.vmem [#allocation2], %s1783
        $region88: #{carla_encoder_forward.5} parent=83 // pred_fallthru
          _
      $region84: #{carla_encoder_forward.5} parent=5 // pred_fallthru
        _
    $region6: #{carla_encoder_forward.5} parent=1 // loop_footer
      %s13 = sadd.s32 1, %s9
    $region7: #{carla_encoder_forward.5} parent=1 // loop_footer_branch
      %8 = sbr.rel target = $region3
    $region8: #{carla_encoder_forward.5} parent=1 // loop_exit
      _

// kernel: carla_encoder_forward.6
$region0: #{carla_encoder_forward.6}
  #allocation0 [shape = 'u32[]', space=smem, size = 0x4, offset = 0x4, fixed_abs, tag = 'smem constant byte address 0x4 - core index']
  #allocation1 [shape = 'u32[72,128]{1,0:T(1,128)}', space=vmem, size = 0x9000, scoped, tag = 'internal scratch']
  %s0 = inlined_call_operand.vmem [shape: bf16[392,512], index: 0, kind: input, shape index: {}]
  %s1 = inlined_call_operand.vmem [shape: bf16[512,64], index: 1, kind: input, shape index: {}]
  %s2 = inlined_call_operand.vmem [shape: f32[1,64], index: 2, kind: input, shape index: {}]
  %s3 = inlined_call_operand.vmem [shape: bf16[392,64], index: 3, kind: output, shape index: {}]
  %s4 = sld [smem:[#allocation0]]
  $region22: #{carla_encoder_forward.6} parent=0
    _
  %s6 = ssub.s32 1, %s4
  %s7 = scalar_select 0, %s6, %s4
  // Predicated region
  $region2: #{carla_encoder_forward.6} parent=0 // pred_check
    _
  $region3: #{carla_encoder_forward.6} parent=0 // pred_check_branch
    %9 = sbr.rel (0) target = $region5
  $region4: #{carla_encoder_forward.6} parent=0 // pred_region
    _
  $region5: #{carla_encoder_forward.6} parent=0 // pred_fallthru
    _
  // Predicated region
  $region6: #{carla_encoder_forward.6} parent=0 // pred_check
    _
  $region7: #{carla_encoder_forward.6} parent=0 // pred_check_branch
    %11 = sbr.rel (0) target = $region9
  $region8: #{carla_encoder_forward.6} parent=0 // pred_region
    _
  $region9: #{carla_encoder_forward.6} parent=0 // pred_fallthru
    _
  // Predicated region
  $region10: #{carla_encoder_forward.6} parent=0 // pred_check
    _
  $region11: #{carla_encoder_forward.6} parent=0 // pred_check_branch
    %13 = sbr.rel (0) target = $region13
  $region12: #{carla_encoder_forward.6} parent=0 // pred_region
    _
  $region13: #{carla_encoder_forward.6} parent=0 // pred_fallthru
    _
  %v14 = vld [vmem:[%s0] sm:$0xff]
  %v15 = vld [vmem:[%s0 + $0x8] sm:$0xff]
  %v16 = vld [vmem:[%s0 + $0x10] sm:$0xff]
  %v17 = vld [vmem:[%s0 + $0x18] sm:$0xff]
  %v18 = vld [vmem:[%s0 + $0x20] sm:$0xff]
  %v19 = vld [vmem:[%s0 + $0x28] sm:$0xff]
  %v20 = vld [vmem:[%s0 + $0x30] sm:$0xff]
  %v21 = vld [vmem:[%s0 + $0x38] sm:$0xff]
  %v22 = vld [vmem:[%s0 + $0x40] sm:$0xff]
  %v23 = vld [vmem:[%s0 + $0x48] sm:$0xff]
  %v24 = vld [vmem:[%s0 + $0x50] sm:$0xff]
  %v25 = vld [vmem:[%s0 + $0x58] sm:$0xff]
  %v26 = vld [vmem:[%s0 + $0x60] sm:$0xff]
  %v27 = vld [vmem:[%s0 + $0x68] sm:$0xff]
  %v28 = vld [vmem:[%s0 + $0x70] sm:$0xff]
  %v29 = vld [vmem:[%s0 + $0x78] sm:$0xff]
  %v30 = vld [vmem:[%s0 + $0x80] sm:$0xff]
  %v31 = vld [vmem:[%s0 + $0x88] sm:$0xff]
  %v32 = vld [vmem:[%s0 + $0x90] sm:$0xff]
  %v33 = vld [vmem:[%s0 + $0x98] sm:$0xff]
  %v34 = vld [vmem:[%s0 + $0xa0] sm:$0xff]
  %v35 = vld [vmem:[%s0 + $0xa8] sm:$0xff]
  %v36 = vld [vmem:[%s0 + $0xb0] sm:$0xff]
  %v37 = vld [vmem:[%s0 + $0xb8] sm:$0xff]
  %v38 = vld [vmem:[%s0 + $0xc0] sm:$0xff]
  %v39 = vld [vmem:[%s0 + $0xc8] sm:$0xff]
  %v40 = vld [vmem:[%s0 + $0xd0] sm:$0xff]
  %v41 = vld [vmem:[%s0 + $0xd8] sm:$0xff]
  %v42 = vld [vmem:[%s0 + $0xe0] sm:$0xff]
  %v43 = vld [vmem:[%s0 + $0xe8] sm:$0xff]
  %v44 = vld [vmem:[%s0 + $0xf0] sm:$0xff]
  %v45 = vld [vmem:[%s0 + $0xf8] sm:$0xff]
  %v46 = vld [vmem:[%s0 + $0x100] sm:$0xff]
  %v47 = vld [vmem:[%s0 + $0x108] sm:$0xff]
  %v48 = vld [vmem:[%s0 + $0x110] sm:$0xff]
  %v49 = vld [vmem:[%s0 + $0x118] sm:$0xff]
  %v50 = vld [vmem:[%s0 + $0x120] sm:$0xff]
  %v51 = vld [vmem:[%s0 + $0x128] sm:$0xff]
  %v52 = vld [vmem:[%s0 + $0x130] sm:$0xff]
  %v53 = vld [vmem:[%s0 + $0x138] sm:$0xff]
  %v54 = vld [vmem:[%s0 + $0x140] sm:$0xff]
  %v55 = vld [vmem:[%s0 + $0x148] sm:$0xff]
  %v56 = vld [vmem:[%s0 + $0x150] sm:$0xff]
  %v57 = vld [vmem:[%s0 + $0x158] sm:$0xff]
  %v58 = vld [vmem:[%s0 + $0x160] sm:$0xff]
  %v59 = vld [vmem:[%s0 + $0x168] sm:$0xff]
  %v60 = vld [vmem:[%s0 + $0x170] sm:$0xff]
  %v61 = vld [vmem:[%s0 + $0x178] sm:$0xff]
  %v62 = vld [vmem:[%s0 + $0x180] sm:$0xff]
  %v63 = vld [vmem:[%s0 + $0x188] sm:$0xff]
  %v64 = vld [vmem:[%s0 + $0x190] sm:$0xff]
  %v65 = vld [vmem:[%s0 + $0x198] sm:$0xff]
  %v66 = vld [vmem:[%s0 + $0x1a0] sm:$0xff]
  %v67 = vld [vmem:[%s0 + $0x1a8] sm:$0xff]
  %v68 = vld [vmem:[%s0 + $0x1b0] sm:$0xff]
  %v69 = vld [vmem:[%s0 + $0x1b8] sm:$0xff]
  %v70 = vld [vmem:[%s0 + $0x1c0] sm:$0xff]
  %v71 = vld [vmem:[%s0 + $0x1c8] sm:$0xff]
  %v72 = vld [vmem:[%s0 + $0x1d0] sm:$0xff]
  %v73 = vld [vmem:[%s0 + $0x1d8] sm:$0xff]
  %v74 = vld [vmem:[%s0 + $0x1e0] sm:$0xff]
  %v75 = vld [vmem:[%s0 + $0x1e8] sm:$0xff]
  %v76 = vld [vmem:[%s0 + $0x1f0] sm:$0xff]
  %v77 = vld [vmem:[%s0 + $0x1f8] sm:$0xff]
  %v78 = vld [vmem:[%s0 + $0x200] sm:$0xff]
  %v79 = vld [vmem:[%s0 + $0x208] sm:$0xff]
  %v80 = vld [vmem:[%s0 + $0x210] sm:$0xff]
  %v81 = vld [vmem:[%s0 + $0x218] sm:$0xff]
  %v82 = vld [vmem:[%s0 + $0x220] sm:$0xff]
  %v83 = vld [vmem:[%s0 + $0x228] sm:$0xff]
  %v84 = vld [vmem:[%s0 + $0x230] sm:$0xff]
  %v85 = vld [vmem:[%s0 + $0x238] sm:$0xff]
  %v86 = vld [vmem:[%s0 + $0x240] sm:$0xff]
  %v87 = vld [vmem:[%s0 + $0x248] sm:$0xff]
  %v88 = vld [vmem:[%s0 + $0x250] sm:$0xff]
  %v89 = vld [vmem:[%s0 + $0x258] sm:$0xff]
  %v90 = vld [vmem:[%s0 + $0x260] sm:$0xff]
  %v91 = vld [vmem:[%s0 + $0x268] sm:$0xff]
  %v92 = vld [vmem:[%s0 + $0x270] sm:$0xff]
  %v93 = vld [vmem:[%s0 + $0x278] sm:$0xff]
  %v94 = vld [vmem:[%s0 + $0x280] sm:$0xff]
  %v95 = vld [vmem:[%s0 + $0x288] sm:$0xff]
  %v96 = vld [vmem:[%s0 + $0x290] sm:$0xff]
  %v97 = vld [vmem:[%s0 + $0x298] sm:$0xff]
  %v98 = vld [vmem:[%s0 + $0x2a0] sm:$0xff]
  %v99 = vld [vmem:[%s0 + $0x2a8] sm:$0xff]
  %v100 = vld [vmem:[%s0 + $0x2b0] sm:$0xff]
  %v101 = vld [vmem:[%s0 + $0x2b8] sm:$0xff]
  %v102 = vld [vmem:[%s0 + $0x2c0] sm:$0xff]
  %v103 = vld [vmem:[%s0 + $0x2c8] sm:$0xff]
  %v104 = vld [vmem:[%s0 + $0x2d0] sm:$0xff]
  %v105 = vld [vmem:[%s0 + $0x2d8] sm:$0xff]
  %v106 = vld [vmem:[%s0 + $0x2e0] sm:$0xff]
  %v107 = vld [vmem:[%s0 + $0x2e8] sm:$0xff]
  %v108 = vld [vmem:[%s0 + $0x2f0] sm:$0xff]
  %v109 = vld [vmem:[%s0 + $0x2f8] sm:$0xff]
  %v110 = vld [vmem:[%s0 + $0x300] sm:$0xff]
  %v111 = vld [vmem:[%s0 + $0x308] sm:$0xff]
  %v112 = vld [vmem:[%s1] sm:$0xf]
  %v113 = vld [vmem:[%s1 + $0x4] sm:$0xf]
  %v114 = vld [vmem:[%s1 + $0x8] sm:$0xf]
  %v115 = vld [vmem:[%s1 + $0xc] sm:$0xf]
  %v116 = vld [vmem:[%s1 + $0x10] sm:$0xf]
  %v117 = vld [vmem:[%s1 + $0x14] sm:$0xf]
  %v118 = vld [vmem:[%s1 + $0x18] sm:$0xf]
  %v119 = vld [vmem:[%s1 + $0x1c] sm:$0xf]
  %v120 = vld [vmem:[%s1 + $0x20] sm:$0xf]
  %v121 = vld [vmem:[%s1 + $0x24] sm:$0xf]
  %v122 = vld [vmem:[%s1 + $0x28] sm:$0xf]
  %v123 = vld [vmem:[%s1 + $0x2c] sm:$0xf]
  %v124 = vld [vmem:[%s1 + $0x30] sm:$0xf]
  %v125 = vld [vmem:[%s1 + $0x34] sm:$0xf]
  %v126 = vld [vmem:[%s1 + $0x38] sm:$0xf]
  %v127 = vld [vmem:[%s1 + $0x3c] sm:$0xf]
  %v128 = vld [vmem:[%s1 + $0x40] sm:$0xf]
  %v129 = vld [vmem:[%s1 + $0x44] sm:$0xf]
  %v130 = vld [vmem:[%s1 + $0x48] sm:$0xf]
  %v131 = vld [vmem:[%s1 + $0x4c] sm:$0xf]
  %v132 = vld [vmem:[%s1 + $0x50] sm:$0xf]
  %v133 = vld [vmem:[%s1 + $0x54] sm:$0xf]
  %v134 = vld [vmem:[%s1 + $0x58] sm:$0xf]
  %v135 = vld [vmem:[%s1 + $0x5c] sm:$0xf]
  %v136 = vld [vmem:[%s1 + $0x60] sm:$0xf]
  %v137 = vld [vmem:[%s1 + $0x64] sm:$0xf]
  %v138 = vld [vmem:[%s1 + $0x68] sm:$0xf]
  %v139 = vld [vmem:[%s1 + $0x6c] sm:$0xf]
  %v140 = vld [vmem:[%s1 + $0x70] sm:$0xf]
  %v141 = vld [vmem:[%s1 + $0x74] sm:$0xf]
  %v142 = vld [vmem:[%s1 + $0x78] sm:$0xf]
  %v143 = vld [vmem:[%s1 + $0x7c] sm:$0xf]
  %v144 = vld [vmem:[%s1 + $0x80] sm:$0xf]
  %v145 = vld [vmem:[%s1 + $0x84] sm:$0xf]
  %v146 = vld [vmem:[%s1 + $0x88] sm:$0xf]
  %v147 = vld [vmem:[%s1 + $0x8c] sm:$0xf]
  %v148 = vld [vmem:[%s1 + $0x90] sm:$0xf]
  %v149 = vld [vmem:[%s1 + $0x94] sm:$0xf]
  %v150 = vld [vmem:[%s1 + $0x98] sm:$0xf]
  %v151 = vld [vmem:[%s1 + $0x9c] sm:$0xf]
  %v152 = vld [vmem:[%s1 + $0xa0] sm:$0xf]
  %v153 = vld [vmem:[%s1 + $0xa4] sm:$0xf]
  %v154 = vld [vmem:[%s1 + $0xa8] sm:$0xf]
  %v155 = vld [vmem:[%s1 + $0xac] sm:$0xf]
  %v156 = vld [vmem:[%s1 + $0xb0] sm:$0xf]
  %v157 = vld [vmem:[%s1 + $0xb4] sm:$0xf]
  %v158 = vld [vmem:[%s1 + $0xb8] sm:$0xf]
  %v159 = vld [vmem:[%s1 + $0xbc] sm:$0xf]
  %v160 = vld [vmem:[%s1 + $0xc0] sm:$0xf]
  %v161 = vld [vmem:[%s1 + $0xc4] sm:$0xf]
  %v162 = vld [vmem:[%s1 + $0xc8] sm:$0xf]
  %v163 = vld [vmem:[%s1 + $0xcc] sm:$0xf]
  %v164 = vld [vmem:[%s1 + $0xd0] sm:$0xf]
  %v165 = vld [vmem:[%s1 + $0xd4] sm:$0xf]
  %v166 = vld [vmem:[%s1 + $0xd8] sm:$0xf]
  %v167 = vld [vmem:[%s1 + $0xdc] sm:$0xf]
  %v168 = vld [vmem:[%s1 + $0xe0] sm:$0xf]
  %v169 = vld [vmem:[%s1 + $0xe4] sm:$0xf]
  %v170 = vld [vmem:[%s1 + $0xe8] sm:$0xf]
  %v171 = vld [vmem:[%s1 + $0xec] sm:$0xf]
  %v172 = vld [vmem:[%s1 + $0xf0] sm:$0xf]
  %v173 = vld [vmem:[%s1 + $0xf4] sm:$0xf]
  %v174 = vld [vmem:[%s1 + $0xf8] sm:$0xf]
  %v175 = vld [vmem:[%s1 + $0xfc] sm:$0xf]
  %v176 = vld [vmem:[%s2] sm:$0x1]
  %v178 = vperm.slane %v176, 0
  %v278 = vunpack.c.l.b16 %v14
  %v279 = vunpack.c.h.b16 %v14
  %v280 = vunpack.c.l.b16 %v15
  %v281 = vunpack.c.h.b16 %v15
  %v282 = vunpack.c.l.b16 %v16
  %v283 = vunpack.c.h.b16 %v16
  %v284 = vunpack.c.l.b16 %v17
  %v285 = vunpack.c.h.b16 %v17
  %v286 = vunpack.c.l.b16 %v18
  %v287 = vunpack.c.h.b16 %v18
  %v288 = vunpack.c.l.b16 %v19
  %v289 = vunpack.c.h.b16 %v19
  %v290 = vunpack.c.l.b16 %v20
  %v291 = vunpack.c.h.b16 %v20
  %v292 = vunpack.c.l.b16 %v21
  %v293 = vunpack.c.h.b16 %v21
  %v294 = vunpack.c.l.b16 %v22
  %v295 = vunpack.c.h.b16 %v22
  %v296 = vunpack.c.l.b16 %v23
  %v297 = vunpack.c.h.b16 %v23
  %v298 = vunpack.c.l.b16 %v24
  %v299 = vunpack.c.h.b16 %v24
  %v300 = vunpack.c.l.b16 %v25
  %v301 = vunpack.c.h.b16 %v25
  %v302 = vunpack.c.l.b16 %v26
  %v303 = vunpack.c.h.b16 %v26
  %v304 = vunpack.c.l.b16 %v27
  %v305 = vunpack.c.h.b16 %v27
  %v306 = vunpack.c.l.b16 %v28
  %v307 = vunpack.c.h.b16 %v28
  %v308 = vunpack.c.l.b16 %v29
  %v309 = vunpack.c.h.b16 %v29
  %v310 = vunpack.c.l.b16 %v30
  %v311 = vunpack.c.h.b16 %v30
  %v312 = vunpack.c.l.b16 %v31
  %v313 = vunpack.c.h.b16 %v31
  %v314 = vunpack.c.l.b16 %v32
  %v315 = vunpack.c.h.b16 %v32
  %v316 = vunpack.c.l.b16 %v33
  %v317 = vunpack.c.h.b16 %v33
  %v318 = vunpack.c.l.b16 %v34
  %v319 = vunpack.c.h.b16 %v34
  %v320 = vunpack.c.l.b16 %v35
  %v321 = vunpack.c.h.b16 %v35
  %v322 = vunpack.c.l.b16 %v36
  %v323 = vunpack.c.h.b16 %v36
  %v324 = vunpack.c.l.b16 %v37
  %v325 = vunpack.c.h.b16 %v37
  %v326 = vunpack.c.l.b16 %v38
  %v327 = vunpack.c.h.b16 %v38
  %v328 = vunpack.c.l.b16 %v39
  %v329 = vunpack.c.h.b16 %v39
  %v330 = vunpack.c.l.b16 %v40
  %v331 = vunpack.c.h.b16 %v40
  %v332 = vunpack.c.l.b16 %v41
  %v333 = vunpack.c.h.b16 %v41
  %v334 = vunpack.c.l.b16 %v42
  %v335 = vunpack.c.h.b16 %v42
  %v336 = vunpack.c.l.b16 %v43
  %v337 = vunpack.c.h.b16 %v43
  %v338 = vunpack.c.l.b16 %v44
  %v339 = vunpack.c.h.b16 %v44
  %v340 = vunpack.c.l.b16 %v45
  %v341 = vunpack.c.h.b16 %v45
  %v342 = vunpack.c.l.b16 %v46
  %v343 = vunpack.c.h.b16 %v46
  %v344 = vunpack.c.l.b16 %v47
  %v345 = vunpack.c.h.b16 %v47
  %v346 = vunpack.c.l.b16 %v48
  %v347 = vunpack.c.h.b16 %v48
  %v348 = vunpack.c.l.b16 %v49
  %v349 = vunpack.c.h.b16 %v49
  %v350 = vunpack.c.l.b16 %v50
  %v351 = vunpack.c.h.b16 %v50
  %v352 = vunpack.c.l.b16 %v51
  %v353 = vunpack.c.h.b16 %v51
  %v354 = vunpack.c.l.b16 %v52
  %v355 = vunpack.c.h.b16 %v52
  %v356 = vunpack.c.l.b16 %v53
  %v357 = vunpack.c.h.b16 %v53
  %v358 = vunpack.c.l.b16 %v54
  %v359 = vunpack.c.h.b16 %v54
  %v360 = vunpack.c.l.b16 %v55
  %v361 = vunpack.c.h.b16 %v55
  %v362 = vunpack.c.l.b16 %v56
  %v363 = vunpack.c.h.b16 %v56
  %v364 = vunpack.c.l.b16 %v57
  %v365 = vunpack.c.h.b16 %v57
  %v366 = vunpack.c.l.b16 %v58
  %v367 = vunpack.c.h.b16 %v58
  %v368 = vunpack.c.l.b16 %v59
  %v369 = vunpack.c.h.b16 %v59
  %v370 = vunpack.c.l.b16 %v60
  %v371 = vunpack.c.h.b16 %v60
  %v372 = vunpack.c.l.b16 %v61
  %v373 = vunpack.c.h.b16 %v61
  %v374 = vunpack.c.l.b16 %v62
  %v375 = vunpack.c.h.b16 %v62
  %v376 = vunpack.c.l.b16 %v63
  %v377 = vunpack.c.h.b16 %v63
  %v378 = vunpack.c.l.b16 %v64
  %v379 = vunpack.c.h.b16 %v64
  %v380 = vunpack.c.l.b16 %v65
  %v381 = vunpack.c.h.b16 %v65
  %v382 = vunpack.c.l.b16 %v66
  %v383 = vunpack.c.h.b16 %v66
  %v384 = vunpack.c.l.b16 %v67
  %v385 = vunpack.c.h.b16 %v67
  %v386 = vunpack.c.l.b16 %v68
  %v387 = vunpack.c.h.b16 %v68
  %v388 = vunpack.c.l.b16 %v69
  %v389 = vunpack.c.h.b16 %v69
  %v390 = vunpack.c.l.b16 %v70
  %v391 = vunpack.c.h.b16 %v70
  %v392 = vunpack.c.l.b16 %v71
  %v393 = vunpack.c.h.b16 %v71
  %v394 = vunpack.c.l.b16 %v72
  %v395 = vunpack.c.h.b16 %v72
  %v396 = vunpack.c.l.b16 %v73
  %v397 = vunpack.c.h.b16 %v73
  %v398 = vunpack.c.l.b16 %v74
  %v399 = vunpack.c.h.b16 %v74
  %v400 = vunpack.c.l.b16 %v75
  %v401 = vunpack.c.h.b16 %v75
  %v402 = vunpack.c.l.b16 %v76
  %v403 = vunpack.c.h.b16 %v76
  %v404 = vunpack.c.l.b16 %v77
  %v405 = vunpack.c.h.b16 %v77
  %v406 = vunpack.c.l.b16 %v78
  %v407 = vunpack.c.h.b16 %v78
  %v408 = vunpack.c.l.b16 %v79
  %v409 = vunpack.c.h.b16 %v79
  %v410 = vunpack.c.l.b16 %v80
  %v411 = vunpack.c.h.b16 %v80
  %v412 = vunpack.c.l.b16 %v81
  %v413 = vunpack.c.h.b16 %v81
  %v414 = vunpack.c.l.b16 %v82
  %v415 = vunpack.c.h.b16 %v82
  %v416 = vunpack.c.l.b16 %v83
  %v417 = vunpack.c.h.b16 %v83
  %v418 = vunpack.c.l.b16 %v84
  %v419 = vunpack.c.h.b16 %v84
  %v420 = vunpack.c.l.b16 %v85
  %v421 = vunpack.c.h.b16 %v85
  %v422 = vunpack.c.l.b16 %v86
  %v423 = vunpack.c.h.b16 %v86
  %v424 = vunpack.c.l.b16 %v87
  %v425 = vunpack.c.h.b16 %v87
  %v426 = vunpack.c.l.b16 %v88
  %v427 = vunpack.c.h.b16 %v88
  %v428 = vunpack.c.l.b16 %v89
  %v429 = vunpack.c.h.b16 %v89
  %v430 = vunpack.c.l.b16 %v90
  %v431 = vunpack.c.h.b16 %v90
  %v432 = vunpack.c.l.b16 %v91
  %v433 = vunpack.c.h.b16 %v91
  %v434 = vunpack.c.l.b16 %v92
  %v435 = vunpack.c.h.b16 %v92
  %v436 = vunpack.c.l.b16 %v93
  %v437 = vunpack.c.h.b16 %v93
  %v438 = vunpack.c.l.b16 %v94
  %v439 = vunpack.c.h.b16 %v94
  %v440 = vunpack.c.l.b16 %v95
  %v441 = vunpack.c.h.b16 %v95
  %v442 = vunpack.c.l.b16 %v96
  %v443 = vunpack.c.h.b16 %v96
  %v444 = vunpack.c.l.b16 %v97
  %v445 = vunpack.c.h.b16 %v97
  %v446 = vunpack.c.l.b16 %v98
  %v447 = vunpack.c.h.b16 %v98
  %v448 = vunpack.c.l.b16 %v99
  %v449 = vunpack.c.h.b16 %v99
  %v450 = vunpack.c.l.b16 %v100
  %v451 = vunpack.c.h.b16 %v100
  %v452 = vunpack.c.l.b16 %v101
  %v453 = vunpack.c.h.b16 %v101
  %v454 = vunpack.c.l.b16 %v102
  %v455 = vunpack.c.h.b16 %v102
  %v456 = vunpack.c.l.b16 %v103
  %v457 = vunpack.c.h.b16 %v103
  %v458 = vunpack.c.l.b16 %v104
  %v459 = vunpack.c.h.b16 %v104
  %v460 = vunpack.c.l.b16 %v105
  %v461 = vunpack.c.h.b16 %v105
  %v462 = vunpack.c.l.b16 %v106
  %v463 = vunpack.c.h.b16 %v106
  %v464 = vunpack.c.l.b16 %v107
  %v465 = vunpack.c.h.b16 %v107
  %v466 = vunpack.c.l.b16 %v108
  %v467 = vunpack.c.h.b16 %v108
  %v468 = vunpack.c.l.b16 %v109
  %v469 = vunpack.c.h.b16 %v109
  %v470 = vunpack.c.l.b16 %v110
  %v471 = vunpack.c.h.b16 %v110
  %v472 = vunpack.c.l.b16 %v111
  %v473 = vunpack.c.h.b16 %v111
  %v474 = vpack.c.b16 %v282, %v278
  %v475 = vpack.c.b16 %v283, %v279
  %v476 = vpack.c.b16 %v284, %v280
  %v477 = vpack.c.b16 %v285, %v281
  %v478 = vpack.c.b16 %v290, %v286
  %v479 = vpack.c.b16 %v291, %v287
  %v480 = vpack.c.b16 %v292, %v288
  %v481 = vpack.c.b16 %v293, %v289
  %v482 = vpack.c.b16 %v298, %v294
  %v483 = vpack.c.b16 %v299, %v295
  %v484 = vpack.c.b16 %v300, %v296
  %v485 = vpack.c.b16 %v301, %v297
  %v486 = vpack.c.b16 %v306, %v302
  %v487 = vpack.c.b16 %v307, %v303
  %v488 = vpack.c.b16 %v308, %v304
  %v489 = vpack.c.b16 %v309, %v305
  %v490 = vpack.c.b16 %v314, %v310
  %v491 = vpack.c.b16 %v315, %v311
  %v492 = vpack.c.b16 %v316, %v312
  %v493 = vpack.c.b16 %v317, %v313
  %v494 = vpack.c.b16 %v322, %v318
  %v495 = vpack.c.b16 %v323, %v319
  %v496 = vpack.c.b16 %v324, %v320
  %v497 = vpack.c.b16 %v325, %v321
  %v498 = vpack.c.b16 %v330, %v326
  %v499 = vpack.c.b16 %v331, %v327
  %v500 = vpack.c.b16 %v332, %v328
  %v501 = vpack.c.b16 %v333, %v329
  %v502 = vpack.c.b16 %v338, %v334
  %v503 = vpack.c.b16 %v339, %v335
  %v504 = vpack.c.b16 %v340, %v336
  %v505 = vpack.c.b16 %v341, %v337
  %v506 = vpack.c.b16 %v346, %v342
  %v507 = vpack.c.b16 %v347, %v343
  %v508 = vpack.c.b16 %v348, %v344
  %v509 = vpack.c.b16 %v349, %v345
  %v510 = vpack.c.b16 %v354, %v350
  %v511 = vpack.c.b16 %v355, %v351
  %v512 = vpack.c.b16 %v356, %v352
  %v513 = vpack.c.b16 %v357, %v353
  %v514 = vpack.c.b16 %v362, %v358
  %v515 = vpack.c.b16 %v363, %v359
  %v516 = vpack.c.b16 %v364, %v360
  %v517 = vpack.c.b16 %v365, %v361
  %v518 = vpack.c.b16 %v370, %v366
  %v519 = vpack.c.b16 %v371, %v367
  %v520 = vpack.c.b16 %v372, %v368
  %v521 = vpack.c.b16 %v373, %v369
  %v522 = vpack.c.b16 %v378, %v374
  %v523 = vpack.c.b16 %v379, %v375
  %v524 = vpack.c.b16 %v380, %v376
  %v525 = vpack.c.b16 %v381, %v377
  %v526 = vpack.c.b16 %v386, %v382
  %v527 = vpack.c.b16 %v387, %v383
  %v528 = vpack.c.b16 %v388, %v384
  %v529 = vpack.c.b16 %v389, %v385
  %v530 = vpack.c.b16 %v394, %v390
  %v531 = vpack.c.b16 %v395, %v391
  %v532 = vpack.c.b16 %v396, %v392
  %v533 = vpack.c.b16 %v397, %v393
  %v534 = vpack.c.b16 %v402, %v398
  %v535 = vpack.c.b16 %v403, %v399
  %v536 = vpack.c.b16 %v404, %v400
  %v537 = vpack.c.b16 %v405, %v401
  %v538 = vpack.c.b16 %v410, %v406
  %v539 = vpack.c.b16 %v411, %v407
  %v540 = vpack.c.b16 %v412, %v408
  %v541 = vpack.c.b16 %v413, %v409
  %v542 = vpack.c.b16 %v418, %v414
  %v543 = vpack.c.b16 %v419, %v415
  %v544 = vpack.c.b16 %v420, %v416
  %v545 = vpack.c.b16 %v421, %v417
  %v546 = vpack.c.b16 %v426, %v422
  %v547 = vpack.c.b16 %v427, %v423
  %v548 = vpack.c.b16 %v428, %v424
  %v549 = vpack.c.b16 %v429, %v425
  %v550 = vpack.c.b16 %v434, %v430
  %v551 = vpack.c.b16 %v435, %v431
  %v552 = vpack.c.b16 %v436, %v432
  %v553 = vpack.c.b16 %v437, %v433
  %v554 = vpack.c.b16 %v442, %v438
  %v555 = vpack.c.b16 %v443, %v439
  %v556 = vpack.c.b16 %v444, %v440
  %v557 = vpack.c.b16 %v445, %v441
  %v558 = vpack.c.b16 %v450, %v446
  %v559 = vpack.c.b16 %v451, %v447
  %v560 = vpack.c.b16 %v452, %v448
  %v561 = vpack.c.b16 %v453, %v449
  %v562 = vpack.c.b16 %v458, %v454
  %v563 = vpack.c.b16 %v459, %v455
  %v564 = vpack.c.b16 %v460, %v456
  %v565 = vpack.c.b16 %v461, %v457
  %v566 = vpack.c.b16 %v466, %v462
  %v567 = vpack.c.b16 %v467, %v463
  %v568 = vpack.c.b16 %v468, %v464
  %v569 = vpack.c.b16 %v469, %v465
  %v570 = vpack.c.b16 %v470, %v470
  %v571 = vpack.c.b16 %v471, %v471
  %v572 = vpack.c.b16 %v472, %v472
  %v573 = vpack.c.b16 %v473, %v473
  %v738 = vunpack.c.l.b16 %v112
  %v739 = vunpack.c.l.b16 %v113
  %v740 = vunpack.c.l.b16 %v114
  %v741 = vunpack.c.l.b16 %v115
  %v742 = vunpack.c.l.b16 %v116
  %v743 = vunpack.c.l.b16 %v117
  %v744 = vunpack.c.l.b16 %v118
  %v745 = vunpack.c.l.b16 %v119
  %v746 = vunpack.c.l.b16 %v120
  %v747 = vunpack.c.l.b16 %v121
  %v748 = vunpack.c.l.b16 %v122
  %v749 = vunpack.c.l.b16 %v123
  %v750 = vunpack.c.l.b16 %v124
  %v751 = vunpack.c.l.b16 %v125
  %v752 = vunpack.c.l.b16 %v126
  %v753 = vunpack.c.l.b16 %v127
  %v754 = vunpack.c.l.b16 %v128
  %v755 = vunpack.c.l.b16 %v129
  %v756 = vunpack.c.l.b16 %v130
  %v757 = vunpack.c.l.b16 %v131
  %v758 = vunpack.c.l.b16 %v132
  %v759 = vunpack.c.l.b16 %v133
  %v760 = vunpack.c.l.b16 %v134
  %v761 = vunpack.c.l.b16 %v135
  %v762 = vunpack.c.l.b16 %v136
  %v763 = vunpack.c.l.b16 %v137
  %v764 = vunpack.c.l.b16 %v138
  %v765 = vunpack.c.l.b16 %v139
  %v766 = vunpack.c.l.b16 %v140
  %v767 = vunpack.c.l.b16 %v141
  %v768 = vunpack.c.l.b16 %v142
  %v769 = vunpack.c.l.b16 %v143
  %v770 = vunpack.c.l.b16 %v144
  %v771 = vunpack.c.l.b16 %v145
  %v772 = vunpack.c.l.b16 %v146
  %v773 = vunpack.c.l.b16 %v147
  %v774 = vunpack.c.l.b16 %v148
  %v775 = vunpack.c.l.b16 %v149
  %v776 = vunpack.c.l.b16 %v150
  %v777 = vunpack.c.l.b16 %v151
  %v778 = vunpack.c.l.b16 %v152
  %v779 = vunpack.c.l.b16 %v153
  %v780 = vunpack.c.l.b16 %v154
  %v781 = vunpack.c.l.b16 %v155
  %v782 = vunpack.c.l.b16 %v156
  %v783 = vunpack.c.l.b16 %v157
  %v784 = vunpack.c.l.b16 %v158
  %v785 = vunpack.c.l.b16 %v159
  %v786 = vunpack.c.l.b16 %v160
  %v787 = vunpack.c.l.b16 %v161
  %v788 = vunpack.c.l.b16 %v162
  %v789 = vunpack.c.l.b16 %v163
  %v790 = vunpack.c.l.b16 %v164
  %v791 = vunpack.c.l.b16 %v165
  %v792 = vunpack.c.l.b16 %v166
  %v793 = vunpack.c.l.b16 %v167
  %v794 = vunpack.c.l.b16 %v168
  %v795 = vunpack.c.l.b16 %v169
  %v796 = vunpack.c.l.b16 %v170
  %v797 = vunpack.c.l.b16 %v171
  %v798 = vunpack.c.l.b16 %v172
  %v799 = vunpack.c.l.b16 %v173
  %v800 = vunpack.c.l.b16 %v174
  %v801 = vunpack.c.l.b16 %v175
  %v802 = vpack.c.b16 %v739, %v738
  %v803 = vpack.c.b16 %v741, %v740
  %v804 = vpack.c.b16 %v743, %v742
  %v805 = vpack.c.b16 %v745, %v744
  %v806 = vpack.c.b16 %v747, %v746
  %v807 = vpack.c.b16 %v749, %v748
  %v808 = vpack.c.b16 %v751, %v750
  %v809 = vpack.c.b16 %v753, %v752
  %v810 = vpack.c.b16 %v755, %v754
  %v811 = vpack.c.b16 %v757, %v756
  %v812 = vpack.c.b16 %v759, %v758
  %v813 = vpack.c.b16 %v761, %v760
  %v814 = vpack.c.b16 %v763, %v762
  %v815 = vpack.c.b16 %v765, %v764
  %v816 = vpack.c.b16 %v767, %v766
  %v817 = vpack.c.b16 %v769, %v768
  %v818 = vpack.c.b16 %v771, %v770
  %v819 = vpack.c.b16 %v773, %v772
  %v820 = vpack.c.b16 %v775, %v774
  %v821 = vpack.c.b16 %v777, %v776
  %v822 = vpack.c.b16 %v779, %v778
  %v823 = vpack.c.b16 %v781, %v780
  %v824 = vpack.c.b16 %v783, %v782
  %v825 = vpack.c.b16 %v785, %v784
  %v826 = vpack.c.b16 %v787, %v786
  %v827 = vpack.c.b16 %v789, %v788
  %v828 = vpack.c.b16 %v791, %v790
  %v829 = vpack.c.b16 %v793, %v792
  %v830 = vpack.c.b16 %v795, %v794
  %v831 = vpack.c.b16 %v797, %v796
  %v832 = vpack.c.b16 %v799, %v798
  %v833 = vpack.c.b16 %v801, %v800
  %866 = vmatpush.bf16.msra.mxu0 %v809
  %867 = vmatpush.bf16.msra.mxu0 %v808
  %868 = vmatpush.bf16.msra.mxu0 %v807
  %869 = vmatpush.bf16.msra.mxu0 %v806
  %870 = vmatpush.bf16.msra.mxu0 %v805
  %871 = vmatpush.bf16.msra.mxu0 %v804
  %872 = vmatpush.bf16.msra.mxu0 %v803
  %873 = vmatpush.bf16.msra.mxu0 %v802
  %874 = vmatmul.bf16.gmra.mxu0 %v474
  %v875 = vpop.f32.mrf.mxu0
  %v876 = vadd.f32 %v178, %v875
  %v877 = vpop.f32.mrf.mxu0
  %v878 = vadd.f32 %v178, %v877
  %879 = vmatmul.bf16.gmra.mxu0 %v478
  %v880 = vpop.f32.mrf.mxu0
  %v881 = vadd.f32 %v178, %v880
  %v882 = vpop.f32.mrf.mxu0
  %v883 = vadd.f32 %v178, %v882
  %884 = vmatmul.bf16.gmra.mxu0 %v482
  %v885 = vpop.f32.mrf.mxu0
  %v886 = vadd.f32 %v178, %v885
  %v887 = vpop.f32.mrf.mxu0
  %v888 = vadd.f32 %v178, %v887
  %889 = vmatmul.bf16.gmra.mxu0 %v486
  %v890 = vpop.f32.mrf.mxu0
  %v891 = vadd.f32 %v178, %v890
  %v892 = vpop.f32.mrf.mxu0
  %v893 = vadd.f32 %v178, %v892
  %894 = vmatmul.bf16.gmra.mxu0 %v490
  %v895 = vpop.f32.mrf.mxu0
  %v896 = vadd.f32 %v178, %v895
  %v897 = vpop.f32.mrf.mxu0
  %v898 = vadd.f32 %v178, %v897
  %899 = vmatmul.bf16.gmra.mxu0 %v494
  %v900 = vpop.f32.mrf.mxu0
  %v901 = vadd.f32 %v178, %v900
  %v902 = vpop.f32.mrf.mxu0
  %v903 = vadd.f32 %v178, %v902
  %904 = vmatmul.bf16.gmra.mxu0 %v498
  %v905 = vpop.f32.mrf.mxu0
  %v906 = vadd.f32 %v178, %v905
  %v907 = vpop.f32.mrf.mxu0
  %v908 = vadd.f32 %v178, %v907
  %909 = vmatmul.bf16.gmra.mxu0 %v502
  %v910 = vpop.f32.mrf.mxu0
  %v911 = vadd.f32 %v178, %v910
  %v912 = vpop.f32.mrf.mxu0
  %v913 = vadd.f32 %v178, %v912
  %914 = vmatmul.bf16.gmra.mxu0 %v506
  %v915 = vpop.f32.mrf.mxu0
  %v916 = vadd.f32 %v178, %v915
  %v917 = vpop.f32.mrf.mxu0
  %v918 = vadd.f32 %v178, %v917
  %919 = vmatmul.bf16.gmra.mxu0 %v510
  %v920 = vpop.f32.mrf.mxu0
  %v921 = vadd.f32 %v178, %v920
  %v922 = vpop.f32.mrf.mxu0
  %v923 = vadd.f32 %v178, %v922
  %924 = vmatmul.bf16.gmra.mxu0 %v514
  %v925 = vpop.f32.mrf.mxu0
  %v926 = vadd.f32 %v178, %v925
  %v927 = vpop.f32.mrf.mxu0
  %v928 = vadd.f32 %v178, %v927
  %929 = vmatmul.bf16.gmra.mxu0 %v518
  %v930 = vpop.f32.mrf.mxu0
  %v931 = vadd.f32 %v178, %v930
  %v932 = vpop.f32.mrf.mxu0
  %v933 = vadd.f32 %v178, %v932
  %934 = vmatmul.bf16.gmra.mxu0 %v522
  %v935 = vpop.f32.mrf.mxu0
  %v936 = vadd.f32 %v178, %v935
  %v937 = vpop.f32.mrf.mxu0
  %v938 = vadd.f32 %v178, %v937
  %939 = vmatmul.bf16.gmra.mxu0 %v526
  %v940 = vpop.f32.mrf.mxu0
  %v941 = vadd.f32 %v178, %v940
  %v942 = vpop.f32.mrf.mxu0
  %v943 = vadd.f32 %v178, %v942
  %944 = vmatmul.bf16.gmra.mxu0 %v530
  %v945 = vpop.f32.mrf.mxu0
  %v946 = vadd.f32 %v178, %v945
  %v947 = vpop.f32.mrf.mxu0
  %v948 = vadd.f32 %v178, %v947
  %949 = vmatmul.bf16.gmra.mxu0 %v534
  %v950 = vpop.f32.mrf.mxu0
  %v951 = vadd.f32 %v178, %v950
  %v952 = vpop.f32.mrf.mxu0
  %v953 = vadd.f32 %v178, %v952
  %954 = vmatmul.bf16.gmra.mxu0 %v538
  %v955 = vpop.f32.mrf.mxu0
  %v956 = vadd.f32 %v178, %v955
  %v957 = vpop.f32.mrf.mxu0
  %v958 = vadd.f32 %v178, %v957
  %959 = vmatmul.bf16.gmra.mxu0 %v542
  %v960 = vpop.f32.mrf.mxu0
  %v961 = vadd.f32 %v178, %v960
  %v962 = vpop.f32.mrf.mxu0
  %v963 = vadd.f32 %v178, %v962
  %964 = vmatmul.bf16.gmra.mxu0 %v546
  %v965 = vpop.f32.mrf.mxu0
  %v966 = vadd.f32 %v178, %v965
  %v967 = vpop.f32.mrf.mxu0
  %v968 = vadd.f32 %v178, %v967
  %969 = vmatmul.bf16.gmra.mxu0 %v550
  %v970 = vpop.f32.mrf.mxu0
  %v971 = vadd.f32 %v178, %v970
  %v972 = vpop.f32.mrf.mxu0
  %v973 = vadd.f32 %v178, %v972
  %974 = vmatmul.bf16.gmra.mxu0 %v554
  %v975 = vpop.f32.mrf.mxu0
  %v976 = vadd.f32 %v178, %v975
  %v977 = vpop.f32.mrf.mxu0
  %v978 = vadd.f32 %v178, %v977
  %979 = vmatmul.bf16.gmra.mxu0 %v558
  %v980 = vpop.f32.mrf.mxu0
  %v981 = vadd.f32 %v178, %v980
  %v982 = vpop.f32.mrf.mxu0
  %v983 = vadd.f32 %v178, %v982
  %984 = vmatmul.bf16.gmra.mxu0 %v562
  %v985 = vpop.f32.mrf.mxu0
  %v986 = vadd.f32 %v178, %v985
  %v987 = vpop.f32.mrf.mxu0
  %v988 = vadd.f32 %v178, %v987
  %989 = vmatmul.bf16.gmra.mxu0 %v566
  %v990 = vpop.f32.mrf.mxu0
  %v991 = vadd.f32 %v178, %v990
  %v992 = vpop.f32.mrf.mxu0
  %v993 = vadd.f32 %v178, %v992
  %994 = vmatmul.bf16.gmra.mxu0 %v570
  %v995 = vpop.f32.mrf.mxu0
  %v996 = vadd.f32 %v178, %v995
  %v997 = vpop.f32.mrf.mxu0
  %998 = vdwg.mxu0
  %999 = vmatpush.bf16.msra.mxu0 %v817
  %1000 = vmatpush.bf16.msra.mxu0 %v816
  %1001 = vmatpush.bf16.msra.mxu0 %v815
  %1002 = vmatpush.bf16.msra.mxu0 %v814
  %1003 = vmatpush.bf16.msra.mxu0 %v813
  %1004 = vmatpush.bf16.msra.mxu0 %v812
  %1005 = vmatpush.bf16.msra.mxu0 %v811
  %1006 = vmatpush.bf16.msra.mxu0 %v810
  %1007 = vmatmul.bf16.gmra.mxu0 %v475
  %v1008 = vpop.f32.mrf.mxu0
  %v1009 = vadd.f32 %v876, %v1008
  %v1010 = vpop.f32.mrf.mxu0
  %v1011 = vadd.f32 %v878, %v1010
  %1012 = vmatmul.bf16.gmra.mxu0 %v479
  %v1013 = vpop.f32.mrf.mxu0
  %v1014 = vadd.f32 %v881, %v1013
  %v1015 = vpop.f32.mrf.mxu0
  %v1016 = vadd.f32 %v883, %v1015
  %1017 = vmatmul.bf16.gmra.mxu0 %v483
  %v1018 = vpop.f32.mrf.mxu0
  %v1019 = vadd.f32 %v886, %v1018
  %v1020 = vpop.f32.mrf.mxu0
  %v1021 = vadd.f32 %v888, %v1020
  %1022 = vmatmul.bf16.gmra.mxu0 %v487
  %v1023 = vpop.f32.mrf.mxu0
  %v1024 = vadd.f32 %v891, %v1023
  %v1025 = vpop.f32.mrf.mxu0
  %v1026 = vadd.f32 %v893, %v1025
  %1027 = vmatmul.bf16.gmra.mxu0 %v491
  %v1028 = vpop.f32.mrf.mxu0
  %v1029 = vadd.f32 %v896, %v1028
  %v1030 = vpop.f32.mrf.mxu0
  %v1031 = vadd.f32 %v898, %v1030
  %1032 = vmatmul.bf16.gmra.mxu0 %v495
  %v1033 = vpop.f32.mrf.mxu0
  %v1034 = vadd.f32 %v901, %v1033
  %v1035 = vpop.f32.mrf.mxu0
  %v1036 = vadd.f32 %v903, %v1035
  %1037 = vmatmul.bf16.gmra.mxu0 %v499
  %v1038 = vpop.f32.mrf.mxu0
  %v1039 = vadd.f32 %v906, %v1038
  %v1040 = vpop.f32.mrf.mxu0
  %v1041 = vadd.f32 %v908, %v1040
  %1042 = vmatmul.bf16.gmra.mxu0 %v503
  %v1043 = vpop.f32.mrf.mxu0
  %v1044 = vadd.f32 %v911, %v1043
  %v1045 = vpop.f32.mrf.mxu0
  %v1046 = vadd.f32 %v913, %v1045
  %1047 = vmatmul.bf16.gmra.mxu0 %v507
  %v1048 = vpop.f32.mrf.mxu0
  %v1049 = vadd.f32 %v916, %v1048
  %v1050 = vpop.f32.mrf.mxu0
  %v1051 = vadd.f32 %v918, %v1050
  %1052 = vmatmul.bf16.gmra.mxu0 %v511
  %v1053 = vpop.f32.mrf.mxu0
  %v1054 = vadd.f32 %v921, %v1053
  %v1055 = vpop.f32.mrf.mxu0
  %v1056 = vadd.f32 %v923, %v1055
  %1057 = vmatmul.bf16.gmra.mxu0 %v515
  %v1058 = vpop.f32.mrf.mxu0
  %v1059 = vadd.f32 %v926, %v1058
  %v1060 = vpop.f32.mrf.mxu0
  %v1061 = vadd.f32 %v928, %v1060
  %1062 = vmatmul.bf16.gmra.mxu0 %v519
  %v1063 = vpop.f32.mrf.mxu0
  %v1064 = vadd.f32 %v931, %v1063
  %v1065 = vpop.f32.mrf.mxu0
  %v1066 = vadd.f32 %v933, %v1065
  %1067 = vmatmul.bf16.gmra.mxu0 %v523
  %v1068 = vpop.f32.mrf.mxu0
  %v1069 = vadd.f32 %v936, %v1068
  %v1070 = vpop.f32.mrf.mxu0
  %v1071 = vadd.f32 %v938, %v1070
  %1072 = vmatmul.bf16.gmra.mxu0 %v527
  %v1073 = vpop.f32.mrf.mxu0
  %v1074 = vadd.f32 %v941, %v1073
  %v1075 = vpop.f32.mrf.mxu0
  %v1076 = vadd.f32 %v943, %v1075
  %1077 = vmatmul.bf16.gmra.mxu0 %v531
  %v1078 = vpop.f32.mrf.mxu0
  %v1079 = vadd.f32 %v946, %v1078
  %v1080 = vpop.f32.mrf.mxu0
  %v1081 = vadd.f32 %v948, %v1080
  %1082 = vmatmul.bf16.gmra.mxu0 %v535
  %v1083 = vpop.f32.mrf.mxu0
  %v1084 = vadd.f32 %v951, %v1083
  %v1085 = vpop.f32.mrf.mxu0
  %v1086 = vadd.f32 %v953, %v1085
  %1087 = vmatmul.bf16.gmra.mxu0 %v539
  %v1088 = vpop.f32.mrf.mxu0
  %v1089 = vadd.f32 %v956, %v1088
  %v1090 = vpop.f32.mrf.mxu0
  %v1091 = vadd.f32 %v958, %v1090
  %1092 = vmatmul.bf16.gmra.mxu0 %v543
  %v1093 = vpop.f32.mrf.mxu0
  %v1094 = vadd.f32 %v961, %v1093
  %v1095 = vpop.f32.mrf.mxu0
  %v1096 = vadd.f32 %v963, %v1095
  %1097 = vmatmul.bf16.gmra.mxu0 %v547
  %v1098 = vpop.f32.mrf.mxu0
  %v1099 = vadd.f32 %v966, %v1098
  %v1100 = vpop.f32.mrf.mxu0
  %v1101 = vadd.f32 %v968, %v1100
  %1102 = vmatmul.bf16.gmra.mxu0 %v551
  %v1103 = vpop.f32.mrf.mxu0
  %v1104 = vadd.f32 %v971, %v1103
  %v1105 = vpop.f32.mrf.mxu0
  %v1106 = vadd.f32 %v973, %v1105
  %1107 = vmatmul.bf16.gmra.mxu0 %v555
  %v1108 = vpop.f32.mrf.mxu0
  %v1109 = vadd.f32 %v976, %v1108
  %v1110 = vpop.f32.mrf.mxu0
  %v1111 = vadd.f32 %v978, %v1110
  %1112 = vmatmul.bf16.gmra.mxu0 %v559
  %v1113 = vpop.f32.mrf.mxu0
  %v1114 = vadd.f32 %v981, %v1113
  %v1115 = vpop.f32.mrf.mxu0
  %v1116 = vadd.f32 %v983, %v1115
  %1117 = vmatmul.bf16.gmra.mxu0 %v563
  %v1118 = vpop.f32.mrf.mxu0
  %v1119 = vadd.f32 %v986, %v1118
  %v1120 = vpop.f32.mrf.mxu0
  %v1121 = vadd.f32 %v988, %v1120
  %1122 = vmatmul.bf16.gmra.mxu0 %v567
  %v1123 = vpop.f32.mrf.mxu0
  %v1124 = vadd.f32 %v991, %v1123
  %v1125 = vpop.f32.mrf.mxu0
  %v1126 = vadd.f32 %v993, %v1125
  %1127 = vmatmul.bf16.gmra.mxu0 %v571
  %v1128 = vpop.f32.mrf.mxu0
  %v1129 = vadd.f32 %v996, %v1128
  %v1130 = vpop.f32.mrf.mxu0
  %1131 = vdwg.mxu0
  %1132 = vmatpush.bf16.msra.mxu0 %v825
  %1133 = vmatpush.bf16.msra.mxu0 %v824
  %1134 = vmatpush.bf16.msra.mxu0 %v823
  %1135 = vmatpush.bf16.msra.mxu0 %v822
  %1136 = vmatpush.bf16.msra.mxu0 %v821
  %1137 = vmatpush.bf16.msra.mxu0 %v820
  %1138 = vmatpush.bf16.msra.mxu0 %v819
  %1139 = vmatpush.bf16.msra.mxu0 %v818
  %1140 = vmatmul.bf16.gmra.mxu0 %v476
  %v1141 = vpop.f32.mrf.mxu0
  %v1142 = vadd.f32 %v1009, %v1141
  %v1143 = vpop.f32.mrf.mxu0
  %v1144 = vadd.f32 %v1011, %v1143
  %1145 = vmatmul.bf16.gmra.mxu0 %v480
  %v1146 = vpop.f32.mrf.mxu0
  %v1147 = vadd.f32 %v1014, %v1146
  %v1148 = vpop.f32.mrf.mxu0
  %v1149 = vadd.f32 %v1016, %v1148
  %1150 = vmatmul.bf16.gmra.mxu0 %v484
  %v1151 = vpop.f32.mrf.mxu0
  %v1152 = vadd.f32 %v1019, %v1151
  %v1153 = vpop.f32.mrf.mxu0
  %v1154 = vadd.f32 %v1021, %v1153
  %1155 = vmatmul.bf16.gmra.mxu0 %v488
  %v1156 = vpop.f32.mrf.mxu0
  %v1157 = vadd.f32 %v1024, %v1156
  %v1158 = vpop.f32.mrf.mxu0
  %v1159 = vadd.f32 %v1026, %v1158
  %1160 = vmatmul.bf16.gmra.mxu0 %v492
  %v1161 = vpop.f32.mrf.mxu0
  %v1162 = vadd.f32 %v1029, %v1161
  %v1163 = vpop.f32.mrf.mxu0
  %v1164 = vadd.f32 %v1031, %v1163
  %1165 = vmatmul.bf16.gmra.mxu0 %v496
  %v1166 = vpop.f32.mrf.mxu0
  %v1167 = vadd.f32 %v1034, %v1166
  %v1168 = vpop.f32.mrf.mxu0
  %v1169 = vadd.f32 %v1036, %v1168
  %1170 = vmatmul.bf16.gmra.mxu0 %v500
  %v1171 = vpop.f32.mrf.mxu0
  %v1172 = vadd.f32 %v1039, %v1171
  %v1173 = vpop.f32.mrf.mxu0
  %v1174 = vadd.f32 %v1041, %v1173
  %1175 = vmatmul.bf16.gmra.mxu0 %v504
  %v1176 = vpop.f32.mrf.mxu0
  %v1177 = vadd.f32 %v1044, %v1176
  %v1178 = vpop.f32.mrf.mxu0
  %v1179 = vadd.f32 %v1046, %v1178
  %1180 = vmatmul.bf16.gmra.mxu0 %v508
  %v1181 = vpop.f32.mrf.mxu0
  %v1182 = vadd.f32 %v1049, %v1181
  %v1183 = vpop.f32.mrf.mxu0
  %v1184 = vadd.f32 %v1051, %v1183
  %1185 = vmatmul.bf16.gmra.mxu0 %v512
  %v1186 = vpop.f32.mrf.mxu0
  %v1187 = vadd.f32 %v1054, %v1186
  %v1188 = vpop.f32.mrf.mxu0
  %v1189 = vadd.f32 %v1056, %v1188
  %1190 = vmatmul.bf16.gmra.mxu0 %v516
  %v1191 = vpop.f32.mrf.mxu0
  %v1192 = vadd.f32 %v1059, %v1191
  %v1193 = vpop.f32.mrf.mxu0
  %v1194 = vadd.f32 %v1061, %v1193
  %1195 = vmatmul.bf16.gmra.mxu0 %v520
  %v1196 = vpop.f32.mrf.mxu0
  %v1197 = vadd.f32 %v1064, %v1196
  %v1198 = vpop.f32.mrf.mxu0
  %v1199 = vadd.f32 %v1066, %v1198
  %1200 = vmatmul.bf16.gmra.mxu0 %v524
  %v1201 = vpop.f32.mrf.mxu0
  %v1202 = vadd.f32 %v1069, %v1201
  %v1203 = vpop.f32.mrf.mxu0
  %v1204 = vadd.f32 %v1071, %v1203
  %1205 = vmatmul.bf16.gmra.mxu0 %v528
  %v1206 = vpop.f32.mrf.mxu0
  %v1207 = vadd.f32 %v1074, %v1206
  %v1208 = vpop.f32.mrf.mxu0
  %v1209 = vadd.f32 %v1076, %v1208
  %1210 = vmatmul.bf16.gmra.mxu0 %v532
  %v1211 = vpop.f32.mrf.mxu0
  %v1212 = vadd.f32 %v1079, %v1211
  %v1213 = vpop.f32.mrf.mxu0
  %v1214 = vadd.f32 %v1081, %v1213
  %1215 = vmatmul.bf16.gmra.mxu0 %v536
  %v1216 = vpop.f32.mrf.mxu0
  %v1217 = vadd.f32 %v1084, %v1216
  %v1218 = vpop.f32.mrf.mxu0
  %v1219 = vadd.f32 %v1086, %v1218
  %1220 = vmatmul.bf16.gmra.mxu0 %v540
  %v1221 = vpop.f32.mrf.mxu0
  %v1222 = vadd.f32 %v1089, %v1221
  %v1223 = vpop.f32.mrf.mxu0
  %v1224 = vadd.f32 %v1091, %v1223
  %1225 = vmatmul.bf16.gmra.mxu0 %v544
  %v1226 = vpop.f32.mrf.mxu0
  %v1227 = vadd.f32 %v1094, %v1226
  %v1228 = vpop.f32.mrf.mxu0
  %v1229 = vadd.f32 %v1096, %v1228
  %1230 = vmatmul.bf16.gmra.mxu0 %v548
  %v1231 = vpop.f32.mrf.mxu0
  %v1232 = vadd.f32 %v1099, %v1231
  %v1233 = vpop.f32.mrf.mxu0
  %v1234 = vadd.f32 %v1101, %v1233
  %1235 = vmatmul.bf16.gmra.mxu0 %v552
  %v1236 = vpop.f32.mrf.mxu0
  %v1237 = vadd.f32 %v1104, %v1236
  %v1238 = vpop.f32.mrf.mxu0
  %v1239 = vadd.f32 %v1106, %v1238
  %1240 = vmatmul.bf16.gmra.mxu0 %v556
  %v1241 = vpop.f32.mrf.mxu0
  %v1242 = vadd.f32 %v1109, %v1241
  %v1243 = vpop.f32.mrf.mxu0
  %v1244 = vadd.f32 %v1111, %v1243
  %1245 = vmatmul.bf16.gmra.mxu0 %v560
  %v1246 = vpop.f32.mrf.mxu0
  %v1247 = vadd.f32 %v1114, %v1246
  %v1248 = vpop.f32.mrf.mxu0
  %v1249 = vadd.f32 %v1116, %v1248
  %1250 = vmatmul.bf16.gmra.mxu0 %v564
  %v1251 = vpop.f32.mrf.mxu0
  %v1252 = vadd.f32 %v1119, %v1251
  %v1253 = vpop.f32.mrf.mxu0
  %v1254 = vadd.f32 %v1121, %v1253
  %1255 = vmatmul.bf16.gmra.mxu0 %v568
  %v1256 = vpop.f32.mrf.mxu0
  %v1257 = vadd.f32 %v1124, %v1256
  %v1258 = vpop.f32.mrf.mxu0
  %v1259 = vadd.f32 %v1126, %v1258
  %1260 = vmatmul.bf16.gmra.mxu0 %v572
  %v1261 = vpop.f32.mrf.mxu0
  %v1262 = vadd.f32 %v1129, %v1261
  %v1263 = vpop.f32.mrf.mxu0
  %1264 = vdwg.mxu0
  %1265 = vmatpush.bf16.msra.mxu0 %v833
  %1266 = vmatpush.bf16.msra.mxu0 %v832
  %1267 = vmatpush.bf16.msra.mxu0 %v831
  %1268 = vmatpush.bf16.msra.mxu0 %v830
  %1269 = vmatpush.bf16.msra.mxu0 %v829
  %1270 = vmatpush.bf16.msra.mxu0 %v828
  %1271 = vmatpush.bf16.msra.mxu0 %v827
  %1272 = vmatpush.bf16.msra.mxu0 %v826
  %1273 = vmatmul.bf16.gmra.mxu0 %v477
  %v1274 = vpop.f32.mrf.mxu0
  %v1275 = vadd.f32 %v1142, %v1274
  %v1276 = vpop.f32.mrf.mxu0
  %v1277 = vadd.f32 %v1144, %v1276
  %1278 = vmatmul.bf16.gmra.mxu0 %v481
  %v1279 = vpop.f32.mrf.mxu0
  %v1280 = vadd.f32 %v1147, %v1279
  %v1281 = vpop.f32.mrf.mxu0
  %v1282 = vadd.f32 %v1149, %v1281
  %1283 = vmatmul.bf16.gmra.mxu0 %v485
  %v1284 = vpop.f32.mrf.mxu0
  %v1285 = vadd.f32 %v1152, %v1284
  %v1286 = vpop.f32.mrf.mxu0
  %v1287 = vadd.f32 %v1154, %v1286
  %1288 = vmatmul.bf16.gmra.mxu0 %v489
  %v1289 = vpop.f32.mrf.mxu0
  %v1290 = vadd.f32 %v1157, %v1289
  %v1291 = vpop.f32.mrf.mxu0
  %v1292 = vadd.f32 %v1159, %v1291
  %1293 = vmatmul.bf16.gmra.mxu0 %v493
  %v1294 = vpop.f32.mrf.mxu0
  %v1295 = vadd.f32 %v1162, %v1294
  %v1296 = vpop.f32.mrf.mxu0
  %v1297 = vadd.f32 %v1164, %v1296
  %1298 = vmatmul.bf16.gmra.mxu0 %v497
  %v1299 = vpop.f32.mrf.mxu0
  %v1300 = vadd.f32 %v1167, %v1299
  %v1301 = vpop.f32.mrf.mxu0
  %v1302 = vadd.f32 %v1169, %v1301
  %1303 = vmatmul.bf16.gmra.mxu0 %v501
  %v1304 = vpop.f32.mrf.mxu0
  %v1305 = vadd.f32 %v1172, %v1304
  %v1306 = vpop.f32.mrf.mxu0
  %v1307 = vadd.f32 %v1174, %v1306
  %1308 = vmatmul.bf16.gmra.mxu0 %v505
  %v1309 = vpop.f32.mrf.mxu0
  %v1310 = vadd.f32 %v1177, %v1309
  %v1311 = vpop.f32.mrf.mxu0
  %v1312 = vadd.f32 %v1179, %v1311
  %1313 = vmatmul.bf16.gmra.mxu0 %v509
  %v1314 = vpop.f32.mrf.mxu0
  %v1315 = vadd.f32 %v1182, %v1314
  %v1316 = vpop.f32.mrf.mxu0
  %v1317 = vadd.f32 %v1184, %v1316
  %1318 = vmatmul.bf16.gmra.mxu0 %v513
  %v1319 = vpop.f32.mrf.mxu0
  %v1320 = vadd.f32 %v1187, %v1319
  %v1321 = vpop.f32.mrf.mxu0
  %v1322 = vadd.f32 %v1189, %v1321
  %1323 = vmatmul.bf16.gmra.mxu0 %v517
  %v1324 = vpop.f32.mrf.mxu0
  %v1325 = vadd.f32 %v1192, %v1324
  %v1326 = vpop.f32.mrf.mxu0
  %v1327 = vadd.f32 %v1194, %v1326
  %1328 = vmatmul.bf16.gmra.mxu0 %v521
  %v1329 = vpop.f32.mrf.mxu0
  %v1330 = vadd.f32 %v1197, %v1329
  %v1331 = vpop.f32.mrf.mxu0
  %v1332 = vadd.f32 %v1199, %v1331
  %1333 = vmatmul.bf16.gmra.mxu0 %v525
  %v1334 = vpop.f32.mrf.mxu0
  %v1335 = vadd.f32 %v1202, %v1334
  %v1336 = vpop.f32.mrf.mxu0
  %v1337 = vadd.f32 %v1204, %v1336
  %1338 = vmatmul.bf16.gmra.mxu0 %v529
  %v1339 = vpop.f32.mrf.mxu0
  %v1340 = vadd.f32 %v1207, %v1339
  %v1341 = vpop.f32.mrf.mxu0
  %v1342 = vadd.f32 %v1209, %v1341
  %1343 = vmatmul.bf16.gmra.mxu0 %v533
  %v1344 = vpop.f32.mrf.mxu0
  %v1345 = vadd.f32 %v1212, %v1344
  %v1346 = vpop.f32.mrf.mxu0
  %v1347 = vadd.f32 %v1214, %v1346
  %1348 = vmatmul.bf16.gmra.mxu0 %v537
  %v1349 = vpop.f32.mrf.mxu0
  %v1350 = vadd.f32 %v1217, %v1349
  %v1351 = vpop.f32.mrf.mxu0
  %v1352 = vadd.f32 %v1219, %v1351
  %1353 = vmatmul.bf16.gmra.mxu0 %v541
  %v1354 = vpop.f32.mrf.mxu0
  %v1355 = vadd.f32 %v1222, %v1354
  %v1356 = vpop.f32.mrf.mxu0
  %v1357 = vadd.f32 %v1224, %v1356
  %1358 = vmatmul.bf16.gmra.mxu0 %v545
  %v1359 = vpop.f32.mrf.mxu0
  %v1360 = vadd.f32 %v1227, %v1359
  %v1361 = vpop.f32.mrf.mxu0
  %v1362 = vadd.f32 %v1229, %v1361
  %1363 = vmatmul.bf16.gmra.mxu0 %v549
  %v1364 = vpop.f32.mrf.mxu0
  %v1365 = vadd.f32 %v1232, %v1364
  %v1366 = vpop.f32.mrf.mxu0
  %v1367 = vadd.f32 %v1234, %v1366
  %1368 = vmatmul.bf16.gmra.mxu0 %v553
  %v1369 = vpop.f32.mrf.mxu0
  %v1370 = vadd.f32 %v1237, %v1369
  %v1371 = vpop.f32.mrf.mxu0
  %v1372 = vadd.f32 %v1239, %v1371
  %1373 = vmatmul.bf16.gmra.mxu0 %v557
  %v1374 = vpop.f32.mrf.mxu0
  %v1375 = vadd.f32 %v1242, %v1374
  %v1376 = vpop.f32.mrf.mxu0
  %v1377 = vadd.f32 %v1244, %v1376
  %1378 = vmatmul.bf16.gmra.mxu0 %v561
  %v1379 = vpop.f32.mrf.mxu0
  %v1380 = vadd.f32 %v1247, %v1379
  %v1381 = vpop.f32.mrf.mxu0
  %v1382 = vadd.f32 %v1249, %v1381
  %1383 = vmatmul.bf16.gmra.mxu0 %v565
  %v1384 = vpop.f32.mrf.mxu0
  %v1385 = vadd.f32 %v1252, %v1384
  %v1386 = vpop.f32.mrf.mxu0
  %v1387 = vadd.f32 %v1254, %v1386
  %1388 = vmatmul.bf16.gmra.mxu0 %v569
  %v1389 = vpop.f32.mrf.mxu0
  %v1390 = vadd.f32 %v1257, %v1389
  %v1391 = vpop.f32.mrf.mxu0
  %v1392 = vadd.f32 %v1259, %v1391
  %1393 = vmatmul.bf16.gmra.mxu0 %v573
  %v1394 = vpop.f32.mrf.mxu0
  %v1395 = vadd.f32 %v1262, %v1394
  %v1396 = vpop.f32.mrf.mxu0
  %1397 = vdwg.mxu0
  %v1398 = vmax.f32 %v1275, 0.0
  %v1399 = vmax.f32 %v1277, 0.0
  %v1400 = vmax.f32 %v1280, 0.0
  %v1401 = vmax.f32 %v1282, 0.0
  %v1402 = vmax.f32 %v1285, 0.0
  %v1403 = vmax.f32 %v1287, 0.0
  %v1404 = vmax.f32 %v1290, 0.0
  %v1405 = vmax.f32 %v1292, 0.0
  %v1406 = vmax.f32 %v1295, 0.0
  %v1407 = vmax.f32 %v1297, 0.0
  %v1408 = vmax.f32 %v1300, 0.0
  %v1409 = vmax.f32 %v1302, 0.0
  %v1410 = vmax.f32 %v1305, 0.0
  %v1411 = vmax.f32 %v1307, 0.0
  %v1412 = vmax.f32 %v1310, 0.0
  %v1413 = vmax.f32 %v1312, 0.0
  %v1414 = vmax.f32 %v1315, 0.0
  %v1415 = vmax.f32 %v1317, 0.0
  %v1416 = vmax.f32 %v1320, 0.0
  %v1417 = vmax.f32 %v1322, 0.0
  %v1418 = vmax.f32 %v1325, 0.0
  %v1419 = vmax.f32 %v1327, 0.0
  %v1420 = vmax.f32 %v1330, 0.0
  %v1421 = vmax.f32 %v1332, 0.0
  %v1422 = vmax.f32 %v1335, 0.0
  %v1423 = vmax.f32 %v1337, 0.0
  %v1424 = vmax.f32 %v1340, 0.0
  %v1425 = vmax.f32 %v1342, 0.0
  %v1426 = vmax.f32 %v1345, 0.0
  %v1427 = vmax.f32 %v1347, 0.0
  %v1428 = vmax.f32 %v1350, 0.0
  %v1429 = vmax.f32 %v1352, 0.0
  %v1430 = vmax.f32 %v1355, 0.0
  %v1431 = vmax.f32 %v1357, 0.0
  %v1432 = vmax.f32 %v1360, 0.0
  %v1433 = vmax.f32 %v1362, 0.0
  %v1434 = vmax.f32 %v1365, 0.0
  %v1435 = vmax.f32 %v1367, 0.0
  %v1436 = vmax.f32 %v1370, 0.0
  %v1437 = vmax.f32 %v1372, 0.0
  %v1438 = vmax.f32 %v1375, 0.0
  %v1439 = vmax.f32 %v1377, 0.0
  %v1440 = vmax.f32 %v1380, 0.0
  %v1441 = vmax.f32 %v1382, 0.0
  %v1442 = vmax.f32 %v1385, 0.0
  %v1443 = vmax.f32 %v1387, 0.0
  %v1444 = vmax.f32 %v1390, 0.0
  %v1445 = vmax.f32 %v1392, 0.0
  %v1446 = vmax.f32 %v1395, 0.0
  %v1447 = vpack.c.bf16 %v1398, %v1398
  %v1448 = vpack.c.bf16 %v1399, %v1399
  %v1449 = vpack.c.bf16 %v1400, %v1400
  %v1450 = vpack.c.bf16 %v1401, %v1401
  %v1451 = vpack.c.bf16 %v1402, %v1402
  %v1452 = vpack.c.bf16 %v1403, %v1403
  %v1453 = vpack.c.bf16 %v1404, %v1404
  %v1454 = vpack.c.bf16 %v1405, %v1405
  %v1455 = vpack.c.bf16 %v1406, %v1406
  %v1456 = vpack.c.bf16 %v1407, %v1407
  %v1457 = vpack.c.bf16 %v1408, %v1408
  %v1458 = vpack.c.bf16 %v1409, %v1409
  %v1459 = vpack.c.bf16 %v1410, %v1410
  %v1460 = vpack.c.bf16 %v1411, %v1411
  %v1461 = vpack.c.bf16 %v1412, %v1412
  %v1462 = vpack.c.bf16 %v1413, %v1413
  %v1463 = vpack.c.bf16 %v1414, %v1414
  %v1464 = vpack.c.bf16 %v1415, %v1415
  %v1465 = vpack.c.bf16 %v1416, %v1416
  %v1466 = vpack.c.bf16 %v1417, %v1417
  %v1467 = vpack.c.bf16 %v1418, %v1418
  %v1468 = vpack.c.bf16 %v1419, %v1419
  %v1469 = vpack.c.bf16 %v1420, %v1420
  %v1470 = vpack.c.bf16 %v1421, %v1421
  %v1471 = vpack.c.bf16 %v1422, %v1422
  %v1472 = vpack.c.bf16 %v1423, %v1423
  %v1473 = vpack.c.bf16 %v1424, %v1424
  %v1474 = vpack.c.bf16 %v1425, %v1425
  %v1475 = vpack.c.bf16 %v1426, %v1426
  %v1476 = vpack.c.bf16 %v1427, %v1427
  %v1477 = vpack.c.bf16 %v1428, %v1428
  %v1478 = vpack.c.bf16 %v1429, %v1429
  %v1479 = vpack.c.bf16 %v1430, %v1430
  %v1480 = vpack.c.bf16 %v1431, %v1431
  %v1481 = vpack.c.bf16 %v1432, %v1432
  %v1482 = vpack.c.bf16 %v1433, %v1433
  %v1483 = vpack.c.bf16 %v1434, %v1434
  %v1484 = vpack.c.bf16 %v1435, %v1435
  %v1485 = vpack.c.bf16 %v1436, %v1436
  %v1486 = vpack.c.bf16 %v1437, %v1437
  %v1487 = vpack.c.bf16 %v1438, %v1438
  %v1488 = vpack.c.bf16 %v1439, %v1439
  %v1489 = vpack.c.bf16 %v1440, %v1440
  %v1490 = vpack.c.bf16 %v1441, %v1441
  %v1491 = vpack.c.bf16 %v1442, %v1442
  %v1492 = vpack.c.bf16 %v1443, %v1443
  %v1493 = vpack.c.bf16 %v1444, %v1444
  %v1494 = vpack.c.bf16 %v1445, %v1445
  %v1495 = vpack.c.bf16 %v1446, %v1446
  %vm1496 = vcmask 519168
  %1497 = vst.msk [vmem:[%s3] sm:$0xf] %vm1496, %v1447
  %1498 = vst.msk [vmem:[%s3 + $0x4] sm:$0xf] %vm1496, %v1448
  %1499 = vst.msk [vmem:[%s3 + $0x8] sm:$0xf] %vm1496, %v1449
  %1500 = vst.msk [vmem:[%s3 + $0xc] sm:$0xf] %vm1496, %v1450
  %1501 = vst.msk [vmem:[%s3 + $0x10] sm:$0xf] %vm1496, %v1451
  %1502 = vst.msk [vmem:[%s3 + $0x14] sm:$0xf] %vm1496, %v1452
  %1503 = vst.msk [vmem:[%s3 + $0x18] sm:$0xf] %vm1496, %v1453
  %1504 = vst.msk [vmem:[%s3 + $0x1c] sm:$0xf] %vm1496, %v1454
  %1505 = vst.msk [vmem:[%s3 + $0x20] sm:$0xf] %vm1496, %v1455
  %1506 = vst.msk [vmem:[%s3 + $0x24] sm:$0xf] %vm1496, %v1456
  %1507 = vst.msk [vmem:[%s3 + $0x28] sm:$0xf] %vm1496, %v1457
  %1508 = vst.msk [vmem:[%s3 + $0x2c] sm:$0xf] %vm1496, %v1458
  %1509 = vst.msk [vmem:[%s3 + $0x30] sm:$0xf] %vm1496, %v1459
  %1510 = vst.msk [vmem:[%s3 + $0x34] sm:$0xf] %vm1496, %v1460
  %1511 = vst.msk [vmem:[%s3 + $0x38] sm:$0xf] %vm1496, %v1461
  %1512 = vst.msk [vmem:[%s3 + $0x3c] sm:$0xf] %vm1496, %v1462
  %1513 = vst.msk [vmem:[%s3 + $0x40] sm:$0xf] %vm1496, %v1463
  %1514 = vst.msk [vmem:[%s3 + $0x44] sm:$0xf] %vm1496, %v1464
  %1515 = vst.msk [vmem:[%s3 + $0x48] sm:$0xf] %vm1496, %v1465
  %1516 = vst.msk [vmem:[%s3 + $0x4c] sm:$0xf] %vm1496, %v1466
  %1517 = vst.msk [vmem:[%s3 + $0x50] sm:$0xf] %vm1496, %v1467
  %1518 = vst.msk [vmem:[%s3 + $0x54] sm:$0xf] %vm1496, %v1468
  %1519 = vst.msk [vmem:[%s3 + $0x58] sm:$0xf] %vm1496, %v1469
  %1520 = vst.msk [vmem:[%s3 + $0x5c] sm:$0xf] %vm1496, %v1470
  %1521 = vst.msk [vmem:[%s3 + $0x60] sm:$0xf] %vm1496, %v1471
  %1522 = vst.msk [vmem:[%s3 + $0x64] sm:$0xf] %vm1496, %v1472
  %1523 = vst.msk [vmem:[%s3 + $0x68] sm:$0xf] %vm1496, %v1473
  %1524 = vst.msk [vmem:[%s3 + $0x6c] sm:$0xf] %vm1496, %v1474
  %1525 = vst.msk [vmem:[%s3 + $0x70] sm:$0xf] %vm1496, %v1475
  %1526 = vst.msk [vmem:[%s3 + $0x74] sm:$0xf] %vm1496, %v1476
  %1527 = vst.msk [vmem:[%s3 + $0x78] sm:$0xf] %vm1496, %v1477
  %1528 = vst.msk [vmem:[%s3 + $0x7c] sm:$0xf] %vm1496, %v1478
  %1529 = vst.msk [vmem:[%s3 + $0x80] sm:$0xf] %vm1496, %v1479
  %1530 = vst.msk [vmem:[%s3 + $0x84] sm:$0xf] %vm1496, %v1480
  %1531 = vst.msk [vmem:[%s3 + $0x88] sm:$0xf] %vm1496, %v1481
  %1532 = vst.msk [vmem:[%s3 + $0x8c] sm:$0xf] %vm1496, %v1482
  %1533 = vst.msk [vmem:[%s3 + $0x90] sm:$0xf] %vm1496, %v1483
  %1534 = vst.msk [vmem:[%s3 + $0x94] sm:$0xf] %vm1496, %v1484
  %1535 = vst.msk [vmem:[%s3 + $0x98] sm:$0xf] %vm1496, %v1485
  %1536 = vst.msk [vmem:[%s3 + $0x9c] sm:$0xf] %vm1496, %v1486
  %1537 = vst.msk [vmem:[%s3 + $0xa0] sm:$0xf] %vm1496, %v1487
  %1538 = vst.msk [vmem:[%s3 + $0xa4] sm:$0xf] %vm1496, %v1488
  %1539 = vst.msk [vmem:[%s3 + $0xa8] sm:$0xf] %vm1496, %v1489
  %1540 = vst.msk [vmem:[%s3 + $0xac] sm:$0xf] %vm1496, %v1490
  %1541 = vst.msk [vmem:[%s3 + $0xb0] sm:$0xf] %vm1496, %v1491
  %1542 = vst.msk [vmem:[%s3 + $0xb4] sm:$0xf] %vm1496, %v1492
  %1543 = vst.msk [vmem:[%s3 + $0xb8] sm:$0xf] %vm1496, %v1493
  %1544 = vst.msk [vmem:[%s3 + $0xbc] sm:$0xf] %vm1496, %v1494
  %1545 = vst.msk [vmem:[%s3 + $0xc0] sm:$0xf] %vm1496, %v1495
  // Predicated region
  $region14: #{carla_encoder_forward.6} parent=0 // pred_check
    _
  $region15: #{carla_encoder_forward.6} parent=0 // pred_check_branch
    %1547 = sbr.rel (0) target = $region17
  $region16: #{carla_encoder_forward.6} parent=0 // pred_region
    _
  $region17: #{carla_encoder_forward.6} parent=0 // pred_fallthru
    _
  // Predicated region
  $region18: #{carla_encoder_forward.6} parent=0 // pred_check
    _
  $region19: #{carla_encoder_forward.6} parent=0 // pred_check_branch
    %1549 = sbr.rel (0) target = $region21
  $region20: #{carla_encoder_forward.6} parent=0 // pred_region
    _
  $region21: #{carla_encoder_forward.6} parent=0 // pred_fallthru
    _

// kernel: carla_encoder_forward.7
$region0: #{carla_encoder_forward.7}
  #allocation0 [shape = 'u32[]', space=smem, size = 0x4, offset = 0x4, fixed_abs, tag = 'smem constant byte address 0x4 - core index']
  #allocation1 [shape = 'u32[72,128]{1,0:T(1,128)}', space=vmem, size = 0x9000, scoped, tag = 'internal scratch']
  %s0 = inlined_call_operand.vmem [shape: bf16[72,1024], index: 0, kind: input, shape index: {}]
  %s1 = inlined_call_operand.vmem [shape: bf16[1024,128], index: 1, kind: input, shape index: {}]
  %s2 = inlined_call_operand.vmem [shape: f32[1,128], index: 2, kind: input, shape index: {}]
  %s3 = inlined_call_operand.vmem [shape: bf16[72,128], index: 3, kind: output, shape index: {}]
  %s4 = sld [smem:[#allocation0]]
  $region22: #{carla_encoder_forward.7} parent=0
    _
  %s6 = ssub.s32 1, %s4
  %s7 = scalar_select 0, %s6, %s4
  // Predicated region
  $region2: #{carla_encoder_forward.7} parent=0 // pred_check
    _
  $region3: #{carla_encoder_forward.7} parent=0 // pred_check_branch
    %9 = sbr.rel (0) target = $region5
  $region4: #{carla_encoder_forward.7} parent=0 // pred_region
    _
  $region5: #{carla_encoder_forward.7} parent=0 // pred_fallthru
    _
  // Predicated region
  $region6: #{carla_encoder_forward.7} parent=0 // pred_check
    _
  $region7: #{carla_encoder_forward.7} parent=0 // pred_check_branch
    %11 = sbr.rel (0) target = $region9
  $region8: #{carla_encoder_forward.7} parent=0 // pred_region
    _
  $region9: #{carla_encoder_forward.7} parent=0 // pred_fallthru
    _
  // Predicated region
  $region10: #{carla_encoder_forward.7} parent=0 // pred_check
    _
  $region11: #{carla_encoder_forward.7} parent=0 // pred_check_branch
    %13 = sbr.rel (0) target = $region13
  $region12: #{carla_encoder_forward.7} parent=0 // pred_region
    _
  $region13: #{carla_encoder_forward.7} parent=0 // pred_fallthru
    _
  %v14 = vld [vmem:[%s0] sm:$0xff]
  %v15 = vld [vmem:[%s0 + $0x8] sm:$0xff]
  %v16 = vld [vmem:[%s0 + $0x10] sm:$0xff]
  %v17 = vld [vmem:[%s0 + $0x18] sm:$0xff]
  %v18 = vld [vmem:[%s0 + $0x20] sm:$0xff]
  %v19 = vld [vmem:[%s0 + $0x28] sm:$0xff]
  %v20 = vld [vmem:[%s0 + $0x30] sm:$0xff]
  %v21 = vld [vmem:[%s0 + $0x38] sm:$0xff]
  %v22 = vld [vmem:[%s0 + $0x40] sm:$0xff]
  %v23 = vld [vmem:[%s0 + $0x48] sm:$0xff]
  %v24 = vld [vmem:[%s0 + $0x50] sm:$0xff]
  %v25 = vld [vmem:[%s0 + $0x58] sm:$0xff]
  %v26 = vld [vmem:[%s0 + $0x60] sm:$0xff]
  %v27 = vld [vmem:[%s0 + $0x68] sm:$0xff]
  %v28 = vld [vmem:[%s0 + $0x70] sm:$0xff]
  %v29 = vld [vmem:[%s0 + $0x78] sm:$0xff]
  %v30 = vld [vmem:[%s0 + $0x80] sm:$0xff]
  %v31 = vld [vmem:[%s0 + $0x88] sm:$0xff]
  %v32 = vld [vmem:[%s0 + $0x90] sm:$0xff]
  %v33 = vld [vmem:[%s0 + $0x98] sm:$0xff]
  %v34 = vld [vmem:[%s0 + $0xa0] sm:$0xff]
  %v35 = vld [vmem:[%s0 + $0xa8] sm:$0xff]
  %v36 = vld [vmem:[%s0 + $0xb0] sm:$0xff]
  %v37 = vld [vmem:[%s0 + $0xb8] sm:$0xff]
  %v38 = vld [vmem:[%s0 + $0xc0] sm:$0xff]
  %v39 = vld [vmem:[%s0 + $0xc8] sm:$0xff]
  %v40 = vld [vmem:[%s0 + $0xd0] sm:$0xff]
  %v41 = vld [vmem:[%s0 + $0xd8] sm:$0xff]
  %v42 = vld [vmem:[%s0 + $0xe0] sm:$0xff]
  %v43 = vld [vmem:[%s0 + $0xe8] sm:$0xff]
  %v44 = vld [vmem:[%s0 + $0xf0] sm:$0xff]
  %v45 = vld [vmem:[%s0 + $0xf8] sm:$0xff]
  %v46 = vld [vmem:[%s0 + $0x100] sm:$0xff]
  %v47 = vld [vmem:[%s0 + $0x108] sm:$0xff]
  %v48 = vld [vmem:[%s0 + $0x110] sm:$0xff]
  %v49 = vld [vmem:[%s0 + $0x118] sm:$0xff]
  %v50 = vld [vmem:[%s1] sm:$0xf]
  %v51 = vld [vmem:[%s1 + $0x4] sm:$0xf]
  %v52 = vld [vmem:[%s1 + $0x8] sm:$0xf]
  %v53 = vld [vmem:[%s1 + $0xc] sm:$0xf]
  %v54 = vld [vmem:[%s1 + $0x10] sm:$0xf]
  %v55 = vld [vmem:[%s1 + $0x14] sm:$0xf]
  %v56 = vld [vmem:[%s1 + $0x18] sm:$0xf]
  %v57 = vld [vmem:[%s1 + $0x1c] sm:$0xf]
  %v58 = vld [vmem:[%s1 + $0x20] sm:$0xf]
  %v59 = vld [vmem:[%s1 + $0x24] sm:$0xf]
  %v60 = vld [vmem:[%s1 + $0x28] sm:$0xf]
  %v61 = vld [vmem:[%s1 + $0x2c] sm:$0xf]
  %v62 = vld [vmem:[%s1 + $0x30] sm:$0xf]
  %v63 = vld [vmem:[%s1 + $0x34] sm:$0xf]
  %v64 = vld [vmem:[%s1 + $0x38] sm:$0xf]
  %v65 = vld [vmem:[%s1 + $0x3c] sm:$0xf]
  %v66 = vld [vmem:[%s1 + $0x40] sm:$0xf]
  %v67 = vld [vmem:[%s1 + $0x44] sm:$0xf]
  %v68 = vld [vmem:[%s1 + $0x48] sm:$0xf]
  %v69 = vld [vmem:[%s1 + $0x4c] sm:$0xf]
  %v70 = vld [vmem:[%s1 + $0x50] sm:$0xf]
  %v71 = vld [vmem:[%s1 + $0x54] sm:$0xf]
  %v72 = vld [vmem:[%s1 + $0x58] sm:$0xf]
  %v73 = vld [vmem:[%s1 + $0x5c] sm:$0xf]
  %v74 = vld [vmem:[%s1 + $0x60] sm:$0xf]
  %v75 = vld [vmem:[%s1 + $0x64] sm:$0xf]
  %v76 = vld [vmem:[%s1 + $0x68] sm:$0xf]
  %v77 = vld [vmem:[%s1 + $0x6c] sm:$0xf]
  %v78 = vld [vmem:[%s1 + $0x70] sm:$0xf]
  %v79 = vld [vmem:[%s1 + $0x74] sm:$0xf]
  %v80 = vld [vmem:[%s1 + $0x78] sm:$0xf]
  %v81 = vld [vmem:[%s1 + $0x7c] sm:$0xf]
  %v82 = vld [vmem:[%s1 + $0x80] sm:$0xf]
  %v83 = vld [vmem:[%s1 + $0x84] sm:$0xf]
  %v84 = vld [vmem:[%s1 + $0x88] sm:$0xf]
  %v85 = vld [vmem:[%s1 + $0x8c] sm:$0xf]
  %v86 = vld [vmem:[%s1 + $0x90] sm:$0xf]
  %v87 = vld [vmem:[%s1 + $0x94] sm:$0xf]
  %v88 = vld [vmem:[%s1 + $0x98] sm:$0xf]
  %v89 = vld [vmem:[%s1 + $0x9c] sm:$0xf]
  %v90 = vld [vmem:[%s1 + $0xa0] sm:$0xf]
  %v91 = vld [vmem:[%s1 + $0xa4] sm:$0xf]
  %v92 = vld [vmem:[%s1 + $0xa8] sm:$0xf]
  %v93 = vld [vmem:[%s1 + $0xac] sm:$0xf]
  %v94 = vld [vmem:[%s1 + $0xb0] sm:$0xf]
  %v95 = vld [vmem:[%s1 + $0xb4] sm:$0xf]
  %v96 = vld [vmem:[%s1 + $0xb8] sm:$0xf]
  %v97 = vld [vmem:[%s1 + $0xbc] sm:$0xf]
  %v98 = vld [vmem:[%s1 + $0xc0] sm:$0xf]
  %v99 = vld [vmem:[%s1 + $0xc4] sm:$0xf]
  %v100 = vld [vmem:[%s1 + $0xc8] sm:$0xf]
  %v101 = vld [vmem:[%s1 + $0xcc] sm:$0xf]
  %v102 = vld [vmem:[%s1 + $0xd0] sm:$0xf]
  %v103 = vld [vmem:[%s1 + $0xd4] sm:$0xf]
  %v104 = vld [vmem:[%s1 + $0xd8] sm:$0xf]
  %v105 = vld [vmem:[%s1 + $0xdc] sm:$0xf]
  %v106 = vld [vmem:[%s1 + $0xe0] sm:$0xf]
  %v107 = vld [vmem:[%s1 + $0xe4] sm:$0xf]
  %v108 = vld [vmem:[%s1 + $0xe8] sm:$0xf]
  %v109 = vld [vmem:[%s1 + $0xec] sm:$0xf]
  %v110 = vld [vmem:[%s1 + $0xf0] sm:$0xf]
  %v111 = vld [vmem:[%s1 + $0xf4] sm:$0xf]
  %v112 = vld [vmem:[%s1 + $0xf8] sm:$0xf]
  %v113 = vld [vmem:[%s1 + $0xfc] sm:$0xf]
  %v114 = vld [vmem:[%s1 + $0x100] sm:$0xf]
  %v115 = vld [vmem:[%s1 + $0x104] sm:$0xf]
  %v116 = vld [vmem:[%s1 + $0x108] sm:$0xf]
  %v117 = vld [vmem:[%s1 + $0x10c] sm:$0xf]
  %v118 = vld [vmem:[%s1 + $0x110] sm:$0xf]
  %v119 = vld [vmem:[%s1 + $0x114] sm:$0xf]
  %v120 = vld [vmem:[%s1 + $0x118] sm:$0xf]
  %v121 = vld [vmem:[%s1 + $0x11c] sm:$0xf]
  %v122 = vld [vmem:[%s1 + $0x120] sm:$0xf]
  %v123 = vld [vmem:[%s1 + $0x124] sm:$0xf]
  %v124 = vld [vmem:[%s1 + $0x128] sm:$0xf]
  %v125 = vld [vmem:[%s1 + $0x12c] sm:$0xf]
  %v126 = vld [vmem:[%s1 + $0x130] sm:$0xf]
  %v127 = vld [vmem:[%s1 + $0x134] sm:$0xf]
  %v128 = vld [vmem:[%s1 + $0x138] sm:$0xf]
  %v129 = vld [vmem:[%s1 + $0x13c] sm:$0xf]
  %v130 = vld [vmem:[%s1 + $0x140] sm:$0xf]
  %v131 = vld [vmem:[%s1 + $0x144] sm:$0xf]
  %v132 = vld [vmem:[%s1 + $0x148] sm:$0xf]
  %v133 = vld [vmem:[%s1 + $0x14c] sm:$0xf]
  %v134 = vld [vmem:[%s1 + $0x150] sm:$0xf]
  %v135 = vld [vmem:[%s1 + $0x154] sm:$0xf]
  %v136 = vld [vmem:[%s1 + $0x158] sm:$0xf]
  %v137 = vld [vmem:[%s1 + $0x15c] sm:$0xf]
  %v138 = vld [vmem:[%s1 + $0x160] sm:$0xf]
  %v139 = vld [vmem:[%s1 + $0x164] sm:$0xf]
  %v140 = vld [vmem:[%s1 + $0x168] sm:$0xf]
  %v141 = vld [vmem:[%s1 + $0x16c] sm:$0xf]
  %v142 = vld [vmem:[%s1 + $0x170] sm:$0xf]
  %v143 = vld [vmem:[%s1 + $0x174] sm:$0xf]
  %v144 = vld [vmem:[%s1 + $0x178] sm:$0xf]
  %v145 = vld [vmem:[%s1 + $0x17c] sm:$0xf]
  %v146 = vld [vmem:[%s1 + $0x180] sm:$0xf]
  %v147 = vld [vmem:[%s1 + $0x184] sm:$0xf]
  %v148 = vld [vmem:[%s1 + $0x188] sm:$0xf]
  %v149 = vld [vmem:[%s1 + $0x18c] sm:$0xf]
  %v150 = vld [vmem:[%s1 + $0x190] sm:$0xf]
  %v151 = vld [vmem:[%s1 + $0x194] sm:$0xf]
  %v152 = vld [vmem:[%s1 + $0x198] sm:$0xf]
  %v153 = vld [vmem:[%s1 + $0x19c] sm:$0xf]
  %v154 = vld [vmem:[%s1 + $0x1a0] sm:$0xf]
  %v155 = vld [vmem:[%s1 + $0x1a4] sm:$0xf]
  %v156 = vld [vmem:[%s1 + $0x1a8] sm:$0xf]
  %v157 = vld [vmem:[%s1 + $0x1ac] sm:$0xf]
  %v158 = vld [vmem:[%s1 + $0x1b0] sm:$0xf]
  %v159 = vld [vmem:[%s1 + $0x1b4] sm:$0xf]
  %v160 = vld [vmem:[%s1 + $0x1b8] sm:$0xf]
  %v161 = vld [vmem:[%s1 + $0x1bc] sm:$0xf]
  %v162 = vld [vmem:[%s1 + $0x1c0] sm:$0xf]
  %v163 = vld [vmem:[%s1 + $0x1c4] sm:$0xf]
  %v164 = vld [vmem:[%s1 + $0x1c8] sm:$0xf]
  %v165 = vld [vmem:[%s1 + $0x1cc] sm:$0xf]
  %v166 = vld [vmem:[%s1 + $0x1d0] sm:$0xf]
  %v167 = vld [vmem:[%s1 + $0x1d4] sm:$0xf]
  %v168 = vld [vmem:[%s1 + $0x1d8] sm:$0xf]
  %v169 = vld [vmem:[%s1 + $0x1dc] sm:$0xf]
  %v170 = vld [vmem:[%s1 + $0x1e0] sm:$0xf]
  %v171 = vld [vmem:[%s1 + $0x1e4] sm:$0xf]
  %v172 = vld [vmem:[%s1 + $0x1e8] sm:$0xf]
  %v173 = vld [vmem:[%s1 + $0x1ec] sm:$0xf]
  %v174 = vld [vmem:[%s1 + $0x1f0] sm:$0xf]
  %v175 = vld [vmem:[%s1 + $0x1f4] sm:$0xf]
  %v176 = vld [vmem:[%s1 + $0x1f8] sm:$0xf]
  %v177 = vld [vmem:[%s1 + $0x1fc] sm:$0xf]
  %v178 = vld [vmem:[%s2] sm:$0x1]
  %v180 = vperm.slane %v178, 0
  %v218 = vunpack.c.l.b16 %v14
  %v219 = vunpack.c.h.b16 %v14
  %v220 = vunpack.c.l.b16 %v15
  %v221 = vunpack.c.h.b16 %v15
  %v222 = vunpack.c.l.b16 %v16
  %v223 = vunpack.c.h.b16 %v16
  %v224 = vunpack.c.l.b16 %v17
  %v225 = vunpack.c.h.b16 %v17
  %v226 = vunpack.c.l.b16 %v18
  %v227 = vunpack.c.h.b16 %v18
  %v228 = vunpack.c.l.b16 %v19
  %v229 = vunpack.c.h.b16 %v19
  %v230 = vunpack.c.l.b16 %v20
  %v231 = vunpack.c.h.b16 %v20
  %v232 = vunpack.c.l.b16 %v21
  %v233 = vunpack.c.h.b16 %v21
  %v234 = vunpack.c.l.b16 %v22
  %v235 = vunpack.c.h.b16 %v22
  %v236 = vunpack.c.l.b16 %v23
  %v237 = vunpack.c.h.b16 %v23
  %v238 = vunpack.c.l.b16 %v24
  %v239 = vunpack.c.h.b16 %v24
  %v240 = vunpack.c.l.b16 %v25
  %v241 = vunpack.c.h.b16 %v25
  %v242 = vunpack.c.l.b16 %v26
  %v243 = vunpack.c.h.b16 %v26
  %v244 = vunpack.c.l.b16 %v27
  %v245 = vunpack.c.h.b16 %v27
  %v246 = vunpack.c.l.b16 %v28
  %v247 = vunpack.c.h.b16 %v28
  %v248 = vunpack.c.l.b16 %v29
  %v249 = vunpack.c.h.b16 %v29
  %v250 = vunpack.c.l.b16 %v30
  %v251 = vunpack.c.h.b16 %v30
  %v252 = vunpack.c.l.b16 %v31
  %v253 = vunpack.c.h.b16 %v31
  %v254 = vunpack.c.l.b16 %v32
  %v255 = vunpack.c.h.b16 %v32
  %v256 = vunpack.c.l.b16 %v33
  %v257 = vunpack.c.h.b16 %v33
  %v258 = vunpack.c.l.b16 %v34
  %v259 = vunpack.c.h.b16 %v34
  %v260 = vunpack.c.l.b16 %v35
  %v261 = vunpack.c.h.b16 %v35
  %v262 = vunpack.c.l.b16 %v36
  %v263 = vunpack.c.h.b16 %v36
  %v264 = vunpack.c.l.b16 %v37
  %v265 = vunpack.c.h.b16 %v37
  %v266 = vunpack.c.l.b16 %v38
  %v267 = vunpack.c.h.b16 %v38
  %v268 = vunpack.c.l.b16 %v39
  %v269 = vunpack.c.h.b16 %v39
  %v270 = vunpack.c.l.b16 %v40
  %v271 = vunpack.c.h.b16 %v40
  %v272 = vunpack.c.l.b16 %v41
  %v273 = vunpack.c.h.b16 %v41
  %v274 = vunpack.c.l.b16 %v42
  %v275 = vunpack.c.h.b16 %v42
  %v276 = vunpack.c.l.b16 %v43
  %v277 = vunpack.c.h.b16 %v43
  %v278 = vunpack.c.l.b16 %v44
  %v279 = vunpack.c.h.b16 %v44
  %v280 = vunpack.c.l.b16 %v45
  %v281 = vunpack.c.h.b16 %v45
  %v282 = vunpack.c.l.b16 %v46
  %v283 = vunpack.c.h.b16 %v46
  %v284 = vunpack.c.l.b16 %v47
  %v285 = vunpack.c.h.b16 %v47
  %v286 = vunpack.c.l.b16 %v48
  %v287 = vunpack.c.h.b16 %v48
  %v288 = vunpack.c.l.b16 %v49
  %v289 = vunpack.c.h.b16 %v49
  %v290 = vpack.c.b16 %v226, %v218
  %v291 = vpack.c.b16 %v227, %v219
  %v292 = vpack.c.b16 %v228, %v220
  %v293 = vpack.c.b16 %v229, %v221
  %v294 = vpack.c.b16 %v230, %v222
  %v295 = vpack.c.b16 %v231, %v223
  %v296 = vpack.c.b16 %v232, %v224
  %v297 = vpack.c.b16 %v233, %v225
  %v298 = vpack.c.b16 %v242, %v234
  %v299 = vpack.c.b16 %v243, %v235
  %v300 = vpack.c.b16 %v244, %v236
  %v301 = vpack.c.b16 %v245, %v237
  %v302 = vpack.c.b16 %v246, %v238
  %v303 = vpack.c.b16 %v247, %v239
  %v304 = vpack.c.b16 %v248, %v240
  %v305 = vpack.c.b16 %v249, %v241
  %v306 = vpack.c.b16 %v258, %v250
  %v307 = vpack.c.b16 %v259, %v251
  %v308 = vpack.c.b16 %v260, %v252
  %v309 = vpack.c.b16 %v261, %v253
  %v310 = vpack.c.b16 %v262, %v254
  %v311 = vpack.c.b16 %v263, %v255
  %v312 = vpack.c.b16 %v264, %v256
  %v313 = vpack.c.b16 %v265, %v257
  %v314 = vpack.c.b16 %v274, %v266
  %v315 = vpack.c.b16 %v275, %v267
  %v316 = vpack.c.b16 %v276, %v268
  %v317 = vpack.c.b16 %v277, %v269
  %v318 = vpack.c.b16 %v278, %v270
  %v319 = vpack.c.b16 %v279, %v271
  %v320 = vpack.c.b16 %v280, %v272
  %v321 = vpack.c.b16 %v281, %v273
  %v322 = vpack.c.b16 %v282, %v282
  %v323 = vpack.c.b16 %v283, %v283
  %v324 = vpack.c.b16 %v284, %v284
  %v325 = vpack.c.b16 %v285, %v285
  %v326 = vpack.c.b16 %v286, %v286
  %v327 = vpack.c.b16 %v287, %v287
  %v328 = vpack.c.b16 %v288, %v288
  %v329 = vpack.c.b16 %v289, %v289
  %v498 = vunpack.c.l.b16 %v50
  %v499 = vunpack.c.l.b16 %v51
  %v500 = vunpack.c.l.b16 %v52
  %v501 = vunpack.c.l.b16 %v53
  %v502 = vunpack.c.l.b16 %v54
  %v503 = vunpack.c.l.b16 %v55
  %v504 = vunpack.c.l.b16 %v56
  %v505 = vunpack.c.l.b16 %v57
  %v506 = vunpack.c.l.b16 %v58
  %v507 = vunpack.c.l.b16 %v59
  %v508 = vunpack.c.l.b16 %v60
  %v509 = vunpack.c.l.b16 %v61
  %v510 = vunpack.c.l.b16 %v62
  %v511 = vunpack.c.l.b16 %v63
  %v512 = vunpack.c.l.b16 %v64
  %v513 = vunpack.c.l.b16 %v65
  %v514 = vunpack.c.l.b16 %v66
  %v515 = vunpack.c.l.b16 %v67
  %v516 = vunpack.c.l.b16 %v68
  %v517 = vunpack.c.l.b16 %v69
  %v518 = vunpack.c.l.b16 %v70
  %v519 = vunpack.c.l.b16 %v71
  %v520 = vunpack.c.l.b16 %v72
  %v521 = vunpack.c.l.b16 %v73
  %v522 = vunpack.c.l.b16 %v74
  %v523 = vunpack.c.l.b16 %v75
  %v524 = vunpack.c.l.b16 %v76
  %v525 = vunpack.c.l.b16 %v77
  %v526 = vunpack.c.l.b16 %v78
  %v527 = vunpack.c.l.b16 %v79
  %v528 = vunpack.c.l.b16 %v80
  %v529 = vunpack.c.l.b16 %v81
  %v530 = vunpack.c.l.b16 %v82
  %v531 = vunpack.c.l.b16 %v83
  %v532 = vunpack.c.l.b16 %v84
  %v533 = vunpack.c.l.b16 %v85
  %v534 = vunpack.c.l.b16 %v86
  %v535 = vunpack.c.l.b16 %v87
  %v536 = vunpack.c.l.b16 %v88
  %v537 = vunpack.c.l.b16 %v89
  %v538 = vunpack.c.l.b16 %v90
  %v539 = vunpack.c.l.b16 %v91
  %v540 = vunpack.c.l.b16 %v92
  %v541 = vunpack.c.l.b16 %v93
  %v542 = vunpack.c.l.b16 %v94
  %v543 = vunpack.c.l.b16 %v95
  %v544 = vunpack.c.l.b16 %v96
  %v545 = vunpack.c.l.b16 %v97
  %v546 = vunpack.c.l.b16 %v98
  %v547 = vunpack.c.l.b16 %v99
  %v548 = vunpack.c.l.b16 %v100
  %v549 = vunpack.c.l.b16 %v101
  %v550 = vunpack.c.l.b16 %v102
  %v551 = vunpack.c.l.b16 %v103
  %v552 = vunpack.c.l.b16 %v104
  %v553 = vunpack.c.l.b16 %v105
  %v554 = vunpack.c.l.b16 %v106
  %v555 = vunpack.c.l.b16 %v107
  %v556 = vunpack.c.l.b16 %v108
  %v557 = vunpack.c.l.b16 %v109
  %v558 = vunpack.c.l.b16 %v110
  %v559 = vunpack.c.l.b16 %v111
  %v560 = vunpack.c.l.b16 %v112
  %v561 = vunpack.c.l.b16 %v113
  %v562 = vunpack.c.l.b16 %v114
  %v563 = vunpack.c.l.b16 %v115
  %v564 = vunpack.c.l.b16 %v116
  %v565 = vunpack.c.l.b16 %v117
  %v566 = vunpack.c.l.b16 %v118
  %v567 = vunpack.c.l.b16 %v119
  %v568 = vunpack.c.l.b16 %v120
  %v569 = vunpack.c.l.b16 %v121
  %v570 = vunpack.c.l.b16 %v122
  %v571 = vunpack.c.l.b16 %v123
  %v572 = vunpack.c.l.b16 %v124
  %v573 = vunpack.c.l.b16 %v125
  %v574 = vunpack.c.l.b16 %v126
  %v575 = vunpack.c.l.b16 %v127
  %v576 = vunpack.c.l.b16 %v128
  %v577 = vunpack.c.l.b16 %v129
  %v578 = vunpack.c.l.b16 %v130
  %v579 = vunpack.c.l.b16 %v131
  %v580 = vunpack.c.l.b16 %v132
  %v581 = vunpack.c.l.b16 %v133
  %v582 = vunpack.c.l.b16 %v134
  %v583 = vunpack.c.l.b16 %v135
  %v584 = vunpack.c.l.b16 %v136
  %v585 = vunpack.c.l.b16 %v137
  %v586 = vunpack.c.l.b16 %v138
  %v587 = vunpack.c.l.b16 %v139
  %v588 = vunpack.c.l.b16 %v140
  %v589 = vunpack.c.l.b16 %v141
  %v590 = vunpack.c.l.b16 %v142
  %v591 = vunpack.c.l.b16 %v143
  %v592 = vunpack.c.l.b16 %v144
  %v593 = vunpack.c.l.b16 %v145
  %v594 = vunpack.c.l.b16 %v146
  %v595 = vunpack.c.l.b16 %v147
  %v596 = vunpack.c.l.b16 %v148
  %v597 = vunpack.c.l.b16 %v149
  %v598 = vunpack.c.l.b16 %v150
  %v599 = vunpack.c.l.b16 %v151
  %v600 = vunpack.c.l.b16 %v152
  %v601 = vunpack.c.l.b16 %v153
  %v602 = vunpack.c.l.b16 %v154
  %v603 = vunpack.c.l.b16 %v155
  %v604 = vunpack.c.l.b16 %v156
  %v605 = vunpack.c.l.b16 %v157
  %v606 = vunpack.c.l.b16 %v158
  %v607 = vunpack.c.l.b16 %v159
  %v608 = vunpack.c.l.b16 %v160
  %v609 = vunpack.c.l.b16 %v161
  %v610 = vunpack.c.l.b16 %v162
  %v611 = vunpack.c.l.b16 %v163
  %v612 = vunpack.c.l.b16 %v164
  %v613 = vunpack.c.l.b16 %v165
  %v614 = vunpack.c.l.b16 %v166
  %v615 = vunpack.c.l.b16 %v167
  %v616 = vunpack.c.l.b16 %v168
  %v617 = vunpack.c.l.b16 %v169
  %v618 = vunpack.c.l.b16 %v170
  %v619 = vunpack.c.l.b16 %v171
  %v620 = vunpack.c.l.b16 %v172
  %v621 = vunpack.c.l.b16 %v173
  %v622 = vunpack.c.l.b16 %v174
  %v623 = vunpack.c.l.b16 %v175
  %v624 = vunpack.c.l.b16 %v176
  %v625 = vunpack.c.l.b16 %v177
  %v626 = vpack.c.b16 %v499, %v498
  %v627 = vpack.c.b16 %v501, %v500
  %v628 = vpack.c.b16 %v503, %v502
  %v629 = vpack.c.b16 %v505, %v504
  %v630 = vpack.c.b16 %v507, %v506
  %v631 = vpack.c.b16 %v509, %v508
  %v632 = vpack.c.b16 %v511, %v510
  %v633 = vpack.c.b16 %v513, %v512
  %v634 = vpack.c.b16 %v515, %v514
  %v635 = vpack.c.b16 %v517, %v516
  %v636 = vpack.c.b16 %v519, %v518
  %v637 = vpack.c.b16 %v521, %v520
  %v638 = vpack.c.b16 %v523, %v522
  %v639 = vpack.c.b16 %v525, %v524
  %v640 = vpack.c.b16 %v527, %v526
  %v641 = vpack.c.b16 %v529, %v528
  %v642 = vpack.c.b16 %v531, %v530
  %v643 = vpack.c.b16 %v533, %v532
  %v644 = vpack.c.b16 %v535, %v534
  %v645 = vpack.c.b16 %v537, %v536
  %v646 = vpack.c.b16 %v539, %v538
  %v647 = vpack.c.b16 %v541, %v540
  %v648 = vpack.c.b16 %v543, %v542
  %v649 = vpack.c.b16 %v545, %v544
  %v650 = vpack.c.b16 %v547, %v546
  %v651 = vpack.c.b16 %v549, %v548
  %v652 = vpack.c.b16 %v551, %v550
  %v653 = vpack.c.b16 %v553, %v552
  %v654 = vpack.c.b16 %v555, %v554
  %v655 = vpack.c.b16 %v557, %v556
  %v656 = vpack.c.b16 %v559, %v558
  %v657 = vpack.c.b16 %v561, %v560
  %v658 = vpack.c.b16 %v563, %v562
  %v659 = vpack.c.b16 %v565, %v564
  %v660 = vpack.c.b16 %v567, %v566
  %v661 = vpack.c.b16 %v569, %v568
  %v662 = vpack.c.b16 %v571, %v570
  %v663 = vpack.c.b16 %v573, %v572
  %v664 = vpack.c.b16 %v575, %v574
  %v665 = vpack.c.b16 %v577, %v576
  %v666 = vpack.c.b16 %v579, %v578
  %v667 = vpack.c.b16 %v581, %v580
  %v668 = vpack.c.b16 %v583, %v582
  %v669 = vpack.c.b16 %v585, %v584
  %v670 = vpack.c.b16 %v587, %v586
  %v671 = vpack.c.b16 %v589, %v588
  %v672 = vpack.c.b16 %v591, %v590
  %v673 = vpack.c.b16 %v593, %v592
  %v674 = vpack.c.b16 %v595, %v594
  %v675 = vpack.c.b16 %v597, %v596
  %v676 = vpack.c.b16 %v599, %v598
  %v677 = vpack.c.b16 %v601, %v600
  %v678 = vpack.c.b16 %v603, %v602
  %v679 = vpack.c.b16 %v605, %v604
  %v680 = vpack.c.b16 %v607, %v606
  %v681 = vpack.c.b16 %v609, %v608
  %v682 = vpack.c.b16 %v611, %v610
  %v683 = vpack.c.b16 %v613, %v612
  %v684 = vpack.c.b16 %v615, %v614
  %v685 = vpack.c.b16 %v617, %v616
  %v686 = vpack.c.b16 %v619, %v618
  %v687 = vpack.c.b16 %v621, %v620
  %v688 = vpack.c.b16 %v623, %v622
  %v689 = vpack.c.b16 %v625, %v624
  %754 = vmatpush.bf16.msra.mxu0 %v633
  %755 = vmatpush.bf16.msra.mxu0 %v632
  %756 = vmatpush.bf16.msra.mxu0 %v631
  %757 = vmatpush.bf16.msra.mxu0 %v630
  %758 = vmatpush.bf16.msra.mxu0 %v629
  %759 = vmatpush.bf16.msra.mxu0 %v628
  %760 = vmatpush.bf16.msra.mxu0 %v627
  %761 = vmatpush.bf16.msra.mxu0 %v626
  %762 = vmatmul.bf16.gmra.mxu0 %v290
  %v763 = vpop.f32.mrf.mxu0
  %v764 = vadd.f32 %v180, %v763
  %v765 = vpop.f32.mrf.mxu0
  %v766 = vadd.f32 %v180, %v765
  %767 = vmatmul.bf16.gmra.mxu0 %v298
  %v768 = vpop.f32.mrf.mxu0
  %v769 = vadd.f32 %v180, %v768
  %v770 = vpop.f32.mrf.mxu0
  %v771 = vadd.f32 %v180, %v770
  %772 = vmatmul.bf16.gmra.mxu0 %v306
  %v773 = vpop.f32.mrf.mxu0
  %v774 = vadd.f32 %v180, %v773
  %v775 = vpop.f32.mrf.mxu0
  %v776 = vadd.f32 %v180, %v775
  %777 = vmatmul.bf16.gmra.mxu0 %v314
  %v778 = vpop.f32.mrf.mxu0
  %v779 = vadd.f32 %v180, %v778
  %v780 = vpop.f32.mrf.mxu0
  %v781 = vadd.f32 %v180, %v780
  %782 = vmatmul.bf16.gmra.mxu0 %v322
  %v783 = vpop.f32.mrf.mxu0
  %v784 = vadd.f32 %v180, %v783
  %v785 = vpop.f32.mrf.mxu0
  %786 = vdwg.mxu0
  %787 = vmatpush.bf16.msra.mxu0 %v641
  %788 = vmatpush.bf16.msra.mxu0 %v640
  %789 = vmatpush.bf16.msra.mxu0 %v639
  %790 = vmatpush.bf16.msra.mxu0 %v638
  %791 = vmatpush.bf16.msra.mxu0 %v637
  %792 = vmatpush.bf16.msra.mxu0 %v636
  %793 = vmatpush.bf16.msra.mxu0 %v635
  %794 = vmatpush.bf16.msra.mxu0 %v634
  %795 = vmatmul.bf16.gmra.mxu0 %v291
  %v796 = vpop.f32.mrf.mxu0
  %v797 = vadd.f32 %v764, %v796
  %v798 = vpop.f32.mrf.mxu0
  %v799 = vadd.f32 %v766, %v798
  %800 = vmatmul.bf16.gmra.mxu0 %v299
  %v801 = vpop.f32.mrf.mxu0
  %v802 = vadd.f32 %v769, %v801
  %v803 = vpop.f32.mrf.mxu0
  %v804 = vadd.f32 %v771, %v803
  %805 = vmatmul.bf16.gmra.mxu0 %v307
  %v806 = vpop.f32.mrf.mxu0
  %v807 = vadd.f32 %v774, %v806
  %v808 = vpop.f32.mrf.mxu0
  %v809 = vadd.f32 %v776, %v808
  %810 = vmatmul.bf16.gmra.mxu0 %v315
  %v811 = vpop.f32.mrf.mxu0
  %v812 = vadd.f32 %v779, %v811
  %v813 = vpop.f32.mrf.mxu0
  %v814 = vadd.f32 %v781, %v813
  %815 = vmatmul.bf16.gmra.mxu0 %v323
  %v816 = vpop.f32.mrf.mxu0
  %v817 = vadd.f32 %v784, %v816
  %v818 = vpop.f32.mrf.mxu0
  %819 = vdwg.mxu0
  %820 = vmatpush.bf16.msra.mxu0 %v649
  %821 = vmatpush.bf16.msra.mxu0 %v648
  %822 = vmatpush.bf16.msra.mxu0 %v647
  %823 = vmatpush.bf16.msra.mxu0 %v646
  %824 = vmatpush.bf16.msra.mxu0 %v645
  %825 = vmatpush.bf16.msra.mxu0 %v644
  %826 = vmatpush.bf16.msra.mxu0 %v643
  %827 = vmatpush.bf16.msra.mxu0 %v642
  %828 = vmatmul.bf16.gmra.mxu0 %v292
  %v829 = vpop.f32.mrf.mxu0
  %v830 = vadd.f32 %v797, %v829
  %v831 = vpop.f32.mrf.mxu0
  %v832 = vadd.f32 %v799, %v831
  %833 = vmatmul.bf16.gmra.mxu0 %v300
  %v834 = vpop.f32.mrf.mxu0
  %v835 = vadd.f32 %v802, %v834
  %v836 = vpop.f32.mrf.mxu0
  %v837 = vadd.f32 %v804, %v836
  %838 = vmatmul.bf16.gmra.mxu0 %v308
  %v839 = vpop.f32.mrf.mxu0
  %v840 = vadd.f32 %v807, %v839
  %v841 = vpop.f32.mrf.mxu0
  %v842 = vadd.f32 %v809, %v841
  %843 = vmatmul.bf16.gmra.mxu0 %v316
  %v844 = vpop.f32.mrf.mxu0
  %v845 = vadd.f32 %v812, %v844
  %v846 = vpop.f32.mrf.mxu0
  %v847 = vadd.f32 %v814, %v846
  %848 = vmatmul.bf16.gmra.mxu0 %v324
  %v849 = vpop.f32.mrf.mxu0
  %v850 = vadd.f32 %v817, %v849
  %v851 = vpop.f32.mrf.mxu0
  %852 = vdwg.mxu0
  %853 = vmatpush.bf16.msra.mxu0 %v657
  %854 = vmatpush.bf16.msra.mxu0 %v656
  %855 = vmatpush.bf16.msra.mxu0 %v655
  %856 = vmatpush.bf16.msra.mxu0 %v654
  %857 = vmatpush.bf16.msra.mxu0 %v653
  %858 = vmatpush.bf16.msra.mxu0 %v652
  %859 = vmatpush.bf16.msra.mxu0 %v651
  %860 = vmatpush.bf16.msra.mxu0 %v650
  %861 = vmatmul.bf16.gmra.mxu0 %v293
  %v862 = vpop.f32.mrf.mxu0
  %v863 = vadd.f32 %v830, %v862
  %v864 = vpop.f32.mrf.mxu0
  %v865 = vadd.f32 %v832, %v864
  %866 = vmatmul.bf16.gmra.mxu0 %v301
  %v867 = vpop.f32.mrf.mxu0
  %v868 = vadd.f32 %v835, %v867
  %v869 = vpop.f32.mrf.mxu0
  %v870 = vadd.f32 %v837, %v869
  %871 = vmatmul.bf16.gmra.mxu0 %v309
  %v872 = vpop.f32.mrf.mxu0
  %v873 = vadd.f32 %v840, %v872
  %v874 = vpop.f32.mrf.mxu0
  %v875 = vadd.f32 %v842, %v874
  %876 = vmatmul.bf16.gmra.mxu0 %v317
  %v877 = vpop.f32.mrf.mxu0
  %v878 = vadd.f32 %v845, %v877
  %v879 = vpop.f32.mrf.mxu0
  %v880 = vadd.f32 %v847, %v879
  %881 = vmatmul.bf16.gmra.mxu0 %v325
  %v882 = vpop.f32.mrf.mxu0
  %v883 = vadd.f32 %v850, %v882
  %v884 = vpop.f32.mrf.mxu0
  %885 = vdwg.mxu0
  %886 = vmatpush.bf16.msra.mxu0 %v665
  %887 = vmatpush.bf16.msra.mxu0 %v664
  %888 = vmatpush.bf16.msra.mxu0 %v663
  %889 = vmatpush.bf16.msra.mxu0 %v662
  %890 = vmatpush.bf16.msra.mxu0 %v661
  %891 = vmatpush.bf16.msra.mxu0 %v660
  %892 = vmatpush.bf16.msra.mxu0 %v659
  %893 = vmatpush.bf16.msra.mxu0 %v658
  %894 = vmatmul.bf16.gmra.mxu0 %v294
  %v895 = vpop.f32.mrf.mxu0
  %v896 = vadd.f32 %v863, %v895
  %v897 = vpop.f32.mrf.mxu0
  %v898 = vadd.f32 %v865, %v897
  %899 = vmatmul.bf16.gmra.mxu0 %v302
  %v900 = vpop.f32.mrf.mxu0
  %v901 = vadd.f32 %v868, %v900
  %v902 = vpop.f32.mrf.mxu0
  %v903 = vadd.f32 %v870, %v902
  %904 = vmatmul.bf16.gmra.mxu0 %v310
  %v905 = vpop.f32.mrf.mxu0
  %v906 = vadd.f32 %v873, %v905
  %v907 = vpop.f32.mrf.mxu0
  %v908 = vadd.f32 %v875, %v907
  %909 = vmatmul.bf16.gmra.mxu0 %v318
  %v910 = vpop.f32.mrf.mxu0
  %v911 = vadd.f32 %v878, %v910
  %v912 = vpop.f32.mrf.mxu0
  %v913 = vadd.f32 %v880, %v912
  %914 = vmatmul.bf16.gmra.mxu0 %v326
  %v915 = vpop.f32.mrf.mxu0
  %v916 = vadd.f32 %v883, %v915
  %v917 = vpop.f32.mrf.mxu0
  %918 = vdwg.mxu0
  %919 = vmatpush.bf16.msra.mxu0 %v673
  %920 = vmatpush.bf16.msra.mxu0 %v672
  %921 = vmatpush.bf16.msra.mxu0 %v671
  %922 = vmatpush.bf16.msra.mxu0 %v670
  %923 = vmatpush.bf16.msra.mxu0 %v669
  %924 = vmatpush.bf16.msra.mxu0 %v668
  %925 = vmatpush.bf16.msra.mxu0 %v667
  %926 = vmatpush.bf16.msra.mxu0 %v666
  %927 = vmatmul.bf16.gmra.mxu0 %v295
  %v928 = vpop.f32.mrf.mxu0
  %v929 = vadd.f32 %v896, %v928
  %v930 = vpop.f32.mrf.mxu0
  %v931 = vadd.f32 %v898, %v930
  %932 = vmatmul.bf16.gmra.mxu0 %v303
  %v933 = vpop.f32.mrf.mxu0
  %v934 = vadd.f32 %v901, %v933
  %v935 = vpop.f32.mrf.mxu0
  %v936 = vadd.f32 %v903, %v935
  %937 = vmatmul.bf16.gmra.mxu0 %v311
  %v938 = vpop.f32.mrf.mxu0
  %v939 = vadd.f32 %v906, %v938
  %v940 = vpop.f32.mrf.mxu0
  %v941 = vadd.f32 %v908, %v940
  %942 = vmatmul.bf16.gmra.mxu0 %v319
  %v943 = vpop.f32.mrf.mxu0
  %v944 = vadd.f32 %v911, %v943
  %v945 = vpop.f32.mrf.mxu0
  %v946 = vadd.f32 %v913, %v945
  %947 = vmatmul.bf16.gmra.mxu0 %v327
  %v948 = vpop.f32.mrf.mxu0
  %v949 = vadd.f32 %v916, %v948
  %v950 = vpop.f32.mrf.mxu0
  %951 = vdwg.mxu0
  %952 = vmatpush.bf16.msra.mxu0 %v681
  %953 = vmatpush.bf16.msra.mxu0 %v680
  %954 = vmatpush.bf16.msra.mxu0 %v679
  %955 = vmatpush.bf16.msra.mxu0 %v678
  %956 = vmatpush.bf16.msra.mxu0 %v677
  %957 = vmatpush.bf16.msra.mxu0 %v676
  %958 = vmatpush.bf16.msra.mxu0 %v675
  %959 = vmatpush.bf16.msra.mxu0 %v674
  %960 = vmatmul.bf16.gmra.mxu0 %v296
  %v961 = vpop.f32.mrf.mxu0
  %v962 = vadd.f32 %v929, %v961
  %v963 = vpop.f32.mrf.mxu0
  %v964 = vadd.f32 %v931, %v963
  %965 = vmatmul.bf16.gmra.mxu0 %v304
  %v966 = vpop.f32.mrf.mxu0
  %v967 = vadd.f32 %v934, %v966
  %v968 = vpop.f32.mrf.mxu0
  %v969 = vadd.f32 %v936, %v968
  %970 = vmatmul.bf16.gmra.mxu0 %v312
  %v971 = vpop.f32.mrf.mxu0
  %v972 = vadd.f32 %v939, %v971
  %v973 = vpop.f32.mrf.mxu0
  %v974 = vadd.f32 %v941, %v973
  %975 = vmatmul.bf16.gmra.mxu0 %v320
  %v976 = vpop.f32.mrf.mxu0
  %v977 = vadd.f32 %v944, %v976
  %v978 = vpop.f32.mrf.mxu0
  %v979 = vadd.f32 %v946, %v978
  %980 = vmatmul.bf16.gmra.mxu0 %v328
  %v981 = vpop.f32.mrf.mxu0
  %v982 = vadd.f32 %v949, %v981
  %v983 = vpop.f32.mrf.mxu0
  %984 = vdwg.mxu0
  %985 = vmatpush.bf16.msra.mxu0 %v689
  %986 = vmatpush.bf16.msra.mxu0 %v688
  %987 = vmatpush.bf16.msra.mxu0 %v687
  %988 = vmatpush.bf16.msra.mxu0 %v686
  %989 = vmatpush.bf16.msra.mxu0 %v685
  %990 = vmatpush.bf16.msra.mxu0 %v684
  %991 = vmatpush.bf16.msra.mxu0 %v683
  %992 = vmatpush.bf16.msra.mxu0 %v682
  %993 = vmatmul.bf16.gmra.mxu0 %v297
  %v994 = vpop.f32.mrf.mxu0
  %v995 = vadd.f32 %v962, %v994
  %v996 = vpop.f32.mrf.mxu0
  %v997 = vadd.f32 %v964, %v996
  %998 = vmatmul.bf16.gmra.mxu0 %v305
  %v999 = vpop.f32.mrf.mxu0
  %v1000 = vadd.f32 %v967, %v999
  %v1001 = vpop.f32.mrf.mxu0
  %v1002 = vadd.f32 %v969, %v1001
  %1003 = vmatmul.bf16.gmra.mxu0 %v313
  %v1004 = vpop.f32.mrf.mxu0
  %v1005 = vadd.f32 %v972, %v1004
  %v1006 = vpop.f32.mrf.mxu0
  %v1007 = vadd.f32 %v974, %v1006
  %1008 = vmatmul.bf16.gmra.mxu0 %v321
  %v1009 = vpop.f32.mrf.mxu0
  %v1010 = vadd.f32 %v977, %v1009
  %v1011 = vpop.f32.mrf.mxu0
  %v1012 = vadd.f32 %v979, %v1011
  %1013 = vmatmul.bf16.gmra.mxu0 %v329
  %v1014 = vpop.f32.mrf.mxu0
  %v1015 = vadd.f32 %v982, %v1014
  %v1016 = vpop.f32.mrf.mxu0
  %1017 = vdwg.mxu0
  %v1018 = vmax.f32 %v995, 0.0
  %v1019 = vmax.f32 %v997, 0.0
  %v1020 = vmax.f32 %v1000, 0.0
  %v1021 = vmax.f32 %v1002, 0.0
  %v1022 = vmax.f32 %v1005, 0.0
  %v1023 = vmax.f32 %v1007, 0.0
  %v1024 = vmax.f32 %v1010, 0.0
  %v1025 = vmax.f32 %v1012, 0.0
  %v1026 = vmax.f32 %v1015, 0.0
  %v1027 = vpack.c.bf16 %v1018, %v1018
  %v1028 = vpack.c.bf16 %v1019, %v1019
  %v1029 = vpack.c.bf16 %v1020, %v1020
  %v1030 = vpack.c.bf16 %v1021, %v1021
  %v1031 = vpack.c.bf16 %v1022, %v1022
  %v1032 = vpack.c.bf16 %v1023, %v1023
  %v1033 = vpack.c.bf16 %v1024, %v1024
  %v1034 = vpack.c.bf16 %v1025, %v1025
  %v1035 = vpack.c.bf16 %v1026, %v1026
  %1036 = vst [vmem:[%s3] sm:$0xf] %v1027
  %1037 = vst [vmem:[%s3 + $0x4] sm:$0xf] %v1028
  %1038 = vst [vmem:[%s3 + $0x8] sm:$0xf] %v1029
  %1039 = vst [vmem:[%s3 + $0xc] sm:$0xf] %v1030
  %1040 = vst [vmem:[%s3 + $0x10] sm:$0xf] %v1031
  %1041 = vst [vmem:[%s3 + $0x14] sm:$0xf] %v1032
  %1042 = vst [vmem:[%s3 + $0x18] sm:$0xf] %v1033
  %1043 = vst [vmem:[%s3 + $0x1c] sm:$0xf] %v1034
  %1044 = vst [vmem:[%s3 + $0x20] sm:$0xf] %v1035
  // Predicated region
  $region14: #{carla_encoder_forward.7} parent=0 // pred_check
    _
  $region15: #{carla_encoder_forward.7} parent=0 // pred_check_branch
    %1046 = sbr.rel (0) target = $region17
  $region16: #{carla_encoder_forward.7} parent=0 // pred_region
    _
  $region17: #{carla_encoder_forward.7} parent=0 // pred_fallthru
    _
  // Predicated region
  $region18: #{carla_encoder_forward.7} parent=0 // pred_check
    _
  $region19: #{carla_encoder_forward.7} parent=0 // pred_check_branch
    %1048 = sbr.rel (0) target = $region21
  $region20: #{carla_encoder_forward.7} parent=0 // pred_region
    _
  $region21: #{carla_encoder_forward.7} parent=0 // pred_fallthru
    _

// kernel: carla_encoder_forward.8
$region0: #{carla_encoder_forward.8}
  #allocation0 [shape = 'u32[]', space=smem, size = 0x4, offset = 0x4, fixed_abs, tag = 'smem constant byte address 0x4 - core index']
  #allocation1 [shape = 'u32[72,128]{1,0:T(1,128)}', space=vmem, size = 0x9000, scoped, tag = 'internal scratch']
  %s0 = inlined_call_operand.vmem [shape: bf16[8,2048], index: 0, kind: input, shape index: {}]
  %s1 = inlined_call_operand.vmem [shape: bf16[2048,256], index: 1, kind: input, shape index: {}]
  %s2 = inlined_call_operand.vmem [shape: f32[1,256], index: 2, kind: input, shape index: {}]
  %s3 = inlined_call_operand.vmem [shape: bf16[8,256], index: 3, kind: output, shape index: {}]
  %s4 = sld [smem:[#allocation0]]
  $region97: #{carla_encoder_forward.8} parent=0
    _
  %s6 = ssub.s32 1, %s4
  %s7 = scalar_select 0, %s6, %s4
  $region1: #{carla_encoder_forward.8} parent=0
    #allocation2 [shape = 'u8[1048576]{0}', space=vmem, size = 0x100000, scoped, tag = 'input window, operand 1']
    loop: start=0, step=1, limit=4
    $region2: #{carla_encoder_forward.8} parent=1 // loop_pre_header
      _
    $region3: #{carla_encoder_forward.8} parent=1 // loop_header
      %s9 = sphi 0, %s13
      %p10 = scmp.ge.s32.totalorder %s9, 4
      %s16 = sphi 0, %s28
      %s17 = sphi 0, %s24
      %s18 = sphi 0, %s16
      %s19 = sphi 0, %s17
      %s20 = sphi 0, %s18
      %s21 = sphi 0, %s19
      %s31 = sphi 0, %s33
      %s34 = sphi 0, %s31
      %s35 = sphi 0, %s34
      %s51 = sphi 0, %s35
      %s57 = sphi 0, %s59
      %s60 = sphi 0, %s57
      %s61 = sphi 0, %s60
      %s77 = sphi 0, %s61
      %s83 = sphi 0, %s85
      %s86 = sphi 0, %s83
      %s87 = sphi 0, %s86
      %s103 = sphi 0, %s87
      %s111 = sphi 0, %s113
      %s114 = sphi 0, %s111
      %s115 = sphi 0, %s114
      %s131 = sphi 0, %s115
    $region4: #{carla_encoder_forward.8} parent=1 // loop_header_branch
      %12 = sbr.rel (%p10) target = $region8
    $region5: #{carla_encoder_forward.8} parent=1 // loop_body
      %s14 = ssub.s32 %s9, 1
      %s15 = ssub.s32 %s9, 2
      %s22 = sadd.s32 1, %s17
      %p23 = scmp.ge.s32.totalorder %s22, 2
      %s24 = scalar_select %p23, 0, %s22
      %s25 = sadd.s32 1, %s16
      %s26 = scalar_select %p23, %s25, %s16
      %p27 = scmp.ge.s32.totalorder %s26, 1
      %s28 = scalar_select %p27, 0, %s26
      %s29 = ssub.s32 %s16, %s28
      %p30 = scmp.eq.s32.totalorder %s29, 0
      %s32 = sadd.s32 %s31, 1
      %s33 = scalar_select %p30, %s31, %s32
      %p36 = pneg %p30
      %p37 = scmp.eq.s32.totalorder %s9, 1
      %p38 = por %p36, %p37
      %p39 = scmp.ne.s32.totalorder %s31, %s34
      %p40 = scmp.eq.s32.totalorder %s9, 0
      %p41 = por %p39, %p40
      %p42 = scmp.ne.s32.totalorder %s31, %s34
      %p43 = scmp.eq.s32.totalorder %s14, 1
      %p44 = por %p42, %p43
      %p45 = scmp.ne.s32.totalorder %s34, %s35
      %p46 = scmp.eq.s32.totalorder %s14, 0
      %p47 = por %p45, %p46
      %p48 = scmp.ne.s32.totalorder %s34, %s35
      %p49 = scmp.eq.s32.totalorder %s15, 1
      %p50 = por %p48, %p49
      %p52 = scmp.ne.s32.totalorder %s35, %s51
      %p53 = scmp.eq.s32.totalorder %s15, 0
      %p54 = por %p52, %p53
      %s55 = ssub.s32 %s17, %s24
      %p56 = scmp.eq.s32.totalorder %s55, 0
      %s58 = sadd.s32 %s57, 1
      %s59 = scalar_select %p56, %s57, %s58
      %p62 = pneg %p56
      %p63 = scmp.eq.s32.totalorder %s9, 1
      %p64 = por %p62, %p63
      %p65 = scmp.ne.s32.totalorder %s57, %s60
      %p66 = scmp.eq.s32.totalorder %s9, 0
      %p67 = por %p65, %p66
      %p68 = scmp.ne.s32.totalorder %s57, %s60
      %p69 = scmp.eq.s32.totalorder %s14, 1
      %p70 = por %p68, %p69
      %p71 = scmp.ne.s32.totalorder %s60, %s61
      %p72 = scmp.eq.s32.totalorder %s14, 0
      %p73 = por %p71, %p72
      %p74 = scmp.ne.s32.totalorder %s60, %s61
      %p75 = scmp.eq.s32.totalorder %s15, 1
      %p76 = por %p74, %p75
      %p78 = scmp.ne.s32.totalorder %s61, %s77
      %p79 = scmp.eq.s32.totalorder %s15, 0
      %p80 = por %p78, %p79
      %s81 = ssub.s32 %s17, %s24
      %p82 = scmp.eq.s32.totalorder %s81, 0
      %s84 = sadd.s32 %s83, 1
      %s85 = scalar_select %p82, %s83, %s84
      %p88 = pneg %p82
      %p89 = scmp.eq.s32.totalorder %s9, 1
      %p90 = por %p88, %p89
      %p91 = scmp.ne.s32.totalorder %s83, %s86
      %p92 = scmp.eq.s32.totalorder %s9, 0
      %p93 = por %p91, %p92
      %p94 = scmp.ne.s32.totalorder %s83, %s86
      %p95 = scmp.eq.s32.totalorder %s14, 1
      %p96 = por %p94, %p95
      %p97 = scmp.ne.s32.totalorder %s86, %s87
      %p98 = scmp.eq.s32.totalorder %s14, 0
      %p99 = por %p97, %p98
      %p100 = scmp.ne.s32.totalorder %s86, %s87
      %p101 = scmp.eq.s32.totalorder %s15, 1
      %p102 = por %p100, %p101
      %p104 = scmp.ne.s32.totalorder %s87, %s103
      %p105 = scmp.eq.s32.totalorder %s15, 0
      %p106 = por %p104, %p105
      %s107 = ssub.s32 %s16, %s28
      %s108 = ssub.s32 %s17, %s24
      %s109 = sor.u32 %s107, %s108
      %p110 = scmp.eq.s32.totalorder %s109, 0
      %s112 = sadd.s32 %s111, 1
      %s113 = scalar_select %p110, %s111, %s112
      %p116 = pneg %p110
      %p117 = scmp.eq.s32.totalorder %s9, 1
      %p118 = por %p116, %p117
      %p119 = scmp.ne.s32.totalorder %s111, %s114
      %p120 = scmp.eq.s32.totalorder %s9, 0
      %p121 = por %p119, %p120
      %p122 = scmp.ne.s32.totalorder %s111, %s114
      %p123 = scmp.eq.s32.totalorder %s14, 1
      %p124 = por %p122, %p123
      %p125 = scmp.ne.s32.totalorder %s114, %s115
      %p126 = scmp.eq.s32.totalorder %s14, 0
      %p127 = por %p125, %p126
      %p128 = scmp.ne.s32.totalorder %s114, %s115
      %p129 = scmp.eq.s32.totalorder %s15, 1
      %p130 = por %p128, %p129
      %p132 = scmp.ne.s32.totalorder %s115, %s131
      %p133 = scmp.eq.s32.totalorder %s15, 0
      %p134 = por %p132, %p133
      %p135 = scmp.le.s32.totalorder 1, %s9
      %p136 = scmp.lt.s32.totalorder %s9, 3
      %p137 = pnand %p135, %p136
      %p138 = pneg %p137
      // Predicated region
      $region9: #{carla_encoder_forward.8} parent=5 // pred_check
        _
      $region10: #{carla_encoder_forward.8} parent=5 // pred_check_branch
        %140 = sbr.rel (%p137) target = $region12
      $region11: #{carla_encoder_forward.8} parent=5 // pred_region
        %s141 = ssub.s32 %s9, 1
        // Predicated region
        $region13: #{carla_encoder_forward.8} parent=11 // pred_check
          %p142 = pneg %p47
        $region14: #{carla_encoder_forward.8} parent=11 // pred_check_branch
          %144 = sbr.rel (%p142) target = $region16
        $region15: #{carla_encoder_forward.8} parent=11 // pred_region
          %p145 = scmp.lt.s32.totalorder %s18, 0
          %s146 = scalar_select %p145, %s18, 0
          %s147 = smul.addr %s146, 16
          %s148 = smul.addr %s147, 4
          %s149 = scalar_lea.vmem %s0, %s148
        $region16: #{carla_encoder_forward.8} parent=11 // pred_fallthru
          _
      $region12: #{carla_encoder_forward.8} parent=5 // pred_fallthru
        _
      %p150 = scmp.lt.s32.totalorder %s9, 2
      // Predicated region
      $region17: #{carla_encoder_forward.8} parent=5 // pred_check
        %p151 = pneg %p150
      $region18: #{carla_encoder_forward.8} parent=5 // pred_check_branch
        %153 = sbr.rel (%p151) target = $region20
      $region19: #{carla_encoder_forward.8} parent=5 // pred_region
        // Predicated region
        $region21: #{carla_encoder_forward.8} parent=19 // pred_check
          %p154 = pneg %p67
        $region22: #{carla_encoder_forward.8} parent=19 // pred_check_branch
          %156 = sbr.rel (%p154) target = $region24
        $region23: #{carla_encoder_forward.8} parent=19 // pred_region
          %s157 = sand.u32 %s57, 1
          %s158 = sand.u32 %s57, 1
          %s159 = smul.addr %s158, 1024
          %s160 = scalar_lea.vmem [#allocation2], %s159
          %s161 = smul.addr %s17, 4
          %s162 = scalar_lea.vmem %s1, %s161
          // Predicated region
          $region25: #{carla_encoder_forward.8} parent=23 // pred_check
            _
          $region26: #{carla_encoder_forward.8} parent=23 // pred_check_branch
            %164 = sbr.rel (0) target = $region28
          $region27: #{carla_encoder_forward.8} parent=23 // pred_region
            // Predicated region
            $region29: #{carla_encoder_forward.8} parent=27 // pred_check
              _
            $region30: #{carla_encoder_forward.8} parent=27 // pred_check_branch
              %166 = sbr.rel target = $region32
            $region31: #{carla_encoder_forward.8} parent=27 // pred_region
              // Predicated region
              $region44: #{carla_encoder_forward.8} parent=31 // pred_check
                _
              $region45: #{carla_encoder_forward.8} parent=31 // pred_check_branch
                %692 = sbr.rel target = $region47
              $region46: #{carla_encoder_forward.8} parent=31 // pred_region
                loop: start=0, step=1, limit=0
                $region48: #{carla_encoder_forward.8} parent=46 // loop_pre_header
                  _
                $region49: #{carla_encoder_forward.8} parent=46 // loop_header
                  %s694 = sphi 0, %s698
                  %p695 = scmp.ge.s32.totalorder %s694, 0
                  %s699 = sphi 0, %s1216
                  %s700 = sphi %s162, %s1219
                  %s701 = sphi %s160, %s1220
                $region50: #{carla_encoder_forward.8} parent=46 // loop_header_branch
                  %697 = sbr.rel (%p695) target = $region54
                $region51: #{carla_encoder_forward.8} parent=46 // loop_body
                  %v702 = vld [vmem:[%s700] sm:$0xff]
                  %703 = vst [vmem:[%s701] sm:$0xff] %v702
                  %v704 = vld [vmem:[%s700 + $0x8] sm:$0xff]
                  %705 = vst [vmem:[%s701 + $0x4] sm:$0xff] %v704
                  %v706 = vld [vmem:[%s700 + $0x10] sm:$0xff]
                  %707 = vst [vmem:[%s701 + $0x8] sm:$0xff] %v706
                  %v708 = vld [vmem:[%s700 + $0x18] sm:$0xff]
                  %709 = vst [vmem:[%s701 + $0xc] sm:$0xff] %v708
                  %v710 = vld [vmem:[%s700 + $0x20] sm:$0xff]
                  %711 = vst [vmem:[%s701 + $0x10] sm:$0xff] %v710
                  %v712 = vld [vmem:[%s700 + $0x28] sm:$0xff]
                  %713 = vst [vmem:[%s701 + $0x14] sm:$0xff] %v712
                  %v714 = vld [vmem:[%s700 + $0x30] sm:$0xff]
                  %715 = vst [vmem:[%s701 + $0x18] sm:$0xff] %v714
                  %v716 = vld [vmem:[%s700 + $0x38] sm:$0xff]
                  %717 = vst [vmem:[%s701 + $0x1c] sm:$0xff] %v716
                  %v718 = vld [vmem:[%s700 + $0x40] sm:$0xff]
                  %719 = vst [vmem:[%s701 + $0x20] sm:$0xff] %v718
                  %v720 = vld [vmem:[%s700 + $0x48] sm:$0xff]
                  %721 = vst [vmem:[%s701 + $0x24] sm:$0xff] %v720
                  %v722 = vld [vmem:[%s700 + $0x50] sm:$0xff]
                  %723 = vst [vmem:[%s701 + $0x28] sm:$0xff] %v722
                  %v724 = vld [vmem:[%s700 + $0x58] sm:$0xff]
                  %725 = vst [vmem:[%s701 + $0x2c] sm:$0xff] %v724
                  %v726 = vld [vmem:[%s700 + $0x60] sm:$0xff]
                  %727 = vst [vmem:[%s701 + $0x30] sm:$0xff] %v726
                  %v728 = vld [vmem:[%s700 + $0x68] sm:$0xff]
                  %729 = vst [vmem:[%s701 + $0x34] sm:$0xff] %v728
                  %v730 = vld [vmem:[%s700 + $0x70] sm:$0xff]
                  %731 = vst [vmem:[%s701 + $0x38] sm:$0xff] %v730
                  %v732 = vld [vmem:[%s700 + $0x78] sm:$0xff]
                  %733 = vst [vmem:[%s701 + $0x3c] sm:$0xff] %v732
                  %v734 = vld [vmem:[%s700 + $0x80] sm:$0xff]
                  %735 = vst [vmem:[%s701 + $0x40] sm:$0xff] %v734
                  %v736 = vld [vmem:[%s700 + $0x88] sm:$0xff]
                  %737 = vst [vmem:[%s701 + $0x44] sm:$0xff] %v736
                  %v738 = vld [vmem:[%s700 + $0x90] sm:$0xff]
                  %739 = vst [vmem:[%s701 + $0x48] sm:$0xff] %v738
                  %v740 = vld [vmem:[%s700 + $0x98] sm:$0xff]
                  %741 = vst [vmem:[%s701 + $0x4c] sm:$0xff] %v740
                  %v742 = vld [vmem:[%s700 + $0xa0] sm:$0xff]
                  %743 = vst [vmem:[%s701 + $0x50] sm:$0xff] %v742
                  %v744 = vld [vmem:[%s700 + $0xa8] sm:$0xff]
                  %745 = vst [vmem:[%s701 + $0x54] sm:$0xff] %v744
                  %v746 = vld [vmem:[%s700 + $0xb0] sm:$0xff]
                  %747 = vst [vmem:[%s701 + $0x58] sm:$0xff] %v746
                  %v748 = vld [vmem:[%s700 + $0xb8] sm:$0xff]
                  %749 = vst [vmem:[%s701 + $0x5c] sm:$0xff] %v748
                  %v750 = vld [vmem:[%s700 + $0xc0] sm:$0xff]
                  %751 = vst [vmem:[%s701 + $0x60] sm:$0xff] %v750
                  %v752 = vld [vmem:[%s700 + $0xc8] sm:$0xff]
                  %753 = vst [vmem:[%s701 + $0x64] sm:$0xff] %v752
                  %v754 = vld [vmem:[%s700 + $0xd0] sm:$0xff]
                  %755 = vst [vmem:[%s701 + $0x68] sm:$0xff] %v754
                  %v756 = vld [vmem:[%s700 + $0xd8] sm:$0xff]
                  %757 = vst [vmem:[%s701 + $0x6c] sm:$0xff] %v756
                  %v758 = vld [vmem:[%s700 + $0xe0] sm:$0xff]
                  %759 = vst [vmem:[%s701 + $0x70] sm:$0xff] %v758
                  %v760 = vld [vmem:[%s700 + $0xe8] sm:$0xff]
                  %761 = vst [vmem:[%s701 + $0x74] sm:$0xff] %v760
                  %v762 = vld [vmem:[%s700 + $0xf0] sm:$0xff]
                  %763 = vst [vmem:[%s701 + $0x78] sm:$0xff] %v762
                  %v764 = vld [vmem:[%s700 + $0xf8] sm:$0xff]
                  %765 = vst [vmem:[%s701 + $0x7c] sm:$0xff] %v764
                  %v766 = vld [vmem:[%s700 + $0x100] sm:$0xff]
                  %767 = vst [vmem:[%s701 + $0x80] sm:$0xff] %v766
                  %v768 = vld [vmem:[%s700 + $0x108] sm:$0xff]
                  %769 = vst [vmem:[%s701 + $0x84] sm:$0xff] %v768
                  %v770 = vld [vmem:[%s700 + $0x110] sm:$0xff]
                  %771 = vst [vmem:[%s701 + $0x88] sm:$0xff] %v770
                  %v772 = vld [vmem:[%s700 + $0x118] sm:$0xff]
                  %773 = vst [vmem:[%s701 + $0x8c] sm:$0xff] %v772
                  %v774 = vld [vmem:[%s700 + $0x120] sm:$0xff]
                  %775 = vst [vmem:[%s701 + $0x90] sm:$0xff] %v774
                  %v776 = vld [vmem:[%s700 + $0x128] sm:$0xff]
                  %777 = vst [vmem:[%s701 + $0x94] sm:$0xff] %v776
                  %v778 = vld [vmem:[%s700 + $0x130] sm:$0xff]
                  %779 = vst [vmem:[%s701 + $0x98] sm:$0xff] %v778
                  %v780 = vld [vmem:[%s700 + $0x138] sm:$0xff]
                  %781 = vst [vmem:[%s701 + $0x9c] sm:$0xff] %v780
                  %v782 = vld [vmem:[%s700 + $0x140] sm:$0xff]
                  %783 = vst [vmem:[%s701 + $0xa0] sm:$0xff] %v782
                  %v784 = vld [vmem:[%s700 + $0x148] sm:$0xff]
                  %785 = vst [vmem:[%s701 + $0xa4] sm:$0xff] %v784
                  %v786 = vld [vmem:[%s700 + $0x150] sm:$0xff]
                  %787 = vst [vmem:[%s701 + $0xa8] sm:$0xff] %v786
                  %v788 = vld [vmem:[%s700 + $0x158] sm:$0xff]
                  %789 = vst [vmem:[%s701 + $0xac] sm:$0xff] %v788
                  %v790 = vld [vmem:[%s700 + $0x160] sm:$0xff]
                  %791 = vst [vmem:[%s701 + $0xb0] sm:$0xff] %v790
                  %v792 = vld [vmem:[%s700 + $0x168] sm:$0xff]
                  %793 = vst [vmem:[%s701 + $0xb4] sm:$0xff] %v792
                  %v794 = vld [vmem:[%s700 + $0x170] sm:$0xff]
                  %795 = vst [vmem:[%s701 + $0xb8] sm:$0xff] %v794
                  %v796 = vld [vmem:[%s700 + $0x178] sm:$0xff]
                  %797 = vst [vmem:[%s701 + $0xbc] sm:$0xff] %v796
                  %v798 = vld [vmem:[%s700 + $0x180] sm:$0xff]
                  %799 = vst [vmem:[%s701 + $0xc0] sm:$0xff] %v798
                  %v800 = vld [vmem:[%s700 + $0x188] sm:$0xff]
                  %801 = vst [vmem:[%s701 + $0xc4] sm:$0xff] %v800
                  %v802 = vld [vmem:[%s700 + $0x190] sm:$0xff]
                  %803 = vst [vmem:[%s701 + $0xc8] sm:$0xff] %v802
                  %v804 = vld [vmem:[%s700 + $0x198] sm:$0xff]
                  %805 = vst [vmem:[%s701 + $0xcc] sm:$0xff] %v804
                  %v806 = vld [vmem:[%s700 + $0x1a0] sm:$0xff]
                  %807 = vst [vmem:[%s701 + $0xd0] sm:$0xff] %v806
                  %v808 = vld [vmem:[%s700 + $0x1a8] sm:$0xff]
                  %809 = vst [vmem:[%s701 + $0xd4] sm:$0xff] %v808
                  %v810 = vld [vmem:[%s700 + $0x1b0] sm:$0xff]
                  %811 = vst [vmem:[%s701 + $0xd8] sm:$0xff] %v810
                  %v812 = vld [vmem:[%s700 + $0x1b8] sm:$0xff]
                  %813 = vst [vmem:[%s701 + $0xdc] sm:$0xff] %v812
                  %v814 = vld [vmem:[%s700 + $0x1c0] sm:$0xff]
                  %815 = vst [vmem:[%s701 + $0xe0] sm:$0xff] %v814
                  %v816 = vld [vmem:[%s700 + $0x1c8] sm:$0xff]
                  %817 = vst [vmem:[%s701 + $0xe4] sm:$0xff] %v816
                  %v818 = vld [vmem:[%s700 + $0x1d0] sm:$0xff]
                  %819 = vst [vmem:[%s701 + $0xe8] sm:$0xff] %v818
                  %v820 = vld [vmem:[%s700 + $0x1d8] sm:$0xff]
                  %821 = vst [vmem:[%s701 + $0xec] sm:$0xff] %v820
                  %v822 = vld [vmem:[%s700 + $0x1e0] sm:$0xff]
                  %823 = vst [vmem:[%s701 + $0xf0] sm:$0xff] %v822
                  %v824 = vld [vmem:[%s700 + $0x1e8] sm:$0xff]
                  %825 = vst [vmem:[%s701 + $0xf4] sm:$0xff] %v824
                  %v826 = vld [vmem:[%s700 + $0x1f0] sm:$0xff]
                  %827 = vst [vmem:[%s701 + $0xf8] sm:$0xff] %v826
                  %v828 = vld [vmem:[%s700 + $0x1f8] sm:$0xff]
                  %829 = vst [vmem:[%s701 + $0xfc] sm:$0xff] %v828
                  %v830 = vld [vmem:[%s700 + $0x200] sm:$0xff]
                  %831 = vst [vmem:[%s701 + $0x100] sm:$0xff] %v830
                  %v832 = vld [vmem:[%s700 + $0x208] sm:$0xff]
                  %833 = vst [vmem:[%s701 + $0x104] sm:$0xff] %v832
                  %v834 = vld [vmem:[%s700 + $0x210] sm:$0xff]
                  %835 = vst [vmem:[%s701 + $0x108] sm:$0xff] %v834
                  %v836 = vld [vmem:[%s700 + $0x218] sm:$0xff]
                  %837 = vst [vmem:[%s701 + $0x10c] sm:$0xff] %v836
                  %v838 = vld [vmem:[%s700 + $0x220] sm:$0xff]
                  %839 = vst [vmem:[%s701 + $0x110] sm:$0xff] %v838
                  %v840 = vld [vmem:[%s700 + $0x228] sm:$0xff]
                  %841 = vst [vmem:[%s701 + $0x114] sm:$0xff] %v840
                  %v842 = vld [vmem:[%s700 + $0x230] sm:$0xff]
                  %843 = vst [vmem:[%s701 + $0x118] sm:$0xff] %v842
                  %v844 = vld [vmem:[%s700 + $0x238] sm:$0xff]
                  %845 = vst [vmem:[%s701 + $0x11c] sm:$0xff] %v844
                  %v846 = vld [vmem:[%s700 + $0x240] sm:$0xff]
                  %847 = vst [vmem:[%s701 + $0x120] sm:$0xff] %v846
                  %v848 = vld [vmem:[%s700 + $0x248] sm:$0xff]
                  %849 = vst [vmem:[%s701 + $0x124] sm:$0xff] %v848
                  %v850 = vld [vmem:[%s700 + $0x250] sm:$0xff]
                  %851 = vst [vmem:[%s701 + $0x128] sm:$0xff] %v850
                  %v852 = vld [vmem:[%s700 + $0x258] sm:$0xff]
                  %853 = vst [vmem:[%s701 + $0x12c] sm:$0xff] %v852
                  %v854 = vld [vmem:[%s700 + $0x260] sm:$0xff]
                  %855 = vst [vmem:[%s701 + $0x130] sm:$0xff] %v854
                  %v856 = vld [vmem:[%s700 + $0x268] sm:$0xff]
                  %857 = vst [vmem:[%s701 + $0x134] sm:$0xff] %v856
                  %v858 = vld [vmem:[%s700 + $0x270] sm:$0xff]
                  %859 = vst [vmem:[%s701 + $0x138] sm:$0xff] %v858
                  %v860 = vld [vmem:[%s700 + $0x278] sm:$0xff]
                  %861 = vst [vmem:[%s701 + $0x13c] sm:$0xff] %v860
                  %v862 = vld [vmem:[%s700 + $0x280] sm:$0xff]
                  %863 = vst [vmem:[%s701 + $0x140] sm:$0xff] %v862
                  %v864 = vld [vmem:[%s700 + $0x288] sm:$0xff]
                  %865 = vst [vmem:[%s701 + $0x144] sm:$0xff] %v864
                  %v866 = vld [vmem:[%s700 + $0x290] sm:$0xff]
                  %867 = vst [vmem:[%s701 + $0x148] sm:$0xff] %v866
                  %v868 = vld [vmem:[%s700 + $0x298] sm:$0xff]
                  %869 = vst [vmem:[%s701 + $0x14c] sm:$0xff] %v868
                  %v870 = vld [vmem:[%s700 + $0x2a0] sm:$0xff]
                  %871 = vst [vmem:[%s701 + $0x150] sm:$0xff] %v870
                  %v872 = vld [vmem:[%s700 + $0x2a8] sm:$0xff]
                  %873 = vst [vmem:[%s701 + $0x154] sm:$0xff] %v872
                  %v874 = vld [vmem:[%s700 + $0x2b0] sm:$0xff]
                  %875 = vst [vmem:[%s701 + $0x158] sm:$0xff] %v874
                  %v876 = vld [vmem:[%s700 + $0x2b8] sm:$0xff]
                  %877 = vst [vmem:[%s701 + $0x15c] sm:$0xff] %v876
                  %v878 = vld [vmem:[%s700 + $0x2c0] sm:$0xff]
                  %879 = vst [vmem:[%s701 + $0x160] sm:$0xff] %v878
                  %v880 = vld [vmem:[%s700 + $0x2c8] sm:$0xff]
                  %881 = vst [vmem:[%s701 + $0x164] sm:$0xff] %v880
                  %v882 = vld [vmem:[%s700 + $0x2d0] sm:$0xff]
                  %883 = vst [vmem:[%s701 + $0x168] sm:$0xff] %v882
                  %v884 = vld [vmem:[%s700 + $0x2d8] sm:$0xff]
                  %885 = vst [vmem:[%s701 + $0x16c] sm:$0xff] %v884
                  %v886 = vld [vmem:[%s700 + $0x2e0] sm:$0xff]
                  %887 = vst [vmem:[%s701 + $0x170] sm:$0xff] %v886
                  %v888 = vld [vmem:[%s700 + $0x2e8] sm:$0xff]
                  %889 = vst [vmem:[%s701 + $0x174] sm:$0xff] %v888
                  %v890 = vld [vmem:[%s700 + $0x2f0] sm:$0xff]
                  %891 = vst [vmem:[%s701 + $0x178] sm:$0xff] %v890
                  %v892 = vld [vmem:[%s700 + $0x2f8] sm:$0xff]
                  %893 = vst [vmem:[%s701 + $0x17c] sm:$0xff] %v892
                  %v894 = vld [vmem:[%s700 + $0x300] sm:$0xff]
                  %895 = vst [vmem:[%s701 + $0x180] sm:$0xff] %v894
                  %v896 = vld [vmem:[%s700 + $0x308] sm:$0xff]
                  %897 = vst [vmem:[%s701 + $0x184] sm:$0xff] %v896
                  %v898 = vld [vmem:[%s700 + $0x310] sm:$0xff]
                  %899 = vst [vmem:[%s701 + $0x188] sm:$0xff] %v898
                  %v900 = vld [vmem:[%s700 + $0x318] sm:$0xff]
                  %901 = vst [vmem:[%s701 + $0x18c] sm:$0xff] %v900
                  %v902 = vld [vmem:[%s700 + $0x320] sm:$0xff]
                  %903 = vst [vmem:[%s701 + $0x190] sm:$0xff] %v902
                  %v904 = vld [vmem:[%s700 + $0x328] sm:$0xff]
                  %905 = vst [vmem:[%s701 + $0x194] sm:$0xff] %v904
                  %v906 = vld [vmem:[%s700 + $0x330] sm:$0xff]
                  %907 = vst [vmem:[%s701 + $0x198] sm:$0xff] %v906
                  %v908 = vld [vmem:[%s700 + $0x338] sm:$0xff]
                  %909 = vst [vmem:[%s701 + $0x19c] sm:$0xff] %v908
                  %v910 = vld [vmem:[%s700 + $0x340] sm:$0xff]
                  %911 = vst [vmem:[%s701 + $0x1a0] sm:$0xff] %v910
                  %v912 = vld [vmem:[%s700 + $0x348] sm:$0xff]
                  %913 = vst [vmem:[%s701 + $0x1a4] sm:$0xff] %v912
                  %v914 = vld [vmem:[%s700 + $0x350] sm:$0xff]
                  %915 = vst [vmem:[%s701 + $0x1a8] sm:$0xff] %v914
                  %v916 = vld [vmem:[%s700 + $0x358] sm:$0xff]
                  %917 = vst [vmem:[%s701 + $0x1ac] sm:$0xff] %v916
                  %v918 = vld [vmem:[%s700 + $0x360] sm:$0xff]
                  %919 = vst [vmem:[%s701 + $0x1b0] sm:$0xff] %v918
                  %v920 = vld [vmem:[%s700 + $0x368] sm:$0xff]
                  %921 = vst [vmem:[%s701 + $0x1b4] sm:$0xff] %v920
                  %v922 = vld [vmem:[%s700 + $0x370] sm:$0xff]
                  %923 = vst [vmem:[%s701 + $0x1b8] sm:$0xff] %v922
                  %v924 = vld [vmem:[%s700 + $0x378] sm:$0xff]
                  %925 = vst [vmem:[%s701 + $0x1bc] sm:$0xff] %v924
                  %v926 = vld [vmem:[%s700 + $0x380] sm:$0xff]
                  %927 = vst [vmem:[%s701 + $0x1c0] sm:$0xff] %v926
                  %v928 = vld [vmem:[%s700 + $0x388] sm:$0xff]
                  %929 = vst [vmem:[%s701 + $0x1c4] sm:$0xff] %v928
                  %v930 = vld [vmem:[%s700 + $0x390] sm:$0xff]
                  %931 = vst [vmem:[%s701 + $0x1c8] sm:$0xff] %v930
                  %v932 = vld [vmem:[%s700 + $0x398] sm:$0xff]
                  %933 = vst [vmem:[%s701 + $0x1cc] sm:$0xff] %v932
                  %v934 = vld [vmem:[%s700 + $0x3a0] sm:$0xff]
                  %935 = vst [vmem:[%s701 + $0x1d0] sm:$0xff] %v934
                  %v936 = vld [vmem:[%s700 + $0x3a8] sm:$0xff]
                  %937 = vst [vmem:[%s701 + $0x1d4] sm:$0xff] %v936
                  %v938 = vld [vmem:[%s700 + $0x3b0] sm:$0xff]
                  %939 = vst [vmem:[%s701 + $0x1d8] sm:$0xff] %v938
                  %v940 = vld [vmem:[%s700 + $0x3b8] sm:$0xff]
                  %941 = vst [vmem:[%s701 + $0x1dc] sm:$0xff] %v940
                  %v942 = vld [vmem:[%s700 + $0x3c0] sm:$0xff]
                  %943 = vst [vmem:[%s701 + $0x1e0] sm:$0xff] %v942
                  %v944 = vld [vmem:[%s700 + $0x3c8] sm:$0xff]
                  %945 = vst [vmem:[%s701 + $0x1e4] sm:$0xff] %v944
                  %v946 = vld [vmem:[%s700 + $0x3d0] sm:$0xff]
                  %947 = vst [vmem:[%s701 + $0x1e8] sm:$0xff] %v946
                  %v948 = vld [vmem:[%s700 + $0x3d8] sm:$0xff]
                  %949 = vst [vmem:[%s701 + $0x1ec] sm:$0xff] %v948
                  %v950 = vld [vmem:[%s700 + $0x3e0] sm:$0xff]
                  %951 = vst [vmem:[%s701 + $0x1f0] sm:$0xff] %v950
                  %v952 = vld [vmem:[%s700 + $0x3e8] sm:$0xff]
                  %953 = vst [vmem:[%s701 + $0x1f4] sm:$0xff] %v952
                  %v954 = vld [vmem:[%s700 + $0x3f0] sm:$0xff]
                  %955 = vst [vmem:[%s701 + $0x1f8] sm:$0xff] %v954
                  %v956 = vld [vmem:[%s700 + $0x3f8] sm:$0xff]
                  %957 = vst [vmem:[%s701 + $0x1fc] sm:$0xff] %v956
                  %v958 = vld [vmem:[%s700 + $0x400] sm:$0xff]
                  %959 = vst [vmem:[%s701 + $0x200] sm:$0xff] %v958
                  %v960 = vld [vmem:[%s700 + $0x408] sm:$0xff]
                  %961 = vst [vmem:[%s701 + $0x204] sm:$0xff] %v960
                  %v962 = vld [vmem:[%s700 + $0x410] sm:$0xff]
                  %963 = vst [vmem:[%s701 + $0x208] sm:$0xff] %v962
                  %v964 = vld [vmem:[%s700 + $0x418] sm:$0xff]
                  %965 = vst [vmem:[%s701 + $0x20c] sm:$0xff] %v964
                  %v966 = vld [vmem:[%s700 + $0x420] sm:$0xff]
                  %967 = vst [vmem:[%s701 + $0x210] sm:$0xff] %v966
                  %v968 = vld [vmem:[%s700 + $0x428] sm:$0xff]
                  %969 = vst [vmem:[%s701 + $0x214] sm:$0xff] %v968
                  %v970 = vld [vmem:[%s700 + $0x430] sm:$0xff]
                  %971 = vst [vmem:[%s701 + $0x218] sm:$0xff] %v970
                  %v972 = vld [vmem:[%s700 + $0x438] sm:$0xff]
                  %973 = vst [vmem:[%s701 + $0x21c] sm:$0xff] %v972
                  %v974 = vld [vmem:[%s700 + $0x440] sm:$0xff]
                  %975 = vst [vmem:[%s701 + $0x220] sm:$0xff] %v974
                  %v976 = vld [vmem:[%s700 + $0x448] sm:$0xff]
                  %977 = vst [vmem:[%s701 + $0x224] sm:$0xff] %v976
                  %v978 = vld [vmem:[%s700 + $0x450] sm:$0xff]
                  %979 = vst [vmem:[%s701 + $0x228] sm:$0xff] %v978
                  %v980 = vld [vmem:[%s700 + $0x458] sm:$0xff]
                  %981 = vst [vmem:[%s701 + $0x22c] sm:$0xff] %v980
                  %v982 = vld [vmem:[%s700 + $0x460] sm:$0xff]
                  %983 = vst [vmem:[%s701 + $0x230] sm:$0xff] %v982
                  %v984 = vld [vmem:[%s700 + $0x468] sm:$0xff]
                  %985 = vst [vmem:[%s701 + $0x234] sm:$0xff] %v984
                  %v986 = vld [vmem:[%s700 + $0x470] sm:$0xff]
                  %987 = vst [vmem:[%s701 + $0x238] sm:$0xff] %v986
                  %v988 = vld [vmem:[%s700 + $0x478] sm:$0xff]
                  %989 = vst [vmem:[%s701 + $0x23c] sm:$0xff] %v988
                  %v990 = vld [vmem:[%s700 + $0x480] sm:$0xff]
                  %991 = vst [vmem:[%s701 + $0x240] sm:$0xff] %v990
                  %v992 = vld [vmem:[%s700 + $0x488] sm:$0xff]
                  %993 = vst [vmem:[%s701 + $0x244] sm:$0xff] %v992
                  %v994 = vld [vmem:[%s700 + $0x490] sm:$0xff]
                  %995 = vst [vmem:[%s701 + $0x248] sm:$0xff] %v994
                  %v996 = vld [vmem:[%s700 + $0x498] sm:$0xff]
                  %997 = vst [vmem:[%s701 + $0x24c] sm:$0xff] %v996
                  %v998 = vld [vmem:[%s700 + $0x4a0] sm:$0xff]
                  %999 = vst [vmem:[%s701 + $0x250] sm:$0xff] %v998
                  %v1000 = vld [vmem:[%s700 + $0x4a8] sm:$0xff]
                  %1001 = vst [vmem:[%s701 + $0x254] sm:$0xff] %v1000
                  %v1002 = vld [vmem:[%s700 + $0x4b0] sm:$0xff]
                  %1003 = vst [vmem:[%s701 + $0x258] sm:$0xff] %v1002
                  %v1004 = vld [vmem:[%s700 + $0x4b8] sm:$0xff]
                  %1005 = vst [vmem:[%s701 + $0x25c] sm:$0xff] %v1004
                  %v1006 = vld [vmem:[%s700 + $0x4c0] sm:$0xff]
                  %1007 = vst [vmem:[%s701 + $0x260] sm:$0xff] %v1006
                  %v1008 = vld [vmem:[%s700 + $0x4c8] sm:$0xff]
                  %1009 = vst [vmem:[%s701 + $0x264] sm:$0xff] %v1008
                  %v1010 = vld [vmem:[%s700 + $0x4d0] sm:$0xff]
                  %1011 = vst [vmem:[%s701 + $0x268] sm:$0xff] %v1010
                  %v1012 = vld [vmem:[%s700 + $0x4d8] sm:$0xff]
                  %1013 = vst [vmem:[%s701 + $0x26c] sm:$0xff] %v1012
                  %v1014 = vld [vmem:[%s700 + $0x4e0] sm:$0xff]
                  %1015 = vst [vmem:[%s701 + $0x270] sm:$0xff] %v1014
                  %v1016 = vld [vmem:[%s700 + $0x4e8] sm:$0xff]
                  %1017 = vst [vmem:[%s701 + $0x274] sm:$0xff] %v1016
                  %v1018 = vld [vmem:[%s700 + $0x4f0] sm:$0xff]
                  %1019 = vst [vmem:[%s701 + $0x278] sm:$0xff] %v1018
                  %v1020 = vld [vmem:[%s700 + $0x4f8] sm:$0xff]
                  %1021 = vst [vmem:[%s701 + $0x27c] sm:$0xff] %v1020
                  %v1022 = vld [vmem:[%s700 + $0x500] sm:$0xff]
                  %1023 = vst [vmem:[%s701 + $0x280] sm:$0xff] %v1022
                  %v1024 = vld [vmem:[%s700 + $0x508] sm:$0xff]
                  %1025 = vst [vmem:[%s701 + $0x284] sm:$0xff] %v1024
                  %v1026 = vld [vmem:[%s700 + $0x510] sm:$0xff]
                  %1027 = vst [vmem:[%s701 + $0x288] sm:$0xff] %v1026
                  %v1028 = vld [vmem:[%s700 + $0x518] sm:$0xff]
                  %1029 = vst [vmem:[%s701 + $0x28c] sm:$0xff] %v1028
                  %v1030 = vld [vmem:[%s700 + $0x520] sm:$0xff]
                  %1031 = vst [vmem:[%s701 + $0x290] sm:$0xff] %v1030
                  %v1032 = vld [vmem:[%s700 + $0x528] sm:$0xff]
                  %1033 = vst [vmem:[%s701 + $0x294] sm:$0xff] %v1032
                  %v1034 = vld [vmem:[%s700 + $0x530] sm:$0xff]
                  %1035 = vst [vmem:[%s701 + $0x298] sm:$0xff] %v1034
                  %v1036 = vld [vmem:[%s700 + $0x538] sm:$0xff]
                  %1037 = vst [vmem:[%s701 + $0x29c] sm:$0xff] %v1036
                  %v1038 = vld [vmem:[%s700 + $0x540] sm:$0xff]
                  %1039 = vst [vmem:[%s701 + $0x2a0] sm:$0xff] %v1038
                  %v1040 = vld [vmem:[%s700 + $0x548] sm:$0xff]
                  %1041 = vst [vmem:[%s701 + $0x2a4] sm:$0xff] %v1040
                  %v1042 = vld [vmem:[%s700 + $0x550] sm:$0xff]
                  %1043 = vst [vmem:[%s701 + $0x2a8] sm:$0xff] %v1042
                  %v1044 = vld [vmem:[%s700 + $0x558] sm:$0xff]
                  %1045 = vst [vmem:[%s701 + $0x2ac] sm:$0xff] %v1044
                  %v1046 = vld [vmem:[%s700 + $0x560] sm:$0xff]
                  %1047 = vst [vmem:[%s701 + $0x2b0] sm:$0xff] %v1046
                  %v1048 = vld [vmem:[%s700 + $0x568] sm:$0xff]
                  %1049 = vst [vmem:[%s701 + $0x2b4] sm:$0xff] %v1048
                  %v1050 = vld [vmem:[%s700 + $0x570] sm:$0xff]
                  %1051 = vst [vmem:[%s701 + $0x2b8] sm:$0xff] %v1050
                  %v1052 = vld [vmem:[%s700 + $0x578] sm:$0xff]
                  %1053 = vst [vmem:[%s701 + $0x2bc] sm:$0xff] %v1052
                  %v1054 = vld [vmem:[%s700 + $0x580] sm:$0xff]
                  %1055 = vst [vmem:[%s701 + $0x2c0] sm:$0xff] %v1054
                  %v1056 = vld [vmem:[%s700 + $0x588] sm:$0xff]
                  %1057 = vst [vmem:[%s701 + $0x2c4] sm:$0xff] %v1056
                  %v1058 = vld [vmem:[%s700 + $0x590] sm:$0xff]
                  %1059 = vst [vmem:[%s701 + $0x2c8] sm:$0xff] %v1058
                  %v1060 = vld [vmem:[%s700 + $0x598] sm:$0xff]
                  %1061 = vst [vmem:[%s701 + $0x2cc] sm:$0xff] %v1060
                  %v1062 = vld [vmem:[%s700 + $0x5a0] sm:$0xff]
                  %1063 = vst [vmem:[%s701 + $0x2d0] sm:$0xff] %v1062
                  %v1064 = vld [vmem:[%s700 + $0x5a8] sm:$0xff]
                  %1065 = vst [vmem:[%s701 + $0x2d4] sm:$0xff] %v1064
                  %v1066 = vld [vmem:[%s700 + $0x5b0] sm:$0xff]
                  %1067 = vst [vmem:[%s701 + $0x2d8] sm:$0xff] %v1066
                  %v1068 = vld [vmem:[%s700 + $0x5b8] sm:$0xff]
                  %1069 = vst [vmem:[%s701 + $0x2dc] sm:$0xff] %v1068
                  %v1070 = vld [vmem:[%s700 + $0x5c0] sm:$0xff]
                  %1071 = vst [vmem:[%s701 + $0x2e0] sm:$0xff] %v1070
                  %v1072 = vld [vmem:[%s700 + $0x5c8] sm:$0xff]
                  %1073 = vst [vmem:[%s701 + $0x2e4] sm:$0xff] %v1072
                  %v1074 = vld [vmem:[%s700 + $0x5d0] sm:$0xff]
                  %1075 = vst [vmem:[%s701 + $0x2e8] sm:$0xff] %v1074
                  %v1076 = vld [vmem:[%s700 + $0x5d8] sm:$0xff]
                  %1077 = vst [vmem:[%s701 + $0x2ec] sm:$0xff] %v1076
                  %v1078 = vld [vmem:[%s700 + $0x5e0] sm:$0xff]
                  %1079 = vst [vmem:[%s701 + $0x2f0] sm:$0xff] %v1078
                  %v1080 = vld [vmem:[%s700 + $0x5e8] sm:$0xff]
                  %1081 = vst [vmem:[%s701 + $0x2f4] sm:$0xff] %v1080
                  %v1082 = vld [vmem:[%s700 + $0x5f0] sm:$0xff]
                  %1083 = vst [vmem:[%s701 + $0x2f8] sm:$0xff] %v1082
                  %v1084 = vld [vmem:[%s700 + $0x5f8] sm:$0xff]
                  %1085 = vst [vmem:[%s701 + $0x2fc] sm:$0xff] %v1084
                  %v1086 = vld [vmem:[%s700 + $0x600] sm:$0xff]
                  %1087 = vst [vmem:[%s701 + $0x300] sm:$0xff] %v1086
                  %v1088 = vld [vmem:[%s700 + $0x608] sm:$0xff]
                  %1089 = vst [vmem:[%s701 + $0x304] sm:$0xff] %v1088
                  %v1090 = vld [vmem:[%s700 + $0x610] sm:$0xff]
                  %1091 = vst [vmem:[%s701 + $0x308] sm:$0xff] %v1090
                  %v1092 = vld [vmem:[%s700 + $0x618] sm:$0xff]
                  %1093 = vst [vmem:[%s701 + $0x30c] sm:$0xff] %v1092
                  %v1094 = vld [vmem:[%s700 + $0x620] sm:$0xff]
                  %1095 = vst [vmem:[%s701 + $0x310] sm:$0xff] %v1094
                  %v1096 = vld [vmem:[%s700 + $0x628] sm:$0xff]
                  %1097 = vst [vmem:[%s701 + $0x314] sm:$0xff] %v1096
                  %v1098 = vld [vmem:[%s700 + $0x630] sm:$0xff]
                  %1099 = vst [vmem:[%s701 + $0x318] sm:$0xff] %v1098
                  %v1100 = vld [vmem:[%s700 + $0x638] sm:$0xff]
                  %1101 = vst [vmem:[%s701 + $0x31c] sm:$0xff] %v1100
                  %v1102 = vld [vmem:[%s700 + $0x640] sm:$0xff]
                  %1103 = vst [vmem:[%s701 + $0x320] sm:$0xff] %v1102
                  %v1104 = vld [vmem:[%s700 + $0x648] sm:$0xff]
                  %1105 = vst [vmem:[%s701 + $0x324] sm:$0xff] %v1104
                  %v1106 = vld [vmem:[%s700 + $0x650] sm:$0xff]
                  %1107 = vst [vmem:[%s701 + $0x328] sm:$0xff] %v1106
                  %v1108 = vld [vmem:[%s700 + $0x658] sm:$0xff]
                  %1109 = vst [vmem:[%s701 + $0x32c] sm:$0xff] %v1108
                  %v1110 = vld [vmem:[%s700 + $0x660] sm:$0xff]
                  %1111 = vst [vmem:[%s701 + $0x330] sm:$0xff] %v1110
                  %v1112 = vld [vmem:[%s700 + $0x668] sm:$0xff]
                  %1113 = vst [vmem:[%s701 + $0x334] sm:$0xff] %v1112
                  %v1114 = vld [vmem:[%s700 + $0x670] sm:$0xff]
                  %1115 = vst [vmem:[%s701 + $0x338] sm:$0xff] %v1114
                  %v1116 = vld [vmem:[%s700 + $0x678] sm:$0xff]
                  %1117 = vst [vmem:[%s701 + $0x33c] sm:$0xff] %v1116
                  %v1118 = vld [vmem:[%s700 + $0x680] sm:$0xff]
                  %1119 = vst [vmem:[%s701 + $0x340] sm:$0xff] %v1118
                  %v1120 = vld [vmem:[%s700 + $0x688] sm:$0xff]
                  %1121 = vst [vmem:[%s701 + $0x344] sm:$0xff] %v1120
                  %v1122 = vld [vmem:[%s700 + $0x690] sm:$0xff]
                  %1123 = vst [vmem:[%s701 + $0x348] sm:$0xff] %v1122
                  %v1124 = vld [vmem:[%s700 + $0x698] sm:$0xff]
                  %1125 = vst [vmem:[%s701 + $0x34c] sm:$0xff] %v1124
                  %v1126 = vld [vmem:[%s700 + $0x6a0] sm:$0xff]
                  %1127 = vst [vmem:[%s701 + $0x350] sm:$0xff] %v1126
                  %v1128 = vld [vmem:[%s700 + $0x6a8] sm:$0xff]
                  %1129 = vst [vmem:[%s701 + $0x354] sm:$0xff] %v1128
                  %v1130 = vld [vmem:[%s700 + $0x6b0] sm:$0xff]
                  %1131 = vst [vmem:[%s701 + $0x358] sm:$0xff] %v1130
                  %v1132 = vld [vmem:[%s700 + $0x6b8] sm:$0xff]
                  %1133 = vst [vmem:[%s701 + $0x35c] sm:$0xff] %v1132
                  %v1134 = vld [vmem:[%s700 + $0x6c0] sm:$0xff]
                  %1135 = vst [vmem:[%s701 + $0x360] sm:$0xff] %v1134
                  %v1136 = vld [vmem:[%s700 + $0x6c8] sm:$0xff]
                  %1137 = vst [vmem:[%s701 + $0x364] sm:$0xff] %v1136
                  %v1138 = vld [vmem:[%s700 + $0x6d0] sm:$0xff]
                  %1139 = vst [vmem:[%s701 + $0x368] sm:$0xff] %v1138
                  %v1140 = vld [vmem:[%s700 + $0x6d8] sm:$0xff]
                  %1141 = vst [vmem:[%s701 + $0x36c] sm:$0xff] %v1140
                  %v1142 = vld [vmem:[%s700 + $0x6e0] sm:$0xff]
                  %1143 = vst [vmem:[%s701 + $0x370] sm:$0xff] %v1142
                  %v1144 = vld [vmem:[%s700 + $0x6e8] sm:$0xff]
                  %1145 = vst [vmem:[%s701 + $0x374] sm:$0xff] %v1144
                  %v1146 = vld [vmem:[%s700 + $0x6f0] sm:$0xff]
                  %1147 = vst [vmem:[%s701 + $0x378] sm:$0xff] %v1146
                  %v1148 = vld [vmem:[%s700 + $0x6f8] sm:$0xff]
                  %1149 = vst [vmem:[%s701 + $0x37c] sm:$0xff] %v1148
                  %v1150 = vld [vmem:[%s700 + $0x700] sm:$0xff]
                  %1151 = vst [vmem:[%s701 + $0x380] sm:$0xff] %v1150
                  %v1152 = vld [vmem:[%s700 + $0x708] sm:$0xff]
                  %1153 = vst [vmem:[%s701 + $0x384] sm:$0xff] %v1152
                  %v1154 = vld [vmem:[%s700 + $0x710] sm:$0xff]
                  %1155 = vst [vmem:[%s701 + $0x388] sm:$0xff] %v1154
                  %v1156 = vld [vmem:[%s700 + $0x718] sm:$0xff]
                  %1157 = vst [vmem:[%s701 + $0x38c] sm:$0xff] %v1156
                  %v1158 = vld [vmem:[%s700 + $0x720] sm:$0xff]
                  %1159 = vst [vmem:[%s701 + $0x390] sm:$0xff] %v1158
                  %v1160 = vld [vmem:[%s700 + $0x728] sm:$0xff]
                  %1161 = vst [vmem:[%s701 + $0x394] sm:$0xff] %v1160
                  %v1162 = vld [vmem:[%s700 + $0x730] sm:$0xff]
                  %1163 = vst [vmem:[%s701 + $0x398] sm:$0xff] %v1162
                  %v1164 = vld [vmem:[%s700 + $0x738] sm:$0xff]
                  %1165 = vst [vmem:[%s701 + $0x39c] sm:$0xff] %v1164
                  %v1166 = vld [vmem:[%s700 + $0x740] sm:$0xff]
                  %1167 = vst [vmem:[%s701 + $0x3a0] sm:$0xff] %v1166
                  %v1168 = vld [vmem:[%s700 + $0x748] sm:$0xff]
                  %1169 = vst [vmem:[%s701 + $0x3a4] sm:$0xff] %v1168
                  %v1170 = vld [vmem:[%s700 + $0x750] sm:$0xff]
                  %1171 = vst [vmem:[%s701 + $0x3a8] sm:$0xff] %v1170
                  %v1172 = vld [vmem:[%s700 + $0x758] sm:$0xff]
                  %1173 = vst [vmem:[%s701 + $0x3ac] sm:$0xff] %v1172
                  %v1174 = vld [vmem:[%s700 + $0x760] sm:$0xff]
                  %1175 = vst [vmem:[%s701 + $0x3b0] sm:$0xff] %v1174
                  %v1176 = vld [vmem:[%s700 + $0x768] sm:$0xff]
                  %1177 = vst [vmem:[%s701 + $0x3b4] sm:$0xff] %v1176
                  %v1178 = vld [vmem:[%s700 + $0x770] sm:$0xff]
                  %1179 = vst [vmem:[%s701 + $0x3b8] sm:$0xff] %v1178
                  %v1180 = vld [vmem:[%s700 + $0x778] sm:$0xff]
                  %1181 = vst [vmem:[%s701 + $0x3bc] sm:$0xff] %v1180
                  %v1182 = vld [vmem:[%s700 + $0x780] sm:$0xff]
                  %1183 = vst [vmem:[%s701 + $0x3c0] sm:$0xff] %v1182
                  %v1184 = vld [vmem:[%s700 + $0x788] sm:$0xff]
                  %1185 = vst [vmem:[%s701 + $0x3c4] sm:$0xff] %v1184
                  %v1186 = vld [vmem:[%s700 + $0x790] sm:$0xff]
                  %1187 = vst [vmem:[%s701 + $0x3c8] sm:$0xff] %v1186
                  %v1188 = vld [vmem:[%s700 + $0x798] sm:$0xff]
                  %1189 = vst [vmem:[%s701 + $0x3cc] sm:$0xff] %v1188
                  %v1190 = vld [vmem:[%s700 + $0x7a0] sm:$0xff]
                  %1191 = vst [vmem:[%s701 + $0x3d0] sm:$0xff] %v1190
                  %v1192 = vld [vmem:[%s700 + $0x7a8] sm:$0xff]
                  %1193 = vst [vmem:[%s701 + $0x3d4] sm:$0xff] %v1192
                  %v1194 = vld [vmem:[%s700 + $0x7b0] sm:$0xff]
                  %1195 = vst [vmem:[%s701 + $0x3d8] sm:$0xff] %v1194
                  %v1196 = vld [vmem:[%s700 + $0x7b8] sm:$0xff]
                  %1197 = vst [vmem:[%s701 + $0x3dc] sm:$0xff] %v1196
                  %v1198 = vld [vmem:[%s700 + $0x7c0] sm:$0xff]
                  %1199 = vst [vmem:[%s701 + $0x3e0] sm:$0xff] %v1198
                  %v1200 = vld [vmem:[%s700 + $0x7c8] sm:$0xff]
                  %1201 = vst [vmem:[%s701 + $0x3e4] sm:$0xff] %v1200
                  %v1202 = vld [vmem:[%s700 + $0x7d0] sm:$0xff]
                  %1203 = vst [vmem:[%s701 + $0x3e8] sm:$0xff] %v1202
                  %v1204 = vld [vmem:[%s700 + $0x7d8] sm:$0xff]
                  %1205 = vst [vmem:[%s701 + $0x3ec] sm:$0xff] %v1204
                  %v1206 = vld [vmem:[%s700 + $0x7e0] sm:$0xff]
                  %1207 = vst [vmem:[%s701 + $0x3f0] sm:$0xff] %v1206
                  %v1208 = vld [vmem:[%s700 + $0x7e8] sm:$0xff]
                  %1209 = vst [vmem:[%s701 + $0x3f4] sm:$0xff] %v1208
                  %v1210 = vld [vmem:[%s700 + $0x7f0] sm:$0xff]
                  %1211 = vst [vmem:[%s701 + $0x3f8] sm:$0xff] %v1210
                  %v1212 = vld [vmem:[%s700 + $0x7f8] sm:$0xff]
                  %1213 = vst [vmem:[%s701 + $0x3fc] sm:$0xff] %v1212
                  %s1214 = sadd.s32 1, %s699
                  %p1215 = scmp.ge.s32.totalorder %s1214, 0
                  %s1216 = scalar_select %p1215, 0, %s1214
                  %s1217 = smul.u32 %s1216, 8
                  %s1218 = smul.u32 %s1216, 8
                  %s1219 = scalar_lea.vmem %s162, %s1217
                  %s1220 = scalar_lea.vmem %s160, %s1218 [#allocation2]
                $region52: #{carla_encoder_forward.8} parent=46 // loop_footer
                  %s698 = sadd.s32 1, %s694
                $region53: #{carla_encoder_forward.8} parent=46 // loop_footer_branch
                  %693 = sbr.rel target = $region49
                $region54: #{carla_encoder_forward.8} parent=46 // loop_exit
                  _
              $region47: #{carla_encoder_forward.8} parent=31 // pred_fallthru
                _
              // Predicated region
              $region55: #{carla_encoder_forward.8} parent=31 // pred_check
                _
              $region56: #{carla_encoder_forward.8} parent=31 // pred_check_branch
                %1222 = sbr.rel (0) target = $region58
              $region57: #{carla_encoder_forward.8} parent=31 // pred_region
                loop: start=0, step=1, limit=0
                $region59: #{carla_encoder_forward.8} parent=57 // loop_pre_header
                  _
                $region60: #{carla_encoder_forward.8} parent=57 // loop_header
                  %s1224 = sphi 0, %s1228
                  %p1225 = scmp.ge.s32.totalorder %s1224, 0
                  %s1229 = sphi 0, %s1746
                  %s1230 = sphi %s162, %s1749
                  %s1231 = sphi %s160, %s1750
                $region61: #{carla_encoder_forward.8} parent=57 // loop_header_branch
                  %1227 = sbr.rel (%p1225) target = $region65
                $region62: #{carla_encoder_forward.8} parent=57 // loop_body
                  %v1232 = vld [vmem:[%s1230] sm:$0xff]
                  %1233 = vst [vmem:[%s1231] sm:$0xff] %v1232
                  %v1234 = vld [vmem:[%s1230 + $0x8] sm:$0xff]
                  %1235 = vst [vmem:[%s1231 + $0x4] sm:$0xff] %v1234
                  %v1236 = vld [vmem:[%s1230 + $0x10] sm:$0xff]
                  %1237 = vst [vmem:[%s1231 + $0x8] sm:$0xff] %v1236
                  %v1238 = vld [vmem:[%s1230 + $0x18] sm:$0xff]
                  %1239 = vst [vmem:[%s1231 + $0xc] sm:$0xff] %v1238
                  %v1240 = vld [vmem:[%s1230 + $0x20] sm:$0xff]
                  %1241 = vst [vmem:[%s1231 + $0x10] sm:$0xff] %v1240
                  %v1242 = vld [vmem:[%s1230 + $0x28] sm:$0xff]
                  %1243 = vst [vmem:[%s1231 + $0x14] sm:$0xff] %v1242
                  %v1244 = vld [vmem:[%s1230 + $0x30] sm:$0xff]
                  %1245 = vst [vmem:[%s1231 + $0x18] sm:$0xff] %v1244
                  %v1246 = vld [vmem:[%s1230 + $0x38] sm:$0xff]
                  %1247 = vst [vmem:[%s1231 + $0x1c] sm:$0xff] %v1246
                  %v1248 = vld [vmem:[%s1230 + $0x40] sm:$0xff]
                  %1249 = vst [vmem:[%s1231 + $0x20] sm:$0xff] %v1248
                  %v1250 = vld [vmem:[%s1230 + $0x48] sm:$0xff]
                  %1251 = vst [vmem:[%s1231 + $0x24] sm:$0xff] %v1250
                  %v1252 = vld [vmem:[%s1230 + $0x50] sm:$0xff]
                  %1253 = vst [vmem:[%s1231 + $0x28] sm:$0xff] %v1252
                  %v1254 = vld [vmem:[%s1230 + $0x58] sm:$0xff]
                  %1255 = vst [vmem:[%s1231 + $0x2c] sm:$0xff] %v1254
                  %v1256 = vld [vmem:[%s1230 + $0x60] sm:$0xff]
                  %1257 = vst [vmem:[%s1231 + $0x30] sm:$0xff] %v1256
                  %v1258 = vld [vmem:[%s1230 + $0x68] sm:$0xff]
                  %1259 = vst [vmem:[%s1231 + $0x34] sm:$0xff] %v1258
                  %v1260 = vld [vmem:[%s1230 + $0x70] sm:$0xff]
                  %1261 = vst [vmem:[%s1231 + $0x38] sm:$0xff] %v1260
                  %v1262 = vld [vmem:[%s1230 + $0x78] sm:$0xff]
                  %1263 = vst [vmem:[%s1231 + $0x3c] sm:$0xff] %v1262
                  %v1264 = vld [vmem:[%s1230 + $0x80] sm:$0xff]
                  %1265 = vst [vmem:[%s1231 + $0x40] sm:$0xff] %v1264
                  %v1266 = vld [vmem:[%s1230 + $0x88] sm:$0xff]
                  %1267 = vst [vmem:[%s1231 + $0x44] sm:$0xff] %v1266
                  %v1268 = vld [vmem:[%s1230 + $0x90] sm:$0xff]
                  %1269 = vst [vmem:[%s1231 + $0x48] sm:$0xff] %v1268
                  %v1270 = vld [vmem:[%s1230 + $0x98] sm:$0xff]
                  %1271 = vst [vmem:[%s1231 + $0x4c] sm:$0xff] %v1270
                  %v1272 = vld [vmem:[%s1230 + $0xa0] sm:$0xff]
                  %1273 = vst [vmem:[%s1231 + $0x50] sm:$0xff] %v1272
                  %v1274 = vld [vmem:[%s1230 + $0xa8] sm:$0xff]
                  %1275 = vst [vmem:[%s1231 + $0x54] sm:$0xff] %v1274
                  %v1276 = vld [vmem:[%s1230 + $0xb0] sm:$0xff]
                  %1277 = vst [vmem:[%s1231 + $0x58] sm:$0xff] %v1276
                  %v1278 = vld [vmem:[%s1230 + $0xb8] sm:$0xff]
                  %1279 = vst [vmem:[%s1231 + $0x5c] sm:$0xff] %v1278
                  %v1280 = vld [vmem:[%s1230 + $0xc0] sm:$0xff]
                  %1281 = vst [vmem:[%s1231 + $0x60] sm:$0xff] %v1280
                  %v1282 = vld [vmem:[%s1230 + $0xc8] sm:$0xff]
                  %1283 = vst [vmem:[%s1231 + $0x64] sm:$0xff] %v1282
                  %v1284 = vld [vmem:[%s1230 + $0xd0] sm:$0xff]
                  %1285 = vst [vmem:[%s1231 + $0x68] sm:$0xff] %v1284
                  %v1286 = vld [vmem:[%s1230 + $0xd8] sm:$0xff]
                  %1287 = vst [vmem:[%s1231 + $0x6c] sm:$0xff] %v1286
                  %v1288 = vld [vmem:[%s1230 + $0xe0] sm:$0xff]
                  %1289 = vst [vmem:[%s1231 + $0x70] sm:$0xff] %v1288
                  %v1290 = vld [vmem:[%s1230 + $0xe8] sm:$0xff]
                  %1291 = vst [vmem:[%s1231 + $0x74] sm:$0xff] %v1290
                  %v1292 = vld [vmem:[%s1230 + $0xf0] sm:$0xff]
                  %1293 = vst [vmem:[%s1231 + $0x78] sm:$0xff] %v1292
                  %v1294 = vld [vmem:[%s1230 + $0xf8] sm:$0xff]
                  %1295 = vst [vmem:[%s1231 + $0x7c] sm:$0xff] %v1294
                  %v1296 = vld [vmem:[%s1230 + $0x100] sm:$0xff]
                  %1297 = vst [vmem:[%s1231 + $0x80] sm:$0xff] %v1296
                  %v1298 = vld [vmem:[%s1230 + $0x108] sm:$0xff]
                  %1299 = vst [vmem:[%s1231 + $0x84] sm:$0xff] %v1298
                  %v1300 = vld [vmem:[%s1230 + $0x110] sm:$0xff]
                  %1301 = vst [vmem:[%s1231 + $0x88] sm:$0xff] %v1300
                  %v1302 = vld [vmem:[%s1230 + $0x118] sm:$0xff]
                  %1303 = vst [vmem:[%s1231 + $0x8c] sm:$0xff] %v1302
                  %v1304 = vld [vmem:[%s1230 + $0x120] sm:$0xff]
                  %1305 = vst [vmem:[%s1231 + $0x90] sm:$0xff] %v1304
                  %v1306 = vld [vmem:[%s1230 + $0x128] sm:$0xff]
                  %1307 = vst [vmem:[%s1231 + $0x94] sm:$0xff] %v1306
                  %v1308 = vld [vmem:[%s1230 + $0x130] sm:$0xff]
                  %1309 = vst [vmem:[%s1231 + $0x98] sm:$0xff] %v1308
                  %v1310 = vld [vmem:[%s1230 + $0x138] sm:$0xff]
                  %1311 = vst [vmem:[%s1231 + $0x9c] sm:$0xff] %v1310
                  %v1312 = vld [vmem:[%s1230 + $0x140] sm:$0xff]
                  %1313 = vst [vmem:[%s1231 + $0xa0] sm:$0xff] %v1312
                  %v1314 = vld [vmem:[%s1230 + $0x148] sm:$0xff]
                  %1315 = vst [vmem:[%s1231 + $0xa4] sm:$0xff] %v1314
                  %v1316 = vld [vmem:[%s1230 + $0x150] sm:$0xff]
                  %1317 = vst [vmem:[%s1231 + $0xa8] sm:$0xff] %v1316
                  %v1318 = vld [vmem:[%s1230 + $0x158] sm:$0xff]
                  %1319 = vst [vmem:[%s1231 + $0xac] sm:$0xff] %v1318
                  %v1320 = vld [vmem:[%s1230 + $0x160] sm:$0xff]
                  %1321 = vst [vmem:[%s1231 + $0xb0] sm:$0xff] %v1320
                  %v1322 = vld [vmem:[%s1230 + $0x168] sm:$0xff]
                  %1323 = vst [vmem:[%s1231 + $0xb4] sm:$0xff] %v1322
                  %v1324 = vld [vmem:[%s1230 + $0x170] sm:$0xff]
                  %1325 = vst [vmem:[%s1231 + $0xb8] sm:$0xff] %v1324
                  %v1326 = vld [vmem:[%s1230 + $0x178] sm:$0xff]
                  %1327 = vst [vmem:[%s1231 + $0xbc] sm:$0xff] %v1326
                  %v1328 = vld [vmem:[%s1230 + $0x180] sm:$0xff]
                  %1329 = vst [vmem:[%s1231 + $0xc0] sm:$0xff] %v1328
                  %v1330 = vld [vmem:[%s1230 + $0x188] sm:$0xff]
                  %1331 = vst [vmem:[%s1231 + $0xc4] sm:$0xff] %v1330
                  %v1332 = vld [vmem:[%s1230 + $0x190] sm:$0xff]
                  %1333 = vst [vmem:[%s1231 + $0xc8] sm:$0xff] %v1332
                  %v1334 = vld [vmem:[%s1230 + $0x198] sm:$0xff]
                  %1335 = vst [vmem:[%s1231 + $0xcc] sm:$0xff] %v1334
                  %v1336 = vld [vmem:[%s1230 + $0x1a0] sm:$0xff]
                  %1337 = vst [vmem:[%s1231 + $0xd0] sm:$0xff] %v1336
                  %v1338 = vld [vmem:[%s1230 + $0x1a8] sm:$0xff]
                  %1339 = vst [vmem:[%s1231 + $0xd4] sm:$0xff] %v1338
                  %v1340 = vld [vmem:[%s1230 + $0x1b0] sm:$0xff]
                  %1341 = vst [vmem:[%s1231 + $0xd8] sm:$0xff] %v1340
                  %v1342 = vld [vmem:[%s1230 + $0x1b8] sm:$0xff]
                  %1343 = vst [vmem:[%s1231 + $0xdc] sm:$0xff] %v1342
                  %v1344 = vld [vmem:[%s1230 + $0x1c0] sm:$0xff]
                  %1345 = vst [vmem:[%s1231 + $0xe0] sm:$0xff] %v1344
                  %v1346 = vld [vmem:[%s1230 + $0x1c8] sm:$0xff]
                  %1347 = vst [vmem:[%s1231 + $0xe4] sm:$0xff] %v1346
                  %v1348 = vld [vmem:[%s1230 + $0x1d0] sm:$0xff]
                  %1349 = vst [vmem:[%s1231 + $0xe8] sm:$0xff] %v1348
                  %v1350 = vld [vmem:[%s1230 + $0x1d8] sm:$0xff]
                  %1351 = vst [vmem:[%s1231 + $0xec] sm:$0xff] %v1350
                  %v1352 = vld [vmem:[%s1230 + $0x1e0] sm:$0xff]
                  %1353 = vst [vmem:[%s1231 + $0xf0] sm:$0xff] %v1352
                  %v1354 = vld [vmem:[%s1230 + $0x1e8] sm:$0xff]
                  %1355 = vst [vmem:[%s1231 + $0xf4] sm:$0xff] %v1354
                  %v1356 = vld [vmem:[%s1230 + $0x1f0] sm:$0xff]
                  %1357 = vst [vmem:[%s1231 + $0xf8] sm:$0xff] %v1356
                  %v1358 = vld [vmem:[%s1230 + $0x1f8] sm:$0xff]
                  %1359 = vst [vmem:[%s1231 + $0xfc] sm:$0xff] %v1358
                  %v1360 = vld [vmem:[%s1230 + $0x200] sm:$0xff]
                  %1361 = vst [vmem:[%s1231 + $0x100] sm:$0xff] %v1360
                  %v1362 = vld [vmem:[%s1230 + $0x208] sm:$0xff]
                  %1363 = vst [vmem:[%s1231 + $0x104] sm:$0xff] %v1362
                  %v1364 = vld [vmem:[%s1230 + $0x210] sm:$0xff]
                  %1365 = vst [vmem:[%s1231 + $0x108] sm:$0xff] %v1364
                  %v1366 = vld [vmem:[%s1230 + $0x218] sm:$0xff]
                  %1367 = vst [vmem:[%s1231 + $0x10c] sm:$0xff] %v1366
                  %v1368 = vld [vmem:[%s1230 + $0x220] sm:$0xff]
                  %1369 = vst [vmem:[%s1231 + $0x110] sm:$0xff] %v1368
                  %v1370 = vld [vmem:[%s1230 + $0x228] sm:$0xff]
                  %1371 = vst [vmem:[%s1231 + $0x114] sm:$0xff] %v1370
                  %v1372 = vld [vmem:[%s1230 + $0x230] sm:$0xff]
                  %1373 = vst [vmem:[%s1231 + $0x118] sm:$0xff] %v1372
                  %v1374 = vld [vmem:[%s1230 + $0x238] sm:$0xff]
                  %1375 = vst [vmem:[%s1231 + $0x11c] sm:$0xff] %v1374
                  %v1376 = vld [vmem:[%s1230 + $0x240] sm:$0xff]
                  %1377 = vst [vmem:[%s1231 + $0x120] sm:$0xff] %v1376
                  %v1378 = vld [vmem:[%s1230 + $0x248] sm:$0xff]
                  %1379 = vst [vmem:[%s1231 + $0x124] sm:$0xff] %v1378
                  %v1380 = vld [vmem:[%s1230 + $0x250] sm:$0xff]
                  %1381 = vst [vmem:[%s1231 + $0x128] sm:$0xff] %v1380
                  %v1382 = vld [vmem:[%s1230 + $0x258] sm:$0xff]
                  %1383 = vst [vmem:[%s1231 + $0x12c] sm:$0xff] %v1382
                  %v1384 = vld [vmem:[%s1230 + $0x260] sm:$0xff]
                  %1385 = vst [vmem:[%s1231 + $0x130] sm:$0xff] %v1384
                  %v1386 = vld [vmem:[%s1230 + $0x268] sm:$0xff]
                  %1387 = vst [vmem:[%s1231 + $0x134] sm:$0xff] %v1386
                  %v1388 = vld [vmem:[%s1230 + $0x270] sm:$0xff]
                  %1389 = vst [vmem:[%s1231 + $0x138] sm:$0xff] %v1388
                  %v1390 = vld [vmem:[%s1230 + $0x278] sm:$0xff]
                  %1391 = vst [vmem:[%s1231 + $0x13c] sm:$0xff] %v1390
                  %v1392 = vld [vmem:[%s1230 + $0x280] sm:$0xff]
                  %1393 = vst [vmem:[%s1231 + $0x140] sm:$0xff] %v1392
                  %v1394 = vld [vmem:[%s1230 + $0x288] sm:$0xff]
                  %1395 = vst [vmem:[%s1231 + $0x144] sm:$0xff] %v1394
                  %v1396 = vld [vmem:[%s1230 + $0x290] sm:$0xff]
                  %1397 = vst [vmem:[%s1231 + $0x148] sm:$0xff] %v1396
                  %v1398 = vld [vmem:[%s1230 + $0x298] sm:$0xff]
                  %1399 = vst [vmem:[%s1231 + $0x14c] sm:$0xff] %v1398
                  %v1400 = vld [vmem:[%s1230 + $0x2a0] sm:$0xff]
                  %1401 = vst [vmem:[%s1231 + $0x150] sm:$0xff] %v1400
                  %v1402 = vld [vmem:[%s1230 + $0x2a8] sm:$0xff]
                  %1403 = vst [vmem:[%s1231 + $0x154] sm:$0xff] %v1402
                  %v1404 = vld [vmem:[%s1230 + $0x2b0] sm:$0xff]
                  %1405 = vst [vmem:[%s1231 + $0x158] sm:$0xff] %v1404
                  %v1406 = vld [vmem:[%s1230 + $0x2b8] sm:$0xff]
                  %1407 = vst [vmem:[%s1231 + $0x15c] sm:$0xff] %v1406
                  %v1408 = vld [vmem:[%s1230 + $0x2c0] sm:$0xff]
                  %1409 = vst [vmem:[%s1231 + $0x160] sm:$0xff] %v1408
                  %v1410 = vld [vmem:[%s1230 + $0x2c8] sm:$0xff]
                  %1411 = vst [vmem:[%s1231 + $0x164] sm:$0xff] %v1410
                  %v1412 = vld [vmem:[%s1230 + $0x2d0] sm:$0xff]
                  %1413 = vst [vmem:[%s1231 + $0x168] sm:$0xff] %v1412
                  %v1414 = vld [vmem:[%s1230 + $0x2d8] sm:$0xff]
                  %1415 = vst [vmem:[%s1231 + $0x16c] sm:$0xff] %v1414
                  %v1416 = vld [vmem:[%s1230 + $0x2e0] sm:$0xff]
                  %1417 = vst [vmem:[%s1231 + $0x170] sm:$0xff] %v1416
                  %v1418 = vld [vmem:[%s1230 + $0x2e8] sm:$0xff]
                  %1419 = vst [vmem:[%s1231 + $0x174] sm:$0xff] %v1418
                  %v1420 = vld [vmem:[%s1230 + $0x2f0] sm:$0xff]
                  %1421 = vst [vmem:[%s1231 + $0x178] sm:$0xff] %v1420
                  %v1422 = vld [vmem:[%s1230 + $0x2f8] sm:$0xff]
                  %1423 = vst [vmem:[%s1231 + $0x17c] sm:$0xff] %v1422
                  %v1424 = vld [vmem:[%s1230 + $0x300] sm:$0xff]
                  %1425 = vst [vmem:[%s1231 + $0x180] sm:$0xff] %v1424
                  %v1426 = vld [vmem:[%s1230 + $0x308] sm:$0xff]
                  %1427 = vst [vmem:[%s1231 + $0x184] sm:$0xff] %v1426
                  %v1428 = vld [vmem:[%s1230 + $0x310] sm:$0xff]
                  %1429 = vst [vmem:[%s1231 + $0x188] sm:$0xff] %v1428
                  %v1430 = vld [vmem:[%s1230 + $0x318] sm:$0xff]
                  %1431 = vst [vmem:[%s1231 + $0x18c] sm:$0xff] %v1430
                  %v1432 = vld [vmem:[%s1230 + $0x320] sm:$0xff]
                  %1433 = vst [vmem:[%s1231 + $0x190] sm:$0xff] %v1432
                  %v1434 = vld [vmem:[%s1230 + $0x328] sm:$0xff]
                  %1435 = vst [vmem:[%s1231 + $0x194] sm:$0xff] %v1434
                  %v1436 = vld [vmem:[%s1230 + $0x330] sm:$0xff]
                  %1437 = vst [vmem:[%s1231 + $0x198] sm:$0xff] %v1436
                  %v1438 = vld [vmem:[%s1230 + $0x338] sm:$0xff]
                  %1439 = vst [vmem:[%s1231 + $0x19c] sm:$0xff] %v1438
                  %v1440 = vld [vmem:[%s1230 + $0x340] sm:$0xff]
                  %1441 = vst [vmem:[%s1231 + $0x1a0] sm:$0xff] %v1440
                  %v1442 = vld [vmem:[%s1230 + $0x348] sm:$0xff]
                  %1443 = vst [vmem:[%s1231 + $0x1a4] sm:$0xff] %v1442
                  %v1444 = vld [vmem:[%s1230 + $0x350] sm:$0xff]
                  %1445 = vst [vmem:[%s1231 + $0x1a8] sm:$0xff] %v1444
                  %v1446 = vld [vmem:[%s1230 + $0x358] sm:$0xff]
                  %1447 = vst [vmem:[%s1231 + $0x1ac] sm:$0xff] %v1446
                  %v1448 = vld [vmem:[%s1230 + $0x360] sm:$0xff]
                  %1449 = vst [vmem:[%s1231 + $0x1b0] sm:$0xff] %v1448
                  %v1450 = vld [vmem:[%s1230 + $0x368] sm:$0xff]
                  %1451 = vst [vmem:[%s1231 + $0x1b4] sm:$0xff] %v1450
                  %v1452 = vld [vmem:[%s1230 + $0x370] sm:$0xff]
                  %1453 = vst [vmem:[%s1231 + $0x1b8] sm:$0xff] %v1452
                  %v1454 = vld [vmem:[%s1230 + $0x378] sm:$0xff]
                  %1455 = vst [vmem:[%s1231 + $0x1bc] sm:$0xff] %v1454
                  %v1456 = vld [vmem:[%s1230 + $0x380] sm:$0xff]
                  %1457 = vst [vmem:[%s1231 + $0x1c0] sm:$0xff] %v1456
                  %v1458 = vld [vmem:[%s1230 + $0x388] sm:$0xff]
                  %1459 = vst [vmem:[%s1231 + $0x1c4] sm:$0xff] %v1458
                  %v1460 = vld [vmem:[%s1230 + $0x390] sm:$0xff]
                  %1461 = vst [vmem:[%s1231 + $0x1c8] sm:$0xff] %v1460
                  %v1462 = vld [vmem:[%s1230 + $0x398] sm:$0xff]
                  %1463 = vst [vmem:[%s1231 + $0x1cc] sm:$0xff] %v1462
                  %v1464 = vld [vmem:[%s1230 + $0x3a0] sm:$0xff]
                  %1465 = vst [vmem:[%s1231 + $0x1d0] sm:$0xff] %v1464
                  %v1466 = vld [vmem:[%s1230 + $0x3a8] sm:$0xff]
                  %1467 = vst [vmem:[%s1231 + $0x1d4] sm:$0xff] %v1466
                  %v1468 = vld [vmem:[%s1230 + $0x3b0] sm:$0xff]
                  %1469 = vst [vmem:[%s1231 + $0x1d8] sm:$0xff] %v1468
                  %v1470 = vld [vmem:[%s1230 + $0x3b8] sm:$0xff]
                  %1471 = vst [vmem:[%s1231 + $0x1dc] sm:$0xff] %v1470
                  %v1472 = vld [vmem:[%s1230 + $0x3c0] sm:$0xff]
                  %1473 = vst [vmem:[%s1231 + $0x1e0] sm:$0xff] %v1472
                  %v1474 = vld [vmem:[%s1230 + $0x3c8] sm:$0xff]
                  %1475 = vst [vmem:[%s1231 + $0x1e4] sm:$0xff] %v1474
                  %v1476 = vld [vmem:[%s1230 + $0x3d0] sm:$0xff]
                  %1477 = vst [vmem:[%s1231 + $0x1e8] sm:$0xff] %v1476
                  %v1478 = vld [vmem:[%s1230 + $0x3d8] sm:$0xff]
                  %1479 = vst [vmem:[%s1231 + $0x1ec] sm:$0xff] %v1478
                  %v1480 = vld [vmem:[%s1230 + $0x3e0] sm:$0xff]
                  %1481 = vst [vmem:[%s1231 + $0x1f0] sm:$0xff] %v1480
                  %v1482 = vld [vmem:[%s1230 + $0x3e8] sm:$0xff]
                  %1483 = vst [vmem:[%s1231 + $0x1f4] sm:$0xff] %v1482
                  %v1484 = vld [vmem:[%s1230 + $0x3f0] sm:$0xff]
                  %1485 = vst [vmem:[%s1231 + $0x1f8] sm:$0xff] %v1484
                  %v1486 = vld [vmem:[%s1230 + $0x3f8] sm:$0xff]
                  %1487 = vst [vmem:[%s1231 + $0x1fc] sm:$0xff] %v1486
                  %v1488 = vld [vmem:[%s1230 + $0x400] sm:$0xff]
                  %1489 = vst [vmem:[%s1231 + $0x200] sm:$0xff] %v1488
                  %v1490 = vld [vmem:[%s1230 + $0x408] sm:$0xff]
                  %1491 = vst [vmem:[%s1231 + $0x204] sm:$0xff] %v1490
                  %v1492 = vld [vmem:[%s1230 + $0x410] sm:$0xff]
                  %1493 = vst [vmem:[%s1231 + $0x208] sm:$0xff] %v1492
                  %v1494 = vld [vmem:[%s1230 + $0x418] sm:$0xff]
                  %1495 = vst [vmem:[%s1231 + $0x20c] sm:$0xff] %v1494
                  %v1496 = vld [vmem:[%s1230 + $0x420] sm:$0xff]
                  %1497 = vst [vmem:[%s1231 + $0x210] sm:$0xff] %v1496
                  %v1498 = vld [vmem:[%s1230 + $0x428] sm:$0xff]
                  %1499 = vst [vmem:[%s1231 + $0x214] sm:$0xff] %v1498
                  %v1500 = vld [vmem:[%s1230 + $0x430] sm:$0xff]
                  %1501 = vst [vmem:[%s1231 + $0x218] sm:$0xff] %v1500
                  %v1502 = vld [vmem:[%s1230 + $0x438] sm:$0xff]
                  %1503 = vst [vmem:[%s1231 + $0x21c] sm:$0xff] %v1502
                  %v1504 = vld [vmem:[%s1230 + $0x440] sm:$0xff]
                  %1505 = vst [vmem:[%s1231 + $0x220] sm:$0xff] %v1504
                  %v1506 = vld [vmem:[%s1230 + $0x448] sm:$0xff]
                  %1507 = vst [vmem:[%s1231 + $0x224] sm:$0xff] %v1506
                  %v1508 = vld [vmem:[%s1230 + $0x450] sm:$0xff]
                  %1509 = vst [vmem:[%s1231 + $0x228] sm:$0xff] %v1508
                  %v1510 = vld [vmem:[%s1230 + $0x458] sm:$0xff]
                  %1511 = vst [vmem:[%s1231 + $0x22c] sm:$0xff] %v1510
                  %v1512 = vld [vmem:[%s1230 + $0x460] sm:$0xff]
                  %1513 = vst [vmem:[%s1231 + $0x230] sm:$0xff] %v1512
                  %v1514 = vld [vmem:[%s1230 + $0x468] sm:$0xff]
                  %1515 = vst [vmem:[%s1231 + $0x234] sm:$0xff] %v1514
                  %v1516 = vld [vmem:[%s1230 + $0x470] sm:$0xff]
                  %1517 = vst [vmem:[%s1231 + $0x238] sm:$0xff] %v1516
                  %v1518 = vld [vmem:[%s1230 + $0x478] sm:$0xff]
                  %1519 = vst [vmem:[%s1231 + $0x23c] sm:$0xff] %v1518
                  %v1520 = vld [vmem:[%s1230 + $0x480] sm:$0xff]
                  %1521 = vst [vmem:[%s1231 + $0x240] sm:$0xff] %v1520
                  %v1522 = vld [vmem:[%s1230 + $0x488] sm:$0xff]
                  %1523 = vst [vmem:[%s1231 + $0x244] sm:$0xff] %v1522
                  %v1524 = vld [vmem:[%s1230 + $0x490] sm:$0xff]
                  %1525 = vst [vmem:[%s1231 + $0x248] sm:$0xff] %v1524
                  %v1526 = vld [vmem:[%s1230 + $0x498] sm:$0xff]
                  %1527 = vst [vmem:[%s1231 + $0x24c] sm:$0xff] %v1526
                  %v1528 = vld [vmem:[%s1230 + $0x4a0] sm:$0xff]
                  %1529 = vst [vmem:[%s1231 + $0x250] sm:$0xff] %v1528
                  %v1530 = vld [vmem:[%s1230 + $0x4a8] sm:$0xff]
                  %1531 = vst [vmem:[%s1231 + $0x254] sm:$0xff] %v1530
                  %v1532 = vld [vmem:[%s1230 + $0x4b0] sm:$0xff]
                  %1533 = vst [vmem:[%s1231 + $0x258] sm:$0xff] %v1532
                  %v1534 = vld [vmem:[%s1230 + $0x4b8] sm:$0xff]
                  %1535 = vst [vmem:[%s1231 + $0x25c] sm:$0xff] %v1534
                  %v1536 = vld [vmem:[%s1230 + $0x4c0] sm:$0xff]
                  %1537 = vst [vmem:[%s1231 + $0x260] sm:$0xff] %v1536
                  %v1538 = vld [vmem:[%s1230 + $0x4c8] sm:$0xff]
                  %1539 = vst [vmem:[%s1231 + $0x264] sm:$0xff] %v1538
                  %v1540 = vld [vmem:[%s1230 + $0x4d0] sm:$0xff]
                  %1541 = vst [vmem:[%s1231 + $0x268] sm:$0xff] %v1540
                  %v1542 = vld [vmem:[%s1230 + $0x4d8] sm:$0xff]
                  %1543 = vst [vmem:[%s1231 + $0x26c] sm:$0xff] %v1542
                  %v1544 = vld [vmem:[%s1230 + $0x4e0] sm:$0xff]
                  %1545 = vst [vmem:[%s1231 + $0x270] sm:$0xff] %v1544
                  %v1546 = vld [vmem:[%s1230 + $0x4e8] sm:$0xff]
                  %1547 = vst [vmem:[%s1231 + $0x274] sm:$0xff] %v1546
                  %v1548 = vld [vmem:[%s1230 + $0x4f0] sm:$0xff]
                  %1549 = vst [vmem:[%s1231 + $0x278] sm:$0xff] %v1548
                  %v1550 = vld [vmem:[%s1230 + $0x4f8] sm:$0xff]
                  %1551 = vst [vmem:[%s1231 + $0x27c] sm:$0xff] %v1550
                  %v1552 = vld [vmem:[%s1230 + $0x500] sm:$0xff]
                  %1553 = vst [vmem:[%s1231 + $0x280] sm:$0xff] %v1552
                  %v1554 = vld [vmem:[%s1230 + $0x508] sm:$0xff]
                  %1555 = vst [vmem:[%s1231 + $0x284] sm:$0xff] %v1554
                  %v1556 = vld [vmem:[%s1230 + $0x510] sm:$0xff]
                  %1557 = vst [vmem:[%s1231 + $0x288] sm:$0xff] %v1556
                  %v1558 = vld [vmem:[%s1230 + $0x518] sm:$0xff]
                  %1559 = vst [vmem:[%s1231 + $0x28c] sm:$0xff] %v1558
                  %v1560 = vld [vmem:[%s1230 + $0x520] sm:$0xff]
                  %1561 = vst [vmem:[%s1231 + $0x290] sm:$0xff] %v1560
                  %v1562 = vld [vmem:[%s1230 + $0x528] sm:$0xff]
                  %1563 = vst [vmem:[%s1231 + $0x294] sm:$0xff] %v1562
                  %v1564 = vld [vmem:[%s1230 + $0x530] sm:$0xff]
                  %1565 = vst [vmem:[%s1231 + $0x298] sm:$0xff] %v1564
                  %v1566 = vld [vmem:[%s1230 + $0x538] sm:$0xff]
                  %1567 = vst [vmem:[%s1231 + $0x29c] sm:$0xff] %v1566
                  %v1568 = vld [vmem:[%s1230 + $0x540] sm:$0xff]
                  %1569 = vst [vmem:[%s1231 + $0x2a0] sm:$0xff] %v1568
                  %v1570 = vld [vmem:[%s1230 + $0x548] sm:$0xff]
                  %1571 = vst [vmem:[%s1231 + $0x2a4] sm:$0xff] %v1570
                  %v1572 = vld [vmem:[%s1230 + $0x550] sm:$0xff]
                  %1573 = vst [vmem:[%s1231 + $0x2a8] sm:$0xff] %v1572
                  %v1574 = vld [vmem:[%s1230 + $0x558] sm:$0xff]
                  %1575 = vst [vmem:[%s1231 + $0x2ac] sm:$0xff] %v1574
                  %v1576 = vld [vmem:[%s1230 + $0x560] sm:$0xff]
                  %1577 = vst [vmem:[%s1231 + $0x2b0] sm:$0xff] %v1576
                  %v1578 = vld [vmem:[%s1230 + $0x568] sm:$0xff]
                  %1579 = vst [vmem:[%s1231 + $0x2b4] sm:$0xff] %v1578
                  %v1580 = vld [vmem:[%s1230 + $0x570] sm:$0xff]
                  %1581 = vst [vmem:[%s1231 + $0x2b8] sm:$0xff] %v1580
                  %v1582 = vld [vmem:[%s1230 + $0x578] sm:$0xff]
                  %1583 = vst [vmem:[%s1231 + $0x2bc] sm:$0xff] %v1582
                  %v1584 = vld [vmem:[%s1230 + $0x580] sm:$0xff]
                  %1585 = vst [vmem:[%s1231 + $0x2c0] sm:$0xff] %v1584
                  %v1586 = vld [vmem:[%s1230 + $0x588] sm:$0xff]
                  %1587 = vst [vmem:[%s1231 + $0x2c4] sm:$0xff] %v1586
                  %v1588 = vld [vmem:[%s1230 + $0x590] sm:$0xff]
                  %1589 = vst [vmem:[%s1231 + $0x2c8] sm:$0xff] %v1588
                  %v1590 = vld [vmem:[%s1230 + $0x598] sm:$0xff]
                  %1591 = vst [vmem:[%s1231 + $0x2cc] sm:$0xff] %v1590
                  %v1592 = vld [vmem:[%s1230 + $0x5a0] sm:$0xff]
                  %1593 = vst [vmem:[%s1231 + $0x2d0] sm:$0xff] %v1592
                  %v1594 = vld [vmem:[%s1230 + $0x5a8] sm:$0xff]
                  %1595 = vst [vmem:[%s1231 + $0x2d4] sm:$0xff] %v1594
                  %v1596 = vld [vmem:[%s1230 + $0x5b0] sm:$0xff]
                  %1597 = vst [vmem:[%s1231 + $0x2d8] sm:$0xff] %v1596
                  %v1598 = vld [vmem:[%s1230 + $0x5b8] sm:$0xff]
                  %1599 = vst [vmem:[%s1231 + $0x2dc] sm:$0xff] %v1598
                  %v1600 = vld [vmem:[%s1230 + $0x5c0] sm:$0xff]
                  %1601 = vst [vmem:[%s1231 + $0x2e0] sm:$0xff] %v1600
                  %v1602 = vld [vmem:[%s1230 + $0x5c8] sm:$0xff]
                  %1603 = vst [vmem:[%s1231 + $0x2e4] sm:$0xff] %v1602
                  %v1604 = vld [vmem:[%s1230 + $0x5d0] sm:$0xff]
                  %1605 = vst [vmem:[%s1231 + $0x2e8] sm:$0xff] %v1604
                  %v1606 = vld [vmem:[%s1230 + $0x5d8] sm:$0xff]
                  %1607 = vst [vmem:[%s1231 + $0x2ec] sm:$0xff] %v1606
                  %v1608 = vld [vmem:[%s1230 + $0x5e0] sm:$0xff]
                  %1609 = vst [vmem:[%s1231 + $0x2f0] sm:$0xff] %v1608
                  %v1610 = vld [vmem:[%s1230 + $0x5e8] sm:$0xff]
                  %1611 = vst [vmem:[%s1231 + $0x2f4] sm:$0xff] %v1610
                  %v1612 = vld [vmem:[%s1230 + $0x5f0] sm:$0xff]
                  %1613 = vst [vmem:[%s1231 + $0x2f8] sm:$0xff] %v1612
                  %v1614 = vld [vmem:[%s1230 + $0x5f8] sm:$0xff]
                  %1615 = vst [vmem:[%s1231 + $0x2fc] sm:$0xff] %v1614
                  %v1616 = vld [vmem:[%s1230 + $0x600] sm:$0xff]
                  %1617 = vst [vmem:[%s1231 + $0x300] sm:$0xff] %v1616
                  %v1618 = vld [vmem:[%s1230 + $0x608] sm:$0xff]
                  %1619 = vst [vmem:[%s1231 + $0x304] sm:$0xff] %v1618
                  %v1620 = vld [vmem:[%s1230 + $0x610] sm:$0xff]
                  %1621 = vst [vmem:[%s1231 + $0x308] sm:$0xff] %v1620
                  %v1622 = vld [vmem:[%s1230 + $0x618] sm:$0xff]
                  %1623 = vst [vmem:[%s1231 + $0x30c] sm:$0xff] %v1622
                  %v1624 = vld [vmem:[%s1230 + $0x620] sm:$0xff]
                  %1625 = vst [vmem:[%s1231 + $0x310] sm:$0xff] %v1624
                  %v1626 = vld [vmem:[%s1230 + $0x628] sm:$0xff]
                  %1627 = vst [vmem:[%s1231 + $0x314] sm:$0xff] %v1626
                  %v1628 = vld [vmem:[%s1230 + $0x630] sm:$0xff]
                  %1629 = vst [vmem:[%s1231 + $0x318] sm:$0xff] %v1628
                  %v1630 = vld [vmem:[%s1230 + $0x638] sm:$0xff]
                  %1631 = vst [vmem:[%s1231 + $0x31c] sm:$0xff] %v1630
                  %v1632 = vld [vmem:[%s1230 + $0x640] sm:$0xff]
                  %1633 = vst [vmem:[%s1231 + $0x320] sm:$0xff] %v1632
                  %v1634 = vld [vmem:[%s1230 + $0x648] sm:$0xff]
                  %1635 = vst [vmem:[%s1231 + $0x324] sm:$0xff] %v1634
                  %v1636 = vld [vmem:[%s1230 + $0x650] sm:$0xff]
                  %1637 = vst [vmem:[%s1231 + $0x328] sm:$0xff] %v1636
                  %v1638 = vld [vmem:[%s1230 + $0x658] sm:$0xff]
                  %1639 = vst [vmem:[%s1231 + $0x32c] sm:$0xff] %v1638
                  %v1640 = vld [vmem:[%s1230 + $0x660] sm:$0xff]
                  %1641 = vst [vmem:[%s1231 + $0x330] sm:$0xff] %v1640
                  %v1642 = vld [vmem:[%s1230 + $0x668] sm:$0xff]
                  %1643 = vst [vmem:[%s1231 + $0x334] sm:$0xff] %v1642
                  %v1644 = vld [vmem:[%s1230 + $0x670] sm:$0xff]
                  %1645 = vst [vmem:[%s1231 + $0x338] sm:$0xff] %v1644
                  %v1646 = vld [vmem:[%s1230 + $0x678] sm:$0xff]
                  %1647 = vst [vmem:[%s1231 + $0x33c] sm:$0xff] %v1646
                  %v1648 = vld [vmem:[%s1230 + $0x680] sm:$0xff]
                  %1649 = vst [vmem:[%s1231 + $0x340] sm:$0xff] %v1648
                  %v1650 = vld [vmem:[%s1230 + $0x688] sm:$0xff]
                  %1651 = vst [vmem:[%s1231 + $0x344] sm:$0xff] %v1650
                  %v1652 = vld [vmem:[%s1230 + $0x690] sm:$0xff]
                  %1653 = vst [vmem:[%s1231 + $0x348] sm:$0xff] %v1652
                  %v1654 = vld [vmem:[%s1230 + $0x698] sm:$0xff]
                  %1655 = vst [vmem:[%s1231 + $0x34c] sm:$0xff] %v1654
                  %v1656 = vld [vmem:[%s1230 + $0x6a0] sm:$0xff]
                  %1657 = vst [vmem:[%s1231 + $0x350] sm:$0xff] %v1656
                  %v1658 = vld [vmem:[%s1230 + $0x6a8] sm:$0xff]
                  %1659 = vst [vmem:[%s1231 + $0x354] sm:$0xff] %v1658
                  %v1660 = vld [vmem:[%s1230 + $0x6b0] sm:$0xff]
                  %1661 = vst [vmem:[%s1231 + $0x358] sm:$0xff] %v1660
                  %v1662 = vld [vmem:[%s1230 + $0x6b8] sm:$0xff]
                  %1663 = vst [vmem:[%s1231 + $0x35c] sm:$0xff] %v1662
                  %v1664 = vld [vmem:[%s1230 + $0x6c0] sm:$0xff]
                  %1665 = vst [vmem:[%s1231 + $0x360] sm:$0xff] %v1664
                  %v1666 = vld [vmem:[%s1230 + $0x6c8] sm:$0xff]
                  %1667 = vst [vmem:[%s1231 + $0x364] sm:$0xff] %v1666
                  %v1668 = vld [vmem:[%s1230 + $0x6d0] sm:$0xff]
                  %1669 = vst [vmem:[%s1231 + $0x368] sm:$0xff] %v1668
                  %v1670 = vld [vmem:[%s1230 + $0x6d8] sm:$0xff]
                  %1671 = vst [vmem:[%s1231 + $0x36c] sm:$0xff] %v1670
                  %v1672 = vld [vmem:[%s1230 + $0x6e0] sm:$0xff]
                  %1673 = vst [vmem:[%s1231 + $0x370] sm:$0xff] %v1672
                  %v1674 = vld [vmem:[%s1230 + $0x6e8] sm:$0xff]
                  %1675 = vst [vmem:[%s1231 + $0x374] sm:$0xff] %v1674
                  %v1676 = vld [vmem:[%s1230 + $0x6f0] sm:$0xff]
                  %1677 = vst [vmem:[%s1231 + $0x378] sm:$0xff] %v1676
                  %v1678 = vld [vmem:[%s1230 + $0x6f8] sm:$0xff]
                  %1679 = vst [vmem:[%s1231 + $0x37c] sm:$0xff] %v1678
                  %v1680 = vld [vmem:[%s1230 + $0x700] sm:$0xff]
                  %1681 = vst [vmem:[%s1231 + $0x380] sm:$0xff] %v1680
                  %v1682 = vld [vmem:[%s1230 + $0x708] sm:$0xff]
                  %1683 = vst [vmem:[%s1231 + $0x384] sm:$0xff] %v1682
                  %v1684 = vld [vmem:[%s1230 + $0x710] sm:$0xff]
                  %1685 = vst [vmem:[%s1231 + $0x388] sm:$0xff] %v1684
                  %v1686 = vld [vmem:[%s1230 + $0x718] sm:$0xff]
                  %1687 = vst [vmem:[%s1231 + $0x38c] sm:$0xff] %v1686
                  %v1688 = vld [vmem:[%s1230 + $0x720] sm:$0xff]
                  %1689 = vst [vmem:[%s1231 + $0x390] sm:$0xff] %v1688
                  %v1690 = vld [vmem:[%s1230 + $0x728] sm:$0xff]
                  %1691 = vst [vmem:[%s1231 + $0x394] sm:$0xff] %v1690
                  %v1692 = vld [vmem:[%s1230 + $0x730] sm:$0xff]
                  %1693 = vst [vmem:[%s1231 + $0x398] sm:$0xff] %v1692
                  %v1694 = vld [vmem:[%s1230 + $0x738] sm:$0xff]
                  %1695 = vst [vmem:[%s1231 + $0x39c] sm:$0xff] %v1694
                  %v1696 = vld [vmem:[%s1230 + $0x740] sm:$0xff]
                  %1697 = vst [vmem:[%s1231 + $0x3a0] sm:$0xff] %v1696
                  %v1698 = vld [vmem:[%s1230 + $0x748] sm:$0xff]
                  %1699 = vst [vmem:[%s1231 + $0x3a4] sm:$0xff] %v1698
                  %v1700 = vld [vmem:[%s1230 + $0x750] sm:$0xff]
                  %1701 = vst [vmem:[%s1231 + $0x3a8] sm:$0xff] %v1700
                  %v1702 = vld [vmem:[%s1230 + $0x758] sm:$0xff]
                  %1703 = vst [vmem:[%s1231 + $0x3ac] sm:$0xff] %v1702
                  %v1704 = vld [vmem:[%s1230 + $0x760] sm:$0xff]
                  %1705 = vst [vmem:[%s1231 + $0x3b0] sm:$0xff] %v1704
                  %v1706 = vld [vmem:[%s1230 + $0x768] sm:$0xff]
                  %1707 = vst [vmem:[%s1231 + $0x3b4] sm:$0xff] %v1706
                  %v1708 = vld [vmem:[%s1230 + $0x770] sm:$0xff]
                  %1709 = vst [vmem:[%s1231 + $0x3b8] sm:$0xff] %v1708
                  %v1710 = vld [vmem:[%s1230 + $0x778] sm:$0xff]
                  %1711 = vst [vmem:[%s1231 + $0x3bc] sm:$0xff] %v1710
                  %v1712 = vld [vmem:[%s1230 + $0x780] sm:$0xff]
                  %1713 = vst [vmem:[%s1231 + $0x3c0] sm:$0xff] %v1712
                  %v1714 = vld [vmem:[%s1230 + $0x788] sm:$0xff]
                  %1715 = vst [vmem:[%s1231 + $0x3c4] sm:$0xff] %v1714
                  %v1716 = vld [vmem:[%s1230 + $0x790] sm:$0xff]
                  %1717 = vst [vmem:[%s1231 + $0x3c8] sm:$0xff] %v1716
                  %v1718 = vld [vmem:[%s1230 + $0x798] sm:$0xff]
                  %1719 = vst [vmem:[%s1231 + $0x3cc] sm:$0xff] %v1718
                  %v1720 = vld [vmem:[%s1230 + $0x7a0] sm:$0xff]
                  %1721 = vst [vmem:[%s1231 + $0x3d0] sm:$0xff] %v1720
                  %v1722 = vld [vmem:[%s1230 + $0x7a8] sm:$0xff]
                  %1723 = vst [vmem:[%s1231 + $0x3d4] sm:$0xff] %v1722
                  %v1724 = vld [vmem:[%s1230 + $0x7b0] sm:$0xff]
                  %1725 = vst [vmem:[%s1231 + $0x3d8] sm:$0xff] %v1724
                  %v1726 = vld [vmem:[%s1230 + $0x7b8] sm:$0xff]
                  %1727 = vst [vmem:[%s1231 + $0x3dc] sm:$0xff] %v1726
                  %v1728 = vld [vmem:[%s1230 + $0x7c0] sm:$0xff]
                  %1729 = vst [vmem:[%s1231 + $0x3e0] sm:$0xff] %v1728
                  %v1730 = vld [vmem:[%s1230 + $0x7c8] sm:$0xff]
                  %1731 = vst [vmem:[%s1231 + $0x3e4] sm:$0xff] %v1730
                  %v1732 = vld [vmem:[%s1230 + $0x7d0] sm:$0xff]
                  %1733 = vst [vmem:[%s1231 + $0x3e8] sm:$0xff] %v1732
                  %v1734 = vld [vmem:[%s1230 + $0x7d8] sm:$0xff]
                  %1735 = vst [vmem:[%s1231 + $0x3ec] sm:$0xff] %v1734
                  %v1736 = vld [vmem:[%s1230 + $0x7e0] sm:$0xff]
                  %1737 = vst [vmem:[%s1231 + $0x3f0] sm:$0xff] %v1736
                  %v1738 = vld [vmem:[%s1230 + $0x7e8] sm:$0xff]
                  %1739 = vst [vmem:[%s1231 + $0x3f4] sm:$0xff] %v1738
                  %v1740 = vld [vmem:[%s1230 + $0x7f0] sm:$0xff]
                  %1741 = vst [vmem:[%s1231 + $0x3f8] sm:$0xff] %v1740
                  %v1742 = vld [vmem:[%s1230 + $0x7f8] sm:$0xff]
                  %1743 = vst [vmem:[%s1231 + $0x3fc] sm:$0xff] %v1742
                  %s1744 = sadd.s32 1, %s1229
                  %p1745 = scmp.ge.s32.totalorder %s1744, 0
                  %s1746 = scalar_select %p1745, 0, %s1744
                  %s1747 = smul.u32 %s1746, 8
                  %s1748 = smul.u32 %s1746, 8
                  %s1749 = scalar_lea.vmem %s162, %s1747
                  %s1750 = scalar_lea.vmem %s160, %s1748 [#allocation2]
                $region63: #{carla_encoder_forward.8} parent=57 // loop_footer
                  %s1228 = sadd.s32 1, %s1224
                $region64: #{carla_encoder_forward.8} parent=57 // loop_footer_branch
                  %1223 = sbr.rel target = $region60
                $region65: #{carla_encoder_forward.8} parent=57 // loop_exit
                  _
                %s1752 = ssub.s32 16, 1
                loop: start=0, step=1, limit=1
                $region66: #{carla_encoder_forward.8} parent=57 // loop_pre_header
                  _
                $region67: #{carla_encoder_forward.8} parent=57 // loop_header
                  %s1754 = sphi 0, %s1758
                  %p1755 = scmp.ge.s32.totalorder %s1754, 1
                  %s1759 = sphi %s162, %s162
                  %s1760 = sphi %s160, %s160
                $region68: #{carla_encoder_forward.8} parent=57 // loop_header_branch
                  %1757 = sbr.rel (%p1755) target = $region72
                $region69: #{carla_encoder_forward.8} parent=57 // loop_body
                  %v1761 = vld [vmem:[%s1759] sm:%s1752]
                  %1762 = vst [vmem:[%s1760] sm:%s1752] %v1761
                  %v1763 = vld [vmem:[%s1759 + $0x8] sm:%s1752]
                  %1764 = vst [vmem:[%s1760 + $0x4] sm:%s1752] %v1763
                  %v1765 = vld [vmem:[%s1759 + $0x10] sm:%s1752]
                  %1766 = vst [vmem:[%s1760 + $0x8] sm:%s1752] %v1765
                  %v1767 = vld [vmem:[%s1759 + $0x18] sm:%s1752]
                  %1768 = vst [vmem:[%s1760 + $0xc] sm:%s1752] %v1767
                  %v1769 = vld [vmem:[%s1759 + $0x20] sm:%s1752]
                  %1770 = vst [vmem:[%s1760 + $0x10] sm:%s1752] %v1769
                  %v1771 = vld [vmem:[%s1759 + $0x28] sm:%s1752]
                  %1772 = vst [vmem:[%s1760 + $0x14] sm:%s1752] %v1771
                  %v1773 = vld [vmem:[%s1759 + $0x30] sm:%s1752]
                  %1774 = vst [vmem:[%s1760 + $0x18] sm:%s1752] %v1773
                  %v1775 = vld [vmem:[%s1759 + $0x38] sm:%s1752]
                  %1776 = vst [vmem:[%s1760 + $0x1c] sm:%s1752] %v1775
                  %v1777 = vld [vmem:[%s1759 + $0x40] sm:%s1752]
                  %1778 = vst [vmem:[%s1760 + $0x20] sm:%s1752] %v1777
                  %v1779 = vld [vmem:[%s1759 + $0x48] sm:%s1752]
                  %1780 = vst [vmem:[%s1760 + $0x24] sm:%s1752] %v1779
                  %v1781 = vld [vmem:[%s1759 + $0x50] sm:%s1752]
                  %1782 = vst [vmem:[%s1760 + $0x28] sm:%s1752] %v1781
                  %v1783 = vld [vmem:[%s1759 + $0x58] sm:%s1752]
                  %1784 = vst [vmem:[%s1760 + $0x2c] sm:%s1752] %v1783
                  %v1785 = vld [vmem:[%s1759 + $0x60] sm:%s1752]
                  %1786 = vst [vmem:[%s1760 + $0x30] sm:%s1752] %v1785
                  %v1787 = vld [vmem:[%s1759 + $0x68] sm:%s1752]
                  %1788 = vst [vmem:[%s1760 + $0x34] sm:%s1752] %v1787
                  %v1789 = vld [vmem:[%s1759 + $0x70] sm:%s1752]
                  %1790 = vst [vmem:[%s1760 + $0x38] sm:%s1752] %v1789
                  %v1791 = vld [vmem:[%s1759 + $0x78] sm:%s1752]
                  %1792 = vst [vmem:[%s1760 + $0x3c] sm:%s1752] %v1791
                  %v1793 = vld [vmem:[%s1759 + $0x80] sm:%s1752]
                  %1794 = vst [vmem:[%s1760 + $0x40] sm:%s1752] %v1793
                  %v1795 = vld [vmem:[%s1759 + $0x88] sm:%s1752]
                  %1796 = vst [vmem:[%s1760 + $0x44] sm:%s1752] %v1795
                  %v1797 = vld [vmem:[%s1759 + $0x90] sm:%s1752]
                  %1798 = vst [vmem:[%s1760 + $0x48] sm:%s1752] %v1797
                  %v1799 = vld [vmem:[%s1759 + $0x98] sm:%s1752]
                  %1800 = vst [vmem:[%s1760 + $0x4c] sm:%s1752] %v1799
                  %v1801 = vld [vmem:[%s1759 + $0xa0] sm:%s1752]
                  %1802 = vst [vmem:[%s1760 + $0x50] sm:%s1752] %v1801
                  %v1803 = vld [vmem:[%s1759 + $0xa8] sm:%s1752]
                  %1804 = vst [vmem:[%s1760 + $0x54] sm:%s1752] %v1803
                  %v1805 = vld [vmem:[%s1759 + $0xb0] sm:%s1752]
                  %1806 = vst [vmem:[%s1760 + $0x58] sm:%s1752] %v1805
                  %v1807 = vld [vmem:[%s1759 + $0xb8] sm:%s1752]
                  %1808 = vst [vmem:[%s1760 + $0x5c] sm:%s1752] %v1807
                  %v1809 = vld [vmem:[%s1759 + $0xc0] sm:%s1752]
                  %1810 = vst [vmem:[%s1760 + $0x60] sm:%s1752] %v1809
                  %v1811 = vld [vmem:[%s1759 + $0xc8] sm:%s1752]
                  %1812 = vst [vmem:[%s1760 + $0x64] sm:%s1752] %v1811
                  %v1813 = vld [vmem:[%s1759 + $0xd0] sm:%s1752]
                  %1814 = vst [vmem:[%s1760 + $0x68] sm:%s1752] %v1813
                  %v1815 = vld [vmem:[%s1759 + $0xd8] sm:%s1752]
                  %1816 = vst [vmem:[%s1760 + $0x6c] sm:%s1752] %v1815
                  %v1817 = vld [vmem:[%s1759 + $0xe0] sm:%s1752]
                  %1818 = vst [vmem:[%s1760 + $0x70] sm:%s1752] %v1817
                  %v1819 = vld [vmem:[%s1759 + $0xe8] sm:%s1752]
                  %1820 = vst [vmem:[%s1760 + $0x74] sm:%s1752] %v1819
                  %v1821 = vld [vmem:[%s1759 + $0xf0] sm:%s1752]
                  %1822 = vst [vmem:[%s1760 + $0x78] sm:%s1752] %v1821
                  %v1823 = vld [vmem:[%s1759 + $0xf8] sm:%s1752]
                  %1824 = vst [vmem:[%s1760 + $0x7c] sm:%s1752] %v1823
                  %v1825 = vld [vmem:[%s1759 + $0x100] sm:%s1752]
                  %1826 = vst [vmem:[%s1760 + $0x80] sm:%s1752] %v1825
                  %v1827 = vld [vmem:[%s1759 + $0x108] sm:%s1752]
                  %1828 = vst [vmem:[%s1760 + $0x84] sm:%s1752] %v1827
                  %v1829 = vld [vmem:[%s1759 + $0x110] sm:%s1752]
                  %1830 = vst [vmem:[%s1760 + $0x88] sm:%s1752] %v1829
                  %v1831 = vld [vmem:[%s1759 + $0x118] sm:%s1752]
                  %1832 = vst [vmem:[%s1760 + $0x8c] sm:%s1752] %v1831
                  %v1833 = vld [vmem:[%s1759 + $0x120] sm:%s1752]
                  %1834 = vst [vmem:[%s1760 + $0x90] sm:%s1752] %v1833
                  %v1835 = vld [vmem:[%s1759 + $0x128] sm:%s1752]
                  %1836 = vst [vmem:[%s1760 + $0x94] sm:%s1752] %v1835
                  %v1837 = vld [vmem:[%s1759 + $0x130] sm:%s1752]
                  %1838 = vst [vmem:[%s1760 + $0x98] sm:%s1752] %v1837
                  %v1839 = vld [vmem:[%s1759 + $0x138] sm:%s1752]
                  %1840 = vst [vmem:[%s1760 + $0x9c] sm:%s1752] %v1839
                  %v1841 = vld [vmem:[%s1759 + $0x140] sm:%s1752]
                  %1842 = vst [vmem:[%s1760 + $0xa0] sm:%s1752] %v1841
                  %v1843 = vld [vmem:[%s1759 + $0x148] sm:%s1752]
                  %1844 = vst [vmem:[%s1760 + $0xa4] sm:%s1752] %v1843
                  %v1845 = vld [vmem:[%s1759 + $0x150] sm:%s1752]
                  %1846 = vst [vmem:[%s1760 + $0xa8] sm:%s1752] %v1845
                  %v1847 = vld [vmem:[%s1759 + $0x158] sm:%s1752]
                  %1848 = vst [vmem:[%s1760 + $0xac] sm:%s1752] %v1847
                  %v1849 = vld [vmem:[%s1759 + $0x160] sm:%s1752]
                  %1850 = vst [vmem:[%s1760 + $0xb0] sm:%s1752] %v1849
                  %v1851 = vld [vmem:[%s1759 + $0x168] sm:%s1752]
                  %1852 = vst [vmem:[%s1760 + $0xb4] sm:%s1752] %v1851
                  %v1853 = vld [vmem:[%s1759 + $0x170] sm:%s1752]
                  %1854 = vst [vmem:[%s1760 + $0xb8] sm:%s1752] %v1853
                  %v1855 = vld [vmem:[%s1759 + $0x178] sm:%s1752]
                  %1856 = vst [vmem:[%s1760 + $0xbc] sm:%s1752] %v1855
                  %v1857 = vld [vmem:[%s1759 + $0x180] sm:%s1752]
                  %1858 = vst [vmem:[%s1760 + $0xc0] sm:%s1752] %v1857
                  %v1859 = vld [vmem:[%s1759 + $0x188] sm:%s1752]
                  %1860 = vst [vmem:[%s1760 + $0xc4] sm:%s1752] %v1859
                  %v1861 = vld [vmem:[%s1759 + $0x190] sm:%s1752]
                  %1862 = vst [vmem:[%s1760 + $0xc8] sm:%s1752] %v1861
                  %v1863 = vld [vmem:[%s1759 + $0x198] sm:%s1752]
                  %1864 = vst [vmem:[%s1760 + $0xcc] sm:%s1752] %v1863
                  %v1865 = vld [vmem:[%s1759 + $0x1a0] sm:%s1752]
                  %1866 = vst [vmem:[%s1760 + $0xd0] sm:%s1752] %v1865
                  %v1867 = vld [vmem:[%s1759 + $0x1a8] sm:%s1752]
                  %1868 = vst [vmem:[%s1760 + $0xd4] sm:%s1752] %v1867
                  %v1869 = vld [vmem:[%s1759 + $0x1b0] sm:%s1752]
                  %1870 = vst [vmem:[%s1760 + $0xd8] sm:%s1752] %v1869
                  %v1871 = vld [vmem:[%s1759 + $0x1b8] sm:%s1752]
                  %1872 = vst [vmem:[%s1760 + $0xdc] sm:%s1752] %v1871
                  %v1873 = vld [vmem:[%s1759 + $0x1c0] sm:%s1752]
                  %1874 = vst [vmem:[%s1760 + $0xe0] sm:%s1752] %v1873
                  %v1875 = vld [vmem:[%s1759 + $0x1c8] sm:%s1752]
                  %1876 = vst [vmem:[%s1760 + $0xe4] sm:%s1752] %v1875
                  %v1877 = vld [vmem:[%s1759 + $0x1d0] sm:%s1752]
                  %1878 = vst [vmem:[%s1760 + $0xe8] sm:%s1752] %v1877
                  %v1879 = vld [vmem:[%s1759 + $0x1d8] sm:%s1752]
                  %1880 = vst [vmem:[%s1760 + $0xec] sm:%s1752] %v1879
                  %v1881 = vld [vmem:[%s1759 + $0x1e0] sm:%s1752]
                  %1882 = vst [vmem:[%s1760 + $0xf0] sm:%s1752] %v1881
                  %v1883 = vld [vmem:[%s1759 + $0x1e8] sm:%s1752]
                  %1884 = vst [vmem:[%s1760 + $0xf4] sm:%s1752] %v1883
                  %v1885 = vld [vmem:[%s1759 + $0x1f0] sm:%s1752]
                  %1886 = vst [vmem:[%s1760 + $0xf8] sm:%s1752] %v1885
                  %v1887 = vld [vmem:[%s1759 + $0x1f8] sm:%s1752]
                  %1888 = vst [vmem:[%s1760 + $0xfc] sm:%s1752] %v1887
                  %v1889 = vld [vmem:[%s1759 + $0x200] sm:%s1752]
                  %1890 = vst [vmem:[%s1760 + $0x100] sm:%s1752] %v1889
                  %v1891 = vld [vmem:[%s1759 + $0x208] sm:%s1752]
                  %1892 = vst [vmem:[%s1760 + $0x104] sm:%s1752] %v1891
                  %v1893 = vld [vmem:[%s1759 + $0x210] sm:%s1752]
                  %1894 = vst [vmem:[%s1760 + $0x108] sm:%s1752] %v1893
                  %v1895 = vld [vmem:[%s1759 + $0x218] sm:%s1752]
                  %1896 = vst [vmem:[%s1760 + $0x10c] sm:%s1752] %v1895
                  %v1897 = vld [vmem:[%s1759 + $0x220] sm:%s1752]
                  %1898 = vst [vmem:[%s1760 + $0x110] sm:%s1752] %v1897
                  %v1899 = vld [vmem:[%s1759 + $0x228] sm:%s1752]
                  %1900 = vst [vmem:[%s1760 + $0x114] sm:%s1752] %v1899
                  %v1901 = vld [vmem:[%s1759 + $0x230] sm:%s1752]
                  %1902 = vst [vmem:[%s1760 + $0x118] sm:%s1752] %v1901
                  %v1903 = vld [vmem:[%s1759 + $0x238] sm:%s1752]
                  %1904 = vst [vmem:[%s1760 + $0x11c] sm:%s1752] %v1903
                  %v1905 = vld [vmem:[%s1759 + $0x240] sm:%s1752]
                  %1906 = vst [vmem:[%s1760 + $0x120] sm:%s1752] %v1905
                  %v1907 = vld [vmem:[%s1759 + $0x248] sm:%s1752]
                  %1908 = vst [vmem:[%s1760 + $0x124] sm:%s1752] %v1907
                  %v1909 = vld [vmem:[%s1759 + $0x250] sm:%s1752]
                  %1910 = vst [vmem:[%s1760 + $0x128] sm:%s1752] %v1909
                  %v1911 = vld [vmem:[%s1759 + $0x258] sm:%s1752]
                  %1912 = vst [vmem:[%s1760 + $0x12c] sm:%s1752] %v1911
                  %v1913 = vld [vmem:[%s1759 + $0x260] sm:%s1752]
                  %1914 = vst [vmem:[%s1760 + $0x130] sm:%s1752] %v1913
                  %v1915 = vld [vmem:[%s1759 + $0x268] sm:%s1752]
                  %1916 = vst [vmem:[%s1760 + $0x134] sm:%s1752] %v1915
                  %v1917 = vld [vmem:[%s1759 + $0x270] sm:%s1752]
                  %1918 = vst [vmem:[%s1760 + $0x138] sm:%s1752] %v1917
                  %v1919 = vld [vmem:[%s1759 + $0x278] sm:%s1752]
                  %1920 = vst [vmem:[%s1760 + $0x13c] sm:%s1752] %v1919
                  %v1921 = vld [vmem:[%s1759 + $0x280] sm:%s1752]
                  %1922 = vst [vmem:[%s1760 + $0x140] sm:%s1752] %v1921
                  %v1923 = vld [vmem:[%s1759 + $0x288] sm:%s1752]
                  %1924 = vst [vmem:[%s1760 + $0x144] sm:%s1752] %v1923
                  %v1925 = vld [vmem:[%s1759 + $0x290] sm:%s1752]
                  %1926 = vst [vmem:[%s1760 + $0x148] sm:%s1752] %v1925
                  %v1927 = vld [vmem:[%s1759 + $0x298] sm:%s1752]
                  %1928 = vst [vmem:[%s1760 + $0x14c] sm:%s1752] %v1927
                  %v1929 = vld [vmem:[%s1759 + $0x2a0] sm:%s1752]
                  %1930 = vst [vmem:[%s1760 + $0x150] sm:%s1752] %v1929
                  %v1931 = vld [vmem:[%s1759 + $0x2a8] sm:%s1752]
                  %1932 = vst [vmem:[%s1760 + $0x154] sm:%s1752] %v1931
                  %v1933 = vld [vmem:[%s1759 + $0x2b0] sm:%s1752]
                  %1934 = vst [vmem:[%s1760 + $0x158] sm:%s1752] %v1933
                  %v1935 = vld [vmem:[%s1759 + $0x2b8] sm:%s1752]
                  %1936 = vst [vmem:[%s1760 + $0x15c] sm:%s1752] %v1935
                  %v1937 = vld [vmem:[%s1759 + $0x2c0] sm:%s1752]
                  %1938 = vst [vmem:[%s1760 + $0x160] sm:%s1752] %v1937
                  %v1939 = vld [vmem:[%s1759 + $0x2c8] sm:%s1752]
                  %1940 = vst [vmem:[%s1760 + $0x164] sm:%s1752] %v1939
                  %v1941 = vld [vmem:[%s1759 + $0x2d0] sm:%s1752]
                  %1942 = vst [vmem:[%s1760 + $0x168] sm:%s1752] %v1941
                  %v1943 = vld [vmem:[%s1759 + $0x2d8] sm:%s1752]
                  %1944 = vst [vmem:[%s1760 + $0x16c] sm:%s1752] %v1943
                  %v1945 = vld [vmem:[%s1759 + $0x2e0] sm:%s1752]
                  %1946 = vst [vmem:[%s1760 + $0x170] sm:%s1752] %v1945
                  %v1947 = vld [vmem:[%s1759 + $0x2e8] sm:%s1752]
                  %1948 = vst [vmem:[%s1760 + $0x174] sm:%s1752] %v1947
                  %v1949 = vld [vmem:[%s1759 + $0x2f0] sm:%s1752]
                  %1950 = vst [vmem:[%s1760 + $0x178] sm:%s1752] %v1949
                  %v1951 = vld [vmem:[%s1759 + $0x2f8] sm:%s1752]
                  %1952 = vst [vmem:[%s1760 + $0x17c] sm:%s1752] %v1951
                  %v1953 = vld [vmem:[%s1759 + $0x300] sm:%s1752]
                  %1954 = vst [vmem:[%s1760 + $0x180] sm:%s1752] %v1953
                  %v1955 = vld [vmem:[%s1759 + $0x308] sm:%s1752]
                  %1956 = vst [vmem:[%s1760 + $0x184] sm:%s1752] %v1955
                  %v1957 = vld [vmem:[%s1759 + $0x310] sm:%s1752]
                  %1958 = vst [vmem:[%s1760 + $0x188] sm:%s1752] %v1957
                  %v1959 = vld [vmem:[%s1759 + $0x318] sm:%s1752]
                  %1960 = vst [vmem:[%s1760 + $0x18c] sm:%s1752] %v1959
                  %v1961 = vld [vmem:[%s1759 + $0x320] sm:%s1752]
                  %1962 = vst [vmem:[%s1760 + $0x190] sm:%s1752] %v1961
                  %v1963 = vld [vmem:[%s1759 + $0x328] sm:%s1752]
                  %1964 = vst [vmem:[%s1760 + $0x194] sm:%s1752] %v1963
                  %v1965 = vld [vmem:[%s1759 + $0x330] sm:%s1752]
                  %1966 = vst [vmem:[%s1760 + $0x198] sm:%s1752] %v1965
                  %v1967 = vld [vmem:[%s1759 + $0x338] sm:%s1752]
                  %1968 = vst [vmem:[%s1760 + $0x19c] sm:%s1752] %v1967
                  %v1969 = vld [vmem:[%s1759 + $0x340] sm:%s1752]
                  %1970 = vst [vmem:[%s1760 + $0x1a0] sm:%s1752] %v1969
                  %v1971 = vld [vmem:[%s1759 + $0x348] sm:%s1752]
                  %1972 = vst [vmem:[%s1760 + $0x1a4] sm:%s1752] %v1971
                  %v1973 = vld [vmem:[%s1759 + $0x350] sm:%s1752]
                  %1974 = vst [vmem:[%s1760 + $0x1a8] sm:%s1752] %v1973
                  %v1975 = vld [vmem:[%s1759 + $0x358] sm:%s1752]
                  %1976 = vst [vmem:[%s1760 + $0x1ac] sm:%s1752] %v1975
                  %v1977 = vld [vmem:[%s1759 + $0x360] sm:%s1752]
                  %1978 = vst [vmem:[%s1760 + $0x1b0] sm:%s1752] %v1977
                  %v1979 = vld [vmem:[%s1759 + $0x368] sm:%s1752]
                  %1980 = vst [vmem:[%s1760 + $0x1b4] sm:%s1752] %v1979
                  %v1981 = vld [vmem:[%s1759 + $0x370] sm:%s1752]
                  %1982 = vst [vmem:[%s1760 + $0x1b8] sm:%s1752] %v1981
                  %v1983 = vld [vmem:[%s1759 + $0x378] sm:%s1752]
                  %1984 = vst [vmem:[%s1760 + $0x1bc] sm:%s1752] %v1983
                  %v1985 = vld [vmem:[%s1759 + $0x380] sm:%s1752]
                  %1986 = vst [vmem:[%s1760 + $0x1c0] sm:%s1752] %v1985
                  %v1987 = vld [vmem:[%s1759 + $0x388] sm:%s1752]
                  %1988 = vst [vmem:[%s1760 + $0x1c4] sm:%s1752] %v1987
                  %v1989 = vld [vmem:[%s1759 + $0x390] sm:%s1752]
                  %1990 = vst [vmem:[%s1760 + $0x1c8] sm:%s1752] %v1989
                  %v1991 = vld [vmem:[%s1759 + $0x398] sm:%s1752]
                  %1992 = vst [vmem:[%s1760 + $0x1cc] sm:%s1752] %v1991
                  %v1993 = vld [vmem:[%s1759 + $0x3a0] sm:%s1752]
                  %1994 = vst [vmem:[%s1760 + $0x1d0] sm:%s1752] %v1993
                  %v1995 = vld [vmem:[%s1759 + $0x3a8] sm:%s1752]
                  %1996 = vst [vmem:[%s1760 + $0x1d4] sm:%s1752] %v1995
                  %v1997 = vld [vmem:[%s1759 + $0x3b0] sm:%s1752]
                  %1998 = vst [vmem:[%s1760 + $0x1d8] sm:%s1752] %v1997
                  %v1999 = vld [vmem:[%s1759 + $0x3b8] sm:%s1752]
                  %2000 = vst [vmem:[%s1760 + $0x1dc] sm:%s1752] %v1999
                  %v2001 = vld [vmem:[%s1759 + $0x3c0] sm:%s1752]
                  %2002 = vst [vmem:[%s1760 + $0x1e0] sm:%s1752] %v2001
                  %v2003 = vld [vmem:[%s1759 + $0x3c8] sm:%s1752]
                  %2004 = vst [vmem:[%s1760 + $0x1e4] sm:%s1752] %v2003
                  %v2005 = vld [vmem:[%s1759 + $0x3d0] sm:%s1752]
                  %2006 = vst [vmem:[%s1760 + $0x1e8] sm:%s1752] %v2005
                  %v2007 = vld [vmem:[%s1759 + $0x3d8] sm:%s1752]
                  %2008 = vst [vmem:[%s1760 + $0x1ec] sm:%s1752] %v2007
                  %v2009 = vld [vmem:[%s1759 + $0x3e0] sm:%s1752]
                  %2010 = vst [vmem:[%s1760 + $0x1f0] sm:%s1752] %v2009
                  %v2011 = vld [vmem:[%s1759 + $0x3e8] sm:%s1752]
                  %2012 = vst [vmem:[%s1760 + $0x1f4] sm:%s1752] %v2011
                  %v2013 = vld [vmem:[%s1759 + $0x3f0] sm:%s1752]
                  %2014 = vst [vmem:[%s1760 + $0x1f8] sm:%s1752] %v2013
                  %v2015 = vld [vmem:[%s1759 + $0x3f8] sm:%s1752]
                  %2016 = vst [vmem:[%s1760 + $0x1fc] sm:%s1752] %v2015
                  %v2017 = vld [vmem:[%s1759 + $0x400] sm:%s1752]
                  %2018 = vst [vmem:[%s1760 + $0x200] sm:%s1752] %v2017
                  %v2019 = vld [vmem:[%s1759 + $0x408] sm:%s1752]
                  %2020 = vst [vmem:[%s1760 + $0x204] sm:%s1752] %v2019
                  %v2021 = vld [vmem:[%s1759 + $0x410] sm:%s1752]
                  %2022 = vst [vmem:[%s1760 + $0x208] sm:%s1752] %v2021
                  %v2023 = vld [vmem:[%s1759 + $0x418] sm:%s1752]
                  %2024 = vst [vmem:[%s1760 + $0x20c] sm:%s1752] %v2023
                  %v2025 = vld [vmem:[%s1759 + $0x420] sm:%s1752]
                  %2026 = vst [vmem:[%s1760 + $0x210] sm:%s1752] %v2025
                  %v2027 = vld [vmem:[%s1759 + $0x428] sm:%s1752]
                  %2028 = vst [vmem:[%s1760 + $0x214] sm:%s1752] %v2027
                  %v2029 = vld [vmem:[%s1759 + $0x430] sm:%s1752]
                  %2030 = vst [vmem:[%s1760 + $0x218] sm:%s1752] %v2029
                  %v2031 = vld [vmem:[%s1759 + $0x438] sm:%s1752]
                  %2032 = vst [vmem:[%s1760 + $0x21c] sm:%s1752] %v2031
                  %v2033 = vld [vmem:[%s1759 + $0x440] sm:%s1752]
                  %2034 = vst [vmem:[%s1760 + $0x220] sm:%s1752] %v2033
                  %v2035 = vld [vmem:[%s1759 + $0x448] sm:%s1752]
                  %2036 = vst [vmem:[%s1760 + $0x224] sm:%s1752] %v2035
                  %v2037 = vld [vmem:[%s1759 + $0x450] sm:%s1752]
                  %2038 = vst [vmem:[%s1760 + $0x228] sm:%s1752] %v2037
                  %v2039 = vld [vmem:[%s1759 + $0x458] sm:%s1752]
                  %2040 = vst [vmem:[%s1760 + $0x22c] sm:%s1752] %v2039
                  %v2041 = vld [vmem:[%s1759 + $0x460] sm:%s1752]
                  %2042 = vst [vmem:[%s1760 + $0x230] sm:%s1752] %v2041
                  %v2043 = vld [vmem:[%s1759 + $0x468] sm:%s1752]
                  %2044 = vst [vmem:[%s1760 + $0x234] sm:%s1752] %v2043
                  %v2045 = vld [vmem:[%s1759 + $0x470] sm:%s1752]
                  %2046 = vst [vmem:[%s1760 + $0x238] sm:%s1752] %v2045
                  %v2047 = vld [vmem:[%s1759 + $0x478] sm:%s1752]
                  %2048 = vst [vmem:[%s1760 + $0x23c] sm:%s1752] %v2047
                  %v2049 = vld [vmem:[%s1759 + $0x480] sm:%s1752]
                  %2050 = vst [vmem:[%s1760 + $0x240] sm:%s1752] %v2049
                  %v2051 = vld [vmem:[%s1759 + $0x488] sm:%s1752]
                  %2052 = vst [vmem:[%s1760 + $0x244] sm:%s1752] %v2051
                  %v2053 = vld [vmem:[%s1759 + $0x490] sm:%s1752]
                  %2054 = vst [vmem:[%s1760 + $0x248] sm:%s1752] %v2053
                  %v2055 = vld [vmem:[%s1759 + $0x498] sm:%s1752]
                  %2056 = vst [vmem:[%s1760 + $0x24c] sm:%s1752] %v2055
                  %v2057 = vld [vmem:[%s1759 + $0x4a0] sm:%s1752]
                  %2058 = vst [vmem:[%s1760 + $0x250] sm:%s1752] %v2057
                  %v2059 = vld [vmem:[%s1759 + $0x4a8] sm:%s1752]
                  %2060 = vst [vmem:[%s1760 + $0x254] sm:%s1752] %v2059
                  %v2061 = vld [vmem:[%s1759 + $0x4b0] sm:%s1752]
                  %2062 = vst [vmem:[%s1760 + $0x258] sm:%s1752] %v2061
                  %v2063 = vld [vmem:[%s1759 + $0x4b8] sm:%s1752]
                  %2064 = vst [vmem:[%s1760 + $0x25c] sm:%s1752] %v2063
                  %v2065 = vld [vmem:[%s1759 + $0x4c0] sm:%s1752]
                  %2066 = vst [vmem:[%s1760 + $0x260] sm:%s1752] %v2065
                  %v2067 = vld [vmem:[%s1759 + $0x4c8] sm:%s1752]
                  %2068 = vst [vmem:[%s1760 + $0x264] sm:%s1752] %v2067
                  %v2069 = vld [vmem:[%s1759 + $0x4d0] sm:%s1752]
                  %2070 = vst [vmem:[%s1760 + $0x268] sm:%s1752] %v2069
                  %v2071 = vld [vmem:[%s1759 + $0x4d8] sm:%s1752]
                  %2072 = vst [vmem:[%s1760 + $0x26c] sm:%s1752] %v2071
                  %v2073 = vld [vmem:[%s1759 + $0x4e0] sm:%s1752]
                  %2074 = vst [vmem:[%s1760 + $0x270] sm:%s1752] %v2073
                  %v2075 = vld [vmem:[%s1759 + $0x4e8] sm:%s1752]
                  %2076 = vst [vmem:[%s1760 + $0x274] sm:%s1752] %v2075
                  %v2077 = vld [vmem:[%s1759 + $0x4f0] sm:%s1752]
                  %2078 = vst [vmem:[%s1760 + $0x278] sm:%s1752] %v2077
                  %v2079 = vld [vmem:[%s1759 + $0x4f8] sm:%s1752]
                  %2080 = vst [vmem:[%s1760 + $0x27c] sm:%s1752] %v2079
                  %v2081 = vld [vmem:[%s1759 + $0x500] sm:%s1752]
                  %2082 = vst [vmem:[%s1760 + $0x280] sm:%s1752] %v2081
                  %v2083 = vld [vmem:[%s1759 + $0x508] sm:%s1752]
                  %2084 = vst [vmem:[%s1760 + $0x284] sm:%s1752] %v2083
                  %v2085 = vld [vmem:[%s1759 + $0x510] sm:%s1752]
                  %2086 = vst [vmem:[%s1760 + $0x288] sm:%s1752] %v2085
                  %v2087 = vld [vmem:[%s1759 + $0x518] sm:%s1752]
                  %2088 = vst [vmem:[%s1760 + $0x28c] sm:%s1752] %v2087
                  %v2089 = vld [vmem:[%s1759 + $0x520] sm:%s1752]
                  %2090 = vst [vmem:[%s1760 + $0x290] sm:%s1752] %v2089
                  %v2091 = vld [vmem:[%s1759 + $0x528] sm:%s1752]
                  %2092 = vst [vmem:[%s1760 + $0x294] sm:%s1752] %v2091
                  %v2093 = vld [vmem:[%s1759 + $0x530] sm:%s1752]
                  %2094 = vst [vmem:[%s1760 + $0x298] sm:%s1752] %v2093
                  %v2095 = vld [vmem:[%s1759 + $0x538] sm:%s1752]
                  %2096 = vst [vmem:[%s1760 + $0x29c] sm:%s1752] %v2095
                  %v2097 = vld [vmem:[%s1759 + $0x540] sm:%s1752]
                  %2098 = vst [vmem:[%s1760 + $0x2a0] sm:%s1752] %v2097
                  %v2099 = vld [vmem:[%s1759 + $0x548] sm:%s1752]
                  %2100 = vst [vmem:[%s1760 + $0x2a4] sm:%s1752] %v2099
                  %v2101 = vld [vmem:[%s1759 + $0x550] sm:%s1752]
                  %2102 = vst [vmem:[%s1760 + $0x2a8] sm:%s1752] %v2101
                  %v2103 = vld [vmem:[%s1759 + $0x558] sm:%s1752]
                  %2104 = vst [vmem:[%s1760 + $0x2ac] sm:%s1752] %v2103
                  %v2105 = vld [vmem:[%s1759 + $0x560] sm:%s1752]
                  %2106 = vst [vmem:[%s1760 + $0x2b0] sm:%s1752] %v2105
                  %v2107 = vld [vmem:[%s1759 + $0x568] sm:%s1752]
                  %2108 = vst [vmem:[%s1760 + $0x2b4] sm:%s1752] %v2107
                  %v2109 = vld [vmem:[%s1759 + $0x570] sm:%s1752]
                  %2110 = vst [vmem:[%s1760 + $0x2b8] sm:%s1752] %v2109
                  %v2111 = vld [vmem:[%s1759 + $0x578] sm:%s1752]
                  %2112 = vst [vmem:[%s1760 + $0x2bc] sm:%s1752] %v2111
                  %v2113 = vld [vmem:[%s1759 + $0x580] sm:%s1752]
                  %2114 = vst [vmem:[%s1760 + $0x2c0] sm:%s1752] %v2113
                  %v2115 = vld [vmem:[%s1759 + $0x588] sm:%s1752]
                  %2116 = vst [vmem:[%s1760 + $0x2c4] sm:%s1752] %v2115
                  %v2117 = vld [vmem:[%s1759 + $0x590] sm:%s1752]
                  %2118 = vst [vmem:[%s1760 + $0x2c8] sm:%s1752] %v2117
                  %v2119 = vld [vmem:[%s1759 + $0x598] sm:%s1752]
                  %2120 = vst [vmem:[%s1760 + $0x2cc] sm:%s1752] %v2119
                  %v2121 = vld [vmem:[%s1759 + $0x5a0] sm:%s1752]
                  %2122 = vst [vmem:[%s1760 + $0x2d0] sm:%s1752] %v2121
                  %v2123 = vld [vmem:[%s1759 + $0x5a8] sm:%s1752]
                  %2124 = vst [vmem:[%s1760 + $0x2d4] sm:%s1752] %v2123
                  %v2125 = vld [vmem:[%s1759 + $0x5b0] sm:%s1752]
                  %2126 = vst [vmem:[%s1760 + $0x2d8] sm:%s1752] %v2125
                  %v2127 = vld [vmem:[%s1759 + $0x5b8] sm:%s1752]
                  %2128 = vst [vmem:[%s1760 + $0x2dc] sm:%s1752] %v2127
                  %v2129 = vld [vmem:[%s1759 + $0x5c0] sm:%s1752]
                  %2130 = vst [vmem:[%s1760 + $0x2e0] sm:%s1752] %v2129
                  %v2131 = vld [vmem:[%s1759 + $0x5c8] sm:%s1752]
                  %2132 = vst [vmem:[%s1760 + $0x2e4] sm:%s1752] %v2131
                  %v2133 = vld [vmem:[%s1759 + $0x5d0] sm:%s1752]
                  %2134 = vst [vmem:[%s1760 + $0x2e8] sm:%s1752] %v2133
                  %v2135 = vld [vmem:[%s1759 + $0x5d8] sm:%s1752]
                  %2136 = vst [vmem:[%s1760 + $0x2ec] sm:%s1752] %v2135
                  %v2137 = vld [vmem:[%s1759 + $0x5e0] sm:%s1752]
                  %2138 = vst [vmem:[%s1760 + $0x2f0] sm:%s1752] %v2137
                  %v2139 = vld [vmem:[%s1759 + $0x5e8] sm:%s1752]
                  %2140 = vst [vmem:[%s1760 + $0x2f4] sm:%s1752] %v2139
                  %v2141 = vld [vmem:[%s1759 + $0x5f0] sm:%s1752]
                  %2142 = vst [vmem:[%s1760 + $0x2f8] sm:%s1752] %v2141
                  %v2143 = vld [vmem:[%s1759 + $0x5f8] sm:%s1752]
                  %2144 = vst [vmem:[%s1760 + $0x2fc] sm:%s1752] %v2143
                  %v2145 = vld [vmem:[%s1759 + $0x600] sm:%s1752]
                  %2146 = vst [vmem:[%s1760 + $0x300] sm:%s1752] %v2145
                  %v2147 = vld [vmem:[%s1759 + $0x608] sm:%s1752]
                  %2148 = vst [vmem:[%s1760 + $0x304] sm:%s1752] %v2147
                  %v2149 = vld [vmem:[%s1759 + $0x610] sm:%s1752]
                  %2150 = vst [vmem:[%s1760 + $0x308] sm:%s1752] %v2149
                  %v2151 = vld [vmem:[%s1759 + $0x618] sm:%s1752]
                  %2152 = vst [vmem:[%s1760 + $0x30c] sm:%s1752] %v2151
                  %v2153 = vld [vmem:[%s1759 + $0x620] sm:%s1752]
                  %2154 = vst [vmem:[%s1760 + $0x310] sm:%s1752] %v2153
                  %v2155 = vld [vmem:[%s1759 + $0x628] sm:%s1752]
                  %2156 = vst [vmem:[%s1760 + $0x314] sm:%s1752] %v2155
                  %v2157 = vld [vmem:[%s1759 + $0x630] sm:%s1752]
                  %2158 = vst [vmem:[%s1760 + $0x318] sm:%s1752] %v2157
                  %v2159 = vld [vmem:[%s1759 + $0x638] sm:%s1752]
                  %2160 = vst [vmem:[%s1760 + $0x31c] sm:%s1752] %v2159
                  %v2161 = vld [vmem:[%s1759 + $0x640] sm:%s1752]
                  %2162 = vst [vmem:[%s1760 + $0x320] sm:%s1752] %v2161
                  %v2163 = vld [vmem:[%s1759 + $0x648] sm:%s1752]
                  %2164 = vst [vmem:[%s1760 + $0x324] sm:%s1752] %v2163
                  %v2165 = vld [vmem:[%s1759 + $0x650] sm:%s1752]
                  %2166 = vst [vmem:[%s1760 + $0x328] sm:%s1752] %v2165
                  %v2167 = vld [vmem:[%s1759 + $0x658] sm:%s1752]
                  %2168 = vst [vmem:[%s1760 + $0x32c] sm:%s1752] %v2167
                  %v2169 = vld [vmem:[%s1759 + $0x660] sm:%s1752]
                  %2170 = vst [vmem:[%s1760 + $0x330] sm:%s1752] %v2169
                  %v2171 = vld [vmem:[%s1759 + $0x668] sm:%s1752]
                  %2172 = vst [vmem:[%s1760 + $0x334] sm:%s1752] %v2171
                  %v2173 = vld [vmem:[%s1759 + $0x670] sm:%s1752]
                  %2174 = vst [vmem:[%s1760 + $0x338] sm:%s1752] %v2173
                  %v2175 = vld [vmem:[%s1759 + $0x678] sm:%s1752]
                  %2176 = vst [vmem:[%s1760 + $0x33c] sm:%s1752] %v2175
                  %v2177 = vld [vmem:[%s1759 + $0x680] sm:%s1752]
                  %2178 = vst [vmem:[%s1760 + $0x340] sm:%s1752] %v2177
                  %v2179 = vld [vmem:[%s1759 + $0x688] sm:%s1752]
                  %2180 = vst [vmem:[%s1760 + $0x344] sm:%s1752] %v2179
                  %v2181 = vld [vmem:[%s1759 + $0x690] sm:%s1752]
                  %2182 = vst [vmem:[%s1760 + $0x348] sm:%s1752] %v2181
                  %v2183 = vld [vmem:[%s1759 + $0x698] sm:%s1752]
                  %2184 = vst [vmem:[%s1760 + $0x34c] sm:%s1752] %v2183
                  %v2185 = vld [vmem:[%s1759 + $0x6a0] sm:%s1752]
                  %2186 = vst [vmem:[%s1760 + $0x350] sm:%s1752] %v2185
                  %v2187 = vld [vmem:[%s1759 + $0x6a8] sm:%s1752]
                  %2188 = vst [vmem:[%s1760 + $0x354] sm:%s1752] %v2187
                  %v2189 = vld [vmem:[%s1759 + $0x6b0] sm:%s1752]
                  %2190 = vst [vmem:[%s1760 + $0x358] sm:%s1752] %v2189
                  %v2191 = vld [vmem:[%s1759 + $0x6b8] sm:%s1752]
                  %2192 = vst [vmem:[%s1760 + $0x35c] sm:%s1752] %v2191
                  %v2193 = vld [vmem:[%s1759 + $0x6c0] sm:%s1752]
                  %2194 = vst [vmem:[%s1760 + $0x360] sm:%s1752] %v2193
                  %v2195 = vld [vmem:[%s1759 + $0x6c8] sm:%s1752]
                  %2196 = vst [vmem:[%s1760 + $0x364] sm:%s1752] %v2195
                  %v2197 = vld [vmem:[%s1759 + $0x6d0] sm:%s1752]
                  %2198 = vst [vmem:[%s1760 + $0x368] sm:%s1752] %v2197
                  %v2199 = vld [vmem:[%s1759 + $0x6d8] sm:%s1752]
                  %2200 = vst [vmem:[%s1760 + $0x36c] sm:%s1752] %v2199
                  %v2201 = vld [vmem:[%s1759 + $0x6e0] sm:%s1752]
                  %2202 = vst [vmem:[%s1760 + $0x370] sm:%s1752] %v2201
                  %v2203 = vld [vmem:[%s1759 + $0x6e8] sm:%s1752]
                  %2204 = vst [vmem:[%s1760 + $0x374] sm:%s1752] %v2203
                  %v2205 = vld [vmem:[%s1759 + $0x6f0] sm:%s1752]
                  %2206 = vst [vmem:[%s1760 + $0x378] sm:%s1752] %v2205
                  %v2207 = vld [vmem:[%s1759 + $0x6f8] sm:%s1752]
                  %2208 = vst [vmem:[%s1760 + $0x37c] sm:%s1752] %v2207
                  %v2209 = vld [vmem:[%s1759 + $0x700] sm:%s1752]
                  %2210 = vst [vmem:[%s1760 + $0x380] sm:%s1752] %v2209
                  %v2211 = vld [vmem:[%s1759 + $0x708] sm:%s1752]
                  %2212 = vst [vmem:[%s1760 + $0x384] sm:%s1752] %v2211
                  %v2213 = vld [vmem:[%s1759 + $0x710] sm:%s1752]
                  %2214 = vst [vmem:[%s1760 + $0x388] sm:%s1752] %v2213
                  %v2215 = vld [vmem:[%s1759 + $0x718] sm:%s1752]
                  %2216 = vst [vmem:[%s1760 + $0x38c] sm:%s1752] %v2215
                  %v2217 = vld [vmem:[%s1759 + $0x720] sm:%s1752]
                  %2218 = vst [vmem:[%s1760 + $0x390] sm:%s1752] %v2217
                  %v2219 = vld [vmem:[%s1759 + $0x728] sm:%s1752]
                  %2220 = vst [vmem:[%s1760 + $0x394] sm:%s1752] %v2219
                  %v2221 = vld [vmem:[%s1759 + $0x730] sm:%s1752]
                  %2222 = vst [vmem:[%s1760 + $0x398] sm:%s1752] %v2221
                  %v2223 = vld [vmem:[%s1759 + $0x738] sm:%s1752]
                  %2224 = vst [vmem:[%s1760 + $0x39c] sm:%s1752] %v2223
                  %v2225 = vld [vmem:[%s1759 + $0x740] sm:%s1752]
                  %2226 = vst [vmem:[%s1760 + $0x3a0] sm:%s1752] %v2225
                  %v2227 = vld [vmem:[%s1759 + $0x748] sm:%s1752]
                  %2228 = vst [vmem:[%s1760 + $0x3a4] sm:%s1752] %v2227
                  %v2229 = vld [vmem:[%s1759 + $0x750] sm:%s1752]
                  %2230 = vst [vmem:[%s1760 + $0x3a8] sm:%s1752] %v2229
                  %v2231 = vld [vmem:[%s1759 + $0x758] sm:%s1752]
                  %2232 = vst [vmem:[%s1760 + $0x3ac] sm:%s1752] %v2231
                  %v2233 = vld [vmem:[%s1759 + $0x760] sm:%s1752]
                  %2234 = vst [vmem:[%s1760 + $0x3b0] sm:%s1752] %v2233
                  %v2235 = vld [vmem:[%s1759 + $0x768] sm:%s1752]
                  %2236 = vst [vmem:[%s1760 + $0x3b4] sm:%s1752] %v2235
                  %v2237 = vld [vmem:[%s1759 + $0x770] sm:%s1752]
                  %2238 = vst [vmem:[%s1760 + $0x3b8] sm:%s1752] %v2237
                  %v2239 = vld [vmem:[%s1759 + $0x778] sm:%s1752]
                  %2240 = vst [vmem:[%s1760 + $0x3bc] sm:%s1752] %v2239
                  %v2241 = vld [vmem:[%s1759 + $0x780] sm:%s1752]
                  %2242 = vst [vmem:[%s1760 + $0x3c0] sm:%s1752] %v2241
                  %v2243 = vld [vmem:[%s1759 + $0x788] sm:%s1752]
                  %2244 = vst [vmem:[%s1760 + $0x3c4] sm:%s1752] %v2243
                  %v2245 = vld [vmem:[%s1759 + $0x790] sm:%s1752]
                  %2246 = vst [vmem:[%s1760 + $0x3c8] sm:%s1752] %v2245
                  %v2247 = vld [vmem:[%s1759 + $0x798] sm:%s1752]
                  %2248 = vst [vmem:[%s1760 + $0x3cc] sm:%s1752] %v2247
                  %v2249 = vld [vmem:[%s1759 + $0x7a0] sm:%s1752]
                  %2250 = vst [vmem:[%s1760 + $0x3d0] sm:%s1752] %v2249
                  %v2251 = vld [vmem:[%s1759 + $0x7a8] sm:%s1752]
                  %2252 = vst [vmem:[%s1760 + $0x3d4] sm:%s1752] %v2251
                  %v2253 = vld [vmem:[%s1759 + $0x7b0] sm:%s1752]
                  %2254 = vst [vmem:[%s1760 + $0x3d8] sm:%s1752] %v2253
                  %v2255 = vld [vmem:[%s1759 + $0x7b8] sm:%s1752]
                  %2256 = vst [vmem:[%s1760 + $0x3dc] sm:%s1752] %v2255
                  %v2257 = vld [vmem:[%s1759 + $0x7c0] sm:%s1752]
                  %2258 = vst [vmem:[%s1760 + $0x3e0] sm:%s1752] %v2257
                  %v2259 = vld [vmem:[%s1759 + $0x7c8] sm:%s1752]
                  %2260 = vst [vmem:[%s1760 + $0x3e4] sm:%s1752] %v2259
                  %v2261 = vld [vmem:[%s1759 + $0x7d0] sm:%s1752]
                  %2262 = vst [vmem:[%s1760 + $0x3e8] sm:%s1752] %v2261
                  %v2263 = vld [vmem:[%s1759 + $0x7d8] sm:%s1752]
                  %2264 = vst [vmem:[%s1760 + $0x3ec] sm:%s1752] %v2263
                  %v2265 = vld [vmem:[%s1759 + $0x7e0] sm:%s1752]
                  %2266 = vst [vmem:[%s1760 + $0x3f0] sm:%s1752] %v2265
                  %v2267 = vld [vmem:[%s1759 + $0x7e8] sm:%s1752]
                  %2268 = vst [vmem:[%s1760 + $0x3f4] sm:%s1752] %v2267
                  %v2269 = vld [vmem:[%s1759 + $0x7f0] sm:%s1752]
                  %2270 = vst [vmem:[%s1760 + $0x3f8] sm:%s1752] %v2269
                  %v2271 = vld [vmem:[%s1759 + $0x7f8] sm:%s1752]
                  %2272 = vst [vmem:[%s1760 + $0x3fc] sm:%s1752] %v2271
                $region70: #{carla_encoder_forward.8} parent=57 // loop_footer
                  %s1758 = sadd.s32 1, %s1754
                $region71: #{carla_encoder_forward.8} parent=57 // loop_footer_branch
                  %1753 = sbr.rel target = $region67
                $region72: #{carla_encoder_forward.8} parent=57 // loop_exit
                  _
              $region58: #{carla_encoder_forward.8} parent=31 // pred_fallthru
                _
            $region32: #{carla_encoder_forward.8} parent=27 // pred_fallthru
              _
            // Predicated region
            $region33: #{carla_encoder_forward.8} parent=27 // pred_check
              _
            $region34: #{carla_encoder_forward.8} parent=27 // pred_check_branch
              %168 = sbr.rel (0) target = $region36
            $region35: #{carla_encoder_forward.8} parent=27 // pred_region
              %s170 = ssub.s32 16, 1
              loop: start=0, step=1, limit=1
              $region37: #{carla_encoder_forward.8} parent=35 // loop_pre_header
                _
              $region38: #{carla_encoder_forward.8} parent=35 // loop_header
                %s172 = sphi 0, %s176
                %p173 = scmp.ge.s32.totalorder %s172, 1
                %s177 = sphi %s162, %s162
                %s178 = sphi %s160, %s160
              $region39: #{carla_encoder_forward.8} parent=35 // loop_header_branch
                %175 = sbr.rel (%p173) target = $region43
              $region40: #{carla_encoder_forward.8} parent=35 // loop_body
                %v179 = vld [vmem:[%s177] sm:%s170]
                %180 = vst [vmem:[%s178] sm:%s170] %v179
                %v181 = vld [vmem:[%s177 + $0x8] sm:%s170]
                %182 = vst [vmem:[%s178 + $0x4] sm:%s170] %v181
                %v183 = vld [vmem:[%s177 + $0x10] sm:%s170]
                %184 = vst [vmem:[%s178 + $0x8] sm:%s170] %v183
                %v185 = vld [vmem:[%s177 + $0x18] sm:%s170]
                %186 = vst [vmem:[%s178 + $0xc] sm:%s170] %v185
                %v187 = vld [vmem:[%s177 + $0x20] sm:%s170]
                %188 = vst [vmem:[%s178 + $0x10] sm:%s170] %v187
                %v189 = vld [vmem:[%s177 + $0x28] sm:%s170]
                %190 = vst [vmem:[%s178 + $0x14] sm:%s170] %v189
                %v191 = vld [vmem:[%s177 + $0x30] sm:%s170]
                %192 = vst [vmem:[%s178 + $0x18] sm:%s170] %v191
                %v193 = vld [vmem:[%s177 + $0x38] sm:%s170]
                %194 = vst [vmem:[%s178 + $0x1c] sm:%s170] %v193
                %v195 = vld [vmem:[%s177 + $0x40] sm:%s170]
                %196 = vst [vmem:[%s178 + $0x20] sm:%s170] %v195
                %v197 = vld [vmem:[%s177 + $0x48] sm:%s170]
                %198 = vst [vmem:[%s178 + $0x24] sm:%s170] %v197
                %v199 = vld [vmem:[%s177 + $0x50] sm:%s170]
                %200 = vst [vmem:[%s178 + $0x28] sm:%s170] %v199
                %v201 = vld [vmem:[%s177 + $0x58] sm:%s170]
                %202 = vst [vmem:[%s178 + $0x2c] sm:%s170] %v201
                %v203 = vld [vmem:[%s177 + $0x60] sm:%s170]
                %204 = vst [vmem:[%s178 + $0x30] sm:%s170] %v203
                %v205 = vld [vmem:[%s177 + $0x68] sm:%s170]
                %206 = vst [vmem:[%s178 + $0x34] sm:%s170] %v205
                %v207 = vld [vmem:[%s177 + $0x70] sm:%s170]
                %208 = vst [vmem:[%s178 + $0x38] sm:%s170] %v207
                %v209 = vld [vmem:[%s177 + $0x78] sm:%s170]
                %210 = vst [vmem:[%s178 + $0x3c] sm:%s170] %v209
                %v211 = vld [vmem:[%s177 + $0x80] sm:%s170]
                %212 = vst [vmem:[%s178 + $0x40] sm:%s170] %v211
                %v213 = vld [vmem:[%s177 + $0x88] sm:%s170]
                %214 = vst [vmem:[%s178 + $0x44] sm:%s170] %v213
                %v215 = vld [vmem:[%s177 + $0x90] sm:%s170]
                %216 = vst [vmem:[%s178 + $0x48] sm:%s170] %v215
                %v217 = vld [vmem:[%s177 + $0x98] sm:%s170]
                %218 = vst [vmem:[%s178 + $0x4c] sm:%s170] %v217
                %v219 = vld [vmem:[%s177 + $0xa0] sm:%s170]
                %220 = vst [vmem:[%s178 + $0x50] sm:%s170] %v219
                %v221 = vld [vmem:[%s177 + $0xa8] sm:%s170]
                %222 = vst [vmem:[%s178 + $0x54] sm:%s170] %v221
                %v223 = vld [vmem:[%s177 + $0xb0] sm:%s170]
                %224 = vst [vmem:[%s178 + $0x58] sm:%s170] %v223
                %v225 = vld [vmem:[%s177 + $0xb8] sm:%s170]
                %226 = vst [vmem:[%s178 + $0x5c] sm:%s170] %v225
                %v227 = vld [vmem:[%s177 + $0xc0] sm:%s170]
                %228 = vst [vmem:[%s178 + $0x60] sm:%s170] %v227
                %v229 = vld [vmem:[%s177 + $0xc8] sm:%s170]
                %230 = vst [vmem:[%s178 + $0x64] sm:%s170] %v229
                %v231 = vld [vmem:[%s177 + $0xd0] sm:%s170]
                %232 = vst [vmem:[%s178 + $0x68] sm:%s170] %v231
                %v233 = vld [vmem:[%s177 + $0xd8] sm:%s170]
                %234 = vst [vmem:[%s178 + $0x6c] sm:%s170] %v233
                %v235 = vld [vmem:[%s177 + $0xe0] sm:%s170]
                %236 = vst [vmem:[%s178 + $0x70] sm:%s170] %v235
                %v237 = vld [vmem:[%s177 + $0xe8] sm:%s170]
                %238 = vst [vmem:[%s178 + $0x74] sm:%s170] %v237
                %v239 = vld [vmem:[%s177 + $0xf0] sm:%s170]
                %240 = vst [vmem:[%s178 + $0x78] sm:%s170] %v239
                %v241 = vld [vmem:[%s177 + $0xf8] sm:%s170]
                %242 = vst [vmem:[%s178 + $0x7c] sm:%s170] %v241
                %v243 = vld [vmem:[%s177 + $0x100] sm:%s170]
                %244 = vst [vmem:[%s178 + $0x80] sm:%s170] %v243
                %v245 = vld [vmem:[%s177 + $0x108] sm:%s170]
                %246 = vst [vmem:[%s178 + $0x84] sm:%s170] %v245
                %v247 = vld [vmem:[%s177 + $0x110] sm:%s170]
                %248 = vst [vmem:[%s178 + $0x88] sm:%s170] %v247
                %v249 = vld [vmem:[%s177 + $0x118] sm:%s170]
                %250 = vst [vmem:[%s178 + $0x8c] sm:%s170] %v249
                %v251 = vld [vmem:[%s177 + $0x120] sm:%s170]
                %252 = vst [vmem:[%s178 + $0x90] sm:%s170] %v251
                %v253 = vld [vmem:[%s177 + $0x128] sm:%s170]
                %254 = vst [vmem:[%s178 + $0x94] sm:%s170] %v253
                %v255 = vld [vmem:[%s177 + $0x130] sm:%s170]
                %256 = vst [vmem:[%s178 + $0x98] sm:%s170] %v255
                %v257 = vld [vmem:[%s177 + $0x138] sm:%s170]
                %258 = vst [vmem:[%s178 + $0x9c] sm:%s170] %v257
                %v259 = vld [vmem:[%s177 + $0x140] sm:%s170]
                %260 = vst [vmem:[%s178 + $0xa0] sm:%s170] %v259
                %v261 = vld [vmem:[%s177 + $0x148] sm:%s170]
                %262 = vst [vmem:[%s178 + $0xa4] sm:%s170] %v261
                %v263 = vld [vmem:[%s177 + $0x150] sm:%s170]
                %264 = vst [vmem:[%s178 + $0xa8] sm:%s170] %v263
                %v265 = vld [vmem:[%s177 + $0x158] sm:%s170]
                %266 = vst [vmem:[%s178 + $0xac] sm:%s170] %v265
                %v267 = vld [vmem:[%s177 + $0x160] sm:%s170]
                %268 = vst [vmem:[%s178 + $0xb0] sm:%s170] %v267
                %v269 = vld [vmem:[%s177 + $0x168] sm:%s170]
                %270 = vst [vmem:[%s178 + $0xb4] sm:%s170] %v269
                %v271 = vld [vmem:[%s177 + $0x170] sm:%s170]
                %272 = vst [vmem:[%s178 + $0xb8] sm:%s170] %v271
                %v273 = vld [vmem:[%s177 + $0x178] sm:%s170]
                %274 = vst [vmem:[%s178 + $0xbc] sm:%s170] %v273
                %v275 = vld [vmem:[%s177 + $0x180] sm:%s170]
                %276 = vst [vmem:[%s178 + $0xc0] sm:%s170] %v275
                %v277 = vld [vmem:[%s177 + $0x188] sm:%s170]
                %278 = vst [vmem:[%s178 + $0xc4] sm:%s170] %v277
                %v279 = vld [vmem:[%s177 + $0x190] sm:%s170]
                %280 = vst [vmem:[%s178 + $0xc8] sm:%s170] %v279
                %v281 = vld [vmem:[%s177 + $0x198] sm:%s170]
                %282 = vst [vmem:[%s178 + $0xcc] sm:%s170] %v281
                %v283 = vld [vmem:[%s177 + $0x1a0] sm:%s170]
                %284 = vst [vmem:[%s178 + $0xd0] sm:%s170] %v283
                %v285 = vld [vmem:[%s177 + $0x1a8] sm:%s170]
                %286 = vst [vmem:[%s178 + $0xd4] sm:%s170] %v285
                %v287 = vld [vmem:[%s177 + $0x1b0] sm:%s170]
                %288 = vst [vmem:[%s178 + $0xd8] sm:%s170] %v287
                %v289 = vld [vmem:[%s177 + $0x1b8] sm:%s170]
                %290 = vst [vmem:[%s178 + $0xdc] sm:%s170] %v289
                %v291 = vld [vmem:[%s177 + $0x1c0] sm:%s170]
                %292 = vst [vmem:[%s178 + $0xe0] sm:%s170] %v291
                %v293 = vld [vmem:[%s177 + $0x1c8] sm:%s170]
                %294 = vst [vmem:[%s178 + $0xe4] sm:%s170] %v293
                %v295 = vld [vmem:[%s177 + $0x1d0] sm:%s170]
                %296 = vst [vmem:[%s178 + $0xe8] sm:%s170] %v295
                %v297 = vld [vmem:[%s177 + $0x1d8] sm:%s170]
                %298 = vst [vmem:[%s178 + $0xec] sm:%s170] %v297
                %v299 = vld [vmem:[%s177 + $0x1e0] sm:%s170]
                %300 = vst [vmem:[%s178 + $0xf0] sm:%s170] %v299
                %v301 = vld [vmem:[%s177 + $0x1e8] sm:%s170]
                %302 = vst [vmem:[%s178 + $0xf4] sm:%s170] %v301
                %v303 = vld [vmem:[%s177 + $0x1f0] sm:%s170]
                %304 = vst [vmem:[%s178 + $0xf8] sm:%s170] %v303
                %v305 = vld [vmem:[%s177 + $0x1f8] sm:%s170]
                %306 = vst [vmem:[%s178 + $0xfc] sm:%s170] %v305
                %v307 = vld [vmem:[%s177 + $0x200] sm:%s170]
                %308 = vst [vmem:[%s178 + $0x100] sm:%s170] %v307
                %v309 = vld [vmem:[%s177 + $0x208] sm:%s170]
                %310 = vst [vmem:[%s178 + $0x104] sm:%s170] %v309
                %v311 = vld [vmem:[%s177 + $0x210] sm:%s170]
                %312 = vst [vmem:[%s178 + $0x108] sm:%s170] %v311
                %v313 = vld [vmem:[%s177 + $0x218] sm:%s170]
                %314 = vst [vmem:[%s178 + $0x10c] sm:%s170] %v313
                %v315 = vld [vmem:[%s177 + $0x220] sm:%s170]
                %316 = vst [vmem:[%s178 + $0x110] sm:%s170] %v315
                %v317 = vld [vmem:[%s177 + $0x228] sm:%s170]
                %318 = vst [vmem:[%s178 + $0x114] sm:%s170] %v317
                %v319 = vld [vmem:[%s177 + $0x230] sm:%s170]
                %320 = vst [vmem:[%s178 + $0x118] sm:%s170] %v319
                %v321 = vld [vmem:[%s177 + $0x238] sm:%s170]
                %322 = vst [vmem:[%s178 + $0x11c] sm:%s170] %v321
                %v323 = vld [vmem:[%s177 + $0x240] sm:%s170]
                %324 = vst [vmem:[%s178 + $0x120] sm:%s170] %v323
                %v325 = vld [vmem:[%s177 + $0x248] sm:%s170]
                %326 = vst [vmem:[%s178 + $0x124] sm:%s170] %v325
                %v327 = vld [vmem:[%s177 + $0x250] sm:%s170]
                %328 = vst [vmem:[%s178 + $0x128] sm:%s170] %v327
                %v329 = vld [vmem:[%s177 + $0x258] sm:%s170]
                %330 = vst [vmem:[%s178 + $0x12c] sm:%s170] %v329
                %v331 = vld [vmem:[%s177 + $0x260] sm:%s170]
                %332 = vst [vmem:[%s178 + $0x130] sm:%s170] %v331
                %v333 = vld [vmem:[%s177 + $0x268] sm:%s170]
                %334 = vst [vmem:[%s178 + $0x134] sm:%s170] %v333
                %v335 = vld [vmem:[%s177 + $0x270] sm:%s170]
                %336 = vst [vmem:[%s178 + $0x138] sm:%s170] %v335
                %v337 = vld [vmem:[%s177 + $0x278] sm:%s170]
                %338 = vst [vmem:[%s178 + $0x13c] sm:%s170] %v337
                %v339 = vld [vmem:[%s177 + $0x280] sm:%s170]
                %340 = vst [vmem:[%s178 + $0x140] sm:%s170] %v339
                %v341 = vld [vmem:[%s177 + $0x288] sm:%s170]
                %342 = vst [vmem:[%s178 + $0x144] sm:%s170] %v341
                %v343 = vld [vmem:[%s177 + $0x290] sm:%s170]
                %344 = vst [vmem:[%s178 + $0x148] sm:%s170] %v343
                %v345 = vld [vmem:[%s177 + $0x298] sm:%s170]
                %346 = vst [vmem:[%s178 + $0x14c] sm:%s170] %v345
                %v347 = vld [vmem:[%s177 + $0x2a0] sm:%s170]
                %348 = vst [vmem:[%s178 + $0x150] sm:%s170] %v347
                %v349 = vld [vmem:[%s177 + $0x2a8] sm:%s170]
                %350 = vst [vmem:[%s178 + $0x154] sm:%s170] %v349
                %v351 = vld [vmem:[%s177 + $0x2b0] sm:%s170]
                %352 = vst [vmem:[%s178 + $0x158] sm:%s170] %v351
                %v353 = vld [vmem:[%s177 + $0x2b8] sm:%s170]
                %354 = vst [vmem:[%s178 + $0x15c] sm:%s170] %v353
                %v355 = vld [vmem:[%s177 + $0x2c0] sm:%s170]
                %356 = vst [vmem:[%s178 + $0x160] sm:%s170] %v355
                %v357 = vld [vmem:[%s177 + $0x2c8] sm:%s170]
                %358 = vst [vmem:[%s178 + $0x164] sm:%s170] %v357
                %v359 = vld [vmem:[%s177 + $0x2d0] sm:%s170]
                %360 = vst [vmem:[%s178 + $0x168] sm:%s170] %v359
                %v361 = vld [vmem:[%s177 + $0x2d8] sm:%s170]
                %362 = vst [vmem:[%s178 + $0x16c] sm:%s170] %v361
                %v363 = vld [vmem:[%s177 + $0x2e0] sm:%s170]
                %364 = vst [vmem:[%s178 + $0x170] sm:%s170] %v363
                %v365 = vld [vmem:[%s177 + $0x2e8] sm:%s170]
                %366 = vst [vmem:[%s178 + $0x174] sm:%s170] %v365
                %v367 = vld [vmem:[%s177 + $0x2f0] sm:%s170]
                %368 = vst [vmem:[%s178 + $0x178] sm:%s170] %v367
                %v369 = vld [vmem:[%s177 + $0x2f8] sm:%s170]
                %370 = vst [vmem:[%s178 + $0x17c] sm:%s170] %v369
                %v371 = vld [vmem:[%s177 + $0x300] sm:%s170]
                %372 = vst [vmem:[%s178 + $0x180] sm:%s170] %v371
                %v373 = vld [vmem:[%s177 + $0x308] sm:%s170]
                %374 = vst [vmem:[%s178 + $0x184] sm:%s170] %v373
                %v375 = vld [vmem:[%s177 + $0x310] sm:%s170]
                %376 = vst [vmem:[%s178 + $0x188] sm:%s170] %v375
                %v377 = vld [vmem:[%s177 + $0x318] sm:%s170]
                %378 = vst [vmem:[%s178 + $0x18c] sm:%s170] %v377
                %v379 = vld [vmem:[%s177 + $0x320] sm:%s170]
                %380 = vst [vmem:[%s178 + $0x190] sm:%s170] %v379
                %v381 = vld [vmem:[%s177 + $0x328] sm:%s170]
                %382 = vst [vmem:[%s178 + $0x194] sm:%s170] %v381
                %v383 = vld [vmem:[%s177 + $0x330] sm:%s170]
                %384 = vst [vmem:[%s178 + $0x198] sm:%s170] %v383
                %v385 = vld [vmem:[%s177 + $0x338] sm:%s170]
                %386 = vst [vmem:[%s178 + $0x19c] sm:%s170] %v385
                %v387 = vld [vmem:[%s177 + $0x340] sm:%s170]
                %388 = vst [vmem:[%s178 + $0x1a0] sm:%s170] %v387
                %v389 = vld [vmem:[%s177 + $0x348] sm:%s170]
                %390 = vst [vmem:[%s178 + $0x1a4] sm:%s170] %v389
                %v391 = vld [vmem:[%s177 + $0x350] sm:%s170]
                %392 = vst [vmem:[%s178 + $0x1a8] sm:%s170] %v391
                %v393 = vld [vmem:[%s177 + $0x358] sm:%s170]
                %394 = vst [vmem:[%s178 + $0x1ac] sm:%s170] %v393
                %v395 = vld [vmem:[%s177 + $0x360] sm:%s170]
                %396 = vst [vmem:[%s178 + $0x1b0] sm:%s170] %v395
                %v397 = vld [vmem:[%s177 + $0x368] sm:%s170]
                %398 = vst [vmem:[%s178 + $0x1b4] sm:%s170] %v397
                %v399 = vld [vmem:[%s177 + $0x370] sm:%s170]
                %400 = vst [vmem:[%s178 + $0x1b8] sm:%s170] %v399
                %v401 = vld [vmem:[%s177 + $0x378] sm:%s170]
                %402 = vst [vmem:[%s178 + $0x1bc] sm:%s170] %v401
                %v403 = vld [vmem:[%s177 + $0x380] sm:%s170]
                %404 = vst [vmem:[%s178 + $0x1c0] sm:%s170] %v403
                %v405 = vld [vmem:[%s177 + $0x388] sm:%s170]
                %406 = vst [vmem:[%s178 + $0x1c4] sm:%s170] %v405
                %v407 = vld [vmem:[%s177 + $0x390] sm:%s170]
                %408 = vst [vmem:[%s178 + $0x1c8] sm:%s170] %v407
                %v409 = vld [vmem:[%s177 + $0x398] sm:%s170]
                %410 = vst [vmem:[%s178 + $0x1cc] sm:%s170] %v409
                %v411 = vld [vmem:[%s177 + $0x3a0] sm:%s170]
                %412 = vst [vmem:[%s178 + $0x1d0] sm:%s170] %v411
                %v413 = vld [vmem:[%s177 + $0x3a8] sm:%s170]
                %414 = vst [vmem:[%s178 + $0x1d4] sm:%s170] %v413
                %v415 = vld [vmem:[%s177 + $0x3b0] sm:%s170]
                %416 = vst [vmem:[%s178 + $0x1d8] sm:%s170] %v415
                %v417 = vld [vmem:[%s177 + $0x3b8] sm:%s170]
                %418 = vst [vmem:[%s178 + $0x1dc] sm:%s170] %v417
                %v419 = vld [vmem:[%s177 + $0x3c0] sm:%s170]
                %420 = vst [vmem:[%s178 + $0x1e0] sm:%s170] %v419
                %v421 = vld [vmem:[%s177 + $0x3c8] sm:%s170]
                %422 = vst [vmem:[%s178 + $0x1e4] sm:%s170] %v421
                %v423 = vld [vmem:[%s177 + $0x3d0] sm:%s170]
                %424 = vst [vmem:[%s178 + $0x1e8] sm:%s170] %v423
                %v425 = vld [vmem:[%s177 + $0x3d8] sm:%s170]
                %426 = vst [vmem:[%s178 + $0x1ec] sm:%s170] %v425
                %v427 = vld [vmem:[%s177 + $0x3e0] sm:%s170]
                %428 = vst [vmem:[%s178 + $0x1f0] sm:%s170] %v427
                %v429 = vld [vmem:[%s177 + $0x3e8] sm:%s170]
                %430 = vst [vmem:[%s178 + $0x1f4] sm:%s170] %v429
                %v431 = vld [vmem:[%s177 + $0x3f0] sm:%s170]
                %432 = vst [vmem:[%s178 + $0x1f8] sm:%s170] %v431
                %v433 = vld [vmem:[%s177 + $0x3f8] sm:%s170]
                %434 = vst [vmem:[%s178 + $0x1fc] sm:%s170] %v433
                %v435 = vld [vmem:[%s177 + $0x400] sm:%s170]
                %436 = vst [vmem:[%s178 + $0x200] sm:%s170] %v435
                %v437 = vld [vmem:[%s177 + $0x408] sm:%s170]
                %438 = vst [vmem:[%s178 + $0x204] sm:%s170] %v437
                %v439 = vld [vmem:[%s177 + $0x410] sm:%s170]
                %440 = vst [vmem:[%s178 + $0x208] sm:%s170] %v439
                %v441 = vld [vmem:[%s177 + $0x418] sm:%s170]
                %442 = vst [vmem:[%s178 + $0x20c] sm:%s170] %v441
                %v443 = vld [vmem:[%s177 + $0x420] sm:%s170]
                %444 = vst [vmem:[%s178 + $0x210] sm:%s170] %v443
                %v445 = vld [vmem:[%s177 + $0x428] sm:%s170]
                %446 = vst [vmem:[%s178 + $0x214] sm:%s170] %v445
                %v447 = vld [vmem:[%s177 + $0x430] sm:%s170]
                %448 = vst [vmem:[%s178 + $0x218] sm:%s170] %v447
                %v449 = vld [vmem:[%s177 + $0x438] sm:%s170]
                %450 = vst [vmem:[%s178 + $0x21c] sm:%s170] %v449
                %v451 = vld [vmem:[%s177 + $0x440] sm:%s170]
                %452 = vst [vmem:[%s178 + $0x220] sm:%s170] %v451
                %v453 = vld [vmem:[%s177 + $0x448] sm:%s170]
                %454 = vst [vmem:[%s178 + $0x224] sm:%s170] %v453
                %v455 = vld [vmem:[%s177 + $0x450] sm:%s170]
                %456 = vst [vmem:[%s178 + $0x228] sm:%s170] %v455
                %v457 = vld [vmem:[%s177 + $0x458] sm:%s170]
                %458 = vst [vmem:[%s178 + $0x22c] sm:%s170] %v457
                %v459 = vld [vmem:[%s177 + $0x460] sm:%s170]
                %460 = vst [vmem:[%s178 + $0x230] sm:%s170] %v459
                %v461 = vld [vmem:[%s177 + $0x468] sm:%s170]
                %462 = vst [vmem:[%s178 + $0x234] sm:%s170] %v461
                %v463 = vld [vmem:[%s177 + $0x470] sm:%s170]
                %464 = vst [vmem:[%s178 + $0x238] sm:%s170] %v463
                %v465 = vld [vmem:[%s177 + $0x478] sm:%s170]
                %466 = vst [vmem:[%s178 + $0x23c] sm:%s170] %v465
                %v467 = vld [vmem:[%s177 + $0x480] sm:%s170]
                %468 = vst [vmem:[%s178 + $0x240] sm:%s170] %v467
                %v469 = vld [vmem:[%s177 + $0x488] sm:%s170]
                %470 = vst [vmem:[%s178 + $0x244] sm:%s170] %v469
                %v471 = vld [vmem:[%s177 + $0x490] sm:%s170]
                %472 = vst [vmem:[%s178 + $0x248] sm:%s170] %v471
                %v473 = vld [vmem:[%s177 + $0x498] sm:%s170]
                %474 = vst [vmem:[%s178 + $0x24c] sm:%s170] %v473
                %v475 = vld [vmem:[%s177 + $0x4a0] sm:%s170]
                %476 = vst [vmem:[%s178 + $0x250] sm:%s170] %v475
                %v477 = vld [vmem:[%s177 + $0x4a8] sm:%s170]
                %478 = vst [vmem:[%s178 + $0x254] sm:%s170] %v477
                %v479 = vld [vmem:[%s177 + $0x4b0] sm:%s170]
                %480 = vst [vmem:[%s178 + $0x258] sm:%s170] %v479
                %v481 = vld [vmem:[%s177 + $0x4b8] sm:%s170]
                %482 = vst [vmem:[%s178 + $0x25c] sm:%s170] %v481
                %v483 = vld [vmem:[%s177 + $0x4c0] sm:%s170]
                %484 = vst [vmem:[%s178 + $0x260] sm:%s170] %v483
                %v485 = vld [vmem:[%s177 + $0x4c8] sm:%s170]
                %486 = vst [vmem:[%s178 + $0x264] sm:%s170] %v485
                %v487 = vld [vmem:[%s177 + $0x4d0] sm:%s170]
                %488 = vst [vmem:[%s178 + $0x268] sm:%s170] %v487
                %v489 = vld [vmem:[%s177 + $0x4d8] sm:%s170]
                %490 = vst [vmem:[%s178 + $0x26c] sm:%s170] %v489
                %v491 = vld [vmem:[%s177 + $0x4e0] sm:%s170]
                %492 = vst [vmem:[%s178 + $0x270] sm:%s170] %v491
                %v493 = vld [vmem:[%s177 + $0x4e8] sm:%s170]
                %494 = vst [vmem:[%s178 + $0x274] sm:%s170] %v493
                %v495 = vld [vmem:[%s177 + $0x4f0] sm:%s170]
                %496 = vst [vmem:[%s178 + $0x278] sm:%s170] %v495
                %v497 = vld [vmem:[%s177 + $0x4f8] sm:%s170]
                %498 = vst [vmem:[%s178 + $0x27c] sm:%s170] %v497
                %v499 = vld [vmem:[%s177 + $0x500] sm:%s170]
                %500 = vst [vmem:[%s178 + $0x280] sm:%s170] %v499
                %v501 = vld [vmem:[%s177 + $0x508] sm:%s170]
                %502 = vst [vmem:[%s178 + $0x284] sm:%s170] %v501
                %v503 = vld [vmem:[%s177 + $0x510] sm:%s170]
                %504 = vst [vmem:[%s178 + $0x288] sm:%s170] %v503
                %v505 = vld [vmem:[%s177 + $0x518] sm:%s170]
                %506 = vst [vmem:[%s178 + $0x28c] sm:%s170] %v505
                %v507 = vld [vmem:[%s177 + $0x520] sm:%s170]
                %508 = vst [vmem:[%s178 + $0x290] sm:%s170] %v507
                %v509 = vld [vmem:[%s177 + $0x528] sm:%s170]
                %510 = vst [vmem:[%s178 + $0x294] sm:%s170] %v509
                %v511 = vld [vmem:[%s177 + $0x530] sm:%s170]
                %512 = vst [vmem:[%s178 + $0x298] sm:%s170] %v511
                %v513 = vld [vmem:[%s177 + $0x538] sm:%s170]
                %514 = vst [vmem:[%s178 + $0x29c] sm:%s170] %v513
                %v515 = vld [vmem:[%s177 + $0x540] sm:%s170]
                %516 = vst [vmem:[%s178 + $0x2a0] sm:%s170] %v515
                %v517 = vld [vmem:[%s177 + $0x548] sm:%s170]
                %518 = vst [vmem:[%s178 + $0x2a4] sm:%s170] %v517
                %v519 = vld [vmem:[%s177 + $0x550] sm:%s170]
                %520 = vst [vmem:[%s178 + $0x2a8] sm:%s170] %v519
                %v521 = vld [vmem:[%s177 + $0x558] sm:%s170]
                %522 = vst [vmem:[%s178 + $0x2ac] sm:%s170] %v521
                %v523 = vld [vmem:[%s177 + $0x560] sm:%s170]
                %524 = vst [vmem:[%s178 + $0x2b0] sm:%s170] %v523
                %v525 = vld [vmem:[%s177 + $0x568] sm:%s170]
                %526 = vst [vmem:[%s178 + $0x2b4] sm:%s170] %v525
                %v527 = vld [vmem:[%s177 + $0x570] sm:%s170]
                %528 = vst [vmem:[%s178 + $0x2b8] sm:%s170] %v527
                %v529 = vld [vmem:[%s177 + $0x578] sm:%s170]
                %530 = vst [vmem:[%s178 + $0x2bc] sm:%s170] %v529
                %v531 = vld [vmem:[%s177 + $0x580] sm:%s170]
                %532 = vst [vmem:[%s178 + $0x2c0] sm:%s170] %v531
                %v533 = vld [vmem:[%s177 + $0x588] sm:%s170]
                %534 = vst [vmem:[%s178 + $0x2c4] sm:%s170] %v533
                %v535 = vld [vmem:[%s177 + $0x590] sm:%s170]
                %536 = vst [vmem:[%s178 + $0x2c8] sm:%s170] %v535
                %v537 = vld [vmem:[%s177 + $0x598] sm:%s170]
                %538 = vst [vmem:[%s178 + $0x2cc] sm:%s170] %v537
                %v539 = vld [vmem:[%s177 + $0x5a0] sm:%s170]
                %540 = vst [vmem:[%s178 + $0x2d0] sm:%s170] %v539
                %v541 = vld [vmem:[%s177 + $0x5a8] sm:%s170]
                %542 = vst [vmem:[%s178 + $0x2d4] sm:%s170] %v541
                %v543 = vld [vmem:[%s177 + $0x5b0] sm:%s170]
                %544 = vst [vmem:[%s178 + $0x2d8] sm:%s170] %v543
                %v545 = vld [vmem:[%s177 + $0x5b8] sm:%s170]
                %546 = vst [vmem:[%s178 + $0x2dc] sm:%s170] %v545
                %v547 = vld [vmem:[%s177 + $0x5c0] sm:%s170]
                %548 = vst [vmem:[%s178 + $0x2e0] sm:%s170] %v547
                %v549 = vld [vmem:[%s177 + $0x5c8] sm:%s170]
                %550 = vst [vmem:[%s178 + $0x2e4] sm:%s170] %v549
                %v551 = vld [vmem:[%s177 + $0x5d0] sm:%s170]
                %552 = vst [vmem:[%s178 + $0x2e8] sm:%s170] %v551
                %v553 = vld [vmem:[%s177 + $0x5d8] sm:%s170]
                %554 = vst [vmem:[%s178 + $0x2ec] sm:%s170] %v553
                %v555 = vld [vmem:[%s177 + $0x5e0] sm:%s170]
                %556 = vst [vmem:[%s178 + $0x2f0] sm:%s170] %v555
                %v557 = vld [vmem:[%s177 + $0x5e8] sm:%s170]
                %558 = vst [vmem:[%s178 + $0x2f4] sm:%s170] %v557
                %v559 = vld [vmem:[%s177 + $0x5f0] sm:%s170]
                %560 = vst [vmem:[%s178 + $0x2f8] sm:%s170] %v559
                %v561 = vld [vmem:[%s177 + $0x5f8] sm:%s170]
                %562 = vst [vmem:[%s178 + $0x2fc] sm:%s170] %v561
                %v563 = vld [vmem:[%s177 + $0x600] sm:%s170]
                %564 = vst [vmem:[%s178 + $0x300] sm:%s170] %v563
                %v565 = vld [vmem:[%s177 + $0x608] sm:%s170]
                %566 = vst [vmem:[%s178 + $0x304] sm:%s170] %v565
                %v567 = vld [vmem:[%s177 + $0x610] sm:%s170]
                %568 = vst [vmem:[%s178 + $0x308] sm:%s170] %v567
                %v569 = vld [vmem:[%s177 + $0x618] sm:%s170]
                %570 = vst [vmem:[%s178 + $0x30c] sm:%s170] %v569
                %v571 = vld [vmem:[%s177 + $0x620] sm:%s170]
                %572 = vst [vmem:[%s178 + $0x310] sm:%s170] %v571
                %v573 = vld [vmem:[%s177 + $0x628] sm:%s170]
                %574 = vst [vmem:[%s178 + $0x314] sm:%s170] %v573
                %v575 = vld [vmem:[%s177 + $0x630] sm:%s170]
                %576 = vst [vmem:[%s178 + $0x318] sm:%s170] %v575
                %v577 = vld [vmem:[%s177 + $0x638] sm:%s170]
                %578 = vst [vmem:[%s178 + $0x31c] sm:%s170] %v577
                %v579 = vld [vmem:[%s177 + $0x640] sm:%s170]
                %580 = vst [vmem:[%s178 + $0x320] sm:%s170] %v579
                %v581 = vld [vmem:[%s177 + $0x648] sm:%s170]
                %582 = vst [vmem:[%s178 + $0x324] sm:%s170] %v581
                %v583 = vld [vmem:[%s177 + $0x650] sm:%s170]
                %584 = vst [vmem:[%s178 + $0x328] sm:%s170] %v583
                %v585 = vld [vmem:[%s177 + $0x658] sm:%s170]
                %586 = vst [vmem:[%s178 + $0x32c] sm:%s170] %v585
                %v587 = vld [vmem:[%s177 + $0x660] sm:%s170]
                %588 = vst [vmem:[%s178 + $0x330] sm:%s170] %v587
                %v589 = vld [vmem:[%s177 + $0x668] sm:%s170]
                %590 = vst [vmem:[%s178 + $0x334] sm:%s170] %v589
                %v591 = vld [vmem:[%s177 + $0x670] sm:%s170]
                %592 = vst [vmem:[%s178 + $0x338] sm:%s170] %v591
                %v593 = vld [vmem:[%s177 + $0x678] sm:%s170]
                %594 = vst [vmem:[%s178 + $0x33c] sm:%s170] %v593
                %v595 = vld [vmem:[%s177 + $0x680] sm:%s170]
                %596 = vst [vmem:[%s178 + $0x340] sm:%s170] %v595
                %v597 = vld [vmem:[%s177 + $0x688] sm:%s170]
                %598 = vst [vmem:[%s178 + $0x344] sm:%s170] %v597
                %v599 = vld [vmem:[%s177 + $0x690] sm:%s170]
                %600 = vst [vmem:[%s178 + $0x348] sm:%s170] %v599
                %v601 = vld [vmem:[%s177 + $0x698] sm:%s170]
                %602 = vst [vmem:[%s178 + $0x34c] sm:%s170] %v601
                %v603 = vld [vmem:[%s177 + $0x6a0] sm:%s170]
                %604 = vst [vmem:[%s178 + $0x350] sm:%s170] %v603
                %v605 = vld [vmem:[%s177 + $0x6a8] sm:%s170]
                %606 = vst [vmem:[%s178 + $0x354] sm:%s170] %v605
                %v607 = vld [vmem:[%s177 + $0x6b0] sm:%s170]
                %608 = vst [vmem:[%s178 + $0x358] sm:%s170] %v607
                %v609 = vld [vmem:[%s177 + $0x6b8] sm:%s170]
                %610 = vst [vmem:[%s178 + $0x35c] sm:%s170] %v609
                %v611 = vld [vmem:[%s177 + $0x6c0] sm:%s170]
                %612 = vst [vmem:[%s178 + $0x360] sm:%s170] %v611
                %v613 = vld [vmem:[%s177 + $0x6c8] sm:%s170]
                %614 = vst [vmem:[%s178 + $0x364] sm:%s170] %v613
                %v615 = vld [vmem:[%s177 + $0x6d0] sm:%s170]
                %616 = vst [vmem:[%s178 + $0x368] sm:%s170] %v615
                %v617 = vld [vmem:[%s177 + $0x6d8] sm:%s170]
                %618 = vst [vmem:[%s178 + $0x36c] sm:%s170] %v617
                %v619 = vld [vmem:[%s177 + $0x6e0] sm:%s170]
                %620 = vst [vmem:[%s178 + $0x370] sm:%s170] %v619
                %v621 = vld [vmem:[%s177 + $0x6e8] sm:%s170]
                %622 = vst [vmem:[%s178 + $0x374] sm:%s170] %v621
                %v623 = vld [vmem:[%s177 + $0x6f0] sm:%s170]
                %624 = vst [vmem:[%s178 + $0x378] sm:%s170] %v623
                %v625 = vld [vmem:[%s177 + $0x6f8] sm:%s170]
                %626 = vst [vmem:[%s178 + $0x37c] sm:%s170] %v625
                %v627 = vld [vmem:[%s177 + $0x700] sm:%s170]
                %628 = vst [vmem:[%s178 + $0x380] sm:%s170] %v627
                %v629 = vld [vmem:[%s177 + $0x708] sm:%s170]
                %630 = vst [vmem:[%s178 + $0x384] sm:%s170] %v629
                %v631 = vld [vmem:[%s177 + $0x710] sm:%s170]
                %632 = vst [vmem:[%s178 + $0x388] sm:%s170] %v631
                %v633 = vld [vmem:[%s177 + $0x718] sm:%s170]
                %634 = vst [vmem:[%s178 + $0x38c] sm:%s170] %v633
                %v635 = vld [vmem:[%s177 + $0x720] sm:%s170]
                %636 = vst [vmem:[%s178 + $0x390] sm:%s170] %v635
                %v637 = vld [vmem:[%s177 + $0x728] sm:%s170]
                %638 = vst [vmem:[%s178 + $0x394] sm:%s170] %v637
                %v639 = vld [vmem:[%s177 + $0x730] sm:%s170]
                %640 = vst [vmem:[%s178 + $0x398] sm:%s170] %v639
                %v641 = vld [vmem:[%s177 + $0x738] sm:%s170]
                %642 = vst [vmem:[%s178 + $0x39c] sm:%s170] %v641
                %v643 = vld [vmem:[%s177 + $0x740] sm:%s170]
                %644 = vst [vmem:[%s178 + $0x3a0] sm:%s170] %v643
                %v645 = vld [vmem:[%s177 + $0x748] sm:%s170]
                %646 = vst [vmem:[%s178 + $0x3a4] sm:%s170] %v645
                %v647 = vld [vmem:[%s177 + $0x750] sm:%s170]
                %648 = vst [vmem:[%s178 + $0x3a8] sm:%s170] %v647
                %v649 = vld [vmem:[%s177 + $0x758] sm:%s170]
                %650 = vst [vmem:[%s178 + $0x3ac] sm:%s170] %v649
                %v651 = vld [vmem:[%s177 + $0x760] sm:%s170]
                %652 = vst [vmem:[%s178 + $0x3b0] sm:%s170] %v651
                %v653 = vld [vmem:[%s177 + $0x768] sm:%s170]
                %654 = vst [vmem:[%s178 + $0x3b4] sm:%s170] %v653
                %v655 = vld [vmem:[%s177 + $0x770] sm:%s170]
                %656 = vst [vmem:[%s178 + $0x3b8] sm:%s170] %v655
                %v657 = vld [vmem:[%s177 + $0x778] sm:%s170]
                %658 = vst [vmem:[%s178 + $0x3bc] sm:%s170] %v657
                %v659 = vld [vmem:[%s177 + $0x780] sm:%s170]
                %660 = vst [vmem:[%s178 + $0x3c0] sm:%s170] %v659
                %v661 = vld [vmem:[%s177 + $0x788] sm:%s170]
                %662 = vst [vmem:[%s178 + $0x3c4] sm:%s170] %v661
                %v663 = vld [vmem:[%s177 + $0x790] sm:%s170]
                %664 = vst [vmem:[%s178 + $0x3c8] sm:%s170] %v663
                %v665 = vld [vmem:[%s177 + $0x798] sm:%s170]
                %666 = vst [vmem:[%s178 + $0x3cc] sm:%s170] %v665
                %v667 = vld [vmem:[%s177 + $0x7a0] sm:%s170]
                %668 = vst [vmem:[%s178 + $0x3d0] sm:%s170] %v667
                %v669 = vld [vmem:[%s177 + $0x7a8] sm:%s170]
                %670 = vst [vmem:[%s178 + $0x3d4] sm:%s170] %v669
                %v671 = vld [vmem:[%s177 + $0x7b0] sm:%s170]
                %672 = vst [vmem:[%s178 + $0x3d8] sm:%s170] %v671
                %v673 = vld [vmem:[%s177 + $0x7b8] sm:%s170]
                %674 = vst [vmem:[%s178 + $0x3dc] sm:%s170] %v673
                %v675 = vld [vmem:[%s177 + $0x7c0] sm:%s170]
                %676 = vst [vmem:[%s178 + $0x3e0] sm:%s170] %v675
                %v677 = vld [vmem:[%s177 + $0x7c8] sm:%s170]
                %678 = vst [vmem:[%s178 + $0x3e4] sm:%s170] %v677
                %v679 = vld [vmem:[%s177 + $0x7d0] sm:%s170]
                %680 = vst [vmem:[%s178 + $0x3e8] sm:%s170] %v679
                %v681 = vld [vmem:[%s177 + $0x7d8] sm:%s170]
                %682 = vst [vmem:[%s178 + $0x3ec] sm:%s170] %v681
                %v683 = vld [vmem:[%s177 + $0x7e0] sm:%s170]
                %684 = vst [vmem:[%s178 + $0x3f0] sm:%s170] %v683
                %v685 = vld [vmem:[%s177 + $0x7e8] sm:%s170]
                %686 = vst [vmem:[%s178 + $0x3f4] sm:%s170] %v685
                %v687 = vld [vmem:[%s177 + $0x7f0] sm:%s170]
                %688 = vst [vmem:[%s178 + $0x3f8] sm:%s170] %v687
                %v689 = vld [vmem:[%s177 + $0x7f8] sm:%s170]
                %690 = vst [vmem:[%s178 + $0x3fc] sm:%s170] %v689
              $region41: #{carla_encoder_forward.8} parent=35 // loop_footer
                %s176 = sadd.s32 1, %s172
              $region42: #{carla_encoder_forward.8} parent=35 // loop_footer_branch
                %171 = sbr.rel target = $region38
              $region43: #{carla_encoder_forward.8} parent=35 // loop_exit
                _
            $region36: #{carla_encoder_forward.8} parent=27 // pred_fallthru
              _
          $region28: #{carla_encoder_forward.8} parent=23 // pred_fallthru
            _
          %2273 = vnop
        $region24: #{carla_encoder_forward.8} parent=19 // pred_fallthru
          _
        // Predicated region
        $region73: #{carla_encoder_forward.8} parent=19 // pred_check
          %p2274 = pneg %p93
        $region74: #{carla_encoder_forward.8} parent=19 // pred_check_branch
          %2276 = sbr.rel (%p2274) target = $region76
        $region75: #{carla_encoder_forward.8} parent=19 // pred_region
          %p2277 = scmp.lt.s32.totalorder %s17, 1
          %s2278 = scalar_select %p2277, %s17, 1
          %s2279 = scalar_lea.vmem %s2, %s2278
        $region76: #{carla_encoder_forward.8} parent=19 // pred_fallthru
          _
      $region20: #{carla_encoder_forward.8} parent=5 // pred_fallthru
        _
      %p2280 = scmp.le.s32.totalorder 1, %s9
      %p2281 = scmp.lt.s32.totalorder %s9, 3
      %p2282 = pnand %p2280, %p2281
      %p2283 = pneg %p2282
      // Predicated region
      $region77: #{carla_encoder_forward.8} parent=5 // pred_check
        _
      $region78: #{carla_encoder_forward.8} parent=5 // pred_check_branch
        %2285 = sbr.rel (%p2282) target = $region80
      $region79: #{carla_encoder_forward.8} parent=5 // pred_region
        %s2286 = ssub.s32 %s9, 1
        %s2287 = sand.u32 %s60, 1
        %s2288 = sand.u32 %s60, 1
        %s2289 = smul.addr %s2288, 1024
        %s2290 = scalar_lea.vmem [#allocation2], %s2289
        // Predicated region
        $region81: #{carla_encoder_forward.8} parent=79 // pred_check
          %p2291 = pneg %p73
        $region82: #{carla_encoder_forward.8} parent=79 // pred_check_branch
          %2293 = sbr.rel (%p2291) target = $region84
        $region83: #{carla_encoder_forward.8} parent=79 // pred_region
          _
        $region84: #{carla_encoder_forward.8} parent=79 // pred_fallthru
          _
        %p2294 = scmp.lt.s32.totalorder %s18, 0
        %s2295 = scalar_select %p2294, %s18, 0
        %s2296 = smul.addr %s2295, 16
        %s2297 = smul.addr %s2296, 4
        %s2298 = scalar_lea.vmem %s0, %s2297
        %p2299 = pneg %p47
        %p2300 = pneg %p44
        %s2301 = sand.u32 %s60, 1
        %s2302 = sand.u32 %s60, 1
        %s2303 = smul.addr %s2302, 1024
        %s2304 = scalar_lea.vmem [#allocation2], %s2303
        %p2305 = pneg %p73
        %p2306 = pneg %p70
        %p2307 = scmp.lt.s32.totalorder %s19, 1
        %s2308 = scalar_select %p2307, %s19, 1
        %s2309 = scalar_lea.vmem %s2, %s2308
        %p2310 = pneg %p99
        %p2311 = pneg %p96
        %p2312 = pneg %p127
        %p2313 = pneg %p124
        %p2314 = scmp.lt.s32.totalorder %s18, 0
        %s2315 = scalar_select %p2314, %s18, 0
        %p2316 = scmp.lt.s32.totalorder %s19, 1
        %s2317 = scalar_select %p2316, %s19, 1
        %s2318 = smul.addr %s2315, 2
        %s2319 = sadd.s32 %s2317, %s2318
        %s2320 = smul.addr %s2319, 4
        %s2321 = scalar_lea.vmem %s3, %s2320
        %p2322 = scmp.lt.s32.totalorder %s18, 0
        %s2323 = scalar_select %p2322, %s18, 0
        %s2324 = smul.addr %s2323, 16
        %s2325 = smul.addr %s2324, 4
        %s2326 = scalar_lea.vmem %s0, %s2325
        %p2327 = scmp.lt.s32.totalorder %s19, 1
        %s2328 = scalar_select %p2327, %s19, 1
        %s2329 = scalar_lea.vmem %s2, %s2328
        %p2330 = scmp.lt.s32.totalorder %s18, 0
        %s2331 = scalar_select %p2330, %s18, 0
        %p2332 = scmp.lt.s32.totalorder %s19, 1
        %s2333 = scalar_select %p2332, %s19, 1
        %s2334 = smul.addr %s2331, 2
        %s2335 = sadd.s32 %s2333, %s2334
        %s2336 = smul.addr %s2335, 4
        %s2337 = scalar_lea.vmem %s3, %s2336
        %v2338 = vld [vmem:[%s2326] sm:$0xff]
        %v2339 = vld [vmem:[%s2326 + $0x8] sm:$0xff]
        %v2340 = vld [vmem:[%s2326 + $0x10] sm:$0xff]
        %v2341 = vld [vmem:[%s2326 + $0x18] sm:$0xff]
        %v2342 = vld [vmem:[%s2326 + $0x20] sm:$0xff]
        %v2343 = vld [vmem:[%s2326 + $0x28] sm:$0xff]
        %v2344 = vld [vmem:[%s2326 + $0x30] sm:$0xff]
        %v2345 = vld [vmem:[%s2326 + $0x38] sm:$0xff]
        %v2346 = vld [vmem:[%s2290] sm:$0xf]
        %v2347 = vld [vmem:[%s2290 + $0x4] sm:$0xf]
        %v2348 = vld [vmem:[%s2290 + $0x8] sm:$0xf]
        %v2349 = vld [vmem:[%s2290 + $0xc] sm:$0xf]
        %v2350 = vld [vmem:[%s2290 + $0x10] sm:$0xf]
        %v2351 = vld [vmem:[%s2290 + $0x14] sm:$0xf]
        %v2352 = vld [vmem:[%s2290 + $0x18] sm:$0xf]
        %v2353 = vld [vmem:[%s2290 + $0x1c] sm:$0xf]
        %v2354 = vld [vmem:[%s2290 + $0x20] sm:$0xf]
        %v2355 = vld [vmem:[%s2290 + $0x24] sm:$0xf]
        %v2356 = vld [vmem:[%s2290 + $0x28] sm:$0xf]
        %v2357 = vld [vmem:[%s2290 + $0x2c] sm:$0xf]
        %v2358 = vld [vmem:[%s2290 + $0x30] sm:$0xf]
        %v2359 = vld [vmem:[%s2290 + $0x34] sm:$0xf]
        %v2360 = vld [vmem:[%s2290 + $0x38] sm:$0xf]
        %v2361 = vld [vmem:[%s2290 + $0x3c] sm:$0xf]
        %v2362 = vld [vmem:[%s2290 + $0x40] sm:$0xf]
        %v2363 = vld [vmem:[%s2290 + $0x44] sm:$0xf]
        %v2364 = vld [vmem:[%s2290 + $0x48] sm:$0xf]
        %v2365 = vld [vmem:[%s2290 + $0x4c] sm:$0xf]
        %v2366 = vld [vmem:[%s2290 + $0x50] sm:$0xf]
        %v2367 = vld [vmem:[%s2290 + $0x54] sm:$0xf]
        %v2368 = vld [vmem:[%s2290 + $0x58] sm:$0xf]
        %v2369 = vld [vmem:[%s2290 + $0x5c] sm:$0xf]
        %v2370 = vld [vmem:[%s2290 + $0x60] sm:$0xf]
        %v2371 = vld [vmem:[%s2290 + $0x64] sm:$0xf]
        %v2372 = vld [vmem:[%s2290 + $0x68] sm:$0xf]
        %v2373 = vld [vmem:[%s2290 + $0x6c] sm:$0xf]
        %v2374 = vld [vmem:[%s2290 + $0x70] sm:$0xf]
        %v2375 = vld [vmem:[%s2290 + $0x74] sm:$0xf]
        %v2376 = vld [vmem:[%s2290 + $0x78] sm:$0xf]
        %v2377 = vld [vmem:[%s2290 + $0x7c] sm:$0xf]
        %v2378 = vld [vmem:[%s2290 + $0x80] sm:$0xf]
        %v2379 = vld [vmem:[%s2290 + $0x84] sm:$0xf]
        %v2380 = vld [vmem:[%s2290 + $0x88] sm:$0xf]
        %v2381 = vld [vmem:[%s2290 + $0x8c] sm:$0xf]
        %v2382 = vld [vmem:[%s2290 + $0x90] sm:$0xf]
        %v2383 = vld [vmem:[%s2290 + $0x94] sm:$0xf]
        %v2384 = vld [vmem:[%s2290 + $0x98] sm:$0xf]
        %v2385 = vld [vmem:[%s2290 + $0x9c] sm:$0xf]
        %v2386 = vld [vmem:[%s2290 + $0xa0] sm:$0xf]
        %v2387 = vld [vmem:[%s2290 + $0xa4] sm:$0xf]
        %v2388 = vld [vmem:[%s2290 + $0xa8] sm:$0xf]
        %v2389 = vld [vmem:[%s2290 + $0xac] sm:$0xf]
        %v2390 = vld [vmem:[%s2290 + $0xb0] sm:$0xf]
        %v2391 = vld [vmem:[%s2290 + $0xb4] sm:$0xf]
        %v2392 = vld [vmem:[%s2290 + $0xb8] sm:$0xf]
        %v2393 = vld [vmem:[%s2290 + $0xbc] sm:$0xf]
        %v2394 = vld [vmem:[%s2290 + $0xc0] sm:$0xf]
        %v2395 = vld [vmem:[%s2290 + $0xc4] sm:$0xf]
        %v2396 = vld [vmem:[%s2290 + $0xc8] sm:$0xf]
        %v2397 = vld [vmem:[%s2290 + $0xcc] sm:$0xf]
        %v2398 = vld [vmem:[%s2290 + $0xd0] sm:$0xf]
        %v2399 = vld [vmem:[%s2290 + $0xd4] sm:$0xf]
        %v2400 = vld [vmem:[%s2290 + $0xd8] sm:$0xf]
        %v2401 = vld [vmem:[%s2290 + $0xdc] sm:$0xf]
        %v2402 = vld [vmem:[%s2290 + $0xe0] sm:$0xf]
        %v2403 = vld [vmem:[%s2290 + $0xe4] sm:$0xf]
        %v2404 = vld [vmem:[%s2290 + $0xe8] sm:$0xf]
        %v2405 = vld [vmem:[%s2290 + $0xec] sm:$0xf]
        %v2406 = vld [vmem:[%s2290 + $0xf0] sm:$0xf]
        %v2407 = vld [vmem:[%s2290 + $0xf4] sm:$0xf]
        %v2408 = vld [vmem:[%s2290 + $0xf8] sm:$0xf]
        %v2409 = vld [vmem:[%s2290 + $0xfc] sm:$0xf]
        %v2410 = vld [vmem:[%s2290 + $0x100] sm:$0xf]
        %v2411 = vld [vmem:[%s2290 + $0x104] sm:$0xf]
        %v2412 = vld [vmem:[%s2290 + $0x108] sm:$0xf]
        %v2413 = vld [vmem:[%s2290 + $0x10c] sm:$0xf]
        %v2414 = vld [vmem:[%s2290 + $0x110] sm:$0xf]
        %v2415 = vld [vmem:[%s2290 + $0x114] sm:$0xf]
        %v2416 = vld [vmem:[%s2290 + $0x118] sm:$0xf]
        %v2417 = vld [vmem:[%s2290 + $0x11c] sm:$0xf]
        %v2418 = vld [vmem:[%s2290 + $0x120] sm:$0xf]
        %v2419 = vld [vmem:[%s2290 + $0x124] sm:$0xf]
        %v2420 = vld [vmem:[%s2290 + $0x128] sm:$0xf]
        %v2421 = vld [vmem:[%s2290 + $0x12c] sm:$0xf]
        %v2422 = vld [vmem:[%s2290 + $0x130] sm:$0xf]
        %v2423 = vld [vmem:[%s2290 + $0x134] sm:$0xf]
        %v2424 = vld [vmem:[%s2290 + $0x138] sm:$0xf]
        %v2425 = vld [vmem:[%s2290 + $0x13c] sm:$0xf]
        %v2426 = vld [vmem:[%s2290 + $0x140] sm:$0xf]
        %v2427 = vld [vmem:[%s2290 + $0x144] sm:$0xf]
        %v2428 = vld [vmem:[%s2290 + $0x148] sm:$0xf]
        %v2429 = vld [vmem:[%s2290 + $0x14c] sm:$0xf]
        %v2430 = vld [vmem:[%s2290 + $0x150] sm:$0xf]
        %v2431 = vld [vmem:[%s2290 + $0x154] sm:$0xf]
        %v2432 = vld [vmem:[%s2290 + $0x158] sm:$0xf]
        %v2433 = vld [vmem:[%s2290 + $0x15c] sm:$0xf]
        %v2434 = vld [vmem:[%s2290 + $0x160] sm:$0xf]
        %v2435 = vld [vmem:[%s2290 + $0x164] sm:$0xf]
        %v2436 = vld [vmem:[%s2290 + $0x168] sm:$0xf]
        %v2437 = vld [vmem:[%s2290 + $0x16c] sm:$0xf]
        %v2438 = vld [vmem:[%s2290 + $0x170] sm:$0xf]
        %v2439 = vld [vmem:[%s2290 + $0x174] sm:$0xf]
        %v2440 = vld [vmem:[%s2290 + $0x178] sm:$0xf]
        %v2441 = vld [vmem:[%s2290 + $0x17c] sm:$0xf]
        %v2442 = vld [vmem:[%s2290 + $0x180] sm:$0xf]
        %v2443 = vld [vmem:[%s2290 + $0x184] sm:$0xf]
        %v2444 = vld [vmem:[%s2290 + $0x188] sm:$0xf]
        %v2445 = vld [vmem:[%s2290 + $0x18c] sm:$0xf]
        %v2446 = vld [vmem:[%s2290 + $0x190] sm:$0xf]
        %v2447 = vld [vmem:[%s2290 + $0x194] sm:$0xf]
        %v2448 = vld [vmem:[%s2290 + $0x198] sm:$0xf]
        %v2449 = vld [vmem:[%s2290 + $0x19c] sm:$0xf]
        %v2450 = vld [vmem:[%s2290 + $0x1a0] sm:$0xf]
        %v2451 = vld [vmem:[%s2290 + $0x1a4] sm:$0xf]
        %v2452 = vld [vmem:[%s2290 + $0x1a8] sm:$0xf]
        %v2453 = vld [vmem:[%s2290 + $0x1ac] sm:$0xf]
        %v2454 = vld [vmem:[%s2290 + $0x1b0] sm:$0xf]
        %v2455 = vld [vmem:[%s2290 + $0x1b4] sm:$0xf]
        %v2456 = vld [vmem:[%s2290 + $0x1b8] sm:$0xf]
        %v2457 = vld [vmem:[%s2290 + $0x1bc] sm:$0xf]
        %v2458 = vld [vmem:[%s2290 + $0x1c0] sm:$0xf]
        %v2459 = vld [vmem:[%s2290 + $0x1c4] sm:$0xf]
        %v2460 = vld [vmem:[%s2290 + $0x1c8] sm:$0xf]
        %v2461 = vld [vmem:[%s2290 + $0x1cc] sm:$0xf]
        %v2462 = vld [vmem:[%s2290 + $0x1d0] sm:$0xf]
        %v2463 = vld [vmem:[%s2290 + $0x1d4] sm:$0xf]
        %v2464 = vld [vmem:[%s2290 + $0x1d8] sm:$0xf]
        %v2465 = vld [vmem:[%s2290 + $0x1dc] sm:$0xf]
        %v2466 = vld [vmem:[%s2290 + $0x1e0] sm:$0xf]
        %v2467 = vld [vmem:[%s2290 + $0x1e4] sm:$0xf]
        %v2468 = vld [vmem:[%s2290 + $0x1e8] sm:$0xf]
        %v2469 = vld [vmem:[%s2290 + $0x1ec] sm:$0xf]
        %v2470 = vld [vmem:[%s2290 + $0x1f0] sm:$0xf]
        %v2471 = vld [vmem:[%s2290 + $0x1f4] sm:$0xf]
        %v2472 = vld [vmem:[%s2290 + $0x1f8] sm:$0xf]
        %v2473 = vld [vmem:[%s2290 + $0x1fc] sm:$0xf]
        %v2474 = vld [vmem:[%s2290 + $0x200] sm:$0xf]
        %v2475 = vld [vmem:[%s2290 + $0x204] sm:$0xf]
        %v2476 = vld [vmem:[%s2290 + $0x208] sm:$0xf]
        %v2477 = vld [vmem:[%s2290 + $0x20c] sm:$0xf]
        %v2478 = vld [vmem:[%s2290 + $0x210] sm:$0xf]
        %v2479 = vld [vmem:[%s2290 + $0x214] sm:$0xf]
        %v2480 = vld [vmem:[%s2290 + $0x218] sm:$0xf]
        %v2481 = vld [vmem:[%s2290 + $0x21c] sm:$0xf]
        %v2482 = vld [vmem:[%s2290 + $0x220] sm:$0xf]
        %v2483 = vld [vmem:[%s2290 + $0x224] sm:$0xf]
        %v2484 = vld [vmem:[%s2290 + $0x228] sm:$0xf]
        %v2485 = vld [vmem:[%s2290 + $0x22c] sm:$0xf]
        %v2486 = vld [vmem:[%s2290 + $0x230] sm:$0xf]
        %v2487 = vld [vmem:[%s2290 + $0x234] sm:$0xf]
        %v2488 = vld [vmem:[%s2290 + $0x238] sm:$0xf]
        %v2489 = vld [vmem:[%s2290 + $0x23c] sm:$0xf]
        %v2490 = vld [vmem:[%s2290 + $0x240] sm:$0xf]
        %v2491 = vld [vmem:[%s2290 + $0x244] sm:$0xf]
        %v2492 = vld [vmem:[%s2290 + $0x248] sm:$0xf]
        %v2493 = vld [vmem:[%s2290 + $0x24c] sm:$0xf]
        %v2494 = vld [vmem:[%s2290 + $0x250] sm:$0xf]
        %v2495 = vld [vmem:[%s2290 + $0x254] sm:$0xf]
        %v2496 = vld [vmem:[%s2290 + $0x258] sm:$0xf]
        %v2497 = vld [vmem:[%s2290 + $0x25c] sm:$0xf]
        %v2498 = vld [vmem:[%s2290 + $0x260] sm:$0xf]
        %v2499 = vld [vmem:[%s2290 + $0x264] sm:$0xf]
        %v2500 = vld [vmem:[%s2290 + $0x268] sm:$0xf]
        %v2501 = vld [vmem:[%s2290 + $0x26c] sm:$0xf]
        %v2502 = vld [vmem:[%s2290 + $0x270] sm:$0xf]
        %v2503 = vld [vmem:[%s2290 + $0x274] sm:$0xf]
        %v2504 = vld [vmem:[%s2290 + $0x278] sm:$0xf]
        %v2505 = vld [vmem:[%s2290 + $0x27c] sm:$0xf]
        %v2506 = vld [vmem:[%s2290 + $0x280] sm:$0xf]
        %v2507 = vld [vmem:[%s2290 + $0x284] sm:$0xf]
        %v2508 = vld [vmem:[%s2290 + $0x288] sm:$0xf]
        %v2509 = vld [vmem:[%s2290 + $0x28c] sm:$0xf]
        %v2510 = vld [vmem:[%s2290 + $0x290] sm:$0xf]
        %v2511 = vld [vmem:[%s2290 + $0x294] sm:$0xf]
        %v2512 = vld [vmem:[%s2290 + $0x298] sm:$0xf]
        %v2513 = vld [vmem:[%s2290 + $0x29c] sm:$0xf]
        %v2514 = vld [vmem:[%s2290 + $0x2a0] sm:$0xf]
        %v2515 = vld [vmem:[%s2290 + $0x2a4] sm:$0xf]
        %v2516 = vld [vmem:[%s2290 + $0x2a8] sm:$0xf]
        %v2517 = vld [vmem:[%s2290 + $0x2ac] sm:$0xf]
        %v2518 = vld [vmem:[%s2290 + $0x2b0] sm:$0xf]
        %v2519 = vld [vmem:[%s2290 + $0x2b4] sm:$0xf]
        %v2520 = vld [vmem:[%s2290 + $0x2b8] sm:$0xf]
        %v2521 = vld [vmem:[%s2290 + $0x2bc] sm:$0xf]
        %v2522 = vld [vmem:[%s2290 + $0x2c0] sm:$0xf]
        %v2523 = vld [vmem:[%s2290 + $0x2c4] sm:$0xf]
        %v2524 = vld [vmem:[%s2290 + $0x2c8] sm:$0xf]
        %v2525 = vld [vmem:[%s2290 + $0x2cc] sm:$0xf]
        %v2526 = vld [vmem:[%s2290 + $0x2d0] sm:$0xf]
        %v2527 = vld [vmem:[%s2290 + $0x2d4] sm:$0xf]
        %v2528 = vld [vmem:[%s2290 + $0x2d8] sm:$0xf]
        %v2529 = vld [vmem:[%s2290 + $0x2dc] sm:$0xf]
        %v2530 = vld [vmem:[%s2290 + $0x2e0] sm:$0xf]
        %v2531 = vld [vmem:[%s2290 + $0x2e4] sm:$0xf]
        %v2532 = vld [vmem:[%s2290 + $0x2e8] sm:$0xf]
        %v2533 = vld [vmem:[%s2290 + $0x2ec] sm:$0xf]
        %v2534 = vld [vmem:[%s2290 + $0x2f0] sm:$0xf]
        %v2535 = vld [vmem:[%s2290 + $0x2f4] sm:$0xf]
        %v2536 = vld [vmem:[%s2290 + $0x2f8] sm:$0xf]
        %v2537 = vld [vmem:[%s2290 + $0x2fc] sm:$0xf]
        %v2538 = vld [vmem:[%s2290 + $0x300] sm:$0xf]
        %v2539 = vld [vmem:[%s2290 + $0x304] sm:$0xf]
        %v2540 = vld [vmem:[%s2290 + $0x308] sm:$0xf]
        %v2541 = vld [vmem:[%s2290 + $0x30c] sm:$0xf]
        %v2542 = vld [vmem:[%s2290 + $0x310] sm:$0xf]
        %v2543 = vld [vmem:[%s2290 + $0x314] sm:$0xf]
        %v2544 = vld [vmem:[%s2290 + $0x318] sm:$0xf]
        %v2545 = vld [vmem:[%s2290 + $0x31c] sm:$0xf]
        %v2546 = vld [vmem:[%s2290 + $0x320] sm:$0xf]
        %v2547 = vld [vmem:[%s2290 + $0x324] sm:$0xf]
        %v2548 = vld [vmem:[%s2290 + $0x328] sm:$0xf]
        %v2549 = vld [vmem:[%s2290 + $0x32c] sm:$0xf]
        %v2550 = vld [vmem:[%s2290 + $0x330] sm:$0xf]
        %v2551 = vld [vmem:[%s2290 + $0x334] sm:$0xf]
        %v2552 = vld [vmem:[%s2290 + $0x338] sm:$0xf]
        %v2553 = vld [vmem:[%s2290 + $0x33c] sm:$0xf]
        %v2554 = vld [vmem:[%s2290 + $0x340] sm:$0xf]
        %v2555 = vld [vmem:[%s2290 + $0x344] sm:$0xf]
        %v2556 = vld [vmem:[%s2290 + $0x348] sm:$0xf]
        %v2557 = vld [vmem:[%s2290 + $0x34c] sm:$0xf]
        %v2558 = vld [vmem:[%s2290 + $0x350] sm:$0xf]
        %v2559 = vld [vmem:[%s2290 + $0x354] sm:$0xf]
        %v2560 = vld [vmem:[%s2290 + $0x358] sm:$0xf]
        %v2561 = vld [vmem:[%s2290 + $0x35c] sm:$0xf]
        %v2562 = vld [vmem:[%s2290 + $0x360] sm:$0xf]
        %v2563 = vld [vmem:[%s2290 + $0x364] sm:$0xf]
        %v2564 = vld [vmem:[%s2290 + $0x368] sm:$0xf]
        %v2565 = vld [vmem:[%s2290 + $0x36c] sm:$0xf]
        %v2566 = vld [vmem:[%s2290 + $0x370] sm:$0xf]
        %v2567 = vld [vmem:[%s2290 + $0x374] sm:$0xf]
        %v2568 = vld [vmem:[%s2290 + $0x378] sm:$0xf]
        %v2569 = vld [vmem:[%s2290 + $0x37c] sm:$0xf]
        %v2570 = vld [vmem:[%s2290 + $0x380] sm:$0xf]
        %v2571 = vld [vmem:[%s2290 + $0x384] sm:$0xf]
        %v2572 = vld [vmem:[%s2290 + $0x388] sm:$0xf]
        %v2573 = vld [vmem:[%s2290 + $0x38c] sm:$0xf]
        %v2574 = vld [vmem:[%s2290 + $0x390] sm:$0xf]
        %v2575 = vld [vmem:[%s2290 + $0x394] sm:$0xf]
        %v2576 = vld [vmem:[%s2290 + $0x398] sm:$0xf]
        %v2577 = vld [vmem:[%s2290 + $0x39c] sm:$0xf]
        %v2578 = vld [vmem:[%s2290 + $0x3a0] sm:$0xf]
        %v2579 = vld [vmem:[%s2290 + $0x3a4] sm:$0xf]
        %v2580 = vld [vmem:[%s2290 + $0x3a8] sm:$0xf]
        %v2581 = vld [vmem:[%s2290 + $0x3ac] sm:$0xf]
        %v2582 = vld [vmem:[%s2290 + $0x3b0] sm:$0xf]
        %v2583 = vld [vmem:[%s2290 + $0x3b4] sm:$0xf]
        %v2584 = vld [vmem:[%s2290 + $0x3b8] sm:$0xf]
        %v2585 = vld [vmem:[%s2290 + $0x3bc] sm:$0xf]
        %v2586 = vld [vmem:[%s2290 + $0x3c0] sm:$0xf]
        %v2587 = vld [vmem:[%s2290 + $0x3c4] sm:$0xf]
        %v2588 = vld [vmem:[%s2290 + $0x3c8] sm:$0xf]
        %v2589 = vld [vmem:[%s2290 + $0x3cc] sm:$0xf]
        %v2590 = vld [vmem:[%s2290 + $0x3d0] sm:$0xf]
        %v2591 = vld [vmem:[%s2290 + $0x3d4] sm:$0xf]
        %v2592 = vld [vmem:[%s2290 + $0x3d8] sm:$0xf]
        %v2593 = vld [vmem:[%s2290 + $0x3dc] sm:$0xf]
        %v2594 = vld [vmem:[%s2290 + $0x3e0] sm:$0xf]
        %v2595 = vld [vmem:[%s2290 + $0x3e4] sm:$0xf]
        %v2596 = vld [vmem:[%s2290 + $0x3e8] sm:$0xf]
        %v2597 = vld [vmem:[%s2290 + $0x3ec] sm:$0xf]
        %v2598 = vld [vmem:[%s2290 + $0x3f0] sm:$0xf]
        %v2599 = vld [vmem:[%s2290 + $0x3f4] sm:$0xf]
        %v2600 = vld [vmem:[%s2290 + $0x3f8] sm:$0xf]
        %v2601 = vld [vmem:[%s2290 + $0x3fc] sm:$0xf]
        %v2602 = vld [vmem:[%s2329] sm:$0x1]
        %v2604 = vperm.slane %v2602, 0
        %v2614 = vunpack.c.l.b16 %v2338
        %v2615 = vunpack.c.h.b16 %v2338
        %v2616 = vunpack.c.l.b16 %v2339
        %v2617 = vunpack.c.h.b16 %v2339
        %v2618 = vunpack.c.l.b16 %v2340
        %v2619 = vunpack.c.h.b16 %v2340
        %v2620 = vunpack.c.l.b16 %v2341
        %v2621 = vunpack.c.h.b16 %v2341
        %v2622 = vunpack.c.l.b16 %v2342
        %v2623 = vunpack.c.h.b16 %v2342
        %v2624 = vunpack.c.l.b16 %v2343
        %v2625 = vunpack.c.h.b16 %v2343
        %v2626 = vunpack.c.l.b16 %v2344
        %v2627 = vunpack.c.h.b16 %v2344
        %v2628 = vunpack.c.l.b16 %v2345
        %v2629 = vunpack.c.h.b16 %v2345
        %v2630 = vpack.c.b16 %v2614, %v2614
        %v2631 = vpack.c.b16 %v2615, %v2615
        %v2632 = vpack.c.b16 %v2616, %v2616
        %v2633 = vpack.c.b16 %v2617, %v2617
        %v2634 = vpack.c.b16 %v2618, %v2618
        %v2635 = vpack.c.b16 %v2619, %v2619
        %v2636 = vpack.c.b16 %v2620, %v2620
        %v2637 = vpack.c.b16 %v2621, %v2621
        %v2638 = vpack.c.b16 %v2622, %v2622
        %v2639 = vpack.c.b16 %v2623, %v2623
        %v2640 = vpack.c.b16 %v2624, %v2624
        %v2641 = vpack.c.b16 %v2625, %v2625
        %v2642 = vpack.c.b16 %v2626, %v2626
        %v2643 = vpack.c.b16 %v2627, %v2627
        %v2644 = vpack.c.b16 %v2628, %v2628
        %v2645 = vpack.c.b16 %v2629, %v2629
        %v2918 = vunpack.c.l.b16 %v2346
        %v2919 = vunpack.c.l.b16 %v2347
        %v2920 = vunpack.c.l.b16 %v2348
        %v2921 = vunpack.c.l.b16 %v2349
        %v2922 = vunpack.c.l.b16 %v2350
        %v2923 = vunpack.c.l.b16 %v2351
        %v2924 = vunpack.c.l.b16 %v2352
        %v2925 = vunpack.c.l.b16 %v2353
        %v2926 = vunpack.c.l.b16 %v2354
        %v2927 = vunpack.c.l.b16 %v2355
        %v2928 = vunpack.c.l.b16 %v2356
        %v2929 = vunpack.c.l.b16 %v2357
        %v2930 = vunpack.c.l.b16 %v2358
        %v2931 = vunpack.c.l.b16 %v2359
        %v2932 = vunpack.c.l.b16 %v2360
        %v2933 = vunpack.c.l.b16 %v2361
        %v2934 = vunpack.c.l.b16 %v2362
        %v2935 = vunpack.c.l.b16 %v2363
        %v2936 = vunpack.c.l.b16 %v2364
        %v2937 = vunpack.c.l.b16 %v2365
        %v2938 = vunpack.c.l.b16 %v2366
        %v2939 = vunpack.c.l.b16 %v2367
        %v2940 = vunpack.c.l.b16 %v2368
        %v2941 = vunpack.c.l.b16 %v2369
        %v2942 = vunpack.c.l.b16 %v2370
        %v2943 = vunpack.c.l.b16 %v2371
        %v2944 = vunpack.c.l.b16 %v2372
        %v2945 = vunpack.c.l.b16 %v2373
        %v2946 = vunpack.c.l.b16 %v2374
        %v2947 = vunpack.c.l.b16 %v2375
        %v2948 = vunpack.c.l.b16 %v2376
        %v2949 = vunpack.c.l.b16 %v2377
        %v2950 = vunpack.c.l.b16 %v2378
        %v2951 = vunpack.c.l.b16 %v2379
        %v2952 = vunpack.c.l.b16 %v2380
        %v2953 = vunpack.c.l.b16 %v2381
        %v2954 = vunpack.c.l.b16 %v2382
        %v2955 = vunpack.c.l.b16 %v2383
        %v2956 = vunpack.c.l.b16 %v2384
        %v2957 = vunpack.c.l.b16 %v2385
        %v2958 = vunpack.c.l.b16 %v2386
        %v2959 = vunpack.c.l.b16 %v2387
        %v2960 = vunpack.c.l.b16 %v2388
        %v2961 = vunpack.c.l.b16 %v2389
        %v2962 = vunpack.c.l.b16 %v2390
        %v2963 = vunpack.c.l.b16 %v2391
        %v2964 = vunpack.c.l.b16 %v2392
        %v2965 = vunpack.c.l.b16 %v2393
        %v2966 = vunpack.c.l.b16 %v2394
        %v2967 = vunpack.c.l.b16 %v2395
        %v2968 = vunpack.c.l.b16 %v2396
        %v2969 = vunpack.c.l.b16 %v2397
        %v2970 = vunpack.c.l.b16 %v2398
        %v2971 = vunpack.c.l.b16 %v2399
        %v2972 = vunpack.c.l.b16 %v2400
        %v2973 = vunpack.c.l.b16 %v2401
        %v2974 = vunpack.c.l.b16 %v2402
        %v2975 = vunpack.c.l.b16 %v2403
        %v2976 = vunpack.c.l.b16 %v2404
        %v2977 = vunpack.c.l.b16 %v2405
        %v2978 = vunpack.c.l.b16 %v2406
        %v2979 = vunpack.c.l.b16 %v2407
        %v2980 = vunpack.c.l.b16 %v2408
        %v2981 = vunpack.c.l.b16 %v2409
        %v2982 = vunpack.c.l.b16 %v2410
        %v2983 = vunpack.c.l.b16 %v2411
        %v2984 = vunpack.c.l.b16 %v2412
        %v2985 = vunpack.c.l.b16 %v2413
        %v2986 = vunpack.c.l.b16 %v2414
        %v2987 = vunpack.c.l.b16 %v2415
        %v2988 = vunpack.c.l.b16 %v2416
        %v2989 = vunpack.c.l.b16 %v2417
        %v2990 = vunpack.c.l.b16 %v2418
        %v2991 = vunpack.c.l.b16 %v2419
        %v2992 = vunpack.c.l.b16 %v2420
        %v2993 = vunpack.c.l.b16 %v2421
        %v2994 = vunpack.c.l.b16 %v2422
        %v2995 = vunpack.c.l.b16 %v2423
        %v2996 = vunpack.c.l.b16 %v2424
        %v2997 = vunpack.c.l.b16 %v2425
        %v2998 = vunpack.c.l.b16 %v2426
        %v2999 = vunpack.c.l.b16 %v2427
        %v3000 = vunpack.c.l.b16 %v2428
        %v3001 = vunpack.c.l.b16 %v2429
        %v3002 = vunpack.c.l.b16 %v2430
        %v3003 = vunpack.c.l.b16 %v2431
        %v3004 = vunpack.c.l.b16 %v2432
        %v3005 = vunpack.c.l.b16 %v2433
        %v3006 = vunpack.c.l.b16 %v2434
        %v3007 = vunpack.c.l.b16 %v2435
        %v3008 = vunpack.c.l.b16 %v2436
        %v3009 = vunpack.c.l.b16 %v2437
        %v3010 = vunpack.c.l.b16 %v2438
        %v3011 = vunpack.c.l.b16 %v2439
        %v3012 = vunpack.c.l.b16 %v2440
        %v3013 = vunpack.c.l.b16 %v2441
        %v3014 = vunpack.c.l.b16 %v2442
        %v3015 = vunpack.c.l.b16 %v2443
        %v3016 = vunpack.c.l.b16 %v2444
        %v3017 = vunpack.c.l.b16 %v2445
        %v3018 = vunpack.c.l.b16 %v2446
        %v3019 = vunpack.c.l.b16 %v2447
        %v3020 = vunpack.c.l.b16 %v2448
        %v3021 = vunpack.c.l.b16 %v2449
        %v3022 = vunpack.c.l.b16 %v2450
        %v3023 = vunpack.c.l.b16 %v2451
        %v3024 = vunpack.c.l.b16 %v2452
        %v3025 = vunpack.c.l.b16 %v2453
        %v3026 = vunpack.c.l.b16 %v2454
        %v3027 = vunpack.c.l.b16 %v2455
        %v3028 = vunpack.c.l.b16 %v2456
        %v3029 = vunpack.c.l.b16 %v2457
        %v3030 = vunpack.c.l.b16 %v2458
        %v3031 = vunpack.c.l.b16 %v2459
        %v3032 = vunpack.c.l.b16 %v2460
        %v3033 = vunpack.c.l.b16 %v2461
        %v3034 = vunpack.c.l.b16 %v2462
        %v3035 = vunpack.c.l.b16 %v2463
        %v3036 = vunpack.c.l.b16 %v2464
        %v3037 = vunpack.c.l.b16 %v2465
        %v3038 = vunpack.c.l.b16 %v2466
        %v3039 = vunpack.c.l.b16 %v2467
        %v3040 = vunpack.c.l.b16 %v2468
        %v3041 = vunpack.c.l.b16 %v2469
        %v3042 = vunpack.c.l.b16 %v2470
        %v3043 = vunpack.c.l.b16 %v2471
        %v3044 = vunpack.c.l.b16 %v2472
        %v3045 = vunpack.c.l.b16 %v2473
        %v3046 = vunpack.c.l.b16 %v2474
        %v3047 = vunpack.c.l.b16 %v2475
        %v3048 = vunpack.c.l.b16 %v2476
        %v3049 = vunpack.c.l.b16 %v2477
        %v3050 = vunpack.c.l.b16 %v2478
        %v3051 = vunpack.c.l.b16 %v2479
        %v3052 = vunpack.c.l.b16 %v2480
        %v3053 = vunpack.c.l.b16 %v2481
        %v3054 = vunpack.c.l.b16 %v2482
        %v3055 = vunpack.c.l.b16 %v2483
        %v3056 = vunpack.c.l.b16 %v2484
        %v3057 = vunpack.c.l.b16 %v2485
        %v3058 = vunpack.c.l.b16 %v2486
        %v3059 = vunpack.c.l.b16 %v2487
        %v3060 = vunpack.c.l.b16 %v2488
        %v3061 = vunpack.c.l.b16 %v2489
        %v3062 = vunpack.c.l.b16 %v2490
        %v3063 = vunpack.c.l.b16 %v2491
        %v3064 = vunpack.c.l.b16 %v2492
        %v3065 = vunpack.c.l.b16 %v2493
        %v3066 = vunpack.c.l.b16 %v2494
        %v3067 = vunpack.c.l.b16 %v2495
        %v3068 = vunpack.c.l.b16 %v2496
        %v3069 = vunpack.c.l.b16 %v2497
        %v3070 = vunpack.c.l.b16 %v2498
        %v3071 = vunpack.c.l.b16 %v2499
        %v3072 = vunpack.c.l.b16 %v2500
        %v3073 = vunpack.c.l.b16 %v2501
        %v3074 = vunpack.c.l.b16 %v2502
        %v3075 = vunpack.c.l.b16 %v2503
        %v3076 = vunpack.c.l.b16 %v2504
        %v3077 = vunpack.c.l.b16 %v2505
        %v3078 = vunpack.c.l.b16 %v2506
        %v3079 = vunpack.c.l.b16 %v2507
        %v3080 = vunpack.c.l.b16 %v2508
        %v3081 = vunpack.c.l.b16 %v2509
        %v3082 = vunpack.c.l.b16 %v2510
        %v3083 = vunpack.c.l.b16 %v2511
        %v3084 = vunpack.c.l.b16 %v2512
        %v3085 = vunpack.c.l.b16 %v2513
        %v3086 = vunpack.c.l.b16 %v2514
        %v3087 = vunpack.c.l.b16 %v2515
        %v3088 = vunpack.c.l.b16 %v2516
        %v3089 = vunpack.c.l.b16 %v2517
        %v3090 = vunpack.c.l.b16 %v2518
        %v3091 = vunpack.c.l.b16 %v2519
        %v3092 = vunpack.c.l.b16 %v2520
        %v3093 = vunpack.c.l.b16 %v2521
        %v3094 = vunpack.c.l.b16 %v2522
        %v3095 = vunpack.c.l.b16 %v2523
        %v3096 = vunpack.c.l.b16 %v2524
        %v3097 = vunpack.c.l.b16 %v2525
        %v3098 = vunpack.c.l.b16 %v2526
        %v3099 = vunpack.c.l.b16 %v2527
        %v3100 = vunpack.c.l.b16 %v2528
        %v3101 = vunpack.c.l.b16 %v2529
        %v3102 = vunpack.c.l.b16 %v2530
        %v3103 = vunpack.c.l.b16 %v2531
        %v3104 = vunpack.c.l.b16 %v2532
        %v3105 = vunpack.c.l.b16 %v2533
        %v3106 = vunpack.c.l.b16 %v2534
        %v3107 = vunpack.c.l.b16 %v2535
        %v3108 = vunpack.c.l.b16 %v2536
        %v3109 = vunpack.c.l.b16 %v2537
        %v3110 = vunpack.c.l.b16 %v2538
        %v3111 = vunpack.c.l.b16 %v2539
        %v3112 = vunpack.c.l.b16 %v2540
        %v3113 = vunpack.c.l.b16 %v2541
        %v3114 = vunpack.c.l.b16 %v2542
        %v3115 = vunpack.c.l.b16 %v2543
        %v3116 = vunpack.c.l.b16 %v2544
        %v3117 = vunpack.c.l.b16 %v2545
        %v3118 = vunpack.c.l.b16 %v2546
        %v3119 = vunpack.c.l.b16 %v2547
        %v3120 = vunpack.c.l.b16 %v2548
        %v3121 = vunpack.c.l.b16 %v2549
        %v3122 = vunpack.c.l.b16 %v2550
        %v3123 = vunpack.c.l.b16 %v2551
        %v3124 = vunpack.c.l.b16 %v2552
        %v3125 = vunpack.c.l.b16 %v2553
        %v3126 = vunpack.c.l.b16 %v2554
        %v3127 = vunpack.c.l.b16 %v2555
        %v3128 = vunpack.c.l.b16 %v2556
        %v3129 = vunpack.c.l.b16 %v2557
        %v3130 = vunpack.c.l.b16 %v2558
        %v3131 = vunpack.c.l.b16 %v2559
        %v3132 = vunpack.c.l.b16 %v2560
        %v3133 = vunpack.c.l.b16 %v2561
        %v3134 = vunpack.c.l.b16 %v2562
        %v3135 = vunpack.c.l.b16 %v2563
        %v3136 = vunpack.c.l.b16 %v2564
        %v3137 = vunpack.c.l.b16 %v2565
        %v3138 = vunpack.c.l.b16 %v2566
        %v3139 = vunpack.c.l.b16 %v2567
        %v3140 = vunpack.c.l.b16 %v2568
        %v3141 = vunpack.c.l.b16 %v2569
        %v3142 = vunpack.c.l.b16 %v2570
        %v3143 = vunpack.c.l.b16 %v2571
        %v3144 = vunpack.c.l.b16 %v2572
        %v3145 = vunpack.c.l.b16 %v2573
        %v3146 = vunpack.c.l.b16 %v2574
        %v3147 = vunpack.c.l.b16 %v2575
        %v3148 = vunpack.c.l.b16 %v2576
        %v3149 = vunpack.c.l.b16 %v2577
        %v3150 = vunpack.c.l.b16 %v2578
        %v3151 = vunpack.c.l.b16 %v2579
        %v3152 = vunpack.c.l.b16 %v2580
        %v3153 = vunpack.c.l.b16 %v2581
        %v3154 = vunpack.c.l.b16 %v2582
        %v3155 = vunpack.c.l.b16 %v2583
        %v3156 = vunpack.c.l.b16 %v2584
        %v3157 = vunpack.c.l.b16 %v2585
        %v3158 = vunpack.c.l.b16 %v2586
        %v3159 = vunpack.c.l.b16 %v2587
        %v3160 = vunpack.c.l.b16 %v2588
        %v3161 = vunpack.c.l.b16 %v2589
        %v3162 = vunpack.c.l.b16 %v2590
        %v3163 = vunpack.c.l.b16 %v2591
        %v3164 = vunpack.c.l.b16 %v2592
        %v3165 = vunpack.c.l.b16 %v2593
        %v3166 = vunpack.c.l.b16 %v2594
        %v3167 = vunpack.c.l.b16 %v2595
        %v3168 = vunpack.c.l.b16 %v2596
        %v3169 = vunpack.c.l.b16 %v2597
        %v3170 = vunpack.c.l.b16 %v2598
        %v3171 = vunpack.c.l.b16 %v2599
        %v3172 = vunpack.c.l.b16 %v2600
        %v3173 = vunpack.c.l.b16 %v2601
        %v3174 = vpack.c.b16 %v2919, %v2918
        %v3175 = vpack.c.b16 %v2921, %v2920
        %v3176 = vpack.c.b16 %v2923, %v2922
        %v3177 = vpack.c.b16 %v2925, %v2924
        %v3178 = vpack.c.b16 %v2927, %v2926
        %v3179 = vpack.c.b16 %v2929, %v2928
        %v3180 = vpack.c.b16 %v2931, %v2930
        %v3181 = vpack.c.b16 %v2933, %v2932
        %v3182 = vpack.c.b16 %v2935, %v2934
        %v3183 = vpack.c.b16 %v2937, %v2936
        %v3184 = vpack.c.b16 %v2939, %v2938
        %v3185 = vpack.c.b16 %v2941, %v2940
        %v3186 = vpack.c.b16 %v2943, %v2942
        %v3187 = vpack.c.b16 %v2945, %v2944
        %v3188 = vpack.c.b16 %v2947, %v2946
        %v3189 = vpack.c.b16 %v2949, %v2948
        %v3190 = vpack.c.b16 %v2951, %v2950
        %v3191 = vpack.c.b16 %v2953, %v2952
        %v3192 = vpack.c.b16 %v2955, %v2954
        %v3193 = vpack.c.b16 %v2957, %v2956
        %v3194 = vpack.c.b16 %v2959, %v2958
        %v3195 = vpack.c.b16 %v2961, %v2960
        %v3196 = vpack.c.b16 %v2963, %v2962
        %v3197 = vpack.c.b16 %v2965, %v2964
        %v3198 = vpack.c.b16 %v2967, %v2966
        %v3199 = vpack.c.b16 %v2969, %v2968
        %v3200 = vpack.c.b16 %v2971, %v2970
        %v3201 = vpack.c.b16 %v2973, %v2972
        %v3202 = vpack.c.b16 %v2975, %v2974
        %v3203 = vpack.c.b16 %v2977, %v2976
        %v3204 = vpack.c.b16 %v2979, %v2978
        %v3205 = vpack.c.b16 %v2981, %v2980
        %v3206 = vpack.c.b16 %v2983, %v2982
        %v3207 = vpack.c.b16 %v2985, %v2984
        %v3208 = vpack.c.b16 %v2987, %v2986
        %v3209 = vpack.c.b16 %v2989, %v2988
        %v3210 = vpack.c.b16 %v2991, %v2990
        %v3211 = vpack.c.b16 %v2993, %v2992
        %v3212 = vpack.c.b16 %v2995, %v2994
        %v3213 = vpack.c.b16 %v2997, %v2996
        %v3214 = vpack.c.b16 %v2999, %v2998
        %v3215 = vpack.c.b16 %v3001, %v3000
        %v3216 = vpack.c.b16 %v3003, %v3002
        %v3217 = vpack.c.b16 %v3005, %v3004
        %v3218 = vpack.c.b16 %v3007, %v3006
        %v3219 = vpack.c.b16 %v3009, %v3008
        %v3220 = vpack.c.b16 %v3011, %v3010
        %v3221 = vpack.c.b16 %v3013, %v3012
        %v3222 = vpack.c.b16 %v3015, %v3014
        %v3223 = vpack.c.b16 %v3017, %v3016
        %v3224 = vpack.c.b16 %v3019, %v3018
        %v3225 = vpack.c.b16 %v3021, %v3020
        %v3226 = vpack.c.b16 %v3023, %v3022
        %v3227 = vpack.c.b16 %v3025, %v3024
        %v3228 = vpack.c.b16 %v3027, %v3026
        %v3229 = vpack.c.b16 %v3029, %v3028
        %v3230 = vpack.c.b16 %v3031, %v3030
        %v3231 = vpack.c.b16 %v3033, %v3032
        %v3232 = vpack.c.b16 %v3035, %v3034
        %v3233 = vpack.c.b16 %v3037, %v3036
        %v3234 = vpack.c.b16 %v3039, %v3038
        %v3235 = vpack.c.b16 %v3041, %v3040
        %v3236 = vpack.c.b16 %v3043, %v3042
        %v3237 = vpack.c.b16 %v3045, %v3044
        %v3238 = vpack.c.b16 %v3047, %v3046
        %v3239 = vpack.c.b16 %v3049, %v3048
        %v3240 = vpack.c.b16 %v3051, %v3050
        %v3241 = vpack.c.b16 %v3053, %v3052
        %v3242 = vpack.c.b16 %v3055, %v3054
        %v3243 = vpack.c.b16 %v3057, %v3056
        %v3244 = vpack.c.b16 %v3059, %v3058
        %v3245 = vpack.c.b16 %v3061, %v3060
        %v3246 = vpack.c.b16 %v3063, %v3062
        %v3247 = vpack.c.b16 %v3065, %v3064
        %v3248 = vpack.c.b16 %v3067, %v3066
        %v3249 = vpack.c.b16 %v3069, %v3068
        %v3250 = vpack.c.b16 %v3071, %v3070
        %v3251 = vpack.c.b16 %v3073, %v3072
        %v3252 = vpack.c.b16 %v3075, %v3074
        %v3253 = vpack.c.b16 %v3077, %v3076
        %v3254 = vpack.c.b16 %v3079, %v3078
        %v3255 = vpack.c.b16 %v3081, %v3080
        %v3256 = vpack.c.b16 %v3083, %v3082
        %v3257 = vpack.c.b16 %v3085, %v3084
        %v3258 = vpack.c.b16 %v3087, %v3086
        %v3259 = vpack.c.b16 %v3089, %v3088
        %v3260 = vpack.c.b16 %v3091, %v3090
        %v3261 = vpack.c.b16 %v3093, %v3092
        %v3262 = vpack.c.b16 %v3095, %v3094
        %v3263 = vpack.c.b16 %v3097, %v3096
        %v3264 = vpack.c.b16 %v3099, %v3098
        %v3265 = vpack.c.b16 %v3101, %v3100
        %v3266 = vpack.c.b16 %v3103, %v3102
        %v3267 = vpack.c.b16 %v3105, %v3104
        %v3268 = vpack.c.b16 %v3107, %v3106
        %v3269 = vpack.c.b16 %v3109, %v3108
        %v3270 = vpack.c.b16 %v3111, %v3110
        %v3271 = vpack.c.b16 %v3113, %v3112
        %v3272 = vpack.c.b16 %v3115, %v3114
        %v3273 = vpack.c.b16 %v3117, %v3116
        %v3274 = vpack.c.b16 %v3119, %v3118
        %v3275 = vpack.c.b16 %v3121, %v3120
        %v3276 = vpack.c.b16 %v3123, %v3122
        %v3277 = vpack.c.b16 %v3125, %v3124
        %v3278 = vpack.c.b16 %v3127, %v3126
        %v3279 = vpack.c.b16 %v3129, %v3128
        %v3280 = vpack.c.b16 %v3131, %v3130
        %v3281 = vpack.c.b16 %v3133, %v3132
        %v3282 = vpack.c.b16 %v3135, %v3134
        %v3283 = vpack.c.b16 %v3137, %v3136
        %v3284 = vpack.c.b16 %v3139, %v3138
        %v3285 = vpack.c.b16 %v3141, %v3140
        %v3286 = vpack.c.b16 %v3143, %v3142
        %v3287 = vpack.c.b16 %v3145, %v3144
        %v3288 = vpack.c.b16 %v3147, %v3146
        %v3289 = vpack.c.b16 %v3149, %v3148
        %v3290 = vpack.c.b16 %v3151, %v3150
        %v3291 = vpack.c.b16 %v3153, %v3152
        %v3292 = vpack.c.b16 %v3155, %v3154
        %v3293 = vpack.c.b16 %v3157, %v3156
        %v3294 = vpack.c.b16 %v3159, %v3158
        %v3295 = vpack.c.b16 %v3161, %v3160
        %v3296 = vpack.c.b16 %v3163, %v3162
        %v3297 = vpack.c.b16 %v3165, %v3164
        %v3298 = vpack.c.b16 %v3167, %v3166
        %v3299 = vpack.c.b16 %v3169, %v3168
        %v3300 = vpack.c.b16 %v3171, %v3170
        %v3301 = vpack.c.b16 %v3173, %v3172
        %3430 = vmatpush.bf16.msra.mxu0 %v3181
        %3431 = vmatpush.bf16.msra.mxu0 %v3180
        %3432 = vmatpush.bf16.msra.mxu0 %v3179
        %3433 = vmatpush.bf16.msra.mxu0 %v3178
        %3434 = vmatpush.bf16.msra.mxu0 %v3177
        %3435 = vmatpush.bf16.msra.mxu0 %v3176
        %3436 = vmatpush.bf16.msra.mxu0 %v3175
        %3437 = vmatpush.bf16.msra.mxu0 %v3174
        %3438 = vmatmul.bf16.gmra.mxu0 %v2630
        %v3439 = vpop.f32.mrf.mxu0
        %v3440 = vadd.f32 %v2604, %v3439
        %v3441 = vpop.f32.mrf.mxu0
        %3442 = vdwg.mxu0
        %3443 = vmatpush.bf16.msra.mxu0 %v3189
        %3444 = vmatpush.bf16.msra.mxu0 %v3188
        %3445 = vmatpush.bf16.msra.mxu0 %v3187
        %3446 = vmatpush.bf16.msra.mxu0 %v3186
        %3447 = vmatpush.bf16.msra.mxu0 %v3185
        %3448 = vmatpush.bf16.msra.mxu0 %v3184
        %3449 = vmatpush.bf16.msra.mxu0 %v3183
        %3450 = vmatpush.bf16.msra.mxu0 %v3182
        %3451 = vmatmul.bf16.gmra.mxu0 %v2631
        %v3452 = vpop.f32.mrf.mxu0
        %v3453 = vadd.f32 %v3440, %v3452
        %v3454 = vpop.f32.mrf.mxu0
        %3455 = vdwg.mxu0
        %3456 = vmatpush.bf16.msra.mxu0 %v3197
        %3457 = vmatpush.bf16.msra.mxu0 %v3196
        %3458 = vmatpush.bf16.msra.mxu0 %v3195
        %3459 = vmatpush.bf16.msra.mxu0 %v3194
        %3460 = vmatpush.bf16.msra.mxu0 %v3193
        %3461 = vmatpush.bf16.msra.mxu0 %v3192
        %3462 = vmatpush.bf16.msra.mxu0 %v3191
        %3463 = vmatpush.bf16.msra.mxu0 %v3190
        %3464 = vmatmul.bf16.gmra.mxu0 %v2632
        %v3465 = vpop.f32.mrf.mxu0
        %v3466 = vadd.f32 %v3453, %v3465
        %v3467 = vpop.f32.mrf.mxu0
        %3468 = vdwg.mxu0
        %3469 = vmatpush.bf16.msra.mxu0 %v3205
        %3470 = vmatpush.bf16.msra.mxu0 %v3204
        %3471 = vmatpush.bf16.msra.mxu0 %v3203
        %3472 = vmatpush.bf16.msra.mxu0 %v3202
        %3473 = vmatpush.bf16.msra.mxu0 %v3201
        %3474 = vmatpush.bf16.msra.mxu0 %v3200
        %3475 = vmatpush.bf16.msra.mxu0 %v3199
        %3476 = vmatpush.bf16.msra.mxu0 %v3198
        %3477 = vmatmul.bf16.gmra.mxu0 %v2633
        %v3478 = vpop.f32.mrf.mxu0
        %v3479 = vadd.f32 %v3466, %v3478
        %v3480 = vpop.f32.mrf.mxu0
        %3481 = vdwg.mxu0
        %3482 = vmatpush.bf16.msra.mxu0 %v3213
        %3483 = vmatpush.bf16.msra.mxu0 %v3212
        %3484 = vmatpush.bf16.msra.mxu0 %v3211
        %3485 = vmatpush.bf16.msra.mxu0 %v3210
        %3486 = vmatpush.bf16.msra.mxu0 %v3209
        %3487 = vmatpush.bf16.msra.mxu0 %v3208
        %3488 = vmatpush.bf16.msra.mxu0 %v3207
        %3489 = vmatpush.bf16.msra.mxu0 %v3206
        %3490 = vmatmul.bf16.gmra.mxu0 %v2634
        %v3491 = vpop.f32.mrf.mxu0
        %v3492 = vadd.f32 %v3479, %v3491
        %v3493 = vpop.f32.mrf.mxu0
        %3494 = vdwg.mxu0
        %3495 = vmatpush.bf16.msra.mxu0 %v3221
        %3496 = vmatpush.bf16.msra.mxu0 %v3220
        %3497 = vmatpush.bf16.msra.mxu0 %v3219
        %3498 = vmatpush.bf16.msra.mxu0 %v3218
        %3499 = vmatpush.bf16.msra.mxu0 %v3217
        %3500 = vmatpush.bf16.msra.mxu0 %v3216
        %3501 = vmatpush.bf16.msra.mxu0 %v3215
        %3502 = vmatpush.bf16.msra.mxu0 %v3214
        %3503 = vmatmul.bf16.gmra.mxu0 %v2635
        %v3504 = vpop.f32.mrf.mxu0
        %v3505 = vadd.f32 %v3492, %v3504
        %v3506 = vpop.f32.mrf.mxu0
        %3507 = vdwg.mxu0
        %3508 = vmatpush.bf16.msra.mxu0 %v3229
        %3509 = vmatpush.bf16.msra.mxu0 %v3228
        %3510 = vmatpush.bf16.msra.mxu0 %v3227
        %3511 = vmatpush.bf16.msra.mxu0 %v3226
        %3512 = vmatpush.bf16.msra.mxu0 %v3225
        %3513 = vmatpush.bf16.msra.mxu0 %v3224
        %3514 = vmatpush.bf16.msra.mxu0 %v3223
        %3515 = vmatpush.bf16.msra.mxu0 %v3222
        %3516 = vmatmul.bf16.gmra.mxu0 %v2636
        %v3517 = vpop.f32.mrf.mxu0
        %v3518 = vadd.f32 %v3505, %v3517
        %v3519 = vpop.f32.mrf.mxu0
        %3520 = vdwg.mxu0
        %3521 = vmatpush.bf16.msra.mxu0 %v3237
        %3522 = vmatpush.bf16.msra.mxu0 %v3236
        %3523 = vmatpush.bf16.msra.mxu0 %v3235
        %3524 = vmatpush.bf16.msra.mxu0 %v3234
        %3525 = vmatpush.bf16.msra.mxu0 %v3233
        %3526 = vmatpush.bf16.msra.mxu0 %v3232
        %3527 = vmatpush.bf16.msra.mxu0 %v3231
        %3528 = vmatpush.bf16.msra.mxu0 %v3230
        %3529 = vmatmul.bf16.gmra.mxu0 %v2637
        %v3530 = vpop.f32.mrf.mxu0
        %v3531 = vadd.f32 %v3518, %v3530
        %v3532 = vpop.f32.mrf.mxu0
        %3533 = vdwg.mxu0
        %3534 = vmatpush.bf16.msra.mxu0 %v3245
        %3535 = vmatpush.bf16.msra.mxu0 %v3244
        %3536 = vmatpush.bf16.msra.mxu0 %v3243
        %3537 = vmatpush.bf16.msra.mxu0 %v3242
        %3538 = vmatpush.bf16.msra.mxu0 %v3241
        %3539 = vmatpush.bf16.msra.mxu0 %v3240
        %3540 = vmatpush.bf16.msra.mxu0 %v3239
        %3541 = vmatpush.bf16.msra.mxu0 %v3238
        %3542 = vmatmul.bf16.gmra.mxu0 %v2638
        %v3543 = vpop.f32.mrf.mxu0
        %v3544 = vadd.f32 %v3531, %v3543
        %v3545 = vpop.f32.mrf.mxu0
        %3546 = vdwg.mxu0
        %3547 = vmatpush.bf16.msra.mxu0 %v3253
        %3548 = vmatpush.bf16.msra.mxu0 %v3252
        %3549 = vmatpush.bf16.msra.mxu0 %v3251
        %3550 = vmatpush.bf16.msra.mxu0 %v3250
        %3551 = vmatpush.bf16.msra.mxu0 %v3249
        %3552 = vmatpush.bf16.msra.mxu0 %v3248
        %3553 = vmatpush.bf16.msra.mxu0 %v3247
        %3554 = vmatpush.bf16.msra.mxu0 %v3246
        %3555 = vmatmul.bf16.gmra.mxu0 %v2639
        %v3556 = vpop.f32.mrf.mxu0
        %v3557 = vadd.f32 %v3544, %v3556
        %v3558 = vpop.f32.mrf.mxu0
        %3559 = vdwg.mxu0
        %3560 = vmatpush.bf16.msra.mxu0 %v3261
        %3561 = vmatpush.bf16.msra.mxu0 %v3260
        %3562 = vmatpush.bf16.msra.mxu0 %v3259
        %3563 = vmatpush.bf16.msra.mxu0 %v3258
        %3564 = vmatpush.bf16.msra.mxu0 %v3257
        %3565 = vmatpush.bf16.msra.mxu0 %v3256
        %3566 = vmatpush.bf16.msra.mxu0 %v3255
        %3567 = vmatpush.bf16.msra.mxu0 %v3254
        %3568 = vmatmul.bf16.gmra.mxu0 %v2640
        %v3569 = vpop.f32.mrf.mxu0
        %v3570 = vadd.f32 %v3557, %v3569
        %v3571 = vpop.f32.mrf.mxu0
        %3572 = vdwg.mxu0
        %3573 = vmatpush.bf16.msra.mxu0 %v3269
        %3574 = vmatpush.bf16.msra.mxu0 %v3268
        %3575 = vmatpush.bf16.msra.mxu0 %v3267
        %3576 = vmatpush.bf16.msra.mxu0 %v3266
        %3577 = vmatpush.bf16.msra.mxu0 %v3265
        %3578 = vmatpush.bf16.msra.mxu0 %v3264
        %3579 = vmatpush.bf16.msra.mxu0 %v3263
        %3580 = vmatpush.bf16.msra.mxu0 %v3262
        %3581 = vmatmul.bf16.gmra.mxu0 %v2641
        %v3582 = vpop.f32.mrf.mxu0
        %v3583 = vadd.f32 %v3570, %v3582
        %v3584 = vpop.f32.mrf.mxu0
        %3585 = vdwg.mxu0
        %3586 = vmatpush.bf16.msra.mxu0 %v3277
        %3587 = vmatpush.bf16.msra.mxu0 %v3276
        %3588 = vmatpush.bf16.msra.mxu0 %v3275
        %3589 = vmatpush.bf16.msra.mxu0 %v3274
        %3590 = vmatpush.bf16.msra.mxu0 %v3273
        %3591 = vmatpush.bf16.msra.mxu0 %v3272
        %3592 = vmatpush.bf16.msra.mxu0 %v3271
        %3593 = vmatpush.bf16.msra.mxu0 %v3270
        %3594 = vmatmul.bf16.gmra.mxu0 %v2642
        %v3595 = vpop.f32.mrf.mxu0
        %v3596 = vadd.f32 %v3583, %v3595
        %v3597 = vpop.f32.mrf.mxu0
        %3598 = vdwg.mxu0
        %3599 = vmatpush.bf16.msra.mxu0 %v3285
        %3600 = vmatpush.bf16.msra.mxu0 %v3284
        %3601 = vmatpush.bf16.msra.mxu0 %v3283
        %3602 = vmatpush.bf16.msra.mxu0 %v3282
        %3603 = vmatpush.bf16.msra.mxu0 %v3281
        %3604 = vmatpush.bf16.msra.mxu0 %v3280
        %3605 = vmatpush.bf16.msra.mxu0 %v3279
        %3606 = vmatpush.bf16.msra.mxu0 %v3278
        %3607 = vmatmul.bf16.gmra.mxu0 %v2643
        %v3608 = vpop.f32.mrf.mxu0
        %v3609 = vadd.f32 %v3596, %v3608
        %v3610 = vpop.f32.mrf.mxu0
        %3611 = vdwg.mxu0
        %3612 = vmatpush.bf16.msra.mxu0 %v3293
        %3613 = vmatpush.bf16.msra.mxu0 %v3292
        %3614 = vmatpush.bf16.msra.mxu0 %v3291
        %3615 = vmatpush.bf16.msra.mxu0 %v3290
        %3616 = vmatpush.bf16.msra.mxu0 %v3289
        %3617 = vmatpush.bf16.msra.mxu0 %v3288
        %3618 = vmatpush.bf16.msra.mxu0 %v3287
        %3619 = vmatpush.bf16.msra.mxu0 %v3286
        %3620 = vmatmul.bf16.gmra.mxu0 %v2644
        %v3621 = vpop.f32.mrf.mxu0
        %v3622 = vadd.f32 %v3609, %v3621
        %v3623 = vpop.f32.mrf.mxu0
        %3624 = vdwg.mxu0
        %3625 = vmatpush.bf16.msra.mxu0 %v3301
        %3626 = vmatpush.bf16.msra.mxu0 %v3300
        %3627 = vmatpush.bf16.msra.mxu0 %v3299
        %3628 = vmatpush.bf16.msra.mxu0 %v3298
        %3629 = vmatpush.bf16.msra.mxu0 %v3297
        %3630 = vmatpush.bf16.msra.mxu0 %v3296
        %3631 = vmatpush.bf16.msra.mxu0 %v3295
        %3632 = vmatpush.bf16.msra.mxu0 %v3294
        %3633 = vmatmul.bf16.gmra.mxu0 %v2645
        %v3634 = vpop.f32.mrf.mxu0
        %v3635 = vadd.f32 %v3622, %v3634
        %v3636 = vpop.f32.mrf.mxu0
        %3637 = vdwg.mxu0
        %v3638 = vmax.f32 %v3635, 0.0
        %v3639 = vpack.c.bf16 %v3638, %v3638
        %3640 = vst [vmem:[%s2337] sm:$0xf] %v3639
        %p3641 = scmp.lt.s32.totalorder %s18, 0
        %s3642 = scalar_select %p3641, %s18, 0
        %p3643 = scmp.lt.s32.totalorder %s19, 1
        %s3644 = scalar_select %p3643, %s19, 1
        %s3645 = smul.addr %s3642, 2
        %s3646 = sadd.s32 %s3644, %s3645
        %s3647 = smul.addr %s3646, 4
        %s3648 = scalar_lea.vmem %s3, %s3647
        // Predicated region
        $region85: #{carla_encoder_forward.8} parent=79 // pred_check
          %p3649 = pneg %p124
        $region86: #{carla_encoder_forward.8} parent=79 // pred_check_branch
          %3651 = sbr.rel (%p3649) target = $region88
        $region87: #{carla_encoder_forward.8} parent=79 // pred_region
          _
        $region88: #{carla_encoder_forward.8} parent=79 // pred_fallthru
          _
      $region80: #{carla_encoder_forward.8} parent=5 // pred_fallthru
        _
      %p3652 = scmp.le.s32.totalorder 2, %s9
      // Predicated region
      $region89: #{carla_encoder_forward.8} parent=5 // pred_check
        %p3653 = pneg %p3652
      $region90: #{carla_encoder_forward.8} parent=5 // pred_check_branch
        %3655 = sbr.rel (%p3653) target = $region92
      $region91: #{carla_encoder_forward.8} parent=5 // pred_region
        %s3656 = ssub.s32 %s9, 2
        // Predicated region
        $region93: #{carla_encoder_forward.8} parent=91 // pred_check
          %p3657 = pneg %p130
        $region94: #{carla_encoder_forward.8} parent=91 // pred_check_branch
          %3659 = sbr.rel (%p3657) target = $region96
        $region95: #{carla_encoder_forward.8} parent=91 // pred_region
          %p3660 = scmp.lt.s32.totalorder %s20, 0
          %s3661 = scalar_select %p3660, %s20, 0
          %p3662 = scmp.lt.s32.totalorder %s21, 1
          %s3663 = scalar_select %p3662, %s21, 1
          %s3664 = smul.addr %s3661, 2
          %s3665 = sadd.s32 %s3663, %s3664
          %s3666 = smul.addr %s3665, 4
          %s3667 = scalar_lea.vmem %s3, %s3666
        $region96: #{carla_encoder_forward.8} parent=91 // pred_fallthru
          _
      $region92: #{carla_encoder_forward.8} parent=5 // pred_fallthru
        _
    $region6: #{carla_encoder_forward.8} parent=1 // loop_footer
      %s13 = sadd.s32 1, %s9
    $region7: #{carla_encoder_forward.8} parent=1 // loop_footer_branch
      %8 = sbr.rel target = $region3
    $region8: #{carla_encoder_forward.8} parent=1 // loop_exit
      _

// kernel: carla_encoder_forward.9
$region0: #{carla_encoder_forward.9}
  #allocation0 [shape = 'u32[]', space=smem, size = 0x4, offset = 0x4, fixed_abs, tag = 'smem constant byte address 0x4 - core index']
  #allocation1 [shape = 'u32[72,128]{1,0:T(1,128)}', space=vmem, size = 0x9000, scoped, tag = 'internal scratch']
  %s0 = inlined_call_operand.vmem [shape: bf16[2,1024], index: 0, kind: input, shape index: {}]
  %s1 = inlined_call_operand.vmem [shape: bf16[1024,128], index: 1, kind: input, shape index: {}]
  %s2 = inlined_call_operand.vmem [shape: f32[1,128], index: 2, kind: input, shape index: {}]
  %s3 = inlined_call_operand.vmem [shape: f32[2,128], index: 3, kind: output, shape index: {}]
  %s4 = sld [smem:[#allocation0]]
  $region22: #{carla_encoder_forward.9} parent=0
    _
  %s6 = ssub.s32 1, %s4
  %s7 = scalar_select 0, %s6, %s4
  // Predicated region
  $region2: #{carla_encoder_forward.9} parent=0 // pred_check
    _
  $region3: #{carla_encoder_forward.9} parent=0 // pred_check_branch
    %9 = sbr.rel (0) target = $region5
  $region4: #{carla_encoder_forward.9} parent=0 // pred_region
    _
  $region5: #{carla_encoder_forward.9} parent=0 // pred_fallthru
    _
  // Predicated region
  $region6: #{carla_encoder_forward.9} parent=0 // pred_check
    _
  $region7: #{carla_encoder_forward.9} parent=0 // pred_check_branch
    %11 = sbr.rel (0) target = $region9
  $region8: #{carla_encoder_forward.9} parent=0 // pred_region
    _
  $region9: #{carla_encoder_forward.9} parent=0 // pred_fallthru
    _
  // Predicated region
  $region10: #{carla_encoder_forward.9} parent=0 // pred_check
    _
  $region11: #{carla_encoder_forward.9} parent=0 // pred_check_branch
    %13 = sbr.rel (0) target = $region13
  $region12: #{carla_encoder_forward.9} parent=0 // pred_region
    _
  $region13: #{carla_encoder_forward.9} parent=0 // pred_fallthru
    _
  %v14 = vld [vmem:[%s0] sm:$0xff]
  %v15 = vld [vmem:[%s1] sm:$0xf]
  %v16 = vld [vmem:[%s1 + $0x4] sm:$0xf]
  %v17 = vld [vmem:[%s1 + $0x8] sm:$0xf]
  %v18 = vld [vmem:[%s1 + $0xc] sm:$0xf]
  %v19 = vld [vmem:[%s1 + $0x10] sm:$0xf]
  %v20 = vld [vmem:[%s1 + $0x14] sm:$0xf]
  %v21 = vld [vmem:[%s1 + $0x18] sm:$0xf]
  %v22 = vld [vmem:[%s1 + $0x1c] sm:$0xf]
  %v23 = vld [vmem:[%s1 + $0x20] sm:$0xf]
  %v24 = vld [vmem:[%s1 + $0x24] sm:$0xf]
  %v25 = vld [vmem:[%s1 + $0x28] sm:$0xf]
  %v26 = vld [vmem:[%s1 + $0x2c] sm:$0xf]
  %v27 = vld [vmem:[%s1 + $0x30] sm:$0xf]
  %v28 = vld [vmem:[%s1 + $0x34] sm:$0xf]
  %v29 = vld [vmem:[%s1 + $0x38] sm:$0xf]
  %v30 = vld [vmem:[%s1 + $0x3c] sm:$0xf]
  %v31 = vld [vmem:[%s1 + $0x40] sm:$0xf]
  %v32 = vld [vmem:[%s1 + $0x44] sm:$0xf]
  %v33 = vld [vmem:[%s1 + $0x48] sm:$0xf]
  %v34 = vld [vmem:[%s1 + $0x4c] sm:$0xf]
  %v35 = vld [vmem:[%s1 + $0x50] sm:$0xf]
  %v36 = vld [vmem:[%s1 + $0x54] sm:$0xf]
  %v37 = vld [vmem:[%s1 + $0x58] sm:$0xf]
  %v38 = vld [vmem:[%s1 + $0x5c] sm:$0xf]
  %v39 = vld [vmem:[%s1 + $0x60] sm:$0xf]
  %v40 = vld [vmem:[%s1 + $0x64] sm:$0xf]
  %v41 = vld [vmem:[%s1 + $0x68] sm:$0xf]
  %v42 = vld [vmem:[%s1 + $0x6c] sm:$0xf]
  %v43 = vld [vmem:[%s1 + $0x70] sm:$0xf]
  %v44 = vld [vmem:[%s1 + $0x74] sm:$0xf]
  %v45 = vld [vmem:[%s1 + $0x78] sm:$0xf]
  %v46 = vld [vmem:[%s1 + $0x7c] sm:$0xf]
  %v47 = vld [vmem:[%s1 + $0x80] sm:$0xf]
  %v48 = vld [vmem:[%s1 + $0x84] sm:$0xf]
  %v49 = vld [vmem:[%s1 + $0x88] sm:$0xf]
  %v50 = vld [vmem:[%s1 + $0x8c] sm:$0xf]
  %v51 = vld [vmem:[%s1 + $0x90] sm:$0xf]
  %v52 = vld [vmem:[%s1 + $0x94] sm:$0xf]
  %v53 = vld [vmem:[%s1 + $0x98] sm:$0xf]
  %v54 = vld [vmem:[%s1 + $0x9c] sm:$0xf]
  %v55 = vld [vmem:[%s1 + $0xa0] sm:$0xf]
  %v56 = vld [vmem:[%s1 + $0xa4] sm:$0xf]
  %v57 = vld [vmem:[%s1 + $0xa8] sm:$0xf]
  %v58 = vld [vmem:[%s1 + $0xac] sm:$0xf]
  %v59 = vld [vmem:[%s1 + $0xb0] sm:$0xf]
  %v60 = vld [vmem:[%s1 + $0xb4] sm:$0xf]
  %v61 = vld [vmem:[%s1 + $0xb8] sm:$0xf]
  %v62 = vld [vmem:[%s1 + $0xbc] sm:$0xf]
  %v63 = vld [vmem:[%s1 + $0xc0] sm:$0xf]
  %v64 = vld [vmem:[%s1 + $0xc4] sm:$0xf]
  %v65 = vld [vmem:[%s1 + $0xc8] sm:$0xf]
  %v66 = vld [vmem:[%s1 + $0xcc] sm:$0xf]
  %v67 = vld [vmem:[%s1 + $0xd0] sm:$0xf]
  %v68 = vld [vmem:[%s1 + $0xd4] sm:$0xf]
  %v69 = vld [vmem:[%s1 + $0xd8] sm:$0xf]
  %v70 = vld [vmem:[%s1 + $0xdc] sm:$0xf]
  %v71 = vld [vmem:[%s1 + $0xe0] sm:$0xf]
  %v72 = vld [vmem:[%s1 + $0xe4] sm:$0xf]
  %v73 = vld [vmem:[%s1 + $0xe8] sm:$0xf]
  %v74 = vld [vmem:[%s1 + $0xec] sm:$0xf]
  %v75 = vld [vmem:[%s1 + $0xf0] sm:$0xf]
  %v76 = vld [vmem:[%s1 + $0xf4] sm:$0xf]
  %v77 = vld [vmem:[%s1 + $0xf8] sm:$0xf]
  %v78 = vld [vmem:[%s1 + $0xfc] sm:$0xf]
  %v79 = vld [vmem:[%s1 + $0x100] sm:$0xf]
  %v80 = vld [vmem:[%s1 + $0x104] sm:$0xf]
  %v81 = vld [vmem:[%s1 + $0x108] sm:$0xf]
  %v82 = vld [vmem:[%s1 + $0x10c] sm:$0xf]
  %v83 = vld [vmem:[%s1 + $0x110] sm:$0xf]
  %v84 = vld [vmem:[%s1 + $0x114] sm:$0xf]
  %v85 = vld [vmem:[%s1 + $0x118] sm:$0xf]
  %v86 = vld [vmem:[%s1 + $0x11c] sm:$0xf]
  %v87 = vld [vmem:[%s1 + $0x120] sm:$0xf]
  %v88 = vld [vmem:[%s1 + $0x124] sm:$0xf]
  %v89 = vld [vmem:[%s1 + $0x128] sm:$0xf]
  %v90 = vld [vmem:[%s1 + $0x12c] sm:$0xf]
  %v91 = vld [vmem:[%s1 + $0x130] sm:$0xf]
  %v92 = vld [vmem:[%s1 + $0x134] sm:$0xf]
  %v93 = vld [vmem:[%s1 + $0x138] sm:$0xf]
  %v94 = vld [vmem:[%s1 + $0x13c] sm:$0xf]
  %v95 = vld [vmem:[%s1 + $0x140] sm:$0xf]
  %v96 = vld [vmem:[%s1 + $0x144] sm:$0xf]
  %v97 = vld [vmem:[%s1 + $0x148] sm:$0xf]
  %v98 = vld [vmem:[%s1 + $0x14c] sm:$0xf]
  %v99 = vld [vmem:[%s1 + $0x150] sm:$0xf]
  %v100 = vld [vmem:[%s1 + $0x154] sm:$0xf]
  %v101 = vld [vmem:[%s1 + $0x158] sm:$0xf]
  %v102 = vld [vmem:[%s1 + $0x15c] sm:$0xf]
  %v103 = vld [vmem:[%s1 + $0x160] sm:$0xf]
  %v104 = vld [vmem:[%s1 + $0x164] sm:$0xf]
  %v105 = vld [vmem:[%s1 + $0x168] sm:$0xf]
  %v106 = vld [vmem:[%s1 + $0x16c] sm:$0xf]
  %v107 = vld [vmem:[%s1 + $0x170] sm:$0xf]
  %v108 = vld [vmem:[%s1 + $0x174] sm:$0xf]
  %v109 = vld [vmem:[%s1 + $0x178] sm:$0xf]
  %v110 = vld [vmem:[%s1 + $0x17c] sm:$0xf]
  %v111 = vld [vmem:[%s1 + $0x180] sm:$0xf]
  %v112 = vld [vmem:[%s1 + $0x184] sm:$0xf]
  %v113 = vld [vmem:[%s1 + $0x188] sm:$0xf]
  %v114 = vld [vmem:[%s1 + $0x18c] sm:$0xf]
  %v115 = vld [vmem:[%s1 + $0x190] sm:$0xf]
  %v116 = vld [vmem:[%s1 + $0x194] sm:$0xf]
  %v117 = vld [vmem:[%s1 + $0x198] sm:$0xf]
  %v118 = vld [vmem:[%s1 + $0x19c] sm:$0xf]
  %v119 = vld [vmem:[%s1 + $0x1a0] sm:$0xf]
  %v120 = vld [vmem:[%s1 + $0x1a4] sm:$0xf]
  %v121 = vld [vmem:[%s1 + $0x1a8] sm:$0xf]
  %v122 = vld [vmem:[%s1 + $0x1ac] sm:$0xf]
  %v123 = vld [vmem:[%s1 + $0x1b0] sm:$0xf]
  %v124 = vld [vmem:[%s1 + $0x1b4] sm:$0xf]
  %v125 = vld [vmem:[%s1 + $0x1b8] sm:$0xf]
  %v126 = vld [vmem:[%s1 + $0x1bc] sm:$0xf]
  %v127 = vld [vmem:[%s1 + $0x1c0] sm:$0xf]
  %v128 = vld [vmem:[%s1 + $0x1c4] sm:$0xf]
  %v129 = vld [vmem:[%s1 + $0x1c8] sm:$0xf]
  %v130 = vld [vmem:[%s1 + $0x1cc] sm:$0xf]
  %v131 = vld [vmem:[%s1 + $0x1d0] sm:$0xf]
  %v132 = vld [vmem:[%s1 + $0x1d4] sm:$0xf]
  %v133 = vld [vmem:[%s1 + $0x1d8] sm:$0xf]
  %v134 = vld [vmem:[%s1 + $0x1dc] sm:$0xf]
  %v135 = vld [vmem:[%s1 + $0x1e0] sm:$0xf]
  %v136 = vld [vmem:[%s1 + $0x1e4] sm:$0xf]
  %v137 = vld [vmem:[%s1 + $0x1e8] sm:$0xf]
  %v138 = vld [vmem:[%s1 + $0x1ec] sm:$0xf]
  %v139 = vld [vmem:[%s1 + $0x1f0] sm:$0xf]
  %v140 = vld [vmem:[%s1 + $0x1f4] sm:$0xf]
  %v141 = vld [vmem:[%s1 + $0x1f8] sm:$0xf]
  %v142 = vld [vmem:[%s1 + $0x1fc] sm:$0xf]
  %v143 = vld [vmem:[%s2] sm:$0x1]
  %v145 = vperm.slane %v143, 0
  %148 = vst [vmem:[#allocation1] ss:$9 sm:$0xff] %v14
  %v149 = vld [vmem:[#allocation1] sm:$0xff]
  %v150 = vld [vmem:[#allocation1 + $0x9] sm:$0xff]
  %v151 = vld [vmem:[#allocation1 + $0x12] sm:$0xff]
  %v152 = vld [vmem:[#allocation1 + $0x1b] sm:$0xff]
  %v153 = vld [vmem:[#allocation1 + $0x24] sm:$0xff]
  %v154 = vld [vmem:[#allocation1 + $0x2d] sm:$0xff]
  %v155 = vld [vmem:[#allocation1 + $0x36] sm:$0xff]
  %v156 = vld [vmem:[#allocation1 + $0x3f] sm:$0xff]
  %v293 = vunpack.c.l.b16 %v15
  %v294 = vunpack.c.l.b16 %v16
  %v295 = vunpack.c.l.b16 %v17
  %v296 = vunpack.c.l.b16 %v18
  %v297 = vunpack.c.l.b16 %v19
  %v298 = vunpack.c.l.b16 %v20
  %v299 = vunpack.c.l.b16 %v21
  %v300 = vunpack.c.l.b16 %v22
  %v301 = vunpack.c.l.b16 %v23
  %v302 = vunpack.c.l.b16 %v24
  %v303 = vunpack.c.l.b16 %v25
  %v304 = vunpack.c.l.b16 %v26
  %v305 = vunpack.c.l.b16 %v27
  %v306 = vunpack.c.l.b16 %v28
  %v307 = vunpack.c.l.b16 %v29
  %v308 = vunpack.c.l.b16 %v30
  %v309 = vunpack.c.l.b16 %v31
  %v310 = vunpack.c.l.b16 %v32
  %v311 = vunpack.c.l.b16 %v33
  %v312 = vunpack.c.l.b16 %v34
  %v313 = vunpack.c.l.b16 %v35
  %v314 = vunpack.c.l.b16 %v36
  %v315 = vunpack.c.l.b16 %v37
  %v316 = vunpack.c.l.b16 %v38
  %v317 = vunpack.c.l.b16 %v39
  %v318 = vunpack.c.l.b16 %v40
  %v319 = vunpack.c.l.b16 %v41
  %v320 = vunpack.c.l.b16 %v42
  %v321 = vunpack.c.l.b16 %v43
  %v322 = vunpack.c.l.b16 %v44
  %v323 = vunpack.c.l.b16 %v45
  %v324 = vunpack.c.l.b16 %v46
  %v325 = vunpack.c.l.b16 %v47
  %v326 = vunpack.c.l.b16 %v48
  %v327 = vunpack.c.l.b16 %v49
  %v328 = vunpack.c.l.b16 %v50
  %v329 = vunpack.c.l.b16 %v51
  %v330 = vunpack.c.l.b16 %v52
  %v331 = vunpack.c.l.b16 %v53
  %v332 = vunpack.c.l.b16 %v54
  %v333 = vunpack.c.l.b16 %v55
  %v334 = vunpack.c.l.b16 %v56
  %v335 = vunpack.c.l.b16 %v57
  %v336 = vunpack.c.l.b16 %v58
  %v337 = vunpack.c.l.b16 %v59
  %v338 = vunpack.c.l.b16 %v60
  %v339 = vunpack.c.l.b16 %v61
  %v340 = vunpack.c.l.b16 %v62
  %v341 = vunpack.c.l.b16 %v63
  %v342 = vunpack.c.l.b16 %v64
  %v343 = vunpack.c.l.b16 %v65
  %v344 = vunpack.c.l.b16 %v66
  %v345 = vunpack.c.l.b16 %v67
  %v346 = vunpack.c.l.b16 %v68
  %v347 = vunpack.c.l.b16 %v69
  %v348 = vunpack.c.l.b16 %v70
  %v349 = vunpack.c.l.b16 %v71
  %v350 = vunpack.c.l.b16 %v72
  %v351 = vunpack.c.l.b16 %v73
  %v352 = vunpack.c.l.b16 %v74
  %v353 = vunpack.c.l.b16 %v75
  %v354 = vunpack.c.l.b16 %v76
  %v355 = vunpack.c.l.b16 %v77
  %v356 = vunpack.c.l.b16 %v78
  %v357 = vunpack.c.l.b16 %v79
  %v358 = vunpack.c.l.b16 %v80
  %v359 = vunpack.c.l.b16 %v81
  %v360 = vunpack.c.l.b16 %v82
  %v361 = vunpack.c.l.b16 %v83
  %v362 = vunpack.c.l.b16 %v84
  %v363 = vunpack.c.l.b16 %v85
  %v364 = vunpack.c.l.b16 %v86
  %v365 = vunpack.c.l.b16 %v87
  %v366 = vunpack.c.l.b16 %v88
  %v367 = vunpack.c.l.b16 %v89
  %v368 = vunpack.c.l.b16 %v90
  %v369 = vunpack.c.l.b16 %v91
  %v370 = vunpack.c.l.b16 %v92
  %v371 = vunpack.c.l.b16 %v93
  %v372 = vunpack.c.l.b16 %v94
  %v373 = vunpack.c.l.b16 %v95
  %v374 = vunpack.c.l.b16 %v96
  %v375 = vunpack.c.l.b16 %v97
  %v376 = vunpack.c.l.b16 %v98
  %v377 = vunpack.c.l.b16 %v99
  %v378 = vunpack.c.l.b16 %v100
  %v379 = vunpack.c.l.b16 %v101
  %v380 = vunpack.c.l.b16 %v102
  %v381 = vunpack.c.l.b16 %v103
  %v382 = vunpack.c.l.b16 %v104
  %v383 = vunpack.c.l.b16 %v105
  %v384 = vunpack.c.l.b16 %v106
  %v385 = vunpack.c.l.b16 %v107
  %v386 = vunpack.c.l.b16 %v108
  %v387 = vunpack.c.l.b16 %v109
  %v388 = vunpack.c.l.b16 %v110
  %v389 = vunpack.c.l.b16 %v111
  %v390 = vunpack.c.l.b16 %v112
  %v391 = vunpack.c.l.b16 %v113
  %v392 = vunpack.c.l.b16 %v114
  %v393 = vunpack.c.l.b16 %v115
  %v394 = vunpack.c.l.b16 %v116
  %v395 = vunpack.c.l.b16 %v117
  %v396 = vunpack.c.l.b16 %v118
  %v397 = vunpack.c.l.b16 %v119
  %v398 = vunpack.c.l.b16 %v120
  %v399 = vunpack.c.l.b16 %v121
  %v400 = vunpack.c.l.b16 %v122
  %v401 = vunpack.c.l.b16 %v123
  %v402 = vunpack.c.l.b16 %v124
  %v403 = vunpack.c.l.b16 %v125
  %v404 = vunpack.c.l.b16 %v126
  %v405 = vunpack.c.l.b16 %v127
  %v406 = vunpack.c.l.b16 %v128
  %v407 = vunpack.c.l.b16 %v129
  %v408 = vunpack.c.l.b16 %v130
  %v409 = vunpack.c.l.b16 %v131
  %v410 = vunpack.c.l.b16 %v132
  %v411 = vunpack.c.l.b16 %v133
  %v412 = vunpack.c.l.b16 %v134
  %v413 = vunpack.c.l.b16 %v135
  %v414 = vunpack.c.l.b16 %v136
  %v415 = vunpack.c.l.b16 %v137
  %v416 = vunpack.c.l.b16 %v138
  %v417 = vunpack.c.l.b16 %v139
  %v418 = vunpack.c.l.b16 %v140
  %v419 = vunpack.c.l.b16 %v141
  %v420 = vunpack.c.l.b16 %v142
  %v421 = vpack.c.b16 %v294, %v293
  %v422 = vpack.c.b16 %v296, %v295
  %v423 = vpack.c.b16 %v298, %v297
  %v424 = vpack.c.b16 %v300, %v299
  %v425 = vpack.c.b16 %v302, %v301
  %v426 = vpack.c.b16 %v304, %v303
  %v427 = vpack.c.b16 %v306, %v305
  %v428 = vpack.c.b16 %v308, %v307
  %v429 = vpack.c.b16 %v310, %v309
  %v430 = vpack.c.b16 %v312, %v311
  %v431 = vpack.c.b16 %v314, %v313
  %v432 = vpack.c.b16 %v316, %v315
  %v433 = vpack.c.b16 %v318, %v317
  %v434 = vpack.c.b16 %v320, %v319
  %v435 = vpack.c.b16 %v322, %v321
  %v436 = vpack.c.b16 %v324, %v323
  %v437 = vpack.c.b16 %v326, %v325
  %v438 = vpack.c.b16 %v328, %v327
  %v439 = vpack.c.b16 %v330, %v329
  %v440 = vpack.c.b16 %v332, %v331
  %v441 = vpack.c.b16 %v334, %v333
  %v442 = vpack.c.b16 %v336, %v335
  %v443 = vpack.c.b16 %v338, %v337
  %v444 = vpack.c.b16 %v340, %v339
  %v445 = vpack.c.b16 %v342, %v341
  %v446 = vpack.c.b16 %v344, %v343
  %v447 = vpack.c.b16 %v346, %v345
  %v448 = vpack.c.b16 %v348, %v347
  %v449 = vpack.c.b16 %v350, %v349
  %v450 = vpack.c.b16 %v352, %v351
  %v451 = vpack.c.b16 %v354, %v353
  %v452 = vpack.c.b16 %v356, %v355
  %v453 = vpack.c.b16 %v358, %v357
  %v454 = vpack.c.b16 %v360, %v359
  %v455 = vpack.c.b16 %v362, %v361
  %v456 = vpack.c.b16 %v364, %v363
  %v457 = vpack.c.b16 %v366, %v365
  %v458 = vpack.c.b16 %v368, %v367
  %v459 = vpack.c.b16 %v370, %v369
  %v460 = vpack.c.b16 %v372, %v371
  %v461 = vpack.c.b16 %v374, %v373
  %v462 = vpack.c.b16 %v376, %v375
  %v463 = vpack.c.b16 %v378, %v377
  %v464 = vpack.c.b16 %v380, %v379
  %v465 = vpack.c.b16 %v382, %v381
  %v466 = vpack.c.b16 %v384, %v383
  %v467 = vpack.c.b16 %v386, %v385
  %v468 = vpack.c.b16 %v388, %v387
  %v469 = vpack.c.b16 %v390, %v389
  %v470 = vpack.c.b16 %v392, %v391
  %v471 = vpack.c.b16 %v394, %v393
  %v472 = vpack.c.b16 %v396, %v395
  %v473 = vpack.c.b16 %v398, %v397
  %v474 = vpack.c.b16 %v400, %v399
  %v475 = vpack.c.b16 %v402, %v401
  %v476 = vpack.c.b16 %v404, %v403
  %v477 = vpack.c.b16 %v406, %v405
  %v478 = vpack.c.b16 %v408, %v407
  %v479 = vpack.c.b16 %v410, %v409
  %v480 = vpack.c.b16 %v412, %v411
  %v481 = vpack.c.b16 %v414, %v413
  %v482 = vpack.c.b16 %v416, %v415
  %v483 = vpack.c.b16 %v418, %v417
  %v484 = vpack.c.b16 %v420, %v419
  %549 = vmatpush.bf16.msra.mxu0 %v428
  %550 = vmatpush.bf16.msra.mxu0 %v427
  %551 = vmatpush.bf16.msra.mxu0 %v426
  %552 = vmatpush.bf16.msra.mxu0 %v425
  %553 = vmatpush.bf16.msra.mxu0 %v424
  %554 = vmatpush.bf16.msra.mxu0 %v423
  %555 = vmatpush.bf16.msra.mxu0 %v422
  %556 = vmatpush.bf16.msra.mxu0 %v421
  %557 = vmatmul.bf16.gmra.mxu0 %v149
  %v558 = vpop.f32.mrf.mxu0
  %v559 = vadd.f32 %v145, %v558
  %v560 = vpop.f32.mrf.mxu0
  %561 = vdwg.mxu0
  %562 = vmatpush.bf16.msra.mxu0 %v436
  %563 = vmatpush.bf16.msra.mxu0 %v435
  %564 = vmatpush.bf16.msra.mxu0 %v434
  %565 = vmatpush.bf16.msra.mxu0 %v433
  %566 = vmatpush.bf16.msra.mxu0 %v432
  %567 = vmatpush.bf16.msra.mxu0 %v431
  %568 = vmatpush.bf16.msra.mxu0 %v430
  %569 = vmatpush.bf16.msra.mxu0 %v429
  %570 = vmatmul.bf16.gmra.mxu0 %v150
  %v571 = vpop.f32.mrf.mxu0
  %v572 = vadd.f32 %v559, %v571
  %v573 = vpop.f32.mrf.mxu0
  %574 = vdwg.mxu0
  %575 = vmatpush.bf16.msra.mxu0 %v444
  %576 = vmatpush.bf16.msra.mxu0 %v443
  %577 = vmatpush.bf16.msra.mxu0 %v442
  %578 = vmatpush.bf16.msra.mxu0 %v441
  %579 = vmatpush.bf16.msra.mxu0 %v440
  %580 = vmatpush.bf16.msra.mxu0 %v439
  %581 = vmatpush.bf16.msra.mxu0 %v438
  %582 = vmatpush.bf16.msra.mxu0 %v437
  %583 = vmatmul.bf16.gmra.mxu0 %v151
  %v584 = vpop.f32.mrf.mxu0
  %v585 = vadd.f32 %v572, %v584
  %v586 = vpop.f32.mrf.mxu0
  %587 = vdwg.mxu0
  %588 = vmatpush.bf16.msra.mxu0 %v452
  %589 = vmatpush.bf16.msra.mxu0 %v451
  %590 = vmatpush.bf16.msra.mxu0 %v450
  %591 = vmatpush.bf16.msra.mxu0 %v449
  %592 = vmatpush.bf16.msra.mxu0 %v448
  %593 = vmatpush.bf16.msra.mxu0 %v447
  %594 = vmatpush.bf16.msra.mxu0 %v446
  %595 = vmatpush.bf16.msra.mxu0 %v445
  %596 = vmatmul.bf16.gmra.mxu0 %v152
  %v597 = vpop.f32.mrf.mxu0
  %v598 = vadd.f32 %v585, %v597
  %v599 = vpop.f32.mrf.mxu0
  %600 = vdwg.mxu0
  %601 = vmatpush.bf16.msra.mxu0 %v460
  %602 = vmatpush.bf16.msra.mxu0 %v459
  %603 = vmatpush.bf16.msra.mxu0 %v458
  %604 = vmatpush.bf16.msra.mxu0 %v457
  %605 = vmatpush.bf16.msra.mxu0 %v456
  %606 = vmatpush.bf16.msra.mxu0 %v455
  %607 = vmatpush.bf16.msra.mxu0 %v454
  %608 = vmatpush.bf16.msra.mxu0 %v453
  %609 = vmatmul.bf16.gmra.mxu0 %v153
  %v610 = vpop.f32.mrf.mxu0
  %v611 = vadd.f32 %v598, %v610
  %v612 = vpop.f32.mrf.mxu0
  %613 = vdwg.mxu0
  %614 = vmatpush.bf16.msra.mxu0 %v468
  %615 = vmatpush.bf16.msra.mxu0 %v467
  %616 = vmatpush.bf16.msra.mxu0 %v466
  %617 = vmatpush.bf16.msra.mxu0 %v465
  %618 = vmatpush.bf16.msra.mxu0 %v464
  %619 = vmatpush.bf16.msra.mxu0 %v463
  %620 = vmatpush.bf16.msra.mxu0 %v462
  %621 = vmatpush.bf16.msra.mxu0 %v461
  %622 = vmatmul.bf16.gmra.mxu0 %v154
  %v623 = vpop.f32.mrf.mxu0
  %v624 = vadd.f32 %v611, %v623
  %v625 = vpop.f32.mrf.mxu0
  %626 = vdwg.mxu0
  %627 = vmatpush.bf16.msra.mxu0 %v476
  %628 = vmatpush.bf16.msra.mxu0 %v475
  %629 = vmatpush.bf16.msra.mxu0 %v474
  %630 = vmatpush.bf16.msra.mxu0 %v473
  %631 = vmatpush.bf16.msra.mxu0 %v472
  %632 = vmatpush.bf16.msra.mxu0 %v471
  %633 = vmatpush.bf16.msra.mxu0 %v470
  %634 = vmatpush.bf16.msra.mxu0 %v469
  %635 = vmatmul.bf16.gmra.mxu0 %v155
  %v636 = vpop.f32.mrf.mxu0
  %v637 = vadd.f32 %v624, %v636
  %v638 = vpop.f32.mrf.mxu0
  %639 = vdwg.mxu0
  %640 = vmatpush.bf16.msra.mxu0 %v484
  %641 = vmatpush.bf16.msra.mxu0 %v483
  %642 = vmatpush.bf16.msra.mxu0 %v482
  %643 = vmatpush.bf16.msra.mxu0 %v481
  %644 = vmatpush.bf16.msra.mxu0 %v480
  %645 = vmatpush.bf16.msra.mxu0 %v479
  %646 = vmatpush.bf16.msra.mxu0 %v478
  %647 = vmatpush.bf16.msra.mxu0 %v477
  %648 = vmatmul.bf16.gmra.mxu0 %v156
  %v649 = vpop.f32.mrf.mxu0
  %v650 = vadd.f32 %v637, %v649
  %v651 = vpop.f32.mrf.mxu0
  %652 = vdwg.mxu0
  %653 = vst [vmem:[%s3] sm:$0x3] %v650
  // Predicated region
  $region14: #{carla_encoder_forward.9} parent=0 // pred_check
    _
  $region15: #{carla_encoder_forward.9} parent=0 // pred_check_branch
    %655 = sbr.rel (0) target = $region17
  $region16: #{carla_encoder_forward.9} parent=0 // pred_region
    _
  $region17: #{carla_encoder_forward.9} parent=0 // pred_fallthru
    _
  // Predicated region
  $region18: #{carla_encoder_forward.9} parent=0 // pred_check
    _
  $region19: #{carla_encoder_forward.9} parent=0 // pred_check_branch
    %657 = sbr.rel (0) target = $region21
  $region20: #{carla_encoder_forward.9} parent=0 // pred_region
    _
  $region21: #{carla_encoder_forward.9} parent=0 // pred_fallthru
    _

</llo_original>
